<compile_context>
chip_gen: v7x
topology: tpu7x:2x2x1
jax: 0.10.0
libtpu: 0.0.40
codegen_flags: <defaults>
</compile_context>

<pallas_src>
import math
from functools import partial

import jax
import jax.numpy as jnp
from jax.experimental import pallas as pl
from jax.experimental.pallas import tpu as pltpu

_GELU_C = math.sqrt(2.0 / math.pi)


# ----------------------------------------------------------------------------
# helpers
# ----------------------------------------------------------------------------
def _round_up(x, m):
    return ((x + m - 1) // m) * m


def _pick_m_tile(M):
    """Row tile: prefer >=2 tiles along M (megacore / v7x 2-TC), never below 128."""
    for c in (512, 256, 128):
        if M % c == 0 and M // c >= 2:
            return c, M
    for c in (512, 256, 128):
        if M % c == 0:
            return c, M
    return 128, _round_up(M, 128)          # ragged M: padded once in the wrapper


def _pick_nk_tile(dim):
    for c in (512, 384, 256, 128):
        if dim >= c and dim % c == 0:
            return c
    raise ValueError(f"feature dimension {dim} must be a multiple of 128")


def _gelu(y):
    # BERT tanh-approx GELU: 0.5*x*(1+tanh(sqrt(2/pi)*(x+0.044715*x^3)))
    return 0.5 * y * (1.0 + jnp.tanh(_GELU_C * (y + 0.044715 * y * y * y)))


# ----------------------------------------------------------------------------
# fused GEMM:  y = act(x @ w + b) [+ residual]   (K-reduction grid, f32 acc)
# ----------------------------------------------------------------------------
def _linear_kernel(activation, has_residual, x_ref, w_ref, b_ref, *rest):
    if has_residual:
        r_ref, o_ref, acc_ref = rest
    else:
        o_ref, acc_ref = rest

    @pl.when(pl.program_id(2) == 0)
    def _init():
        acc_ref[...] = jnp.zeros_like(acc_ref)

    acc_ref[...] += jnp.dot(x_ref[...].astype(jnp.bfloat16), w_ref[...],
                            preferred_element_type=jnp.float32)

    @pl.when(pl.program_id(2) == pl.num_programs(2) - 1)
    def _finalize():
        y = acc_ref[...] + b_ref[...]
        if activation == "gelu":
            y = _gelu(y)
        if has_residual:
            y = y + r_ref[...]
        o_ref[...] = y.astype(o_ref.dtype)


def fused_linear(x, w, b, activation=None, residual=None, out_dtype=jnp.float32):
    """x: (M, K) float, w: (K, N) bf16, b: (N,) -> (M, N) out_dtype."""
    M, K = x.shape
    K2, N = w.shape
    assert K == K2 and K % 128 == 0 and N % 128 == 0

    tm, Mp = _pick_m_tile(M)
    tk = _pick_nk_tile(K)
    tn = _pick_nk_tile(N)

    xp = x if Mp == M else jnp.pad(x, ((0, Mp - M), (0, 0)))
    b2 = b.astype(jnp.float32).reshape(1, N)

    in_specs = [
        pl.BlockSpec((tm, tk), lambda i, j, k: (i, k)),
        pl.BlockSpec((tk, tn), lambda i, j, k: (k, j)),
        pl.BlockSpec((1, tn), lambda i, j, k: (0, j)),
    ]
    args = [xp, w, b2]
    has_res = residual is not None
    if has_res:
        rp = residual if Mp == M else jnp.pad(residual, ((0, Mp - M), (0, 0)))
        in_specs.append(pl.BlockSpec((tm, tn), lambda i, j, k: (i, j)))
        args.append(rp)

    out = pl.pallas_call(
        partial(_linear_kernel, activation, has_res),
        out_shape=jax.ShapeDtypeStruct((Mp, N), out_dtype),
        grid_spec=pltpu.PrefetchScalarGridSpec(
            num_scalar_prefetch=0,
            grid=(Mp // tm, N // tn, K // tk),
            in_specs=in_specs,
            out_specs=pl.BlockSpec((tm, tn), lambda i, j, k: (i, j)),
            scratch_shapes=[pltpu.VMEM((tm, tn), jnp.float32)],
        ),
        compiler_params=pltpu.CompilerParams(
            dimension_semantics=("parallel", "parallel", "arbitrary")),
    )(*args)
    return out[:M] if Mp != M else out


# ----------------------------------------------------------------------------
# fused LayerNorm + GEMM:  y = act(LN(x) @ w + b)
#   LN is the custom variant: a2 * (x - mean) / (std + eps) + b2, unbiased std.
#   K == D fits a single block, so the norm is computed in-kernel before the dot.
# ----------------------------------------------------------------------------
def _ln_linear_kernel(activation, eps, nfeat, x_ref, g_ref, bb_ref, w_ref, b_ref,
                      o_ref):
    x = x_ref[...]                                            # (tm, D) f32
    mean = jnp.mean(x, axis=-1, keepdims=True)
    xc = x - mean
    var = jnp.sum(xc * xc, axis=-1, keepdims=True) * (1.0 / (nfeat - 1))
    inv = pl.reciprocal(jnp.sqrt(var) + eps, approx=True)     # EUP slot (~free)
    h = (g_ref[...] * (xc * inv) + bb_ref[...]).astype(jnp.bfloat16)
    y = jnp.dot(h, w_ref[...], preferred_element_type=jnp.float32) + b_ref[...]
    if activation == "gelu":
        y = _gelu(y)
    o_ref[...] = y.astype(o_ref.dtype)


def fused_ln_linear(x, gamma, beta, w, b, activation=None, out_dtype=jnp.float32,
                    eps=1e-6):
    M, D = x.shape
    D2, N = w.shape
    assert D == D2 and N % 128 == 0

    tm, Mp = _pick_m_tile(M)
    tn = _pick_nk_tile(N)

    xp = x if Mp == M else jnp.pad(x, ((0, Mp - M), (0, 0)))
    g = gamma.astype(jnp.float32).reshape(1, D)
    bb = beta.astype(jnp.float32).reshape(1, D)
    b2 = b.astype(jnp.float32).reshape(1, N)

    out = pl.pallas_call(
        partial(_ln_linear_kernel, activation, eps, D),
        out_shape=jax.ShapeDtypeStruct((Mp, N), out_dtype),
        grid_spec=pltpu.PrefetchScalarGridSpec(
            num_scalar_prefetch=0,
            grid=(Mp // tm, N // tn),
            in_specs=[
                pl.BlockSpec((tm, D), lambda i, j: (i, 0)),
                pl.BlockSpec((1, D), lambda i, j: (0, 0)),
                pl.BlockSpec((1, D), lambda i, j: (0, 0)),
                pl.BlockSpec((D, tn), lambda i, j: (0, j)),
                pl.BlockSpec((1, tn), lambda i, j: (0, j)),
            ],
            out_specs=pl.BlockSpec((tm, tn), lambda i, j: (i, j)),
        ),
        compiler_params=pltpu.CompilerParams(
            dimension_semantics=("parallel", "parallel")),
    )(xp, g, bb, w, b2)
    return out[:M] if Mp != M else out


# ----------------------------------------------------------------------------
# fused multi-head attention: reads Q/K/V column blocks straight from the QKV
# GEMM output (B, S, 3D) bf16; key-padding mask built in-kernel from lengths;
# all heads processed per q-tile; lane-dense (tq, D) output in (B, S, D) layout.
# ----------------------------------------------------------------------------
def _attention_kernel(scale, heads, dk, lens_ref, q_ref, k_ref, v_ref, o_ref):
    b = pl.program_id(0)
    valid_len = lens_ref[b]
    q = q_ref[0]                                              # (tq, D) bf16
    k = k_ref[0]                                              # (S,  D) bf16
    v = v_ref[0]                                              # (S,  D) bf16
    tq, S = q.shape[0], k.shape[0]
    key_valid = jax.lax.broadcasted_iota(jnp.int32, (tq, S), 1) < valid_len

    outs = []
    for h in range(heads):                                    # static unroll
        sl = slice(h * dk, (h + 1) * dk)
        s = jax.lax.dot_general(q[:, sl], k[:, sl], (((1,), (1,)), ((), ())),
                                preferred_element_type=jnp.float32) * scale
        s = jnp.where(key_valid, s, jnp.float32(-1e9))        # masked_fill
        s = s - jnp.max(s, axis=-1, keepdims=True)            # stable softmax
        p = jnp.exp(s)
        p = p * pl.reciprocal(jnp.sum(p, axis=-1, keepdims=True), approx=True)
        outs.append(jnp.dot(p.astype(v.dtype), v[:, sl],
                            preferred_element_type=jnp.float32))
    o_ref[0] = jnp.concatenate(outs, axis=-1).astype(o_ref.dtype)


def multihead_attention(qkv, lengths, heads):
    """qkv: (B, S, 3D) bf16; lengths: (B,) int32 valid key counts -> (B, S, D) bf16."""
    B, S, threeD = qkv.shape
    D = threeD // 3
    dk = D // heads
    tq = 128 if S % 128 == 0 else S
    scale = 1.0 / math.sqrt(dk)

    return pl.pallas_call(
        partial(_attention_kernel, scale, heads, dk),
        out_shape=jax.ShapeDtypeStruct((B, S, D), jnp.bfloat16),
        grid_spec=pltpu.PrefetchScalarGridSpec(
            num_scalar_prefetch=1,                            # lengths -> SMEM
            grid=(B, S // tq),
            in_specs=[
                pl.BlockSpec((1, tq, D), lambda b, i, lens: (b, i, 0)),  # Q cols
                pl.BlockSpec((1, S, D), lambda b, i, lens: (b, 0, 1)),   # K cols
                pl.BlockSpec((1, S, D), lambda b, i, lens: (b, 0, 2)),   # V cols
            ],
            out_specs=pl.BlockSpec((1, tq, D), lambda b, i, lens: (b, i, 0)),
        ),
        compiler_params=pltpu.CompilerParams(
            dimension_semantics=("parallel", "parallel"),
            vmem_limit_bytes=32 * 1024 * 1024),               # v7x-safe budget
    )(lengths, qkv, qkv, qkv)


# ----------------------------------------------------------------------------
# parameters & full forward
# ----------------------------------------------------------------------------
def init_params(key, hidden, ff_hidden):
    def linear_init(k, fan_in, fan_out):
        k1, k2 = jax.random.split(k)
        bound = 1.0 / math.sqrt(fan_in)
        w = jax.random.uniform(k1, (fan_in, fan_out), jnp.float32, -bound, bound)
        b = jax.random.uniform(k2, (fan_out,), jnp.float32, -bound, bound)
        return w.astype(jnp.bfloat16), b                      # bf16 weights at init

    ks = jax.random.split(key, 6)
    wq, bq = linear_init(ks[0], hidden, hidden)
    wk, bk = linear_init(ks[1], hidden, hidden)
    wv, bv = linear_init(ks[2], hidden, hidden)
    wo, bo = linear_init(ks[3], hidden, hidden)
    w1, b1 = linear_init(ks[4], hidden, ff_hidden)
    w2, b2 = linear_init(ks[5], ff_hidden, hidden)
    return {
        # Q/K/V projections fused into a single GEMM (shared-input fusion).
        "qkv_w": jnp.concatenate([wq, wk, wv], axis=1),
        "qkv_b": jnp.concatenate([bq, bk, bv], axis=0),
        "proj_w": wo, "proj_b": bo,
        "ff1_w": w1, "ff1_b": b1,
        "ff2_w": w2, "ff2_b": b2,
        "ln1_g": jnp.ones((hidden,), jnp.float32),
        "ln1_b": jnp.zeros((hidden,), jnp.float32),
        "ln2_g": jnp.ones((hidden,), jnp.float32),
        "ln2_b": jnp.zeros((hidden,), jnp.float32),
    }


def transformer_block_forward(x, lengths, params, attn_heads):
    B, S, D = x.shape
    x2 = x.reshape(B * S, D).astype(jnp.float32)

    # ---- input sublayer: x + Dropout(MHA(LN(x)));  dropout = identity (eval)
    qkv = fused_ln_linear(x2, params["ln1_g"], params["ln1_b"],
                          params["qkv_w"], params["qkv_b"],
                          out_dtype=jnp.bfloat16)                    # (B*S, 3D) bf16
    attn = multihead_attention(qkv.reshape(B, S, 3 * D), lengths,
                               attn_heads)                           # (B, S, D) bf16
    x1 = fused_linear(attn.reshape(B * S, D), params["proj_w"], params["proj_b"],
                      residual=x2, out_dtype=jnp.float32)            # (B*S, D) f32

    # ---- output sublayer: x + Dropout(FFN(LN(x)));  dropout = identity (eval)
    f1 = fused_ln_linear(x1, params["ln2_g"], params["ln2_b"],
                         params["ff1_w"], params["ff1_b"],
                         activation="gelu", out_dtype=jnp.bfloat16)  # (B*S, 4D) bf16
    out = fused_linear(f1, params["ff2_w"], params["ff2_b"],
                       residual=x1, out_dtype=jnp.float32)           # (B*S, D) f32

    # final dropout: identity in eval mode.
    return out.reshape(B, S, D)


if __name__ == "__main__":
    key = jax.random.PRNGKey(0)
    pkey, xkey = jax.random.split(key)

    B, S, hidden, heads, ff = 2, 128, 128, 4, 512
    params = init_params(pkey, hidden, ff)
    x = jax.random.normal(xkey, (B, S, hidden), jnp.float32)

    # key-padding mask expressed as per-batch valid lengths:
    # batch 0 fully valid, batch 1's last 16 key positions masked.
    lengths = jnp.array([S, S - 16], dtype=jnp.int32)

    fwd = jax.jit(partial(transformer_block_forward, attn_heads=heads))
    out = jax.block_until_ready(fwd(x, lengths, params))

    assert out.shape == (B, S, hidden), out.shape
    assert bool(jnp.all(jnp.isfinite(out)))
    print("KERNEL_OK")
</pallas_src>

<mosaic_0001>
module attributes {stable_mosaic.version = 11 : i64} {
  func.func @_attention_kernel(%arg0: i32, %arg1: i32, %arg2: memref<2xi32, #tpu.memory_space<smem>>, %arg3: memref<1x128x128xbf16, #tpu.memory_space<vmem>>, %arg4: memref<1x128x128xbf16, #tpu.memory_space<vmem>>, %arg5: memref<1x128x128xbf16, #tpu.memory_space<vmem>>, %arg6: memref<1x128x128xbf16, #tpu.memory_space<vmem>>) attributes {dimension_semantics = [#tpu.dimension_semantics<parallel>, #tpu.dimension_semantics<parallel>], iteration_bounds = array<i64: 2, 1>, scalar_prefetch = 1 : i64, scratch_operands = 0 : i64, tpu.core_type = #tpu.core_type<tc>, window_params = [{transform_indices = @transform_0, window_bounds = array<i64: 1, 128, 128>}, {transform_indices = @transform_1, window_bounds = array<i64: 1, 128, 128>}, {transform_indices = @transform_2, window_bounds = array<i64: 1, 128, 128>}, {transform_indices = @transform_3, window_bounds = array<i64: 1, 128, 128>}]} {
    %0 = arith.index_cast %arg0 : i32 to index
    %1 = memref.load %arg2[%0] : memref<2xi32, #tpu.memory_space<smem>>
    %c0 = arith.constant 0 : index
    %c0_0 = arith.constant 0 : index
    %c0_1 = arith.constant 0 : index
    %2 = vector.load %arg3[%c0, %c0_0, %c0_1] : memref<1x128x128xbf16, #tpu.memory_space<vmem>>, vector<1x128x128xbf16>
    %3 = vector.shape_cast %2 : vector<1x128x128xbf16> to vector<128x128xbf16>
    %c0_2 = arith.constant 0 : index
    %c0_3 = arith.constant 0 : index
    %c0_4 = arith.constant 0 : index
    %4 = vector.load %arg4[%c0_2, %c0_3, %c0_4] : memref<1x128x128xbf16, #tpu.memory_space<vmem>>, vector<1x128x128xbf16>
    %5 = vector.shape_cast %4 : vector<1x128x128xbf16> to vector<128x128xbf16>
    %c0_5 = arith.constant 0 : index
    %c0_6 = arith.constant 0 : index
    %c0_7 = arith.constant 0 : index
    %6 = vector.load %arg5[%c0_5, %c0_6, %c0_7] : memref<1x128x128xbf16, #tpu.memory_space<vmem>>, vector<1x128x128xbf16>
    %7 = vector.shape_cast %6 : vector<1x128x128xbf16> to vector<128x128xbf16>
    %8 = tpu.iota {dimensions = array<i32: 1>} : vector<128x128xi32>
    %9 = vector.broadcast %1 : i32 to vector<128x128xi32>
    %10 = arith.cmpi slt, %8, %9 : vector<128x128xi32>
    %11 = vector.extract_strided_slice %3 {offsets = [0, 0], sizes = [128, 32], strides = [1, 1]} : vector<128x128xbf16> to vector<128x32xbf16>
    %12 = vector.extract_strided_slice %5 {offsets = [0, 0], sizes = [128, 32], strides = [1, 1]} : vector<128x128xbf16> to vector<128x32xbf16>
    %cst = arith.constant dense<0.000000e+00> : vector<128x128xf32>
    %13 = tpu.matmul %11, %12, %cst {dimension_numbers = #tpu.dot_dimension_numbers<[1], [1], [0], [0], [0, 0, 1, 0], [], []>} : vector<128x32xbf16>, vector<128x32xbf16>, vector<128x128xf32> -> vector<128x128xf32>
    %cst_8 = arith.constant 0.176776692 : f32
    %14 = vector.broadcast %cst_8 : f32 to vector<128x128xf32>
    %15 = arith.mulf %13, %14 : vector<128x128xf32>
    %cst_9 = arith.constant -1.000000e+09 : f32
    %16 = vector.broadcast %cst_9 : f32 to vector<128x128xf32>
    %17 = arith.select %10, %15, %16 : vector<128x128xi1>, vector<128x128xf32>
    %cst_10 = arith.constant dense<0xFF800000> : vector<128xf32>
    %18 = vector.multi_reduction <maximumf>, %17, %cst_10 [1] : vector<128x128xf32> to vector<128xf32>
    %19 = vector.shape_cast %18 : vector<128xf32> to vector<128x1xf32>
    %20 = vector.broadcast %19 : vector<128x1xf32> to vector<128x128xf32>
    %21 = arith.subf %17, %20 : vector<128x128xf32>
    %22 = math.exp %21 : vector<128x128xf32>
    %cst_11 = arith.constant dense<0.000000e+00> : vector<128xf32>
    %23 = vector.multi_reduction <add>, %22, %cst_11 [1] : vector<128x128xf32> to vector<128xf32>
    %24 = vector.shape_cast %23 : vector<128xf32> to vector<128x1xf32>
    %25 = tpu.reciprocal %24 {approx = true} : vector<128x1xf32> -> vector<128x1xf32>
    %26 = vector.broadcast %25 : vector<128x1xf32> to vector<128x128xf32>
    %27 = arith.mulf %22, %26 : vector<128x128xf32>
    %28 = arith.truncf %27 : vector<128x128xf32> to vector<128x128xbf16>
    %29 = vector.extract_strided_slice %7 {offsets = [0, 0], sizes = [128, 32], strides = [1, 1]} : vector<128x128xbf16> to vector<128x32xbf16>
    %cst_12 = arith.constant dense<0.000000e+00> : vector<128x32xf32>
    %30 = tpu.matmul %28, %29, %cst_12 {dimension_numbers = #tpu.dot_dimension_numbers<[1], [0], [0], [1], [0, 0, 1, 1], [], []>} : vector<128x128xbf16>, vector<128x32xbf16>, vector<128x32xf32> -> vector<128x32xf32>
    %31 = vector.extract_strided_slice %3 {offsets = [0, 32], sizes = [128, 32], strides = [1, 1]} : vector<128x128xbf16> to vector<128x32xbf16>
    %32 = vector.extract_strided_slice %5 {offsets = [0, 32], sizes = [128, 32], strides = [1, 1]} : vector<128x128xbf16> to vector<128x32xbf16>
    %cst_13 = arith.constant dense<0.000000e+00> : vector<128x128xf32>
    %33 = tpu.matmul %31, %32, %cst_13 {dimension_numbers = #tpu.dot_dimension_numbers<[1], [1], [0], [0], [0, 0, 1, 0], [], []>} : vector<128x32xbf16>, vector<128x32xbf16>, vector<128x128xf32> -> vector<128x128xf32>
    %cst_14 = arith.constant 0.176776692 : f32
    %34 = vector.broadcast %cst_14 : f32 to vector<128x128xf32>
    %35 = arith.mulf %33, %34 : vector<128x128xf32>
    %cst_15 = arith.constant -1.000000e+09 : f32
    %36 = vector.broadcast %cst_15 : f32 to vector<128x128xf32>
    %37 = arith.select %10, %35, %36 : vector<128x128xi1>, vector<128x128xf32>
    %cst_16 = arith.constant dense<0xFF800000> : vector<128xf32>
    %38 = vector.multi_reduction <maximumf>, %37, %cst_16 [1] : vector<128x128xf32> to vector<128xf32>
    %39 = vector.shape_cast %38 : vector<128xf32> to vector<128x1xf32>
    %40 = vector.broadcast %39 : vector<128x1xf32> to vector<128x128xf32>
    %41 = arith.subf %37, %40 : vector<128x128xf32>
    %42 = math.exp %41 : vector<128x128xf32>
    %cst_17 = arith.constant dense<0.000000e+00> : vector<128xf32>
    %43 = vector.multi_reduction <add>, %42, %cst_17 [1] : vector<128x128xf32> to vector<128xf32>
    %44 = vector.shape_cast %43 : vector<128xf32> to vector<128x1xf32>
    %45 = tpu.reciprocal %44 {approx = true} : vector<128x1xf32> -> vector<128x1xf32>
    %46 = vector.broadcast %45 : vector<128x1xf32> to vector<128x128xf32>
    %47 = arith.mulf %42, %46 : vector<128x128xf32>
    %48 = arith.truncf %47 : vector<128x128xf32> to vector<128x128xbf16>
    %49 = vector.extract_strided_slice %7 {offsets = [0, 32], sizes = [128, 32], strides = [1, 1]} : vector<128x128xbf16> to vector<128x32xbf16>
    %cst_18 = arith.constant dense<0.000000e+00> : vector<128x32xf32>
    %50 = tpu.matmul %48, %49, %cst_18 {dimension_numbers = #tpu.dot_dimension_numbers<[1], [0], [0], [1], [0, 0, 1, 1], [], []>} : vector<128x128xbf16>, vector<128x32xbf16>, vector<128x32xf32> -> vector<128x32xf32>
    %51 = vector.extract_strided_slice %3 {offsets = [0, 64], sizes = [128, 32], strides = [1, 1]} : vector<128x128xbf16> to vector<128x32xbf16>
    %52 = vector.extract_strided_slice %5 {offsets = [0, 64], sizes = [128, 32], strides = [1, 1]} : vector<128x128xbf16> to vector<128x32xbf16>
    %cst_19 = arith.constant dense<0.000000e+00> : vector<128x128xf32>
    %53 = tpu.matmul %51, %52, %cst_19 {dimension_numbers = #tpu.dot_dimension_numbers<[1], [1], [0], [0], [0, 0, 1, 0], [], []>} : vector<128x32xbf16>, vector<128x32xbf16>, vector<128x128xf32> -> vector<128x128xf32>
    %cst_20 = arith.constant 0.176776692 : f32
    %54 = vector.broadcast %cst_20 : f32 to vector<128x128xf32>
    %55 = arith.mulf %53, %54 : vector<128x128xf32>
    %cst_21 = arith.constant -1.000000e+09 : f32
    %56 = vector.broadcast %cst_21 : f32 to vector<128x128xf32>
    %57 = arith.select %10, %55, %56 : vector<128x128xi1>, vector<128x128xf32>
    %cst_22 = arith.constant dense<0xFF800000> : vector<128xf32>
    %58 = vector.multi_reduction <maximumf>, %57, %cst_22 [1] : vector<128x128xf32> to vector<128xf32>
    %59 = vector.shape_cast %58 : vector<128xf32> to vector<128x1xf32>
    %60 = vector.broadcast %59 : vector<128x1xf32> to vector<128x128xf32>
    %61 = arith.subf %57, %60 : vector<128x128xf32>
    %62 = math.exp %61 : vector<128x128xf32>
    %cst_23 = arith.constant dense<0.000000e+00> : vector<128xf32>
    %63 = vector.multi_reduction <add>, %62, %cst_23 [1] : vector<128x128xf32> to vector<128xf32>
    %64 = vector.shape_cast %63 : vector<128xf32> to vector<128x1xf32>
    %65 = tpu.reciprocal %64 {approx = true} : vector<128x1xf32> -> vector<128x1xf32>
    %66 = vector.broadcast %65 : vector<128x1xf32> to vector<128x128xf32>
    %67 = arith.mulf %62, %66 : vector<128x128xf32>
    %68 = arith.truncf %67 : vector<128x128xf32> to vector<128x128xbf16>
    %69 = vector.extract_strided_slice %7 {offsets = [0, 64], sizes = [128, 32], strides = [1, 1]} : vector<128x128xbf16> to vector<128x32xbf16>
    %cst_24 = arith.constant dense<0.000000e+00> : vector<128x32xf32>
    %70 = tpu.matmul %68, %69, %cst_24 {dimension_numbers = #tpu.dot_dimension_numbers<[1], [0], [0], [1], [0, 0, 1, 1], [], []>} : vector<128x128xbf16>, vector<128x32xbf16>, vector<128x32xf32> -> vector<128x32xf32>
    %71 = vector.extract_strided_slice %3 {offsets = [0, 96], sizes = [128, 32], strides = [1, 1]} : vector<128x128xbf16> to vector<128x32xbf16>
    %72 = vector.extract_strided_slice %5 {offsets = [0, 96], sizes = [128, 32], strides = [1, 1]} : vector<128x128xbf16> to vector<128x32xbf16>
    %cst_25 = arith.constant dense<0.000000e+00> : vector<128x128xf32>
    %73 = tpu.matmul %71, %72, %cst_25 {dimension_numbers = #tpu.dot_dimension_numbers<[1], [1], [0], [0], [0, 0, 1, 0], [], []>} : vector<128x32xbf16>, vector<128x32xbf16>, vector<128x128xf32> -> vector<128x128xf32>
    %cst_26 = arith.constant 0.176776692 : f32
    %74 = vector.broadcast %cst_26 : f32 to vector<128x128xf32>
    %75 = arith.mulf %73, %74 : vector<128x128xf32>
    %cst_27 = arith.constant -1.000000e+09 : f32
    %76 = vector.broadcast %cst_27 : f32 to vector<128x128xf32>
    %77 = arith.select %10, %75, %76 : vector<128x128xi1>, vector<128x128xf32>
    %cst_28 = arith.constant dense<0xFF800000> : vector<128xf32>
    %78 = vector.multi_reduction <maximumf>, %77, %cst_28 [1] : vector<128x128xf32> to vector<128xf32>
    %79 = vector.shape_cast %78 : vector<128xf32> to vector<128x1xf32>
    %80 = vector.broadcast %79 : vector<128x1xf32> to vector<128x128xf32>
    %81 = arith.subf %77, %80 : vector<128x128xf32>
    %82 = math.exp %81 : vector<128x128xf32>
    %cst_29 = arith.constant dense<0.000000e+00> : vector<128xf32>
    %83 = vector.multi_reduction <add>, %82, %cst_29 [1] : vector<128x128xf32> to vector<128xf32>
    %84 = vector.shape_cast %83 : vector<128xf32> to vector<128x1xf32>
    %85 = tpu.reciprocal %84 {approx = true} : vector<128x1xf32> -> vector<128x1xf32>
    %86 = vector.broadcast %85 : vector<128x1xf32> to vector<128x128xf32>
    %87 = arith.mulf %82, %86 : vector<128x128xf32>
    %88 = arith.truncf %87 : vector<128x128xf32> to vector<128x128xbf16>
    %89 = vector.extract_strided_slice %7 {offsets = [0, 96], sizes = [128, 32], strides = [1, 1]} : vector<128x128xbf16> to vector<128x32xbf16>
    %cst_30 = arith.constant dense<0.000000e+00> : vector<128x32xf32>
    %90 = tpu.matmul %88, %89, %cst_30 {dimension_numbers = #tpu.dot_dimension_numbers<[1], [0], [0], [1], [0, 0, 1, 1], [], []>} : vector<128x128xbf16>, vector<128x32xbf16>, vector<128x32xf32> -> vector<128x32xf32>
    %91 = tpu.concatenate %30, %50, %70, %90 in 1 : vector<128x32xf32>, vector<128x32xf32>, vector<128x32xf32>, vector<128x32xf32> -> vector<128x128xf32>
    %92 = arith.truncf %91 : vector<128x128xf32> to vector<128x128xbf16>
    %c0_31 = arith.constant 0 : index
    %c0_32 = arith.constant 0 : index
    %c0_33 = arith.constant 0 : index
    %93 = vector.load %arg6[%c0_31, %c0_32, %c0_33] : memref<1x128x128xbf16, #tpu.memory_space<vmem>>, vector<1x128x128xbf16>
    %94 = vector.shape_cast %93 : vector<1x128x128xbf16> to vector<128x128xbf16>
    %95 = vector.shape_cast %92 : vector<128x128xbf16> to vector<1x128x128xbf16>
    tpu.vector_store %arg6[%c0_31, %c0_32, %c0_33], %95 {strides = array<i32>} : memref<1x128x128xbf16, #tpu.memory_space<vmem>>, vector<1x128x128xbf16>,
    return
  }
  func.func @transform_0(%arg0: i32, %arg1: i32, %arg2: memref<2xi32, #tpu.memory_space<smem>>) -> (i32, i32, i32) {
    %c0_i32 = arith.constant 0 : i32
    %c0_i32_0 = arith.constant 0 : i32
    return %arg0, %arg1, %c0_i32 : i32, i32, i32
  }
  func.func @transform_1(%arg0: i32, %arg1: i32, %arg2: memref<2xi32, #tpu.memory_space<smem>>) -> (i32, i32, i32) {
    %c0_i32 = arith.constant 0 : i32
    %c1_i32 = arith.constant 1 : i32
    %c0_i32_0 = arith.constant 0 : i32
    return %arg0, %c0_i32, %c1_i32 : i32, i32, i32
  }
  func.func @transform_2(%arg0: i32, %arg1: i32, %arg2: memref<2xi32, #tpu.memory_space<smem>>) -> (i32, i32, i32) {
    %c0_i32 = arith.constant 0 : i32
    %c2_i32 = arith.constant 2 : i32
    %c0_i32_0 = arith.constant 0 : i32
    return %arg0, %c0_i32, %c2_i32 : i32, i32, i32
  }
  func.func @transform_3(%arg0: i32, %arg1: i32, %arg2: memref<2xi32, #tpu.memory_space<smem>>) -> (i32, i32, i32) {
    %c0_i32 = arith.constant 0 : i32
    %c0_i32_0 = arith.constant 0 : i32
    return %arg0, %arg1, %c0_i32 : i32, i32, i32
  }
}

module attributes {stable_mosaic.version = 11 : i64} {
  func.func @_ln_linear_kernel(%arg0: i32, %arg1: i32, %arg2: memref<128x128xf32, #tpu.memory_space<vmem>>, %arg3: memref<1x128xf32, #tpu.memory_space<vmem>>, %arg4: memref<1x128xf32, #tpu.memory_space<vmem>>, %arg5: memref<128x384xbf16, #tpu.memory_space<vmem>>, %arg6: memref<1x384xf32, #tpu.memory_space<vmem>>, %arg7: memref<128x384xbf16, #tpu.memory_space<vmem>>) attributes {dimension_semantics = [#tpu.dimension_semantics<parallel>, #tpu.dimension_semantics<parallel>], iteration_bounds = array<i64: 2, 1>, scalar_prefetch = 0 : i64, scratch_operands = 0 : i64, tpu.core_type = #tpu.core_type<tc>, window_params = [{transform_indices = @transform_0, window_bounds = array<i64: 128, 128>}, {pipeline_mode = #tpu.pipeline_mode<synchronous>, transform_indices = @transform_1, window_bounds = array<i64: 1, 128>}, {pipeline_mode = #tpu.pipeline_mode<synchronous>, transform_indices = @transform_2, window_bounds = array<i64: 1, 128>}, {transform_indices = @transform_3, window_bounds = array<i64: 128, 384>}, {transform_indices = @transform_4, window_bounds = array<i64: 1, 384>}, {transform_indices = @transform_5, window_bounds = array<i64: 128, 384>}]} {
    %c0 = arith.constant 0 : index
    %c0_0 = arith.constant 0 : index
    %0 = vector.load %arg2[%c0, %c0_0] : memref<128x128xf32, #tpu.memory_space<vmem>>, vector<128x128xf32>
    %cst = arith.constant dense<0.000000e+00> : vector<128xf32>
    %1 = vector.multi_reduction <add>, %0, %cst [1] : vector<128x128xf32> to vector<128xf32>
    %2 = vector.shape_cast %1 : vector<128xf32> to vector<128x1xf32>
    %cst_1 = arith.constant 1.280000e+02 : f32
    %3 = vector.broadcast %cst_1 : f32 to vector<128x1xf32>
    %4 = arith.divf %2, %3 : vector<128x1xf32>
    %5 = vector.broadcast %4 : vector<128x1xf32> to vector<128x128xf32>
    %6 = arith.subf %0, %5 : vector<128x128xf32>
    %7 = arith.mulf %6, %6 : vector<128x128xf32>
    %cst_2 = arith.constant dense<0.000000e+00> : vector<128xf32>
    %8 = vector.multi_reduction <add>, %7, %cst_2 [1] : vector<128x128xf32> to vector<128xf32>
    %9 = vector.shape_cast %8 : vector<128xf32> to vector<128x1xf32>
    %cst_3 = arith.constant 0.00787401571 : f32
    %10 = vector.broadcast %cst_3 : f32 to vector<128x1xf32>
    %11 = arith.mulf %9, %10 : vector<128x1xf32>
    %12 = math.sqrt %11 : vector<128x1xf32>
    %cst_4 = arith.constant 9.99999997E-7 : f32
    %13 = vector.broadcast %cst_4 : f32 to vector<128x1xf32>
    %14 = arith.addf %12, %13 : vector<128x1xf32>
    %15 = tpu.reciprocal %14 {approx = true} : vector<128x1xf32> -> vector<128x1xf32>
    %c0_5 = arith.constant 0 : index
    %c0_6 = arith.constant 0 : index
    %16 = vector.load %arg3[%c0_5, %c0_6] : memref<1x128xf32, #tpu.memory_space<vmem>>, vector<1x128xf32>
    %17 = vector.broadcast %15 : vector<128x1xf32> to vector<128x128xf32>
    %18 = arith.mulf %6, %17 : vector<128x128xf32>
    %19 = vector.broadcast %16 : vector<1x128xf32> to vector<128x128xf32>
    %20 = arith.mulf %19, %18 : vector<128x128xf32>
    %c0_7 = arith.constant 0 : index
    %c0_8 = arith.constant 0 : index
    %21 = vector.load %arg4[%c0_7, %c0_8] : memref<1x128xf32, #tpu.memory_space<vmem>>, vector<1x128xf32>
    %22 = vector.broadcast %21 : vector<1x128xf32> to vector<128x128xf32>
    %23 = arith.addf %20, %22 : vector<128x128xf32>
    %24 = arith.truncf %23 : vector<128x128xf32> to vector<128x128xbf16>
    %c0_9 = arith.constant 0 : index
    %c0_10 = arith.constant 0 : index
    %25 = vector.load %arg5[%c0_9, %c0_10] : memref<128x384xbf16, #tpu.memory_space<vmem>>, vector<128x384xbf16>
    %cst_11 = arith.constant dense<0.000000e+00> : vector<128x384xf32>
    %26 = tpu.matmul %24, %25, %cst_11 {dimension_numbers = #tpu.dot_dimension_numbers<[1], [0], [0], [1], [0, 0, 1, 1], [], []>} : vector<128x128xbf16>, vector<128x384xbf16>, vector<128x384xf32> -> vector<128x384xf32>
    %c0_12 = arith.constant 0 : index
    %c0_13 = arith.constant 0 : index
    %27 = vector.load %arg6[%c0_12, %c0_13] : memref<1x384xf32, #tpu.memory_space<vmem>>, vector<1x384xf32>
    %28 = vector.broadcast %27 : vector<1x384xf32> to vector<128x384xf32>
    %29 = arith.addf %26, %28 : vector<128x384xf32>
    %30 = arith.truncf %29 : vector<128x384xf32> to vector<128x384xbf16>
    %c0_14 = arith.constant 0 : index
    %c0_15 = arith.constant 0 : index
    %31 = vector.load %arg7[%c0_14, %c0_15] : memref<128x384xbf16, #tpu.memory_space<vmem>>, vector<128x384xbf16>
    tpu.vector_store %arg7[%c0_14, %c0_15], %30 {strides = array<i32>} : memref<128x384xbf16, #tpu.memory_space<vmem>>, vector<128x384xbf16>,
    return
  }
  func.func @transform_0(%arg0: i32, %arg1: i32) -> (i32, i32) {
    %c0_i32 = arith.constant 0 : i32
    %c0_i32_0 = arith.constant 0 : i32
    return %arg0, %c0_i32 : i32, i32
  }
  func.func @transform_1(%arg0: i32, %arg1: i32) -> (i32, i32) {
    %c0_i32 = arith.constant 0 : i32
    %c0_i32_0 = arith.constant 0 : i32
    %c0_i32_1 = arith.constant 0 : i32
    return %c0_i32, %c0_i32_0 : i32, i32
  }
  func.func @transform_2(%arg0: i32, %arg1: i32) -> (i32, i32) {
    %c0_i32 = arith.constant 0 : i32
    %c0_i32_0 = arith.constant 0 : i32
    %c0_i32_1 = arith.constant 0 : i32
    return %c0_i32, %c0_i32_0 : i32, i32
  }
  func.func @transform_3(%arg0: i32, %arg1: i32) -> (i32, i32) {
    %c0_i32 = arith.constant 0 : i32
    %c0_i32_0 = arith.constant 0 : i32
    return %c0_i32, %arg1 : i32, i32
  }
  func.func @transform_4(%arg0: i32, %arg1: i32) -> (i32, i32) {
    %c0_i32 = arith.constant 0 : i32
    %c0_i32_0 = arith.constant 0 : i32
    return %c0_i32, %arg1 : i32, i32
  }
  func.func @transform_5(%arg0: i32, %arg1: i32) -> (i32, i32) {
    %c0_i32 = arith.constant 0 : i32
    return %arg0, %arg1 : i32, i32
  }
}

module attributes {stable_mosaic.version = 11 : i64} {
  func.func @_linear_kernel(%arg0: i32, %arg1: i32, %arg2: i32, %arg3: memref<128x128xbf16, #tpu.memory_space<vmem>>, %arg4: memref<128x128xbf16, #tpu.memory_space<vmem>>, %arg5: memref<1x128xf32, #tpu.memory_space<vmem>>, %arg6: memref<128x128xf32, #tpu.memory_space<vmem>>, %arg7: memref<128x128xf32, #tpu.memory_space<vmem>>, %arg8: memref<128x128xf32, #tpu.memory_space<vmem>>) attributes {dimension_semantics = [#tpu.dimension_semantics<parallel>, #tpu.dimension_semantics<parallel>, #tpu.dimension_semantics<arbitrary>], iteration_bounds = array<i64: 2, 1, 1>, scalar_prefetch = 0 : i64, scratch_operands = 1 : i64, tpu.core_type = #tpu.core_type<tc>, window_params = [{transform_indices = @transform_0, window_bounds = array<i64: 128, 128>}, {transform_indices = @transform_1, window_bounds = array<i64: 128, 128>}, {transform_indices = @transform_2, window_bounds = array<i64: 1, 128>}, {transform_indices = @transform_3, window_bounds = array<i64: 128, 128>}, {transform_indices = @transform_4, window_bounds = array<i64: 128, 128>}]} {
    %c0_i32 = arith.constant 0 : i32
    %0 = arith.cmpi eq, %arg2, %c0_i32 : i32
    %1 = arith.extui %0 : i1 to i32
    %c0_i32_0 = arith.constant 0 : i32
    %2 = arith.cmpi ne, %1, %c0_i32_0 : i32
    scf.if %2 {
      %cst_10 = arith.constant 0.000000e+00 : f32
      %12 = vector.broadcast %cst_10 : f32 to vector<128x128xf32>
      %c0_11 = arith.constant 0 : index
      %c0_12 = arith.constant 0 : index
      %13 = vector.load %arg8[%c0_11, %c0_12] : memref<128x128xf32, #tpu.memory_space<vmem>>, vector<128x128xf32>
      tpu.vector_store %arg8[%c0_11, %c0_12], %12 {strides = array<i32>} : memref<128x128xf32, #tpu.memory_space<vmem>>, vector<128x128xf32>,
    } else {
    }
    %c0 = arith.constant 0 : index
    %c0_1 = arith.constant 0 : index
    %3 = vector.load %arg8[%c0, %c0_1] : memref<128x128xf32, #tpu.memory_space<vmem>>, vector<128x128xf32>
    %c0_2 = arith.constant 0 : index
    %c0_3 = arith.constant 0 : index
    %4 = vector.load %arg3[%c0_2, %c0_3] : memref<128x128xbf16, #tpu.memory_space<vmem>>, vector<128x128xbf16>
    %c0_4 = arith.constant 0 : index
    %c0_5 = arith.constant 0 : index
    %5 = vector.load %arg4[%c0_4, %c0_5] : memref<128x128xbf16, #tpu.memory_space<vmem>>, vector<128x128xbf16>
    %cst = arith.constant dense<0.000000e+00> : vector<128x128xf32>
    %6 = tpu.matmul %4, %5, %cst {dimension_numbers = #tpu.dot_dimension_numbers<[1], [0], [0], [1], [0, 0, 1, 1], [], []>} : vector<128x128xbf16>, vector<128x128xbf16>, vector<128x128xf32> -> vector<128x128xf32>
    %7 = arith.addf %3, %6 : vector<128x128xf32>
    %c0_6 = arith.constant 0 : index
    %c0_7 = arith.constant 0 : index
    %8 = vector.load %arg8[%c0_6, %c0_7] : memref<128x128xf32, #tpu.memory_space<vmem>>, vector<128x128xf32>
    tpu.vector_store %arg8[%c0_6, %c0_7], %7 {strides = array<i32>} : memref<128x128xf32, #tpu.memory_space<vmem>>, vector<128x128xf32>,
    %c0_i32_8 = arith.constant 0 : i32
    %9 = arith.cmpi eq, %arg2, %c0_i32_8 : i32
    %10 = arith.extui %9 : i1 to i32
    %c0_i32_9 = arith.constant 0 : i32
    %11 = arith.cmpi ne, %10, %c0_i32_9 : i32
    scf.if %11 {
      %c0_10 = arith.constant 0 : index
      %c0_11 = arith.constant 0 : index
      %12 = vector.load %arg8[%c0_10, %c0_11] : memref<128x128xf32, #tpu.memory_space<vmem>>, vector<128x128xf32>
      %c0_12 = arith.constant 0 : index
      %c0_13 = arith.constant 0 : index
      %13 = vector.load %arg5[%c0_12, %c0_13] : memref<1x128xf32, #tpu.memory_space<vmem>>, vector<1x128xf32>
      %14 = vector.broadcast %13 : vector<1x128xf32> to vector<128x128xf32>
      %15 = arith.addf %12, %14 : vector<128x128xf32>
      %c0_14 = arith.constant 0 : index
      %c0_15 = arith.constant 0 : index
      %16 = vector.load %arg6[%c0_14, %c0_15] : memref<128x128xf32, #tpu.memory_space<vmem>>, vector<128x128xf32>
      %17 = arith.addf %15, %16 : vector<128x128xf32>
      %c0_16 = arith.constant 0 : index
      %c0_17 = arith.constant 0 : index
      %18 = vector.load %arg7[%c0_16, %c0_17] : memref<128x128xf32, #tpu.memory_space<vmem>>, vector<128x128xf32>
      tpu.vector_store %arg7[%c0_16, %c0_17], %17 {strides = array<i32>} : memref<128x128xf32, #tpu.memory_space<vmem>>, vector<128x128xf32>,
    } else {
    }
    return
  }
  func.func @transform_0(%arg0: i32, %arg1: i32, %arg2: i32) -> (i32, i32) {
    %c0_i32 = arith.constant 0 : i32
    return %arg0, %arg2 : i32, i32
  }
  func.func @transform_1(%arg0: i32, %arg1: i32, %arg2: i32) -> (i32, i32) {
    %c0_i32 = arith.constant 0 : i32
    return %arg2, %arg1 : i32, i32
  }
  func.func @transform_2(%arg0: i32, %arg1: i32, %arg2: i32) -> (i32, i32) {
    %c0_i32 = arith.constant 0 : i32
    %c0_i32_0 = arith.constant 0 : i32
    return %c0_i32, %arg1 : i32, i32
  }
  func.func @transform_3(%arg0: i32, %arg1: i32, %arg2: i32) -> (i32, i32) {
    %c0_i32 = arith.constant 0 : i32
    return %arg0, %arg1 : i32, i32
  }
  func.func @transform_4(%arg0: i32, %arg1: i32, %arg2: i32) -> (i32, i32) {
    %c0_i32 = arith.constant 0 : i32
    return %arg0, %arg1 : i32, i32
  }
}

module attributes {stable_mosaic.version = 11 : i64} {
  func.func @_ln_linear_kernel(%arg0: i32, %arg1: i32, %arg2: memref<128x128xf32, #tpu.memory_space<vmem>>, %arg3: memref<1x128xf32, #tpu.memory_space<vmem>>, %arg4: memref<1x128xf32, #tpu.memory_space<vmem>>, %arg5: memref<128x512xbf16, #tpu.memory_space<vmem>>, %arg6: memref<1x512xf32, #tpu.memory_space<vmem>>, %arg7: memref<128x512xbf16, #tpu.memory_space<vmem>>) attributes {dimension_semantics = [#tpu.dimension_semantics<parallel>, #tpu.dimension_semantics<parallel>], iteration_bounds = array<i64: 2, 1>, scalar_prefetch = 0 : i64, scratch_operands = 0 : i64, tpu.core_type = #tpu.core_type<tc>, window_params = [{transform_indices = @transform_0, window_bounds = array<i64: 128, 128>}, {pipeline_mode = #tpu.pipeline_mode<synchronous>, transform_indices = @transform_1, window_bounds = array<i64: 1, 128>}, {pipeline_mode = #tpu.pipeline_mode<synchronous>, transform_indices = @transform_2, window_bounds = array<i64: 1, 128>}, {transform_indices = @transform_3, window_bounds = array<i64: 128, 512>}, {transform_indices = @transform_4, window_bounds = array<i64: 1, 512>}, {transform_indices = @transform_5, window_bounds = array<i64: 128, 512>}]} {
    %c0 = arith.constant 0 : index
    %c0_0 = arith.constant 0 : index
    %0 = vector.load %arg2[%c0, %c0_0] : memref<128x128xf32, #tpu.memory_space<vmem>>, vector<128x128xf32>
    %cst = arith.constant dense<0.000000e+00> : vector<128xf32>
    %1 = vector.multi_reduction <add>, %0, %cst [1] : vector<128x128xf32> to vector<128xf32>
    %2 = vector.shape_cast %1 : vector<128xf32> to vector<128x1xf32>
    %cst_1 = arith.constant 1.280000e+02 : f32
    %3 = vector.broadcast %cst_1 : f32 to vector<128x1xf32>
    %4 = arith.divf %2, %3 : vector<128x1xf32>
    %5 = vector.broadcast %4 : vector<128x1xf32> to vector<128x128xf32>
    %6 = arith.subf %0, %5 : vector<128x128xf32>
    %7 = arith.mulf %6, %6 : vector<128x128xf32>
    %cst_2 = arith.constant dense<0.000000e+00> : vector<128xf32>
    %8 = vector.multi_reduction <add>, %7, %cst_2 [1] : vector<128x128xf32> to vector<128xf32>
    %9 = vector.shape_cast %8 : vector<128xf32> to vector<128x1xf32>
    %cst_3 = arith.constant 0.00787401571 : f32
    %10 = vector.broadcast %cst_3 : f32 to vector<128x1xf32>
    %11 = arith.mulf %9, %10 : vector<128x1xf32>
    %12 = math.sqrt %11 : vector<128x1xf32>
    %cst_4 = arith.constant 9.99999997E-7 : f32
    %13 = vector.broadcast %cst_4 : f32 to vector<128x1xf32>
    %14 = arith.addf %12, %13 : vector<128x1xf32>
    %15 = tpu.reciprocal %14 {approx = true} : vector<128x1xf32> -> vector<128x1xf32>
    %c0_5 = arith.constant 0 : index
    %c0_6 = arith.constant 0 : index
    %16 = vector.load %arg3[%c0_5, %c0_6] : memref<1x128xf32, #tpu.memory_space<vmem>>, vector<1x128xf32>
    %17 = vector.broadcast %15 : vector<128x1xf32> to vector<128x128xf32>
    %18 = arith.mulf %6, %17 : vector<128x128xf32>
    %19 = vector.broadcast %16 : vector<1x128xf32> to vector<128x128xf32>
    %20 = arith.mulf %19, %18 : vector<128x128xf32>
    %c0_7 = arith.constant 0 : index
    %c0_8 = arith.constant 0 : index
    %21 = vector.load %arg4[%c0_7, %c0_8] : memref<1x128xf32, #tpu.memory_space<vmem>>, vector<1x128xf32>
    %22 = vector.broadcast %21 : vector<1x128xf32> to vector<128x128xf32>
    %23 = arith.addf %20, %22 : vector<128x128xf32>
    %24 = arith.truncf %23 : vector<128x128xf32> to vector<128x128xbf16>
    %c0_9 = arith.constant 0 : index
    %c0_10 = arith.constant 0 : index
    %25 = vector.load %arg5[%c0_9, %c0_10] : memref<128x512xbf16, #tpu.memory_space<vmem>>, vector<128x512xbf16>
    %cst_11 = arith.constant dense<0.000000e+00> : vector<128x512xf32>
    %26 = tpu.matmul %24, %25, %cst_11 {dimension_numbers = #tpu.dot_dimension_numbers<[1], [0], [0], [1], [0, 0, 1, 1], [], []>} : vector<128x128xbf16>, vector<128x512xbf16>, vector<128x512xf32> -> vector<128x512xf32>
    %c0_12 = arith.constant 0 : index
    %c0_13 = arith.constant 0 : index
    %27 = vector.load %arg6[%c0_12, %c0_13] : memref<1x512xf32, #tpu.memory_space<vmem>>, vector<1x512xf32>
    %28 = vector.broadcast %27 : vector<1x512xf32> to vector<128x512xf32>
    %29 = arith.addf %26, %28 : vector<128x512xf32>
    %cst_14 = arith.constant 5.000000e-01 : f32
    %30 = vector.broadcast %cst_14 : f32 to vector<128x512xf32>
    %31 = arith.mulf %30, %29 : vector<128x512xf32>
    %cst_15 = arith.constant 4.471500e-02 : f32
    %32 = vector.broadcast %cst_15 : f32 to vector<128x512xf32>
    %33 = arith.mulf %32, %29 : vector<128x512xf32>
    %34 = arith.mulf %33, %29 : vector<128x512xf32>
    %35 = arith.mulf %34, %29 : vector<128x512xf32>
    %36 = arith.addf %29, %35 : vector<128x512xf32>
    %cst_16 = arith.constant 0.797884583 : f32
    %37 = vector.broadcast %cst_16 : f32 to vector<128x512xf32>
    %38 = arith.mulf %37, %36 : vector<128x512xf32>
    %39 = math.tanh %38 : vector<128x512xf32>
    %cst_17 = arith.constant 1.000000e+00 : f32
    %40 = vector.broadcast %cst_17 : f32 to vector<128x512xf32>
    %41 = arith.addf %40, %39 : vector<128x512xf32>
    %42 = arith.mulf %31, %41 : vector<128x512xf32>
    %43 = arith.truncf %42 : vector<128x512xf32> to vector<128x512xbf16>
    %c0_18 = arith.constant 0 : index
    %c0_19 = arith.constant 0 : index
    %44 = vector.load %arg7[%c0_18, %c0_19] : memref<128x512xbf16, #tpu.memory_space<vmem>>, vector<128x512xbf16>
    tpu.vector_store %arg7[%c0_18, %c0_19], %43 {strides = array<i32>} : memref<128x512xbf16, #tpu.memory_space<vmem>>, vector<128x512xbf16>,
    return
  }
  func.func @transform_0(%arg0: i32, %arg1: i32) -> (i32, i32) {
    %c0_i32 = arith.constant 0 : i32
    %c0_i32_0 = arith.constant 0 : i32
    return %arg0, %c0_i32 : i32, i32
  }
  func.func @transform_1(%arg0: i32, %arg1: i32) -> (i32, i32) {
    %c0_i32 = arith.constant 0 : i32
    %c0_i32_0 = arith.constant 0 : i32
    %c0_i32_1 = arith.constant 0 : i32
    return %c0_i32, %c0_i32_0 : i32, i32
  }
  func.func @transform_2(%arg0: i32, %arg1: i32) -> (i32, i32) {
    %c0_i32 = arith.constant 0 : i32
    %c0_i32_0 = arith.constant 0 : i32
    %c0_i32_1 = arith.constant 0 : i32
    return %c0_i32, %c0_i32_0 : i32, i32
  }
  func.func @transform_3(%arg0: i32, %arg1: i32) -> (i32, i32) {
    %c0_i32 = arith.constant 0 : i32
    %c0_i32_0 = arith.constant 0 : i32
    return %c0_i32, %arg1 : i32, i32
  }
  func.func @transform_4(%arg0: i32, %arg1: i32) -> (i32, i32) {
    %c0_i32 = arith.constant 0 : i32
    %c0_i32_0 = arith.constant 0 : i32
    return %c0_i32, %arg1 : i32, i32
  }
  func.func @transform_5(%arg0: i32, %arg1: i32) -> (i32, i32) {
    %c0_i32 = arith.constant 0 : i32
    return %arg0, %arg1 : i32, i32
  }
}

module attributes {stable_mosaic.version = 11 : i64} {
  func.func @_linear_kernel(%arg0: i32, %arg1: i32, %arg2: i32, %arg3: memref<128x512xbf16, #tpu.memory_space<vmem>>, %arg4: memref<512x128xbf16, #tpu.memory_space<vmem>>, %arg5: memref<1x128xf32, #tpu.memory_space<vmem>>, %arg6: memref<128x128xf32, #tpu.memory_space<vmem>>, %arg7: memref<128x128xf32, #tpu.memory_space<vmem>>, %arg8: memref<128x128xf32, #tpu.memory_space<vmem>>) attributes {dimension_semantics = [#tpu.dimension_semantics<parallel>, #tpu.dimension_semantics<parallel>, #tpu.dimension_semantics<arbitrary>], iteration_bounds = array<i64: 2, 1, 1>, scalar_prefetch = 0 : i64, scratch_operands = 1 : i64, tpu.core_type = #tpu.core_type<tc>, window_params = [{transform_indices = @transform_0, window_bounds = array<i64: 128, 512>}, {transform_indices = @transform_1, window_bounds = array<i64: 512, 128>}, {transform_indices = @transform_2, window_bounds = array<i64: 1, 128>}, {transform_indices = @transform_3, window_bounds = array<i64: 128, 128>}, {transform_indices = @transform_4, window_bounds = array<i64: 128, 128>}]} {
    %c0_i32 = arith.constant 0 : i32
    %0 = arith.cmpi eq, %arg2, %c0_i32 : i32
    %1 = arith.extui %0 : i1 to i32
    %c0_i32_0 = arith.constant 0 : i32
    %2 = arith.cmpi ne, %1, %c0_i32_0 : i32
    scf.if %2 {
      %cst_10 = arith.constant 0.000000e+00 : f32
      %12 = vector.broadcast %cst_10 : f32 to vector<128x128xf32>
      %c0_11 = arith.constant 0 : index
      %c0_12 = arith.constant 0 : index
      %13 = vector.load %arg8[%c0_11, %c0_12] : memref<128x128xf32, #tpu.memory_space<vmem>>, vector<128x128xf32>
      tpu.vector_store %arg8[%c0_11, %c0_12], %12 {strides = array<i32>} : memref<128x128xf32, #tpu.memory_space<vmem>>, vector<128x128xf32>,
    } else {
    }
    %c0 = arith.constant 0 : index
    %c0_1 = arith.constant 0 : index
    %3 = vector.load %arg8[%c0, %c0_1] : memref<128x128xf32, #tpu.memory_space<vmem>>, vector<128x128xf32>
    %c0_2 = arith.constant 0 : index
    %c0_3 = arith.constant 0 : index
    %4 = vector.load %arg3[%c0_2, %c0_3] : memref<128x512xbf16, #tpu.memory_space<vmem>>, vector<128x512xbf16>
    %c0_4 = arith.constant 0 : index
    %c0_5 = arith.constant 0 : index
    %5 = vector.load %arg4[%c0_4, %c0_5] : memref<512x128xbf16, #tpu.memory_space<vmem>>, vector<512x128xbf16>
    %cst = arith.constant dense<0.000000e+00> : vector<128x128xf32>
    %6 = tpu.matmul %4, %5, %cst {dimension_numbers = #tpu.dot_dimension_numbers<[1], [0], [0], [1], [0, 0, 1, 1], [], []>} : vector<128x512xbf16>, vector<512x128xbf16>, vector<128x128xf32> -> vector<128x128xf32>
    %7 = arith.addf %3, %6 : vector<128x128xf32>
    %c0_6 = arith.constant 0 : index
    %c0_7 = arith.constant 0 : index
    %8 = vector.load %arg8[%c0_6, %c0_7] : memref<128x128xf32, #tpu.memory_space<vmem>>, vector<128x128xf32>
    tpu.vector_store %arg8[%c0_6, %c0_7], %7 {strides = array<i32>} : memref<128x128xf32, #tpu.memory_space<vmem>>, vector<128x128xf32>,
    %c0_i32_8 = arith.constant 0 : i32
    %9 = arith.cmpi eq, %arg2, %c0_i32_8 : i32
    %10 = arith.extui %9 : i1 to i32
    %c0_i32_9 = arith.constant 0 : i32
    %11 = arith.cmpi ne, %10, %c0_i32_9 : i32
    scf.if %11 {
      %c0_10 = arith.constant 0 : index
      %c0_11 = arith.constant 0 : index
      %12 = vector.load %arg8[%c0_10, %c0_11] : memref<128x128xf32, #tpu.memory_space<vmem>>, vector<128x128xf32>
      %c0_12 = arith.constant 0 : index
      %c0_13 = arith.constant 0 : index
      %13 = vector.load %arg5[%c0_12, %c0_13] : memref<1x128xf32, #tpu.memory_space<vmem>>, vector<1x128xf32>
      %14 = vector.broadcast %13 : vector<1x128xf32> to vector<128x128xf32>
      %15 = arith.addf %12, %14 : vector<128x128xf32>
      %c0_14 = arith.constant 0 : index
      %c0_15 = arith.constant 0 : index
      %16 = vector.load %arg6[%c0_14, %c0_15] : memref<128x128xf32, #tpu.memory_space<vmem>>, vector<128x128xf32>
      %17 = arith.addf %15, %16 : vector<128x128xf32>
      %c0_16 = arith.constant 0 : index
      %c0_17 = arith.constant 0 : index
      %18 = vector.load %arg7[%c0_16, %c0_17] : memref<128x128xf32, #tpu.memory_space<vmem>>, vector<128x128xf32>
      tpu.vector_store %arg7[%c0_16, %c0_17], %17 {strides = array<i32>} : memref<128x128xf32, #tpu.memory_space<vmem>>, vector<128x128xf32>,
    } else {
    }
    return
  }
  func.func @transform_0(%arg0: i32, %arg1: i32, %arg2: i32) -> (i32, i32) {
    %c0_i32 = arith.constant 0 : i32
    return %arg0, %arg2 : i32, i32
  }
  func.func @transform_1(%arg0: i32, %arg1: i32, %arg2: i32) -> (i32, i32) {
    %c0_i32 = arith.constant 0 : i32
    return %arg2, %arg1 : i32, i32
  }
  func.func @transform_2(%arg0: i32, %arg1: i32, %arg2: i32) -> (i32, i32) {
    %c0_i32 = arith.constant 0 : i32
    %c0_i32_0 = arith.constant 0 : i32
    return %c0_i32, %arg1 : i32, i32
  }
  func.func @transform_3(%arg0: i32, %arg1: i32, %arg2: i32) -> (i32, i32) {
    %c0_i32 = arith.constant 0 : i32
    return %arg0, %arg1 : i32, i32
  }
  func.func @transform_4(%arg0: i32, %arg1: i32, %arg2: i32) -> (i32, i32) {
    %c0_i32 = arith.constant 0 : i32
    return %arg0, %arg1 : i32, i32
  }
}

</mosaic_0001>

<llo_original>
// kernel: transformer_block_forward.7
$region0: #{transformer_block_forward.7}
  #allocation0 [shape = 'u32[]', space=smem, size = 0x4, offset = 0x4, fixed_abs, tag = 'smem constant byte address 0x4 - core index']
  #allocation1 [shape = 'u32[144,128]{1,0:T(1,128)}', space=vmem, size = 0x12000, scoped, tag = 'internal scratch']
  #allocation2 [shape = 'f32[128,128]{1,0:T(8,128)}', space=vmem, size = 0x10000, scoped, tag = 'scratch operand']
  %s0 = inlined_call_operand.vmem [shape: bf16[256,128], index: 0, kind: input, shape index: {}]
  %s1 = inlined_call_operand.vmem [shape: bf16[128,128], index: 1, kind: input, shape index: {}]
  %s2 = inlined_call_operand.vmem [shape: f32[1,128], index: 2, kind: input, shape index: {}]
  %s3 = inlined_call_operand.vmem [shape: f32[256,128], index: 3, kind: input, shape index: {}]
  %s4 = inlined_call_operand.vmem [shape: f32[256,128], index: 4, kind: output, shape index: {}]
  %s5 = sld [smem:[#allocation0]]
  $region57: #{transformer_block_forward.7} parent=0
    _
  %s7 = ssub.s32 1, %s5
  %s8 = scalar_select 0, %s7, %s5
  loop: start=0, step=1, limit=4
  $region2: #{transformer_block_forward.7} parent=0 // loop_pre_header
    _
  $region3: #{transformer_block_forward.7} parent=0 // loop_header
    %s10 = sphi 0, %s14
    %p11 = scmp.ge.s32.totalorder %s10, 4
    %s17 = sphi 0, %s36
    %s18 = sphi 0, %s32
    %s19 = sphi 0, %s28
    %s20 = sphi 0, %s17
    %s21 = sphi 0, %s18
    %s22 = sphi 0, %s19
    %s23 = sphi 0, %s20
    %s24 = sphi 0, %s21
    %s25 = sphi 0, %s22
    %s41 = sphi 0, %s43
    %s44 = sphi 0, %s41
    %s45 = sphi 0, %s44
    %s61 = sphi 0, %s45
    %s69 = sphi 0, %s71
    %s72 = sphi 0, %s69
    %s73 = sphi 0, %s72
    %s89 = sphi 0, %s73
    %s95 = sphi 0, %s97
    %s98 = sphi 0, %s95
    %s99 = sphi 0, %s98
    %s115 = sphi 0, %s99
    %s123 = sphi 0, %s125
    %s126 = sphi 0, %s123
    %s127 = sphi 0, %s126
    %s143 = sphi 0, %s127
    %s151 = sphi 0, %s153
    %s154 = sphi 0, %s151
    %s155 = sphi 0, %s154
    %s171 = sphi 0, %s155
  $region4: #{transformer_block_forward.7} parent=0 // loop_header_branch
    %13 = sbr.rel (%p11) target = $region8
  $region5: #{transformer_block_forward.7} parent=0 // loop_body
    %s15 = ssub.s32 %s10, 1
    %s16 = ssub.s32 %s10, 2
    %s26 = sadd.s32 1, %s19
    %p27 = scmp.ge.s32.totalorder %s26, 1
    %s28 = scalar_select %p27, 0, %s26
    %s29 = sadd.s32 1, %s18
    %s30 = scalar_select %p27, %s29, %s18
    %p31 = scmp.ge.s32.totalorder %s30, 1
    %s32 = scalar_select %p31, 0, %s30
    %s33 = sadd.s32 1, %s17
    %s34 = scalar_select %p31, %s33, %s17
    %p35 = scmp.ge.s32.totalorder %s34, 2
    %s36 = scalar_select %p35, 0, %s34
    %s37 = ssub.s32 %s17, %s36
    %s38 = ssub.s32 %s19, %s28
    %s39 = sor.u32 %s37, %s38
    %p40 = scmp.eq.s32.totalorder %s39, 0
    %s42 = sadd.s32 %s41, 1
    %s43 = scalar_select %p40, %s41, %s42
    %p46 = pneg %p40
    %p47 = scmp.eq.s32.totalorder %s10, 1
    %p48 = por %p46, %p47
    %p49 = scmp.ne.s32.totalorder %s41, %s44
    %p50 = scmp.eq.s32.totalorder %s10, 0
    %p51 = por %p49, %p50
    %p52 = scmp.ne.s32.totalorder %s41, %s44
    %p53 = scmp.eq.s32.totalorder %s15, 1
    %p54 = por %p52, %p53
    %p55 = scmp.ne.s32.totalorder %s44, %s45
    %p56 = scmp.eq.s32.totalorder %s15, 0
    %p57 = por %p55, %p56
    %p58 = scmp.ne.s32.totalorder %s44, %s45
    %p59 = scmp.eq.s32.totalorder %s16, 1
    %p60 = por %p58, %p59
    %p62 = scmp.ne.s32.totalorder %s45, %s61
    %p63 = scmp.eq.s32.totalorder %s16, 0
    %p64 = por %p62, %p63
    %s65 = ssub.s32 %s19, %s28
    %s66 = ssub.s32 %s18, %s32
    %s67 = sor.u32 %s65, %s66
    %p68 = scmp.eq.s32.totalorder %s67, 0
    %s70 = sadd.s32 %s69, 1
    %s71 = scalar_select %p68, %s69, %s70
    %p74 = pneg %p68
    %p75 = scmp.eq.s32.totalorder %s10, 1
    %p76 = por %p74, %p75
    %p77 = scmp.ne.s32.totalorder %s69, %s72
    %p78 = scmp.eq.s32.totalorder %s10, 0
    %p79 = por %p77, %p78
    %p80 = scmp.ne.s32.totalorder %s69, %s72
    %p81 = scmp.eq.s32.totalorder %s15, 1
    %p82 = por %p80, %p81
    %p83 = scmp.ne.s32.totalorder %s72, %s73
    %p84 = scmp.eq.s32.totalorder %s15, 0
    %p85 = por %p83, %p84
    %p86 = scmp.ne.s32.totalorder %s72, %s73
    %p87 = scmp.eq.s32.totalorder %s16, 1
    %p88 = por %p86, %p87
    %p90 = scmp.ne.s32.totalorder %s73, %s89
    %p91 = scmp.eq.s32.totalorder %s16, 0
    %p92 = por %p90, %p91
    %s93 = ssub.s32 %s18, %s32
    %p94 = scmp.eq.s32.totalorder %s93, 0
    %s96 = sadd.s32 %s95, 1
    %s97 = scalar_select %p94, %s95, %s96
    %p100 = pneg %p94
    %p101 = scmp.eq.s32.totalorder %s10, 1
    %p102 = por %p100, %p101
    %p103 = scmp.ne.s32.totalorder %s95, %s98
    %p104 = scmp.eq.s32.totalorder %s10, 0
    %p105 = por %p103, %p104
    %p106 = scmp.ne.s32.totalorder %s95, %s98
    %p107 = scmp.eq.s32.totalorder %s15, 1
    %p108 = por %p106, %p107
    %p109 = scmp.ne.s32.totalorder %s98, %s99
    %p110 = scmp.eq.s32.totalorder %s15, 0
    %p111 = por %p109, %p110
    %p112 = scmp.ne.s32.totalorder %s98, %s99
    %p113 = scmp.eq.s32.totalorder %s16, 1
    %p114 = por %p112, %p113
    %p116 = scmp.ne.s32.totalorder %s99, %s115
    %p117 = scmp.eq.s32.totalorder %s16, 0
    %p118 = por %p116, %p117
    %s119 = ssub.s32 %s17, %s36
    %s120 = ssub.s32 %s18, %s32
    %s121 = sor.u32 %s119, %s120
    %p122 = scmp.eq.s32.totalorder %s121, 0
    %s124 = sadd.s32 %s123, 1
    %s125 = scalar_select %p122, %s123, %s124
    %p128 = pneg %p122
    %p129 = scmp.eq.s32.totalorder %s10, 1
    %p130 = por %p128, %p129
    %p131 = scmp.ne.s32.totalorder %s123, %s126
    %p132 = scmp.eq.s32.totalorder %s10, 0
    %p133 = por %p131, %p132
    %p134 = scmp.ne.s32.totalorder %s123, %s126
    %p135 = scmp.eq.s32.totalorder %s15, 1
    %p136 = por %p134, %p135
    %p137 = scmp.ne.s32.totalorder %s126, %s127
    %p138 = scmp.eq.s32.totalorder %s15, 0
    %p139 = por %p137, %p138
    %p140 = scmp.ne.s32.totalorder %s126, %s127
    %p141 = scmp.eq.s32.totalorder %s16, 1
    %p142 = por %p140, %p141
    %p144 = scmp.ne.s32.totalorder %s127, %s143
    %p145 = scmp.eq.s32.totalorder %s16, 0
    %p146 = por %p144, %p145
    %s147 = ssub.s32 %s17, %s36
    %s148 = ssub.s32 %s18, %s32
    %s149 = sor.u32 %s147, %s148
    %p150 = scmp.eq.s32.totalorder %s149, 0
    %s152 = sadd.s32 %s151, 1
    %s153 = scalar_select %p150, %s151, %s152
    %p156 = pneg %p150
    %p157 = scmp.eq.s32.totalorder %s10, 1
    %p158 = por %p156, %p157
    %p159 = scmp.ne.s32.totalorder %s151, %s154
    %p160 = scmp.eq.s32.totalorder %s10, 0
    %p161 = por %p159, %p160
    %p162 = scmp.ne.s32.totalorder %s151, %s154
    %p163 = scmp.eq.s32.totalorder %s15, 1
    %p164 = por %p162, %p163
    %p165 = scmp.ne.s32.totalorder %s154, %s155
    %p166 = scmp.eq.s32.totalorder %s15, 0
    %p167 = por %p165, %p166
    %p168 = scmp.ne.s32.totalorder %s154, %s155
    %p169 = scmp.eq.s32.totalorder %s16, 1
    %p170 = por %p168, %p169
    %p172 = scmp.ne.s32.totalorder %s155, %s171
    %p173 = scmp.eq.s32.totalorder %s16, 0
    %p174 = por %p172, %p173
    %p175 = scmp.le.s32.totalorder 1, %s10
    %p176 = scmp.lt.s32.totalorder %s10, 3
    %p177 = pnand %p175, %p176
    %p178 = pneg %p177
    // Predicated region
    $region9: #{transformer_block_forward.7} parent=5 // pred_check
      _
    $region10: #{transformer_block_forward.7} parent=5 // pred_check_branch
      %180 = sbr.rel (%p177) target = $region12
    $region11: #{transformer_block_forward.7} parent=5 // pred_region
      %s181 = ssub.s32 %s10, 1
      // Predicated region
      $region13: #{transformer_block_forward.7} parent=11 // pred_check
        %p182 = pneg %p85
      $region14: #{transformer_block_forward.7} parent=11 // pred_check_branch
        %184 = sbr.rel (%p182) target = $region16
      $region15: #{transformer_block_forward.7} parent=11 // pred_region
        %s185 = smul.u32 16, %s22
        %p186 = scmp.lt.s32.totalorder %s185, 15
        %s187 = scalar_select %p186, %s185, 15
        %p188 = scmp.lt.s32.totalorder %s21, 0
        %s189 = scalar_select %p188, %s21, 0
        %s190 = sadd.s32 %s189, %s187
        %s191 = smul.addr %s190, 4
        %s192 = scalar_lea.vmem %s1, %s191
        %s193 = smul.u32 16, %s22
      $region16: #{transformer_block_forward.7} parent=11 // pred_fallthru
        _
      // Predicated region
      $region17: #{transformer_block_forward.7} parent=11 // pred_check
        %p194 = pneg %p111
      $region18: #{transformer_block_forward.7} parent=11 // pred_check_branch
        %196 = sbr.rel (%p194) target = $region20
      $region19: #{transformer_block_forward.7} parent=11 // pred_region
        %p197 = scmp.lt.s32.totalorder %s21, 0
        %s198 = scalar_select %p197, %s21, 0
        %s199 = scalar_lea.vmem %s2, %s198
      $region20: #{transformer_block_forward.7} parent=11 // pred_fallthru
        _
    $region12: #{transformer_block_forward.7} parent=5 // pred_fallthru
      _
    %p200 = scmp.lt.s32.totalorder %s10, 2
    // Predicated region
    $region21: #{transformer_block_forward.7} parent=5 // pred_check
      %p201 = pneg %p200
    $region22: #{transformer_block_forward.7} parent=5 // pred_check_branch
      %203 = sbr.rel (%p201) target = $region24
    $region23: #{transformer_block_forward.7} parent=5 // pred_region
      // Predicated region
      $region25: #{transformer_block_forward.7} parent=23 // pred_check
        %p204 = pneg %p51
      $region26: #{transformer_block_forward.7} parent=23 // pred_check_branch
        %206 = sbr.rel (%p204) target = $region28
      $region27: #{transformer_block_forward.7} parent=23 // pred_region
        %s207 = smul.u32 16, %s17
        %p208 = scmp.lt.s32.totalorder %s207, 31
        %s209 = scalar_select %p208, %s207, 31
        %p210 = scmp.lt.s32.totalorder %s19, 0
        %s211 = scalar_select %p210, %s19, 0
        %s212 = sadd.s32 %s211, %s209
        %s213 = smul.addr %s212, 4
        %s214 = scalar_lea.vmem %s0, %s213
        %s215 = smul.u32 16, %s17
      $region28: #{transformer_block_forward.7} parent=23 // pred_fallthru
        _
      // Predicated region
      $region29: #{transformer_block_forward.7} parent=23 // pred_check
        %p216 = pneg %p133
      $region30: #{transformer_block_forward.7} parent=23 // pred_check_branch
        %218 = sbr.rel (%p216) target = $region32
      $region31: #{transformer_block_forward.7} parent=23 // pred_region
        %s219 = smul.u32 16, %s17
        %p220 = scmp.lt.s32.totalorder %s219, 31
        %s221 = scalar_select %p220, %s219, 31
        %p222 = scmp.lt.s32.totalorder %s18, 0
        %s223 = scalar_select %p222, %s18, 0
        %s224 = sadd.s32 %s223, %s221
        %s225 = smul.addr %s224, 8
        %s226 = scalar_lea.vmem %s3, %s225
        %s227 = smul.u32 16, %s17
      $region32: #{transformer_block_forward.7} parent=23 // pred_fallthru
        _
    $region24: #{transformer_block_forward.7} parent=5 // pred_fallthru
      _
    %p228 = scmp.le.s32.totalorder 1, %s10
    %p229 = scmp.lt.s32.totalorder %s10, 3
    %p230 = pnand %p228, %p229
    %p231 = pneg %p230
    // Predicated region
    $region33: #{transformer_block_forward.7} parent=5 // pred_check
      _
    $region34: #{transformer_block_forward.7} parent=5 // pred_check_branch
      %233 = sbr.rel (%p230) target = $region36
    $region35: #{transformer_block_forward.7} parent=5 // pred_region
      %s234 = ssub.s32 %s10, 1
      %s235 = smul.u32 16, %s20
      %p236 = scmp.lt.s32.totalorder %s235, 31
      %s237 = scalar_select %p236, %s235, 31
      %p238 = scmp.lt.s32.totalorder %s22, 0
      %s239 = scalar_select %p238, %s22, 0
      %s240 = sadd.s32 %s239, %s237
      %s241 = smul.addr %s240, 4
      %s242 = scalar_lea.vmem %s0, %s241
      %p243 = pneg %p57
      %p244 = pneg %p54
      %s245 = smul.u32 16, %s22
      %p246 = scmp.lt.s32.totalorder %s245, 15
      %s247 = scalar_select %p246, %s245, 15
      %p248 = scmp.lt.s32.totalorder %s21, 0
      %s249 = scalar_select %p248, %s21, 0
      %s250 = sadd.s32 %s249, %s247
      %s251 = smul.addr %s250, 4
      %s252 = scalar_lea.vmem %s1, %s251
      %p253 = pneg %p85
      %p254 = pneg %p82
      %p255 = scmp.lt.s32.totalorder %s21, 0
      %s256 = scalar_select %p255, %s21, 0
      %s257 = scalar_lea.vmem %s2, %s256
      %p258 = pneg %p111
      %p259 = pneg %p108
      %s260 = smul.u32 16, %s20
      %p261 = scmp.lt.s32.totalorder %s260, 31
      %s262 = scalar_select %p261, %s260, 31
      %p263 = scmp.lt.s32.totalorder %s21, 0
      %s264 = scalar_select %p263, %s21, 0
      %s265 = sadd.s32 %s264, %s262
      %s266 = smul.addr %s265, 8
      %s267 = scalar_lea.vmem %s3, %s266
      %p268 = pneg %p139
      %p269 = pneg %p136
      %p270 = pneg %p167
      %p271 = pneg %p164
      %s272 = smul.u32 16, %s20
      %p273 = scmp.lt.s32.totalorder %s272, 31
      %s274 = scalar_select %p273, %s272, 31
      %p275 = scmp.lt.s32.totalorder %s21, 0
      %s276 = scalar_select %p275, %s21, 0
      %s277 = sadd.s32 %s276, %s274
      %s278 = smul.addr %s277, 8
      %s279 = scalar_lea.vmem %s4, %s278
      %s280 = smul.u32 16, %s20
      %p281 = scmp.lt.s32.totalorder %s280, 31
      %s282 = scalar_select %p281, %s280, 31
      %p283 = scmp.lt.s32.totalorder %s22, 0
      %s284 = scalar_select %p283, %s22, 0
      %s285 = sadd.s32 %s284, %s282
      %s286 = smul.addr %s285, 4
      %s287 = scalar_lea.vmem %s0, %s286
      %s288 = smul.u32 16, %s20
      %s289 = smul.u32 16, %s22
      %p290 = scmp.lt.s32.totalorder %s289, 15
      %s291 = scalar_select %p290, %s289, 15
      %p292 = scmp.lt.s32.totalorder %s21, 0
      %s293 = scalar_select %p292, %s21, 0
      %s294 = sadd.s32 %s293, %s291
      %s295 = smul.addr %s294, 4
      %s296 = scalar_lea.vmem %s1, %s295
      %s297 = smul.u32 16, %s22
      %p298 = scmp.lt.s32.totalorder %s21, 0
      %s299 = scalar_select %p298, %s21, 0
      %s300 = scalar_lea.vmem %s2, %s299
      %s301 = smul.u32 16, %s20
      %p302 = scmp.lt.s32.totalorder %s301, 31
      %s303 = scalar_select %p302, %s301, 31
      %p304 = scmp.lt.s32.totalorder %s21, 0
      %s305 = scalar_select %p304, %s21, 0
      %s306 = sadd.s32 %s305, %s303
      %s307 = smul.addr %s306, 8
      %s308 = scalar_lea.vmem %s3, %s307
      %s309 = smul.u32 16, %s20
      %s310 = smul.u32 16, %s20
      %p311 = scmp.lt.s32.totalorder %s310, 31
      %s312 = scalar_select %p311, %s310, 31
      %p313 = scmp.lt.s32.totalorder %s21, 0
      %s314 = scalar_select %p313, %s21, 0
      %s315 = sadd.s32 %s314, %s312
      %s316 = smul.addr %s315, 8
      %s317 = scalar_lea.vmem %s4, %s316
      %s318 = smul.u32 16, %s20
      %p320 = scmp.eq.s32.totalorder %s22, 0
      // Predicated region
      $region37: #{transformer_block_forward.7} parent=35 // pred_check
        %p321 = pneg %p320
      $region38: #{transformer_block_forward.7} parent=35 // pred_check_branch
        %323 = sbr.rel (%p321) target = $region40
      $region39: #{transformer_block_forward.7} parent=35 // pred_region
        %324 = vst [vmem:[#allocation2] sm:$0xff] 0.0
        %325 = vst [vmem:[#allocation2 + $0x8] sm:$0xff] 0.0
        %326 = vst [vmem:[#allocation2 + $0x10] sm:$0xff] 0.0
        %327 = vst [vmem:[#allocation2 + $0x18] sm:$0xff] 0.0
        %328 = vst [vmem:[#allocation2 + $0x20] sm:$0xff] 0.0
        %329 = vst [vmem:[#allocation2 + $0x28] sm:$0xff] 0.0
        %330 = vst [vmem:[#allocation2 + $0x30] sm:$0xff] 0.0
        %331 = vst [vmem:[#allocation2 + $0x38] sm:$0xff] 0.0
        %332 = vst [vmem:[#allocation2 + $0x40] sm:$0xff] 0.0
        %333 = vst [vmem:[#allocation2 + $0x48] sm:$0xff] 0.0
        %334 = vst [vmem:[#allocation2 + $0x50] sm:$0xff] 0.0
        %335 = vst [vmem:[#allocation2 + $0x58] sm:$0xff] 0.0
        %336 = vst [vmem:[#allocation2 + $0x60] sm:$0xff] 0.0
        %337 = vst [vmem:[#allocation2 + $0x68] sm:$0xff] 0.0
        %338 = vst [vmem:[#allocation2 + $0x70] sm:$0xff] 0.0
        %339 = vst [vmem:[#allocation2 + $0x78] sm:$0xff] 0.0
      $region40: #{transformer_block_forward.7} parent=35 // pred_fallthru
        _
      %v340 = vld [vmem:[#allocation2] sm:$0xff]
      %v341 = vld [vmem:[#allocation2 + $0x8] sm:$0xff]
      %v342 = vld [vmem:[#allocation2 + $0x10] sm:$0xff]
      %v343 = vld [vmem:[#allocation2 + $0x18] sm:$0xff]
      %v344 = vld [vmem:[#allocation2 + $0x20] sm:$0xff]
      %v345 = vld [vmem:[#allocation2 + $0x28] sm:$0xff]
      %v346 = vld [vmem:[#allocation2 + $0x30] sm:$0xff]
      %v347 = vld [vmem:[#allocation2 + $0x38] sm:$0xff]
      %v348 = vld [vmem:[#allocation2 + $0x40] sm:$0xff]
      %v349 = vld [vmem:[#allocation2 + $0x48] sm:$0xff]
      %v350 = vld [vmem:[#allocation2 + $0x50] sm:$0xff]
      %v351 = vld [vmem:[#allocation2 + $0x58] sm:$0xff]
      %v352 = vld [vmem:[#allocation2 + $0x60] sm:$0xff]
      %v353 = vld [vmem:[#allocation2 + $0x68] sm:$0xff]
      %v354 = vld [vmem:[#allocation2 + $0x70] sm:$0xff]
      %v355 = vld [vmem:[#allocation2 + $0x78] sm:$0xff]
      %v356 = vld [vmem:[%s287] sm:$0xf]
      %v357 = vld [vmem:[%s287 + $0x4] sm:$0xf]
      %v358 = vld [vmem:[%s287 + $0x8] sm:$0xf]
      %v359 = vld [vmem:[%s287 + $0xc] sm:$0xf]
      %v360 = vld [vmem:[%s287 + $0x10] sm:$0xf]
      %v361 = vld [vmem:[%s287 + $0x14] sm:$0xf]
      %v362 = vld [vmem:[%s287 + $0x18] sm:$0xf]
      %v363 = vld [vmem:[%s287 + $0x1c] sm:$0xf]
      %v364 = vld [vmem:[%s287 + $0x20] sm:$0xf]
      %v365 = vld [vmem:[%s287 + $0x24] sm:$0xf]
      %v366 = vld [vmem:[%s287 + $0x28] sm:$0xf]
      %v367 = vld [vmem:[%s287 + $0x2c] sm:$0xf]
      %v368 = vld [vmem:[%s287 + $0x30] sm:$0xf]
      %v369 = vld [vmem:[%s287 + $0x34] sm:$0xf]
      %v370 = vld [vmem:[%s287 + $0x38] sm:$0xf]
      %v371 = vld [vmem:[%s287 + $0x3c] sm:$0xf]
      %v372 = vld [vmem:[%s296] sm:$0xf]
      %v373 = vld [vmem:[%s296 + $0x4] sm:$0xf]
      %v374 = vld [vmem:[%s296 + $0x8] sm:$0xf]
      %v375 = vld [vmem:[%s296 + $0xc] sm:$0xf]
      %v376 = vld [vmem:[%s296 + $0x10] sm:$0xf]
      %v377 = vld [vmem:[%s296 + $0x14] sm:$0xf]
      %v378 = vld [vmem:[%s296 + $0x18] sm:$0xf]
      %v379 = vld [vmem:[%s296 + $0x1c] sm:$0xf]
      %v380 = vld [vmem:[%s296 + $0x20] sm:$0xf]
      %v381 = vld [vmem:[%s296 + $0x24] sm:$0xf]
      %v382 = vld [vmem:[%s296 + $0x28] sm:$0xf]
      %v383 = vld [vmem:[%s296 + $0x2c] sm:$0xf]
      %v384 = vld [vmem:[%s296 + $0x30] sm:$0xf]
      %v385 = vld [vmem:[%s296 + $0x34] sm:$0xf]
      %v386 = vld [vmem:[%s296 + $0x38] sm:$0xf]
      %v387 = vld [vmem:[%s296 + $0x3c] sm:$0xf]
      %v404 = vunpack.c.l.b16 %v356
      %v405 = vunpack.c.l.b16 %v357
      %v406 = vunpack.c.l.b16 %v358
      %v407 = vunpack.c.l.b16 %v359
      %v408 = vunpack.c.l.b16 %v360
      %v409 = vunpack.c.l.b16 %v361
      %v410 = vunpack.c.l.b16 %v362
      %v411 = vunpack.c.l.b16 %v363
      %v412 = vunpack.c.l.b16 %v364
      %v413 = vunpack.c.l.b16 %v365
      %v414 = vunpack.c.l.b16 %v366
      %v415 = vunpack.c.l.b16 %v367
      %v416 = vunpack.c.l.b16 %v368
      %v417 = vunpack.c.l.b16 %v369
      %v418 = vunpack.c.l.b16 %v370
      %v419 = vunpack.c.l.b16 %v371
      %v420 = vpack.c.b16 %v405, %v404
      %v421 = vpack.c.b16 %v407, %v406
      %v422 = vpack.c.b16 %v409, %v408
      %v423 = vpack.c.b16 %v411, %v410
      %v424 = vpack.c.b16 %v413, %v412
      %v425 = vpack.c.b16 %v415, %v414
      %v426 = vpack.c.b16 %v417, %v416
      %v427 = vpack.c.b16 %v419, %v418
      %v452 = vunpack.c.l.b16 %v372
      %v453 = vunpack.c.l.b16 %v373
      %v454 = vunpack.c.l.b16 %v374
      %v455 = vunpack.c.l.b16 %v375
      %v456 = vunpack.c.l.b16 %v376
      %v457 = vunpack.c.l.b16 %v377
      %v458 = vunpack.c.l.b16 %v378
      %v459 = vunpack.c.l.b16 %v379
      %v460 = vunpack.c.l.b16 %v380
      %v461 = vunpack.c.l.b16 %v381
      %v462 = vunpack.c.l.b16 %v382
      %v463 = vunpack.c.l.b16 %v383
      %v464 = vunpack.c.l.b16 %v384
      %v465 = vunpack.c.l.b16 %v385
      %v466 = vunpack.c.l.b16 %v386
      %v467 = vunpack.c.l.b16 %v387
      %v468 = vpack.c.b16 %v453, %v452
      %v469 = vpack.c.b16 %v455, %v454
      %v470 = vpack.c.b16 %v457, %v456
      %v471 = vpack.c.b16 %v459, %v458
      %v472 = vpack.c.b16 %v461, %v460
      %v473 = vpack.c.b16 %v463, %v462
      %v474 = vpack.c.b16 %v465, %v464
      %v475 = vpack.c.b16 %v467, %v466
      %484 = vmatprep.subr.bf16.mxu0 0
      %485 = vmatpush1.bf16.msra.mxu0 %v468
      %486 = vmatprep.subr.bf16.mxu0 0
      %487 = vmatpush1.bf16.msra.mxu0 %v469
      %488 = vmatprep.subr.bf16.mxu0 0
      %489 = vmatpush1.bf16.msra.mxu0 %v470
      %490 = vmatprep.subr.bf16.mxu0 0
      %491 = vmatpush1.bf16.msra.mxu0 %v471
      %492 = vmatprep.subr.bf16.mxu0 0
      %493 = vmatpush1.bf16.msra.mxu0 %v472
      %494 = vmatprep.subr.bf16.mxu0 0
      %495 = vmatpush1.bf16.msra.mxu0 %v473
      %496 = vmatprep.subr.bf16.mxu0 0
      %497 = vmatpush1.bf16.msra.mxu0 %v474
      %498 = vmatprep.subr.bf16.mxu0 0
      %499 = vmatpush1.bf16.msra.mxu0 %v475
      %500 = vmatprep.subr.bf16.mxu0 0
      %501 = vmatpush1.bf16.msra.mxu0 0
      %502 = vmatprep.subr.bf16.mxu0 0
      %503 = vmatpush1.bf16.msra.mxu0 0
      %504 = vmatprep.subr.bf16.mxu0 0
      %505 = vmatpush1.bf16.msra.mxu0 0
      %506 = vmatprep.subr.bf16.mxu0 0
      %507 = vmatpush1.bf16.msra.mxu0 0
      %508 = vmatprep.subr.bf16.mxu0 0
      %509 = vmatpush1.bf16.msra.mxu0 0
      %510 = vmatprep.subr.bf16.mxu0 0
      %511 = vmatpush1.bf16.msra.mxu0 0
      %512 = vmatprep.subr.bf16.mxu0 0
      %513 = vmatpush1.bf16.msra.mxu0 0
      %514 = vmatprep.subr.bf16.mxu0 0
      %515 = vmatpush1.bf16.msra.mxu0 0
      %516 = vmatprep.mubr.bf16.mxu0 0
      %517 = vmatmul.mubr.bf16.gmra.mrb[0].mxu0 %v420
      %v518 = vpop.f32.mrb[0].mxu0
      %v519 = vadd.f32 0.0, %v518
      %v520 = vpop.f32.mrb[0].mxu0
      %v521 = vpop.f32.mrb[0].mxu0
      %v522 = vadd.f32 0.0, %v521
      %v523 = vpop.f32.mrb[0].mxu0
      %524 = vmatprep.mubr.bf16.mxu0 0
      %525 = vmatmul.mubr.bf16.gmra.mrb[0].mxu0 %v421
      %v526 = vpop.f32.mrb[0].mxu0
      %v527 = vadd.f32 0.0, %v526
      %v528 = vpop.f32.mrb[0].mxu0
      %v529 = vpop.f32.mrb[0].mxu0
      %v530 = vadd.f32 0.0, %v529
      %v531 = vpop.f32.mrb[0].mxu0
      %532 = vmatprep.mubr.bf16.mxu0 0
      %533 = vmatmul.mubr.bf16.gmra.mrb[0].mxu0 %v422
      %v534 = vpop.f32.mrb[0].mxu0
      %v535 = vadd.f32 0.0, %v534
      %v536 = vpop.f32.mrb[0].mxu0
      %v537 = vpop.f32.mrb[0].mxu0
      %v538 = vadd.f32 0.0, %v537
      %v539 = vpop.f32.mrb[0].mxu0
      %540 = vmatprep.mubr.bf16.mxu0 0
      %541 = vmatmul.mubr.bf16.gmra.mrb[0].mxu0 %v423
      %v542 = vpop.f32.mrb[0].mxu0
      %v543 = vadd.f32 0.0, %v542
      %v544 = vpop.f32.mrb[0].mxu0
      %v545 = vpop.f32.mrb[0].mxu0
      %v546 = vadd.f32 0.0, %v545
      %v547 = vpop.f32.mrb[0].mxu0
      %548 = vmatprep.mubr.bf16.mxu0 0
      %549 = vmatmul.mubr.bf16.gmra.mrb[0].mxu0 %v424
      %v550 = vpop.f32.mrb[0].mxu0
      %v551 = vadd.f32 0.0, %v550
      %v552 = vpop.f32.mrb[0].mxu0
      %v553 = vpop.f32.mrb[0].mxu0
      %v554 = vadd.f32 0.0, %v553
      %v555 = vpop.f32.mrb[0].mxu0
      %556 = vmatprep.mubr.bf16.mxu0 0
      %557 = vmatmul.mubr.bf16.gmra.mrb[0].mxu0 %v425
      %v558 = vpop.f32.mrb[0].mxu0
      %v559 = vadd.f32 0.0, %v558
      %v560 = vpop.f32.mrb[0].mxu0
      %v561 = vpop.f32.mrb[0].mxu0
      %v562 = vadd.f32 0.0, %v561
      %v563 = vpop.f32.mrb[0].mxu0
      %564 = vmatprep.mubr.bf16.mxu0 0
      %565 = vmatmul.mubr.bf16.gmra.mrb[0].mxu0 %v426
      %v566 = vpop.f32.mrb[0].mxu0
      %v567 = vadd.f32 0.0, %v566
      %v568 = vpop.f32.mrb[0].mxu0
      %v569 = vpop.f32.mrb[0].mxu0
      %v570 = vadd.f32 0.0, %v569
      %v571 = vpop.f32.mrb[0].mxu0
      %572 = vmatprep.mubr.bf16.mxu0 0
      %573 = vmatmul.mubr.bf16.gmra.mrb[0].mxu0 %v427
      %v574 = vpop.f32.mrb[0].mxu0
      %v575 = vadd.f32 0.0, %v574
      %v576 = vpop.f32.mrb[0].mxu0
      %v577 = vpop.f32.mrb[0].mxu0
      %v578 = vadd.f32 0.0, %v577
      %v579 = vpop.f32.mrb[0].mxu0
      %580 = vdwg.mxu0
      %v581 = vadd.f32 %v340, %v519
      %v582 = vadd.f32 %v341, %v522
      %v583 = vadd.f32 %v342, %v527
      %v584 = vadd.f32 %v343, %v530
      %v585 = vadd.f32 %v344, %v535
      %v586 = vadd.f32 %v345, %v538
      %v587 = vadd.f32 %v346, %v543
      %v588 = vadd.f32 %v347, %v546
      %v589 = vadd.f32 %v348, %v551
      %v590 = vadd.f32 %v349, %v554
      %v591 = vadd.f32 %v350, %v559
      %v592 = vadd.f32 %v351, %v562
      %v593 = vadd.f32 %v352, %v567
      %v594 = vadd.f32 %v353, %v570
      %v595 = vadd.f32 %v354, %v575
      %v596 = vadd.f32 %v355, %v578
      %597 = vst [vmem:[#allocation2] sm:$0xff] %v581
      %598 = vst [vmem:[#allocation2 + $0x8] sm:$0xff] %v582
      %599 = vst [vmem:[#allocation2 + $0x10] sm:$0xff] %v583
      %600 = vst [vmem:[#allocation2 + $0x18] sm:$0xff] %v584
      %601 = vst [vmem:[#allocation2 + $0x20] sm:$0xff] %v585
      %602 = vst [vmem:[#allocation2 + $0x28] sm:$0xff] %v586
      %603 = vst [vmem:[#allocation2 + $0x30] sm:$0xff] %v587
      %604 = vst [vmem:[#allocation2 + $0x38] sm:$0xff] %v588
      %605 = vst [vmem:[#allocation2 + $0x40] sm:$0xff] %v589
      %606 = vst [vmem:[#allocation2 + $0x48] sm:$0xff] %v590
      %607 = vst [vmem:[#allocation2 + $0x50] sm:$0xff] %v591
      %608 = vst [vmem:[#allocation2 + $0x58] sm:$0xff] %v592
      %609 = vst [vmem:[#allocation2 + $0x60] sm:$0xff] %v593
      %610 = vst [vmem:[#allocation2 + $0x68] sm:$0xff] %v594
      %611 = vst [vmem:[#allocation2 + $0x70] sm:$0xff] %v595
      %612 = vst [vmem:[#allocation2 + $0x78] sm:$0xff] %v596
      // Predicated region
      $region41: #{transformer_block_forward.7} parent=35 // pred_check
        %p613 = pneg %p320
      $region42: #{transformer_block_forward.7} parent=35 // pred_check_branch
        %615 = sbr.rel (%p613) target = $region44
      $region43: #{transformer_block_forward.7} parent=35 // pred_region
        %v616 = vld [vmem:[#allocation2] sm:$0xff]
        %v617 = vld [vmem:[#allocation2 + $0x8] sm:$0xff]
        %v618 = vld [vmem:[#allocation2 + $0x10] sm:$0xff]
        %v619 = vld [vmem:[#allocation2 + $0x18] sm:$0xff]
        %v620 = vld [vmem:[#allocation2 + $0x20] sm:$0xff]
        %v621 = vld [vmem:[#allocation2 + $0x28] sm:$0xff]
        %v622 = vld [vmem:[#allocation2 + $0x30] sm:$0xff]
        %v623 = vld [vmem:[#allocation2 + $0x38] sm:$0xff]
        %v624 = vld [vmem:[#allocation2 + $0x40] sm:$0xff]
        %v625 = vld [vmem:[#allocation2 + $0x48] sm:$0xff]
        %v626 = vld [vmem:[#allocation2 + $0x50] sm:$0xff]
        %v627 = vld [vmem:[#allocation2 + $0x58] sm:$0xff]
        %v628 = vld [vmem:[#allocation2 + $0x60] sm:$0xff]
        %v629 = vld [vmem:[#allocation2 + $0x68] sm:$0xff]
        %v630 = vld [vmem:[#allocation2 + $0x70] sm:$0xff]
        %v631 = vld [vmem:[#allocation2 + $0x78] sm:$0xff]
        %v632 = vld [vmem:[%s300] sm:$0x1]
        %v634 = vlaneseq
        %v635 = vshrl.u32 %v634, 7
        %v636 = vsub.s32 0, %v635
        %v637 = vrot.slane %v632, %v636
        %v639 = vadd.f32 %v616, %v637
        %v640 = vadd.f32 %v617, %v637
        %v641 = vadd.f32 %v618, %v637
        %v642 = vadd.f32 %v619, %v637
        %v643 = vadd.f32 %v620, %v637
        %v644 = vadd.f32 %v621, %v637
        %v645 = vadd.f32 %v622, %v637
        %v646 = vadd.f32 %v623, %v637
        %v647 = vadd.f32 %v624, %v637
        %v648 = vadd.f32 %v625, %v637
        %v649 = vadd.f32 %v626, %v637
        %v650 = vadd.f32 %v627, %v637
        %v651 = vadd.f32 %v628, %v637
        %v652 = vadd.f32 %v629, %v637
        %v653 = vadd.f32 %v630, %v637
        %v654 = vadd.f32 %v631, %v637
        %v655 = vld [vmem:[%s308] sm:$0xff]
        %v656 = vld [vmem:[%s308 + $0x8] sm:$0xff]
        %v657 = vld [vmem:[%s308 + $0x10] sm:$0xff]
        %v658 = vld [vmem:[%s308 + $0x18] sm:$0xff]
        %v659 = vld [vmem:[%s308 + $0x20] sm:$0xff]
        %v660 = vld [vmem:[%s308 + $0x28] sm:$0xff]
        %v661 = vld [vmem:[%s308 + $0x30] sm:$0xff]
        %v662 = vld [vmem:[%s308 + $0x38] sm:$0xff]
        %v663 = vld [vmem:[%s308 + $0x40] sm:$0xff]
        %v664 = vld [vmem:[%s308 + $0x48] sm:$0xff]
        %v665 = vld [vmem:[%s308 + $0x50] sm:$0xff]
        %v666 = vld [vmem:[%s308 + $0x58] sm:$0xff]
        %v667 = vld [vmem:[%s308 + $0x60] sm:$0xff]
        %v668 = vld [vmem:[%s308 + $0x68] sm:$0xff]
        %v669 = vld [vmem:[%s308 + $0x70] sm:$0xff]
        %v670 = vld [vmem:[%s308 + $0x78] sm:$0xff]
        %v671 = vadd.f32 %v639, %v655
        %v672 = vadd.f32 %v640, %v656
        %v673 = vadd.f32 %v641, %v657
        %v674 = vadd.f32 %v642, %v658
        %v675 = vadd.f32 %v643, %v659
        %v676 = vadd.f32 %v644, %v660
        %v677 = vadd.f32 %v645, %v661
        %v678 = vadd.f32 %v646, %v662
        %v679 = vadd.f32 %v647, %v663
        %v680 = vadd.f32 %v648, %v664
        %v681 = vadd.f32 %v649, %v665
        %v682 = vadd.f32 %v650, %v666
        %v683 = vadd.f32 %v651, %v667
        %v684 = vadd.f32 %v652, %v668
        %v685 = vadd.f32 %v653, %v669
        %v686 = vadd.f32 %v654, %v670
        %687 = vst [vmem:[%s317] sm:$0xff] %v671
        %688 = vst [vmem:[%s317 + $0x8] sm:$0xff] %v672
        %689 = vst [vmem:[%s317 + $0x10] sm:$0xff] %v673
        %690 = vst [vmem:[%s317 + $0x18] sm:$0xff] %v674
        %691 = vst [vmem:[%s317 + $0x20] sm:$0xff] %v675
        %692 = vst [vmem:[%s317 + $0x28] sm:$0xff] %v676
        %693 = vst [vmem:[%s317 + $0x30] sm:$0xff] %v677
        %694 = vst [vmem:[%s317 + $0x38] sm:$0xff] %v678
        %695 = vst [vmem:[%s317 + $0x40] sm:$0xff] %v679
        %696 = vst [vmem:[%s317 + $0x48] sm:$0xff] %v680
        %697 = vst [vmem:[%s317 + $0x50] sm:$0xff] %v681
        %698 = vst [vmem:[%s317 + $0x58] sm:$0xff] %v682
        %699 = vst [vmem:[%s317 + $0x60] sm:$0xff] %v683
        %700 = vst [vmem:[%s317 + $0x68] sm:$0xff] %v684
        %701 = vst [vmem:[%s317 + $0x70] sm:$0xff] %v685
        %702 = vst [vmem:[%s317 + $0x78] sm:$0xff] %v686
      $region44: #{transformer_block_forward.7} parent=35 // pred_fallthru
        _
      %s703 = smul.u32 16, %s20
      %p704 = scmp.lt.s32.totalorder %s703, 31
      %s705 = scalar_select %p704, %s703, 31
      %p706 = scmp.lt.s32.totalorder %s21, 0
      %s707 = scalar_select %p706, %s21, 0
      %s708 = sadd.s32 %s707, %s705
      %s709 = smul.addr %s708, 8
      %s710 = scalar_lea.vmem %s4, %s709
      // Predicated region
      $region45: #{transformer_block_forward.7} parent=35 // pred_check
        %p711 = pneg %p164
      $region46: #{transformer_block_forward.7} parent=35 // pred_check_branch
        %713 = sbr.rel (%p711) target = $region48
      $region47: #{transformer_block_forward.7} parent=35 // pred_region
        %s714 = smul.u32 16, %s20
      $region48: #{transformer_block_forward.7} parent=35 // pred_fallthru
        _
    $region36: #{transformer_block_forward.7} parent=5 // pred_fallthru
      _
    %p715 = scmp.le.s32.totalorder 2, %s10
    // Predicated region
    $region49: #{transformer_block_forward.7} parent=5 // pred_check
      %p716 = pneg %p715
    $region50: #{transformer_block_forward.7} parent=5 // pred_check_branch
      %718 = sbr.rel (%p716) target = $region52
    $region51: #{transformer_block_forward.7} parent=5 // pred_region
      %s719 = ssub.s32 %s10, 2
      // Predicated region
      $region53: #{transformer_block_forward.7} parent=51 // pred_check
        %p720 = pneg %p170
      $region54: #{transformer_block_forward.7} parent=51 // pred_check_branch
        %722 = sbr.rel (%p720) target = $region56
      $region55: #{transformer_block_forward.7} parent=51 // pred_region
        %s723 = smul.u32 16, %s23
        %p724 = scmp.lt.s32.totalorder %s723, 31
        %s725 = scalar_select %p724, %s723, 31
        %p726 = scmp.lt.s32.totalorder %s24, 0
        %s727 = scalar_select %p726, %s24, 0
        %s728 = sadd.s32 %s727, %s725
        %s729 = smul.addr %s728, 8
        %s730 = scalar_lea.vmem %s4, %s729
      $region56: #{transformer_block_forward.7} parent=51 // pred_fallthru
        _
    $region52: #{transformer_block_forward.7} parent=5 // pred_fallthru
      _
  $region6: #{transformer_block_forward.7} parent=0 // loop_footer
    %s14 = sadd.s32 1, %s10
  $region7: #{transformer_block_forward.7} parent=0 // loop_footer_branch
    %9 = sbr.rel target = $region3
  $region8: #{transformer_block_forward.7} parent=0 // loop_exit
    _

// kernel: transformer_block_forward.5
$region0: #{transformer_block_forward.5}
  #allocation0 [shape = 'u32[]', space=smem, size = 0x4, offset = 0x4, fixed_abs, tag = 'smem constant byte address 0x4 - core index']
  #allocation1 [shape = 'u32[144,128]{1,0:T(1,128)}', space=vmem, size = 0x12000, scoped, tag = 'internal scratch']
  %s0 = inlined_call_operand.hbm [shape: f32[256,128], index: 0, kind: input, shape index: {}]
  %s1 = inlined_call_operand.vmem [shape: f32[1,128], index: 1, kind: input, shape index: {}]
  %s2 = inlined_call_operand.vmem [shape: f32[1,128], index: 2, kind: input, shape index: {}]
  %s3 = inlined_call_operand.hbm [shape: bf16[128,384], index: 3, kind: input, shape index: {}]
  %s4 = inlined_call_operand.vmem [shape: f32[1,384], index: 4, kind: input, shape index: {}]
  %s5 = inlined_call_operand.vmem [shape: bf16[256,384], index: 5, kind: output, shape index: {}]
  %s6 = sld [smem:[#allocation0]]
  $region61: #{transformer_block_forward.5} parent=0
    _
  %s8 = ssub.s32 1, %s6
  %s9 = scalar_select 0, %s8, %s6
  $region1: #{transformer_block_forward.5} parent=0
    #allocation2 [shape = 'u8[131072]{0}', space=vmem, size = 0x20000, scoped, tag = 'input window, operand 0']
    #allocation3 [shape = 's32[2]{0}', space=sflag, size = 0x8, scoped, tag = 'scoped memory for transformer_block_forward.5']
    #allocation4 [shape = 'u8[98304]{0}', space=vmem, size = 0x18000, scoped, tag = 'input window, operand 3, single buffered']
    #allocation5 [shape = 's32[1]{0}', space=sflag, size = 0x4, scoped, tag = 'scoped memory for transformer_block_forward.5']
    %10 = vsyncpa [#allocation3], 0
    %s11 = scalar_lea.sflag [#allocation3], 1
    %12 = vsyncpa %s11, 0
    %13 = vsyncpa [#allocation5], 0
    loop: start=0, step=1, limit=4
    $region2: #{transformer_block_forward.5} parent=1 // loop_pre_header
      _
    $region3: #{transformer_block_forward.5} parent=1 // loop_header
      %s15 = sphi 0, %s19
      %p16 = scmp.ge.s32.totalorder %s15, 4
      %s22 = sphi 0, %s34
      %s23 = sphi 0, %s30
      %s24 = sphi 0, %s22
      %s25 = sphi 0, %s23
      %s26 = sphi 0, %s24
      %s27 = sphi 0, %s25
      %s37 = sphi 0, %s39
      %s40 = sphi 0, %s37
      %s41 = sphi 0, %s40
      %s57 = sphi 0, %s41
      %s61 = sphi 0, %s61
      %s63 = sphi 0, %s61
      %s64 = sphi 0, %s63
      %s78 = sphi 0, %s64
      %s82 = sphi 0, %s82
      %s84 = sphi 0, %s82
      %s85 = sphi 0, %s84
      %s99 = sphi 0, %s85
      %s105 = sphi 0, %s107
      %s108 = sphi 0, %s105
      %s109 = sphi 0, %s108
      %s125 = sphi 0, %s109
      %s131 = sphi 0, %s133
      %s134 = sphi 0, %s131
      %s135 = sphi 0, %s134
      %s151 = sphi 0, %s135
      %s159 = sphi 0, %s161
      %s162 = sphi 0, %s159
      %s163 = sphi 0, %s162
      %s179 = sphi 0, %s163
    $region4: #{transformer_block_forward.5} parent=1 // loop_header_branch
      %18 = sbr.rel (%p16) target = $region8
    $region5: #{transformer_block_forward.5} parent=1 // loop_body
      %s20 = ssub.s32 %s15, 1
      %s21 = ssub.s32 %s15, 2
      %s28 = sadd.s32 1, %s23
      %p29 = scmp.ge.s32.totalorder %s28, 1
      %s30 = scalar_select %p29, 0, %s28
      %s31 = sadd.s32 1, %s22
      %s32 = scalar_select %p29, %s31, %s22
      %p33 = scmp.ge.s32.totalorder %s32, 2
      %s34 = scalar_select %p33, 0, %s32
      %s35 = ssub.s32 %s22, %s34
      %p36 = scmp.eq.s32.totalorder %s35, 0
      %s38 = sadd.s32 %s37, 1
      %s39 = scalar_select %p36, %s37, %s38
      %p42 = pneg %p36
      %p43 = scmp.eq.s32.totalorder %s15, 1
      %p44 = por %p42, %p43
      %p45 = scmp.ne.s32.totalorder %s37, %s40
      %p46 = scmp.eq.s32.totalorder %s15, 0
      %p47 = por %p45, %p46
      %p48 = scmp.ne.s32.totalorder %s37, %s40
      %p49 = scmp.eq.s32.totalorder %s20, 1
      %p50 = por %p48, %p49
      %p51 = scmp.ne.s32.totalorder %s40, %s41
      %p52 = scmp.eq.s32.totalorder %s20, 0
      %p53 = por %p51, %p52
      %p54 = scmp.ne.s32.totalorder %s40, %s41
      %p55 = scmp.eq.s32.totalorder %s21, 1
      %p56 = por %p54, %p55
      %p58 = scmp.ne.s32.totalorder %s41, %s57
      %p59 = scmp.eq.s32.totalorder %s21, 0
      %p60 = por %p58, %p59
      %s62 = sadd.s32 %s61, 1
      %p65 = scmp.eq.s32.totalorder %s15, 1
      %p66 = scmp.ne.s32.totalorder %s61, %s63
      %p67 = scmp.eq.s32.totalorder %s15, 0
      %p68 = por %p66, %p67
      %p69 = scmp.ne.s32.totalorder %s61, %s63
      %p70 = scmp.eq.s32.totalorder %s20, 1
      %p71 = por %p69, %p70
      %p72 = scmp.ne.s32.totalorder %s63, %s64
      %p73 = scmp.eq.s32.totalorder %s20, 0
      %p74 = por %p72, %p73
      %p75 = scmp.ne.s32.totalorder %s63, %s64
      %p76 = scmp.eq.s32.totalorder %s21, 1
      %p77 = por %p75, %p76
      %p79 = scmp.ne.s32.totalorder %s64, %s78
      %p80 = scmp.eq.s32.totalorder %s21, 0
      %p81 = por %p79, %p80
      %s83 = sadd.s32 %s82, 1
      %p86 = scmp.eq.s32.totalorder %s15, 1
      %p87 = scmp.ne.s32.totalorder %s82, %s84
      %p88 = scmp.eq.s32.totalorder %s15, 0
      %p89 = por %p87, %p88
      %p90 = scmp.ne.s32.totalorder %s82, %s84
      %p91 = scmp.eq.s32.totalorder %s20, 1
      %p92 = por %p90, %p91
      %p93 = scmp.ne.s32.totalorder %s84, %s85
      %p94 = scmp.eq.s32.totalorder %s20, 0
      %p95 = por %p93, %p94
      %p96 = scmp.ne.s32.totalorder %s84, %s85
      %p97 = scmp.eq.s32.totalorder %s21, 1
      %p98 = por %p96, %p97
      %p100 = scmp.ne.s32.totalorder %s85, %s99
      %p101 = scmp.eq.s32.totalorder %s21, 0
      %p102 = por %p100, %p101
      %s103 = ssub.s32 %s23, %s30
      %p104 = scmp.eq.s32.totalorder %s103, 0
      %s106 = sadd.s32 %s105, 1
      %s107 = scalar_select %p104, %s105, %s106
      %p110 = pneg %p104
      %p111 = scmp.eq.s32.totalorder %s15, 1
      %p112 = por %p110, %p111
      %p113 = scmp.ne.s32.totalorder %s105, %s108
      %p114 = scmp.eq.s32.totalorder %s15, 0
      %p115 = por %p113, %p114
      %p116 = scmp.ne.s32.totalorder %s105, %s108
      %p117 = scmp.eq.s32.totalorder %s20, 1
      %p118 = por %p116, %p117
      %p119 = scmp.ne.s32.totalorder %s108, %s109
      %p120 = scmp.eq.s32.totalorder %s20, 0
      %p121 = por %p119, %p120
      %p122 = scmp.ne.s32.totalorder %s108, %s109
      %p123 = scmp.eq.s32.totalorder %s21, 1
      %p124 = por %p122, %p123
      %p126 = scmp.ne.s32.totalorder %s109, %s125
      %p127 = scmp.eq.s32.totalorder %s21, 0
      %p128 = por %p126, %p127
      %s129 = ssub.s32 %s23, %s30
      %p130 = scmp.eq.s32.totalorder %s129, 0
      %s132 = sadd.s32 %s131, 1
      %s133 = scalar_select %p130, %s131, %s132
      %p136 = pneg %p130
      %p137 = scmp.eq.s32.totalorder %s15, 1
      %p138 = por %p136, %p137
      %p139 = scmp.ne.s32.totalorder %s131, %s134
      %p140 = scmp.eq.s32.totalorder %s15, 0
      %p141 = por %p139, %p140
      %p142 = scmp.ne.s32.totalorder %s131, %s134
      %p143 = scmp.eq.s32.totalorder %s20, 1
      %p144 = por %p142, %p143
      %p145 = scmp.ne.s32.totalorder %s134, %s135
      %p146 = scmp.eq.s32.totalorder %s20, 0
      %p147 = por %p145, %p146
      %p148 = scmp.ne.s32.totalorder %s134, %s135
      %p149 = scmp.eq.s32.totalorder %s21, 1
      %p150 = por %p148, %p149
      %p152 = scmp.ne.s32.totalorder %s135, %s151
      %p153 = scmp.eq.s32.totalorder %s21, 0
      %p154 = por %p152, %p153
      %s155 = ssub.s32 %s22, %s34
      %s156 = ssub.s32 %s23, %s30
      %s157 = sor.u32 %s155, %s156
      %p158 = scmp.eq.s32.totalorder %s157, 0
      %s160 = sadd.s32 %s159, 1
      %s161 = scalar_select %p158, %s159, %s160
      %p164 = pneg %p158
      %p165 = scmp.eq.s32.totalorder %s15, 1
      %p166 = por %p164, %p165
      %p167 = scmp.ne.s32.totalorder %s159, %s162
      %p168 = scmp.eq.s32.totalorder %s15, 0
      %p169 = por %p167, %p168
      %p170 = scmp.ne.s32.totalorder %s159, %s162
      %p171 = scmp.eq.s32.totalorder %s20, 1
      %p172 = por %p170, %p171
      %p173 = scmp.ne.s32.totalorder %s162, %s163
      %p174 = scmp.eq.s32.totalorder %s20, 0
      %p175 = por %p173, %p174
      %p176 = scmp.ne.s32.totalorder %s162, %s163
      %p177 = scmp.eq.s32.totalorder %s21, 1
      %p178 = por %p176, %p177
      %p180 = scmp.ne.s32.totalorder %s163, %s179
      %p181 = scmp.eq.s32.totalorder %s21, 0
      %p182 = por %p180, %p181
      %p183 = scmp.le.s32.totalorder 1, %s15
      %p184 = scmp.lt.s32.totalorder %s15, 3
      %p185 = pnand %p183, %p184
      %p186 = pneg %p185
      // Predicated region
      $region9: #{transformer_block_forward.5} parent=5 // pred_check
        _
      $region10: #{transformer_block_forward.5} parent=5 // pred_check_branch
        %188 = sbr.rel (%p185) target = $region12
      $region11: #{transformer_block_forward.5} parent=5 // pred_region
        %s189 = ssub.s32 %s15, 1
        // Predicated region
        $region13: #{transformer_block_forward.5} parent=11 // pred_check
          %p190 = pneg %p74
        $region14: #{transformer_block_forward.5} parent=11 // pred_check_branch
          %192 = sbr.rel (%p190) target = $region16
        $region15: #{transformer_block_forward.5} parent=11 // pred_region
          _
        $region16: #{transformer_block_forward.5} parent=11 // pred_fallthru
          _
        // Predicated region
        $region17: #{transformer_block_forward.5} parent=11 // pred_check
          %p193 = pneg %p95
        $region18: #{transformer_block_forward.5} parent=11 // pred_check_branch
          %195 = sbr.rel (%p193) target = $region20
        $region19: #{transformer_block_forward.5} parent=11 // pred_region
          _
        $region20: #{transformer_block_forward.5} parent=11 // pred_fallthru
          _
        // Predicated region
        $region21: #{transformer_block_forward.5} parent=11 // pred_check
          %p196 = pneg %p121
        $region22: #{transformer_block_forward.5} parent=11 // pred_check_branch
          %198 = sbr.rel (%p196) target = $region24
        $region23: #{transformer_block_forward.5} parent=11 // pred_region
          %s199 = smul.u32 3, %s25
          %s201 = ssub.s32 3072, 3072
          %202 = vsyncadd [#allocation5], %s201
          %s203 = smul.addr %s199, 64
          %s204 = scalar_lea.hbm %s3, %s203
          %s205 = sshll.u32 [#allocation4], 4
          %s206 = int_to_ptr.vmem [resolvable:$true] %s205
          %211 = dma.hbm_to_vmem [thread:$0]  %s204, 3072, %s206, [#allocation5], 192, 192, 12
        $region24: #{transformer_block_forward.5} parent=11 // pred_fallthru
          _
        // Predicated region
        $region25: #{transformer_block_forward.5} parent=11 // pred_check
          %p212 = pneg %p147
        $region26: #{transformer_block_forward.5} parent=11 // pred_check_branch
          %214 = sbr.rel (%p212) target = $region28
        $region27: #{transformer_block_forward.5} parent=11 // pred_region
          %s215 = smul.u32 3, %s25
          %p216 = scmp.lt.s32.totalorder %s215, 2
          %s217 = scalar_select %p216, %s215, 2
          %s218 = scalar_lea.vmem %s4, %s217
          %s219 = smul.u32 3, %s25
        $region28: #{transformer_block_forward.5} parent=11 // pred_fallthru
          _
      $region12: #{transformer_block_forward.5} parent=5 // pred_fallthru
        _
      %p220 = scmp.lt.s32.totalorder %s15, 2
      // Predicated region
      $region29: #{transformer_block_forward.5} parent=5 // pred_check
        %p221 = pneg %p220
      $region30: #{transformer_block_forward.5} parent=5 // pred_check_branch
        %223 = sbr.rel (%p221) target = $region32
      $region31: #{transformer_block_forward.5} parent=5 // pred_region
        // Predicated region
        $region33: #{transformer_block_forward.5} parent=31 // pred_check
          %p224 = pneg %p47
        $region34: #{transformer_block_forward.5} parent=31 // pred_check_branch
          %226 = sbr.rel (%p224) target = $region36
        $region35: #{transformer_block_forward.5} parent=31 // pred_region
          %s227 = sand.u32 %s37, 1
          %s228 = scalar_lea.sflag [#allocation3], %s227
          %s229 = sand.u32 %s37, 1
          %s230 = smul.addr %s229, 128
          %s231 = scalar_lea.vmem [#allocation2], %s230
          %s232 = smul.u32 16, %s22
          %s234 = ssub.s32 2048, 2048
          %235 = vsyncadd %s228, %s234
          %s236 = smul.addr %s232, 128
          %s237 = scalar_lea.hbm %s0, %s236
          %s238 = sshll.u32 %s231, 4
          %s239 = int_to_ptr.vmem [resolvable:$true] %s238
          %244 = dma.hbm_to_vmem [thread:$0]  %s237, 2048, %s239, %s228, 128, 128, 8
        $region36: #{transformer_block_forward.5} parent=31 // pred_fallthru
          _
      $region32: #{transformer_block_forward.5} parent=5 // pred_fallthru
        _
      %p245 = scmp.le.s32.totalorder 1, %s15
      %p246 = scmp.lt.s32.totalorder %s15, 3
      %p247 = pnand %p245, %p246
      %p248 = pneg %p247
      // Predicated region
      $region37: #{transformer_block_forward.5} parent=5 // pred_check
        _
      $region38: #{transformer_block_forward.5} parent=5 // pred_check_branch
        %250 = sbr.rel (%p247) target = $region40
      $region39: #{transformer_block_forward.5} parent=5 // pred_region
        %s251 = ssub.s32 %s15, 1
        %s252 = sand.u32 %s40, 1
        %s253 = scalar_lea.sflag [#allocation3], %s252
        %s254 = sand.u32 %s40, 1
        %s255 = smul.addr %s254, 128
        %s256 = scalar_lea.vmem [#allocation2], %s255
        // Predicated region
        $region41: #{transformer_block_forward.5} parent=39 // pred_check
          %p257 = pneg %p53
        $region42: #{transformer_block_forward.5} parent=39 // pred_check_branch
          %259 = sbr.rel (%p257) target = $region44
        $region43: #{transformer_block_forward.5} parent=39 // pred_region
          %260 = dma.done %s253, 2048
        $region44: #{transformer_block_forward.5} parent=39 // pred_fallthru
          _
        // Predicated region
        $region45: #{transformer_block_forward.5} parent=39 // pred_check
          %p261 = pneg %p121
        $region46: #{transformer_block_forward.5} parent=39 // pred_check_branch
          %263 = sbr.rel (%p261) target = $region48
        $region47: #{transformer_block_forward.5} parent=39 // pred_region
          %264 = dma.done [#allocation5], 3072
        $region48: #{transformer_block_forward.5} parent=39 // pred_fallthru
          _
        %s265 = sand.u32 %s40, 1
        %s266 = scalar_lea.sflag [#allocation3], %s265
        %s267 = sand.u32 %s40, 1
        %s268 = smul.addr %s267, 128
        %s269 = scalar_lea.vmem [#allocation2], %s268
        %p270 = pneg %p53
        %p271 = pneg %p50
        %p272 = pneg %p74
        %p273 = pneg %p71
        %p274 = pneg %p95
        %p275 = pneg %p92
        %p276 = pneg %p121
        %p277 = pneg %p118
        %s278 = smul.u32 3, %s25
        %p279 = scmp.lt.s32.totalorder %s278, 2
        %s280 = scalar_select %p279, %s278, 2
        %s281 = scalar_lea.vmem %s4, %s280
        %p282 = pneg %p147
        %p283 = pneg %p144
        %p284 = pneg %p175
        %p285 = pneg %p172
        %s286 = smul.u32 16, %s24
        %s287 = smul.u32 3, %s25
        %p288 = scmp.lt.s32.totalorder %s286, 31
        %s289 = scalar_select %p288, %s286, 31
        %p290 = scmp.lt.s32.totalorder %s287, 2
        %s291 = scalar_select %p290, %s287, 2
        %s292 = smul.addr %s289, 3
        %s293 = sadd.s32 %s291, %s292
        %s294 = smul.addr %s293, 4
        %s295 = scalar_lea.vmem %s5, %s294
        %s296 = smul.u32 16, %s24
        %s297 = smul.u32 3, %s25
        %s298 = smul.u32 3, %s25
        %p299 = scmp.lt.s32.totalorder %s298, 2
        %s300 = scalar_select %p299, %s298, 2
        %s301 = scalar_lea.vmem %s4, %s300
        %s302 = smul.u32 3, %s25
        %s303 = smul.u32 16, %s24
        %s304 = smul.u32 3, %s25
        %p305 = scmp.lt.s32.totalorder %s303, 31
        %s306 = scalar_select %p305, %s303, 31
        %p307 = scmp.lt.s32.totalorder %s304, 2
        %s308 = scalar_select %p307, %s304, 2
        %s309 = smul.addr %s306, 3
        %s310 = sadd.s32 %s308, %s309
        %s311 = smul.addr %s310, 4
        %s312 = scalar_lea.vmem %s5, %s311
        %s313 = smul.u32 16, %s24
        %s314 = smul.u32 3, %s25
        %v316 = vld [vmem:[%s256] sm:$0xff]
        %v317 = vld [vmem:[%s256 + $0x8] sm:$0xff]
        %v318 = vld [vmem:[%s256 + $0x10] sm:$0xff]
        %v319 = vld [vmem:[%s256 + $0x18] sm:$0xff]
        %v320 = vld [vmem:[%s256 + $0x20] sm:$0xff]
        %v321 = vld [vmem:[%s256 + $0x28] sm:$0xff]
        %v322 = vld [vmem:[%s256 + $0x30] sm:$0xff]
        %v323 = vld [vmem:[%s256 + $0x38] sm:$0xff]
        %v324 = vld [vmem:[%s256 + $0x40] sm:$0xff]
        %v325 = vld [vmem:[%s256 + $0x48] sm:$0xff]
        %v326 = vld [vmem:[%s256 + $0x50] sm:$0xff]
        %v327 = vld [vmem:[%s256 + $0x58] sm:$0xff]
        %v328 = vld [vmem:[%s256 + $0x60] sm:$0xff]
        %v329 = vld [vmem:[%s256 + $0x68] sm:$0xff]
        %v330 = vld [vmem:[%s256 + $0x70] sm:$0xff]
        %v331 = vld [vmem:[%s256 + $0x78] sm:$0xff]
        %332 = vadd.xlane.f32.xlu0 %v316
        %v333 = vpop.xlane.xlu0 %332
        %334 = vadd.xlane.f32.xlu0 %v317
        %v335 = vpop.xlane.xlu0 %334
        %336 = vadd.xlane.f32.xlu0 %v318
        %v337 = vpop.xlane.xlu0 %336
        %338 = vadd.xlane.f32.xlu0 %v319
        %v339 = vpop.xlane.xlu0 %338
        %340 = vadd.xlane.f32.xlu0 %v320
        %v341 = vpop.xlane.xlu0 %340
        %342 = vadd.xlane.f32.xlu0 %v321
        %v343 = vpop.xlane.xlu0 %342
        %344 = vadd.xlane.f32.xlu0 %v322
        %v345 = vpop.xlane.xlu0 %344
        %346 = vadd.xlane.f32.xlu0 %v323
        %v347 = vpop.xlane.xlu0 %346
        %348 = vadd.xlane.f32.xlu0 %v324
        %v349 = vpop.xlane.xlu0 %348
        %350 = vadd.xlane.f32.xlu0 %v325
        %v351 = vpop.xlane.xlu0 %350
        %352 = vadd.xlane.f32.xlu0 %v326
        %v353 = vpop.xlane.xlu0 %352
        %354 = vadd.xlane.f32.xlu0 %v327
        %v355 = vpop.xlane.xlu0 %354
        %356 = vadd.xlane.f32.xlu0 %v328
        %v357 = vpop.xlane.xlu0 %356
        %358 = vadd.xlane.f32.xlu0 %v329
        %v359 = vpop.xlane.xlu0 %358
        %360 = vadd.xlane.f32.xlu0 %v330
        %v361 = vpop.xlane.xlu0 %360
        %362 = vadd.xlane.f32.xlu0 %v331
        %v363 = vpop.xlane.xlu0 %362
        %v364 = vrcp.pop 128.0
        %v365 = vmul.f32 %v333, %v364
        %v366 = vmul.f32 %v335, %v364
        %v367 = vmul.f32 %v337, %v364
        %v368 = vmul.f32 %v339, %v364
        %v369 = vmul.f32 %v341, %v364
        %v370 = vmul.f32 %v343, %v364
        %v371 = vmul.f32 %v345, %v364
        %v372 = vmul.f32 %v347, %v364
        %v373 = vmul.f32 %v349, %v364
        %v374 = vmul.f32 %v351, %v364
        %v375 = vmul.f32 %v353, %v364
        %v376 = vmul.f32 %v355, %v364
        %v377 = vmul.f32 %v357, %v364
        %v378 = vmul.f32 %v359, %v364
        %v379 = vmul.f32 %v361, %v364
        %v380 = vmul.f32 %v363, %v364
        %v381 = vsub.f32 %v316, %v365
        %v382 = vsub.f32 %v317, %v366
        %v383 = vsub.f32 %v318, %v367
        %v384 = vsub.f32 %v319, %v368
        %v385 = vsub.f32 %v320, %v369
        %v386 = vsub.f32 %v321, %v370
        %v387 = vsub.f32 %v322, %v371
        %v388 = vsub.f32 %v323, %v372
        %v389 = vsub.f32 %v324, %v373
        %v390 = vsub.f32 %v325, %v374
        %v391 = vsub.f32 %v326, %v375
        %v392 = vsub.f32 %v327, %v376
        %v393 = vsub.f32 %v328, %v377
        %v394 = vsub.f32 %v329, %v378
        %v395 = vsub.f32 %v330, %v379
        %v396 = vsub.f32 %v331, %v380
        %v397 = vmul.f32 %v381, %v381
        %v398 = vmul.f32 %v382, %v382
        %v399 = vmul.f32 %v383, %v383
        %v400 = vmul.f32 %v384, %v384
        %v401 = vmul.f32 %v385, %v385
        %v402 = vmul.f32 %v386, %v386
        %v403 = vmul.f32 %v387, %v387
        %v404 = vmul.f32 %v388, %v388
        %v405 = vmul.f32 %v389, %v389
        %v406 = vmul.f32 %v390, %v390
        %v407 = vmul.f32 %v391, %v391
        %v408 = vmul.f32 %v392, %v392
        %v409 = vmul.f32 %v393, %v393
        %v410 = vmul.f32 %v394, %v394
        %v411 = vmul.f32 %v395, %v395
        %v412 = vmul.f32 %v396, %v396
        %413 = vadd.xlane.f32.xlu0 %v397
        %v414 = vpop.xlane.xlu0 %413
        %415 = vadd.xlane.f32.xlu0 %v398
        %v416 = vpop.xlane.xlu0 %415
        %417 = vadd.xlane.f32.xlu0 %v399
        %v418 = vpop.xlane.xlu0 %417
        %419 = vadd.xlane.f32.xlu0 %v400
        %v420 = vpop.xlane.xlu0 %419
        %421 = vadd.xlane.f32.xlu0 %v401
        %v422 = vpop.xlane.xlu0 %421
        %423 = vadd.xlane.f32.xlu0 %v402
        %v424 = vpop.xlane.xlu0 %423
        %425 = vadd.xlane.f32.xlu0 %v403
        %v426 = vpop.xlane.xlu0 %425
        %427 = vadd.xlane.f32.xlu0 %v404
        %v428 = vpop.xlane.xlu0 %427
        %429 = vadd.xlane.f32.xlu0 %v405
        %v430 = vpop.xlane.xlu0 %429
        %431 = vadd.xlane.f32.xlu0 %v406
        %v432 = vpop.xlane.xlu0 %431
        %433 = vadd.xlane.f32.xlu0 %v407
        %v434 = vpop.xlane.xlu0 %433
        %435 = vadd.xlane.f32.xlu0 %v408
        %v436 = vpop.xlane.xlu0 %435
        %437 = vadd.xlane.f32.xlu0 %v409
        %v438 = vpop.xlane.xlu0 %437
        %439 = vadd.xlane.f32.xlu0 %v410
        %v440 = vpop.xlane.xlu0 %439
        %441 = vadd.xlane.f32.xlu0 %v411
        %v442 = vpop.xlane.xlu0 %441
        %443 = vadd.xlane.f32.xlu0 %v412
        %v444 = vpop.xlane.xlu0 %443
        %v445 = vmul.f32 %v414, 0.007874016
        %v446 = vmul.f32 %v416, 0.007874016
        %v447 = vmul.f32 %v418, 0.007874016
        %v448 = vmul.f32 %v420, 0.007874016
        %v449 = vmul.f32 %v422, 0.007874016
        %v450 = vmul.f32 %v424, 0.007874016
        %v451 = vmul.f32 %v426, 0.007874016
        %v452 = vmul.f32 %v428, 0.007874016
        %v453 = vmul.f32 %v430, 0.007874016
        %v454 = vmul.f32 %v432, 0.007874016
        %v455 = vmul.f32 %v434, 0.007874016
        %v456 = vmul.f32 %v436, 0.007874016
        %v457 = vmul.f32 %v438, 0.007874016
        %v458 = vmul.f32 %v440, 0.007874016
        %v459 = vmul.f32 %v442, 0.007874016
        %v460 = vmul.f32 %v444, 0.007874016
        %v461 = vrsqrt.pop %v445
        %v462 = vmul.f32 %v445, %v461
        %vm463 = vcmp.eq.f32.partialorder %v445, inf
        %v464 = vsel %vm463, %v445, %v462
        %vm465 = vcmp.eq.f32.partialorder %v445, 0.0
        %v466 = vand.u32 %v445, 2147483648
        %v467 = vsel %vm465, %v466, %v464
        %v468 = vrsqrt.pop %v446
        %v469 = vmul.f32 %v446, %v468
        %vm470 = vcmp.eq.f32.partialorder %v446, inf
        %v471 = vsel %vm470, %v446, %v469
        %vm472 = vcmp.eq.f32.partialorder %v446, 0.0
        %v473 = vand.u32 %v446, 2147483648
        %v474 = vsel %vm472, %v473, %v471
        %v475 = vrsqrt.pop %v447
        %v476 = vmul.f32 %v447, %v475
        %vm477 = vcmp.eq.f32.partialorder %v447, inf
        %v478 = vsel %vm477, %v447, %v476
        %vm479 = vcmp.eq.f32.partialorder %v447, 0.0
        %v480 = vand.u32 %v447, 2147483648
        %v481 = vsel %vm479, %v480, %v478
        %v482 = vrsqrt.pop %v448
        %v483 = vmul.f32 %v448, %v482
        %vm484 = vcmp.eq.f32.partialorder %v448, inf
        %v485 = vsel %vm484, %v448, %v483
        %vm486 = vcmp.eq.f32.partialorder %v448, 0.0
        %v487 = vand.u32 %v448, 2147483648
        %v488 = vsel %vm486, %v487, %v485
        %v489 = vrsqrt.pop %v449
        %v490 = vmul.f32 %v449, %v489
        %vm491 = vcmp.eq.f32.partialorder %v449, inf
        %v492 = vsel %vm491, %v449, %v490
        %vm493 = vcmp.eq.f32.partialorder %v449, 0.0
        %v494 = vand.u32 %v449, 2147483648
        %v495 = vsel %vm493, %v494, %v492
        %v496 = vrsqrt.pop %v450
        %v497 = vmul.f32 %v450, %v496
        %vm498 = vcmp.eq.f32.partialorder %v450, inf
        %v499 = vsel %vm498, %v450, %v497
        %vm500 = vcmp.eq.f32.partialorder %v450, 0.0
        %v501 = vand.u32 %v450, 2147483648
        %v502 = vsel %vm500, %v501, %v499
        %v503 = vrsqrt.pop %v451
        %v504 = vmul.f32 %v451, %v503
        %vm505 = vcmp.eq.f32.partialorder %v451, inf
        %v506 = vsel %vm505, %v451, %v504
        %vm507 = vcmp.eq.f32.partialorder %v451, 0.0
        %v508 = vand.u32 %v451, 2147483648
        %v509 = vsel %vm507, %v508, %v506
        %v510 = vrsqrt.pop %v452
        %v511 = vmul.f32 %v452, %v510
        %vm512 = vcmp.eq.f32.partialorder %v452, inf
        %v513 = vsel %vm512, %v452, %v511
        %vm514 = vcmp.eq.f32.partialorder %v452, 0.0
        %v515 = vand.u32 %v452, 2147483648
        %v516 = vsel %vm514, %v515, %v513
        %v517 = vrsqrt.pop %v453
        %v518 = vmul.f32 %v453, %v517
        %vm519 = vcmp.eq.f32.partialorder %v453, inf
        %v520 = vsel %vm519, %v453, %v518
        %vm521 = vcmp.eq.f32.partialorder %v453, 0.0
        %v522 = vand.u32 %v453, 2147483648
        %v523 = vsel %vm521, %v522, %v520
        %v524 = vrsqrt.pop %v454
        %v525 = vmul.f32 %v454, %v524
        %vm526 = vcmp.eq.f32.partialorder %v454, inf
        %v527 = vsel %vm526, %v454, %v525
        %vm528 = vcmp.eq.f32.partialorder %v454, 0.0
        %v529 = vand.u32 %v454, 2147483648
        %v530 = vsel %vm528, %v529, %v527
        %v531 = vrsqrt.pop %v455
        %v532 = vmul.f32 %v455, %v531
        %vm533 = vcmp.eq.f32.partialorder %v455, inf
        %v534 = vsel %vm533, %v455, %v532
        %vm535 = vcmp.eq.f32.partialorder %v455, 0.0
        %v536 = vand.u32 %v455, 2147483648
        %v537 = vsel %vm535, %v536, %v534
        %v538 = vrsqrt.pop %v456
        %v539 = vmul.f32 %v456, %v538
        %vm540 = vcmp.eq.f32.partialorder %v456, inf
        %v541 = vsel %vm540, %v456, %v539
        %vm542 = vcmp.eq.f32.partialorder %v456, 0.0
        %v543 = vand.u32 %v456, 2147483648
        %v544 = vsel %vm542, %v543, %v541
        %v545 = vrsqrt.pop %v457
        %v546 = vmul.f32 %v457, %v545
        %vm547 = vcmp.eq.f32.partialorder %v457, inf
        %v548 = vsel %vm547, %v457, %v546
        %vm549 = vcmp.eq.f32.partialorder %v457, 0.0
        %v550 = vand.u32 %v457, 2147483648
        %v551 = vsel %vm549, %v550, %v548
        %v552 = vrsqrt.pop %v458
        %v553 = vmul.f32 %v458, %v552
        %vm554 = vcmp.eq.f32.partialorder %v458, inf
        %v555 = vsel %vm554, %v458, %v553
        %vm556 = vcmp.eq.f32.partialorder %v458, 0.0
        %v557 = vand.u32 %v458, 2147483648
        %v558 = vsel %vm556, %v557, %v555
        %v559 = vrsqrt.pop %v459
        %v560 = vmul.f32 %v459, %v559
        %vm561 = vcmp.eq.f32.partialorder %v459, inf
        %v562 = vsel %vm561, %v459, %v560
        %vm563 = vcmp.eq.f32.partialorder %v459, 0.0
        %v564 = vand.u32 %v459, 2147483648
        %v565 = vsel %vm563, %v564, %v562
        %v566 = vrsqrt.pop %v460
        %v567 = vmul.f32 %v460, %v566
        %vm568 = vcmp.eq.f32.partialorder %v460, inf
        %v569 = vsel %vm568, %v460, %v567
        %vm570 = vcmp.eq.f32.partialorder %v460, 0.0
        %v571 = vand.u32 %v460, 2147483648
        %v572 = vsel %vm570, %v571, %v569
        %v573 = vadd.f32 %v467, 1e-06
        %v574 = vadd.f32 %v474, 1e-06
        %v575 = vadd.f32 %v481, 1e-06
        %v576 = vadd.f32 %v488, 1e-06
        %v577 = vadd.f32 %v495, 1e-06
        %v578 = vadd.f32 %v502, 1e-06
        %v579 = vadd.f32 %v509, 1e-06
        %v580 = vadd.f32 %v516, 1e-06
        %v581 = vadd.f32 %v523, 1e-06
        %v582 = vadd.f32 %v530, 1e-06
        %v583 = vadd.f32 %v537, 1e-06
        %v584 = vadd.f32 %v544, 1e-06
        %v585 = vadd.f32 %v551, 1e-06
        %v586 = vadd.f32 %v558, 1e-06
        %v587 = vadd.f32 %v565, 1e-06
        %v588 = vadd.f32 %v572, 1e-06
        %v589 = vrcp.pop %v573
        %v590 = vrcp.pop %v574
        %v591 = vrcp.pop %v575
        %v592 = vrcp.pop %v576
        %v593 = vrcp.pop %v577
        %v594 = vrcp.pop %v578
        %v595 = vrcp.pop %v579
        %v596 = vrcp.pop %v580
        %v597 = vrcp.pop %v581
        %v598 = vrcp.pop %v582
        %v599 = vrcp.pop %v583
        %v600 = vrcp.pop %v584
        %v601 = vrcp.pop %v585
        %v602 = vrcp.pop %v586
        %v603 = vrcp.pop %v587
        %v604 = vrcp.pop %v588
        %v605 = vld [vmem:[%s1] sm:$0x1]
        %v606 = vmul.f32 %v381, %v589
        %v607 = vmul.f32 %v382, %v590
        %v608 = vmul.f32 %v383, %v591
        %v609 = vmul.f32 %v384, %v592
        %v610 = vmul.f32 %v385, %v593
        %v611 = vmul.f32 %v386, %v594
        %v612 = vmul.f32 %v387, %v595
        %v613 = vmul.f32 %v388, %v596
        %v614 = vmul.f32 %v389, %v597
        %v615 = vmul.f32 %v390, %v598
        %v616 = vmul.f32 %v391, %v599
        %v617 = vmul.f32 %v392, %v600
        %v618 = vmul.f32 %v393, %v601
        %v619 = vmul.f32 %v394, %v602
        %v620 = vmul.f32 %v395, %v603
        %v621 = vmul.f32 %v396, %v604
        %v623 = vlaneseq
        %v624 = vshrl.u32 %v623, 7
        %v625 = vsub.s32 0, %v624
        %v626 = vrot.slane %v605, %v625
        %v628 = vmul.f32 %v626, %v606
        %v629 = vmul.f32 %v626, %v607
        %v630 = vmul.f32 %v626, %v608
        %v631 = vmul.f32 %v626, %v609
        %v632 = vmul.f32 %v626, %v610
        %v633 = vmul.f32 %v626, %v611
        %v634 = vmul.f32 %v626, %v612
        %v635 = vmul.f32 %v626, %v613
        %v636 = vmul.f32 %v626, %v614
        %v637 = vmul.f32 %v626, %v615
        %v638 = vmul.f32 %v626, %v616
        %v639 = vmul.f32 %v626, %v617
        %v640 = vmul.f32 %v626, %v618
        %v641 = vmul.f32 %v626, %v619
        %v642 = vmul.f32 %v626, %v620
        %v643 = vmul.f32 %v626, %v621
        %v644 = vld [vmem:[%s2] sm:$0x1]
        %v646 = vlaneseq
        %v647 = vshrl.u32 %v646, 7
        %v648 = vsub.s32 0, %v647
        %v649 = vrot.slane %v644, %v648
        %v651 = vadd.f32 %v628, %v649
        %v652 = vadd.f32 %v629, %v649
        %v653 = vadd.f32 %v630, %v649
        %v654 = vadd.f32 %v631, %v649
        %v655 = vadd.f32 %v632, %v649
        %v656 = vadd.f32 %v633, %v649
        %v657 = vadd.f32 %v634, %v649
        %v658 = vadd.f32 %v635, %v649
        %v659 = vadd.f32 %v636, %v649
        %v660 = vadd.f32 %v637, %v649
        %v661 = vadd.f32 %v638, %v649
        %v662 = vadd.f32 %v639, %v649
        %v663 = vadd.f32 %v640, %v649
        %v664 = vadd.f32 %v641, %v649
        %v665 = vadd.f32 %v642, %v649
        %v666 = vadd.f32 %v643, %v649
        %v667 = vpack.c.bf16 %v652, %v651
        %v668 = vpack.c.bf16 %v654, %v653
        %v669 = vpack.c.bf16 %v656, %v655
        %v670 = vpack.c.bf16 %v658, %v657
        %v671 = vpack.c.bf16 %v660, %v659
        %v672 = vpack.c.bf16 %v662, %v661
        %v673 = vpack.c.bf16 %v664, %v663
        %v674 = vpack.c.bf16 %v666, %v665
        %v675 = vld [vmem:[#allocation4] sm:$0xff]
        %v676 = vld [vmem:[#allocation4 + $0x8] sm:$0xf]
        %v677 = vld [vmem:[#allocation4 + $0xc] sm:$0xff]
        %v678 = vld [vmem:[#allocation4 + $0x14] sm:$0xf]
        %v679 = vld [vmem:[#allocation4 + $0x18] sm:$0xff]
        %v680 = vld [vmem:[#allocation4 + $0x20] sm:$0xf]
        %v681 = vld [vmem:[#allocation4 + $0x24] sm:$0xff]
        %v682 = vld [vmem:[#allocation4 + $0x2c] sm:$0xf]
        %v683 = vld [vmem:[#allocation4 + $0x30] sm:$0xff]
        %v684 = vld [vmem:[#allocation4 + $0x38] sm:$0xf]
        %v685 = vld [vmem:[#allocation4 + $0x3c] sm:$0xff]
        %v686 = vld [vmem:[#allocation4 + $0x44] sm:$0xf]
        %v687 = vld [vmem:[#allocation4 + $0x48] sm:$0xff]
        %v688 = vld [vmem:[#allocation4 + $0x50] sm:$0xf]
        %v689 = vld [vmem:[#allocation4 + $0x54] sm:$0xff]
        %v690 = vld [vmem:[#allocation4 + $0x5c] sm:$0xf]
        %v691 = vld [vmem:[#allocation4 + $0x60] sm:$0xff]
        %v692 = vld [vmem:[#allocation4 + $0x68] sm:$0xf]
        %v693 = vld [vmem:[#allocation4 + $0x6c] sm:$0xff]
        %v694 = vld [vmem:[#allocation4 + $0x74] sm:$0xf]
        %v695 = vld [vmem:[#allocation4 + $0x78] sm:$0xff]
        %v696 = vld [vmem:[#allocation4 + $0x80] sm:$0xf]
        %v697 = vld [vmem:[#allocation4 + $0x84] sm:$0xff]
        %v698 = vld [vmem:[#allocation4 + $0x8c] sm:$0xf]
        %v699 = vld [vmem:[#allocation4 + $0x90] sm:$0xff]
        %v700 = vld [vmem:[#allocation4 + $0x98] sm:$0xf]
        %v701 = vld [vmem:[#allocation4 + $0x9c] sm:$0xff]
        %v702 = vld [vmem:[#allocation4 + $0xa4] sm:$0xf]
        %v703 = vld [vmem:[#allocation4 + $0xa8] sm:$0xff]
        %v704 = vld [vmem:[#allocation4 + $0xb0] sm:$0xf]
        %v705 = vld [vmem:[#allocation4 + $0xb4] sm:$0xff]
        %v706 = vld [vmem:[#allocation4 + $0xbc] sm:$0xf]
        %v707 = vld [vmem:[%s301] sm:$0x7]
        %v709 = vlaneseq
        %v710 = vshrl.u32 %v709, 7
        %v711 = vsub.s32 0, %v710
        %v712 = vrot.slane %v707, %v711
        %v713 = vlaneseq
        %v714 = vshrl.u32 %v713, 7
        %v715 = vsub.s32 1, %v714
        %v716 = vrot.slane %v707, %v715
        %v717 = vlaneseq
        %v718 = vshrl.u32 %v717, 7
        %v719 = vsub.s32 2, %v718
        %v720 = vrot.slane %v707, %v719
        %v756 = vunpack.c.l.b16 %v675
        %v757 = vunpack.c.h.b16 %v675
        %v758 = vunpack.c.l.b16 %v676
        %v759 = vunpack.c.l.b16 %v677
        %v760 = vunpack.c.h.b16 %v677
        %v761 = vunpack.c.l.b16 %v678
        %v762 = vunpack.c.l.b16 %v679
        %v763 = vunpack.c.h.b16 %v679
        %v764 = vunpack.c.l.b16 %v680
        %v765 = vunpack.c.l.b16 %v681
        %v766 = vunpack.c.h.b16 %v681
        %v767 = vunpack.c.l.b16 %v682
        %v768 = vunpack.c.l.b16 %v683
        %v769 = vunpack.c.h.b16 %v683
        %v770 = vunpack.c.l.b16 %v684
        %v771 = vunpack.c.l.b16 %v685
        %v772 = vunpack.c.h.b16 %v685
        %v773 = vunpack.c.l.b16 %v686
        %v774 = vunpack.c.l.b16 %v687
        %v775 = vunpack.c.h.b16 %v687
        %v776 = vunpack.c.l.b16 %v688
        %v777 = vunpack.c.l.b16 %v689
        %v778 = vunpack.c.h.b16 %v689
        %v779 = vunpack.c.l.b16 %v690
        %v780 = vunpack.c.l.b16 %v691
        %v781 = vunpack.c.h.b16 %v691
        %v782 = vunpack.c.l.b16 %v692
        %v783 = vunpack.c.l.b16 %v693
        %v784 = vunpack.c.h.b16 %v693
        %v785 = vunpack.c.l.b16 %v694
        %v786 = vunpack.c.l.b16 %v695
        %v787 = vunpack.c.h.b16 %v695
        %v788 = vunpack.c.l.b16 %v696
        %v789 = vunpack.c.l.b16 %v697
        %v790 = vunpack.c.h.b16 %v697
        %v791 = vunpack.c.l.b16 %v698
        %v792 = vunpack.c.l.b16 %v699
        %v793 = vunpack.c.h.b16 %v699
        %v794 = vunpack.c.l.b16 %v700
        %v795 = vunpack.c.l.b16 %v701
        %v796 = vunpack.c.h.b16 %v701
        %v797 = vunpack.c.l.b16 %v702
        %v798 = vunpack.c.l.b16 %v703
        %v799 = vunpack.c.h.b16 %v703
        %v800 = vunpack.c.l.b16 %v704
        %v801 = vunpack.c.l.b16 %v705
        %v802 = vunpack.c.h.b16 %v705
        %v803 = vunpack.c.l.b16 %v706
        %v804 = vpack.c.b16 %v759, %v756
        %v805 = vpack.c.b16 %v760, %v757
        %v806 = vpack.c.b16 %v761, %v758
        %v807 = vpack.c.b16 %v765, %v762
        %v808 = vpack.c.b16 %v766, %v763
        %v809 = vpack.c.b16 %v767, %v764
        %v810 = vpack.c.b16 %v771, %v768
        %v811 = vpack.c.b16 %v772, %v769
        %v812 = vpack.c.b16 %v773, %v770
        %v813 = vpack.c.b16 %v777, %v774
        %v814 = vpack.c.b16 %v778, %v775
        %v815 = vpack.c.b16 %v779, %v776
        %v816 = vpack.c.b16 %v783, %v780
        %v817 = vpack.c.b16 %v784, %v781
        %v818 = vpack.c.b16 %v785, %v782
        %v819 = vpack.c.b16 %v789, %v786
        %v820 = vpack.c.b16 %v790, %v787
        %v821 = vpack.c.b16 %v791, %v788
        %v822 = vpack.c.b16 %v795, %v792
        %v823 = vpack.c.b16 %v796, %v793
        %v824 = vpack.c.b16 %v797, %v794
        %v825 = vpack.c.b16 %v801, %v798
        %v826 = vpack.c.b16 %v802, %v799
        %v827 = vpack.c.b16 %v803, %v800
        %852 = vmatprep.subr.bf16.mxu0 %v805
        %853 = vmatpush1.bf16.msra.mxu0 %v804
        %854 = vmatprep.subr.bf16.mxu0 %v808
        %855 = vmatpush1.bf16.msra.mxu0 %v807
        %856 = vmatprep.subr.bf16.mxu0 %v811
        %857 = vmatpush1.bf16.msra.mxu0 %v810
        %858 = vmatprep.subr.bf16.mxu0 %v814
        %859 = vmatpush1.bf16.msra.mxu0 %v813
        %860 = vmatprep.subr.bf16.mxu0 %v817
        %861 = vmatpush1.bf16.msra.mxu0 %v816
        %862 = vmatprep.subr.bf16.mxu0 %v820
        %863 = vmatpush1.bf16.msra.mxu0 %v819
        %864 = vmatprep.subr.bf16.mxu0 %v823
        %865 = vmatpush1.bf16.msra.mxu0 %v822
        %866 = vmatprep.subr.bf16.mxu0 %v826
        %867 = vmatpush1.bf16.msra.mxu0 %v825
        %868 = vmatprep.subr.bf16.mxu0 0
        %869 = vmatpush1.bf16.msra.mxu0 0
        %870 = vmatprep.subr.bf16.mxu0 0
        %871 = vmatpush1.bf16.msra.mxu0 0
        %872 = vmatprep.subr.bf16.mxu0 0
        %873 = vmatpush1.bf16.msra.mxu0 0
        %874 = vmatprep.subr.bf16.mxu0 0
        %875 = vmatpush1.bf16.msra.mxu0 0
        %876 = vmatprep.subr.bf16.mxu0 0
        %877 = vmatpush1.bf16.msra.mxu0 0
        %878 = vmatprep.subr.bf16.mxu0 0
        %879 = vmatpush1.bf16.msra.mxu0 0
        %880 = vmatprep.subr.bf16.mxu0 0
        %881 = vmatpush1.bf16.msra.mxu0 0
        %882 = vmatprep.subr.bf16.mxu0 0
        %883 = vmatpush1.bf16.msra.mxu0 0
        %884 = vmatprep.mubr.bf16.mxu0 0
        %885 = vmatmul.mubr.bf16.gmra.mrb[0].mxu0 %v667
        %v886 = vpop.f32.mrb[0].mxu0
        %v887 = vadd.f32 %v712, %v886
        %v888 = vpop.f32.mrb[0].mxu0
        %v889 = vadd.f32 %v716, %v888
        %v890 = vpop.f32.mrb[0].mxu0
        %v891 = vadd.f32 %v712, %v890
        %v892 = vpop.f32.mrb[0].mxu0
        %v893 = vadd.f32 %v716, %v892
        %894 = vmatprep.mubr.bf16.mxu0 0
        %895 = vmatmul.mubr.bf16.gmra.mrb[0].mxu0 %v668
        %v896 = vpop.f32.mrb[0].mxu0
        %v897 = vadd.f32 %v712, %v896
        %v898 = vpop.f32.mrb[0].mxu0
        %v899 = vadd.f32 %v716, %v898
        %v900 = vpop.f32.mrb[0].mxu0
        %v901 = vadd.f32 %v712, %v900
        %v902 = vpop.f32.mrb[0].mxu0
        %v903 = vadd.f32 %v716, %v902
        %904 = vmatprep.mubr.bf16.mxu0 0
        %905 = vmatmul.mubr.bf16.gmra.mrb[0].mxu0 %v669
        %v906 = vpop.f32.mrb[0].mxu0
        %v907 = vadd.f32 %v712, %v906
        %v908 = vpop.f32.mrb[0].mxu0
        %v909 = vadd.f32 %v716, %v908
        %v910 = vpop.f32.mrb[0].mxu0
        %v911 = vadd.f32 %v712, %v910
        %v912 = vpop.f32.mrb[0].mxu0
        %v913 = vadd.f32 %v716, %v912
        %914 = vmatprep.mubr.bf16.mxu0 0
        %915 = vmatmul.mubr.bf16.gmra.mrb[0].mxu0 %v670
        %v916 = vpop.f32.mrb[0].mxu0
        %v917 = vadd.f32 %v712, %v916
        %v918 = vpop.f32.mrb[0].mxu0
        %v919 = vadd.f32 %v716, %v918
        %v920 = vpop.f32.mrb[0].mxu0
        %v921 = vadd.f32 %v712, %v920
        %v922 = vpop.f32.mrb[0].mxu0
        %v923 = vadd.f32 %v716, %v922
        %924 = vmatprep.mubr.bf16.mxu0 0
        %925 = vmatmul.mubr.bf16.gmra.mrb[0].mxu0 %v671
        %v926 = vpop.f32.mrb[0].mxu0
        %v927 = vadd.f32 %v712, %v926
        %v928 = vpop.f32.mrb[0].mxu0
        %v929 = vadd.f32 %v716, %v928
        %v930 = vpop.f32.mrb[0].mxu0
        %v931 = vadd.f32 %v712, %v930
        %v932 = vpop.f32.mrb[0].mxu0
        %v933 = vadd.f32 %v716, %v932
        %934 = vmatprep.mubr.bf16.mxu0 0
        %935 = vmatmul.mubr.bf16.gmra.mrb[0].mxu0 %v672
        %v936 = vpop.f32.mrb[0].mxu0
        %v937 = vadd.f32 %v712, %v936
        %v938 = vpop.f32.mrb[0].mxu0
        %v939 = vadd.f32 %v716, %v938
        %v940 = vpop.f32.mrb[0].mxu0
        %v941 = vadd.f32 %v712, %v940
        %v942 = vpop.f32.mrb[0].mxu0
        %v943 = vadd.f32 %v716, %v942
        %944 = vmatprep.mubr.bf16.mxu0 0
        %945 = vmatmul.mubr.bf16.gmra.mrb[0].mxu0 %v673
        %v946 = vpop.f32.mrb[0].mxu0
        %v947 = vadd.f32 %v712, %v946
        %v948 = vpop.f32.mrb[0].mxu0
        %v949 = vadd.f32 %v716, %v948
        %v950 = vpop.f32.mrb[0].mxu0
        %v951 = vadd.f32 %v712, %v950
        %v952 = vpop.f32.mrb[0].mxu0
        %v953 = vadd.f32 %v716, %v952
        %954 = vmatprep.mubr.bf16.mxu0 0
        %955 = vmatmul.mubr.bf16.gmra.mrb[0].mxu0 %v674
        %v956 = vpop.f32.mrb[0].mxu0
        %v957 = vadd.f32 %v712, %v956
        %v958 = vpop.f32.mrb[0].mxu0
        %v959 = vadd.f32 %v716, %v958
        %v960 = vpop.f32.mrb[0].mxu0
        %v961 = vadd.f32 %v712, %v960
        %v962 = vpop.f32.mrb[0].mxu0
        %v963 = vadd.f32 %v716, %v962
        %964 = vdwg.mxu0
        %965 = vmatprep.subr.bf16.mxu0 0
        %966 = vmatpush1.bf16.msra.mxu0 %v806
        %967 = vmatprep.subr.bf16.mxu0 0
        %968 = vmatpush1.bf16.msra.mxu0 %v809
        %969 = vmatprep.subr.bf16.mxu0 0
        %970 = vmatpush1.bf16.msra.mxu0 %v812
        %971 = vmatprep.subr.bf16.mxu0 0
        %972 = vmatpush1.bf16.msra.mxu0 %v815
        %973 = vmatprep.subr.bf16.mxu0 0
        %974 = vmatpush1.bf16.msra.mxu0 %v818
        %975 = vmatprep.subr.bf16.mxu0 0
        %976 = vmatpush1.bf16.msra.mxu0 %v821
        %977 = vmatprep.subr.bf16.mxu0 0
        %978 = vmatpush1.bf16.msra.mxu0 %v824
        %979 = vmatprep.subr.bf16.mxu0 0
        %980 = vmatpush1.bf16.msra.mxu0 %v827
        %981 = vmatprep.subr.bf16.mxu0 0
        %982 = vmatpush1.bf16.msra.mxu0 0
        %983 = vmatprep.subr.bf16.mxu0 0
        %984 = vmatpush1.bf16.msra.mxu0 0
        %985 = vmatprep.subr.bf16.mxu0 0
        %986 = vmatpush1.bf16.msra.mxu0 0
        %987 = vmatprep.subr.bf16.mxu0 0
        %988 = vmatpush1.bf16.msra.mxu0 0
        %989 = vmatprep.subr.bf16.mxu0 0
        %990 = vmatpush1.bf16.msra.mxu0 0
        %991 = vmatprep.subr.bf16.mxu0 0
        %992 = vmatpush1.bf16.msra.mxu0 0
        %993 = vmatprep.subr.bf16.mxu0 0
        %994 = vmatpush1.bf16.msra.mxu0 0
        %995 = vmatprep.subr.bf16.mxu0 0
        %996 = vmatpush1.bf16.msra.mxu0 0
        %997 = vmatprep.mubr.bf16.mxu0 0
        %998 = vmatmul.mubr.bf16.gmra.mrb[0].mxu0 %v667
        %v999 = vpop.f32.mrb[0].mxu0
        %v1000 = vadd.f32 %v720, %v999
        %v1001 = vpop.f32.mrb[0].mxu0
        %v1002 = vpop.f32.mrb[0].mxu0
        %v1003 = vadd.f32 %v720, %v1002
        %v1004 = vpop.f32.mrb[0].mxu0
        %1005 = vmatprep.mubr.bf16.mxu0 0
        %1006 = vmatmul.mubr.bf16.gmra.mrb[0].mxu0 %v668
        %v1007 = vpop.f32.mrb[0].mxu0
        %v1008 = vadd.f32 %v720, %v1007
        %v1009 = vpop.f32.mrb[0].mxu0
        %v1010 = vpop.f32.mrb[0].mxu0
        %v1011 = vadd.f32 %v720, %v1010
        %v1012 = vpop.f32.mrb[0].mxu0
        %1013 = vmatprep.mubr.bf16.mxu0 0
        %1014 = vmatmul.mubr.bf16.gmra.mrb[0].mxu0 %v669
        %v1015 = vpop.f32.mrb[0].mxu0
        %v1016 = vadd.f32 %v720, %v1015
        %v1017 = vpop.f32.mrb[0].mxu0
        %v1018 = vpop.f32.mrb[0].mxu0
        %v1019 = vadd.f32 %v720, %v1018
        %v1020 = vpop.f32.mrb[0].mxu0
        %1021 = vmatprep.mubr.bf16.mxu0 0
        %1022 = vmatmul.mubr.bf16.gmra.mrb[0].mxu0 %v670
        %v1023 = vpop.f32.mrb[0].mxu0
        %v1024 = vadd.f32 %v720, %v1023
        %v1025 = vpop.f32.mrb[0].mxu0
        %v1026 = vpop.f32.mrb[0].mxu0
        %v1027 = vadd.f32 %v720, %v1026
        %v1028 = vpop.f32.mrb[0].mxu0
        %1029 = vmatprep.mubr.bf16.mxu0 0
        %1030 = vmatmul.mubr.bf16.gmra.mrb[0].mxu0 %v671
        %v1031 = vpop.f32.mrb[0].mxu0
        %v1032 = vadd.f32 %v720, %v1031
        %v1033 = vpop.f32.mrb[0].mxu0
        %v1034 = vpop.f32.mrb[0].mxu0
        %v1035 = vadd.f32 %v720, %v1034
        %v1036 = vpop.f32.mrb[0].mxu0
        %1037 = vmatprep.mubr.bf16.mxu0 0
        %1038 = vmatmul.mubr.bf16.gmra.mrb[0].mxu0 %v672
        %v1039 = vpop.f32.mrb[0].mxu0
        %v1040 = vadd.f32 %v720, %v1039
        %v1041 = vpop.f32.mrb[0].mxu0
        %v1042 = vpop.f32.mrb[0].mxu0
        %v1043 = vadd.f32 %v720, %v1042
        %v1044 = vpop.f32.mrb[0].mxu0
        %1045 = vmatprep.mubr.bf16.mxu0 0
        %1046 = vmatmul.mubr.bf16.gmra.mrb[0].mxu0 %v673
        %v1047 = vpop.f32.mrb[0].mxu0
        %v1048 = vadd.f32 %v720, %v1047
        %v1049 = vpop.f32.mrb[0].mxu0
        %v1050 = vpop.f32.mrb[0].mxu0
        %v1051 = vadd.f32 %v720, %v1050
        %v1052 = vpop.f32.mrb[0].mxu0
        %1053 = vmatprep.mubr.bf16.mxu0 0
        %1054 = vmatmul.mubr.bf16.gmra.mrb[0].mxu0 %v674
        %v1055 = vpop.f32.mrb[0].mxu0
        %v1056 = vadd.f32 %v720, %v1055
        %v1057 = vpop.f32.mrb[0].mxu0
        %v1058 = vpop.f32.mrb[0].mxu0
        %v1059 = vadd.f32 %v720, %v1058
        %v1060 = vpop.f32.mrb[0].mxu0
        %1061 = vdwg.mxu0
        %v1062 = vpack.c.bf16 %v891, %v887
        %v1063 = vpack.c.bf16 %v893, %v889
        %v1064 = vpack.c.bf16 %v1003, %v1000
        %v1065 = vpack.c.bf16 %v901, %v897
        %v1066 = vpack.c.bf16 %v903, %v899
        %v1067 = vpack.c.bf16 %v1011, %v1008
        %v1068 = vpack.c.bf16 %v911, %v907
        %v1069 = vpack.c.bf16 %v913, %v909
        %v1070 = vpack.c.bf16 %v1019, %v1016
        %v1071 = vpack.c.bf16 %v921, %v917
        %v1072 = vpack.c.bf16 %v923, %v919
        %v1073 = vpack.c.bf16 %v1027, %v1024
        %v1074 = vpack.c.bf16 %v931, %v927
        %v1075 = vpack.c.bf16 %v933, %v929
        %v1076 = vpack.c.bf16 %v1035, %v1032
        %v1077 = vpack.c.bf16 %v941, %v937
        %v1078 = vpack.c.bf16 %v943, %v939
        %v1079 = vpack.c.bf16 %v1043, %v1040
        %v1080 = vpack.c.bf16 %v951, %v947
        %v1081 = vpack.c.bf16 %v953, %v949
        %v1082 = vpack.c.bf16 %v1051, %v1048
        %v1083 = vpack.c.bf16 %v961, %v957
        %v1084 = vpack.c.bf16 %v963, %v959
        %v1085 = vpack.c.bf16 %v1059, %v1056
        %v1110 = vunpack.c.l.b16 %v1062
        %v1111 = vunpack.c.l.b16 %v1063
        %v1112 = vunpack.c.l.b16 %v1064
        %v1113 = vunpack.c.h.b16 %v1062
        %v1114 = vunpack.c.h.b16 %v1063
        %v1115 = vunpack.c.h.b16 %v1064
        %v1116 = vunpack.c.l.b16 %v1065
        %v1117 = vunpack.c.l.b16 %v1066
        %v1118 = vunpack.c.l.b16 %v1067
        %v1119 = vunpack.c.h.b16 %v1065
        %v1120 = vunpack.c.h.b16 %v1066
        %v1121 = vunpack.c.h.b16 %v1067
        %v1122 = vunpack.c.l.b16 %v1068
        %v1123 = vunpack.c.l.b16 %v1069
        %v1124 = vunpack.c.l.b16 %v1070
        %v1125 = vunpack.c.h.b16 %v1068
        %v1126 = vunpack.c.h.b16 %v1069
        %v1127 = vunpack.c.h.b16 %v1070
        %v1128 = vunpack.c.l.b16 %v1071
        %v1129 = vunpack.c.l.b16 %v1072
        %v1130 = vunpack.c.l.b16 %v1073
        %v1131 = vunpack.c.h.b16 %v1071
        %v1132 = vunpack.c.h.b16 %v1072
        %v1133 = vunpack.c.h.b16 %v1073
        %v1134 = vunpack.c.l.b16 %v1074
        %v1135 = vunpack.c.l.b16 %v1075
        %v1136 = vunpack.c.l.b16 %v1076
        %v1137 = vunpack.c.h.b16 %v1074
        %v1138 = vunpack.c.h.b16 %v1075
        %v1139 = vunpack.c.h.b16 %v1076
        %v1140 = vunpack.c.l.b16 %v1077
        %v1141 = vunpack.c.l.b16 %v1078
        %v1142 = vunpack.c.l.b16 %v1079
        %v1143 = vunpack.c.h.b16 %v1077
        %v1144 = vunpack.c.h.b16 %v1078
        %v1145 = vunpack.c.h.b16 %v1079
        %v1146 = vunpack.c.l.b16 %v1080
        %v1147 = vunpack.c.l.b16 %v1081
        %v1148 = vunpack.c.l.b16 %v1082
        %v1149 = vunpack.c.h.b16 %v1080
        %v1150 = vunpack.c.h.b16 %v1081
        %v1151 = vunpack.c.h.b16 %v1082
        %v1152 = vunpack.c.l.b16 %v1083
        %v1153 = vunpack.c.l.b16 %v1084
        %v1154 = vunpack.c.l.b16 %v1085
        %v1155 = vunpack.c.h.b16 %v1083
        %v1156 = vunpack.c.h.b16 %v1084
        %v1157 = vunpack.c.h.b16 %v1085
        %v1158 = vpack.c.b16 %v1111, %v1110
        %v1159 = vpack.c.b16 %v1112, %v1112
        %v1160 = vpack.c.b16 %v1114, %v1113
        %v1161 = vpack.c.b16 %v1115, %v1115
        %v1162 = vpack.c.b16 %v1117, %v1116
        %v1163 = vpack.c.b16 %v1118, %v1118
        %v1164 = vpack.c.b16 %v1120, %v1119
        %v1165 = vpack.c.b16 %v1121, %v1121
        %v1166 = vpack.c.b16 %v1123, %v1122
        %v1167 = vpack.c.b16 %v1124, %v1124
        %v1168 = vpack.c.b16 %v1126, %v1125
        %v1169 = vpack.c.b16 %v1127, %v1127
        %v1170 = vpack.c.b16 %v1129, %v1128
        %v1171 = vpack.c.b16 %v1130, %v1130
        %v1172 = vpack.c.b16 %v1132, %v1131
        %v1173 = vpack.c.b16 %v1133, %v1133
        %v1174 = vpack.c.b16 %v1135, %v1134
        %v1175 = vpack.c.b16 %v1136, %v1136
        %v1176 = vpack.c.b16 %v1138, %v1137
        %v1177 = vpack.c.b16 %v1139, %v1139
        %v1178 = vpack.c.b16 %v1141, %v1140
        %v1179 = vpack.c.b16 %v1142, %v1142
        %v1180 = vpack.c.b16 %v1144, %v1143
        %v1181 = vpack.c.b16 %v1145, %v1145
        %v1182 = vpack.c.b16 %v1147, %v1146
        %v1183 = vpack.c.b16 %v1148, %v1148
        %v1184 = vpack.c.b16 %v1150, %v1149
        %v1185 = vpack.c.b16 %v1151, %v1151
        %v1186 = vpack.c.b16 %v1153, %v1152
        %v1187 = vpack.c.b16 %v1154, %v1154
        %v1188 = vpack.c.b16 %v1156, %v1155
        %v1189 = vpack.c.b16 %v1157, %v1157
        %1222 = vst [vmem:[%s312] sm:$0xff] %v1158
        %1223 = vst [vmem:[%s312 + $0x8] sm:$0xf] %v1159
        %1224 = vst [vmem:[%s312 + $0xc] sm:$0xff] %v1160
        %1225 = vst [vmem:[%s312 + $0x14] sm:$0xf] %v1161
        %1226 = vst [vmem:[%s312 + $0x18] sm:$0xff] %v1162
        %1227 = vst [vmem:[%s312 + $0x20] sm:$0xf] %v1163
        %1228 = vst [vmem:[%s312 + $0x24] sm:$0xff] %v1164
        %1229 = vst [vmem:[%s312 + $0x2c] sm:$0xf] %v1165
        %1230 = vst [vmem:[%s312 + $0x30] sm:$0xff] %v1166
        %1231 = vst [vmem:[%s312 + $0x38] sm:$0xf] %v1167
        %1232 = vst [vmem:[%s312 + $0x3c] sm:$0xff] %v1168
        %1233 = vst [vmem:[%s312 + $0x44] sm:$0xf] %v1169
        %1234 = vst [vmem:[%s312 + $0x48] sm:$0xff] %v1170
        %1235 = vst [vmem:[%s312 + $0x50] sm:$0xf] %v1171
        %1236 = vst [vmem:[%s312 + $0x54] sm:$0xff] %v1172
        %1237 = vst [vmem:[%s312 + $0x5c] sm:$0xf] %v1173
        %1238 = vst [vmem:[%s312 + $0x60] sm:$0xff] %v1174
        %1239 = vst [vmem:[%s312 + $0x68] sm:$0xf] %v1175
        %1240 = vst [vmem:[%s312 + $0x6c] sm:$0xff] %v1176
        %1241 = vst [vmem:[%s312 + $0x74] sm:$0xf] %v1177
        %1242 = vst [vmem:[%s312 + $0x78] sm:$0xff] %v1178
        %1243 = vst [vmem:[%s312 + $0x80] sm:$0xf] %v1179
        %1244 = vst [vmem:[%s312 + $0x84] sm:$0xff] %v1180
        %1245 = vst [vmem:[%s312 + $0x8c] sm:$0xf] %v1181
        %1246 = vst [vmem:[%s312 + $0x90] sm:$0xff] %v1182
        %1247 = vst [vmem:[%s312 + $0x98] sm:$0xf] %v1183
        %1248 = vst [vmem:[%s312 + $0x9c] sm:$0xff] %v1184
        %1249 = vst [vmem:[%s312 + $0xa4] sm:$0xf] %v1185
        %1250 = vst [vmem:[%s312 + $0xa8] sm:$0xff] %v1186
        %1251 = vst [vmem:[%s312 + $0xb0] sm:$0xf] %v1187
        %1252 = vst [vmem:[%s312 + $0xb4] sm:$0xff] %v1188
        %1253 = vst [vmem:[%s312 + $0xbc] sm:$0xf] %v1189
        %s1254 = smul.u32 16, %s24
        %s1255 = smul.u32 3, %s25
        %p1256 = scmp.lt.s32.totalorder %s1254, 31
        %s1257 = scalar_select %p1256, %s1254, 31
        %p1258 = scmp.lt.s32.totalorder %s1255, 2
        %s1259 = scalar_select %p1258, %s1255, 2
        %s1260 = smul.addr %s1257, 3
        %s1261 = sadd.s32 %s1259, %s1260
        %s1262 = smul.addr %s1261, 4
        %s1263 = scalar_lea.vmem %s5, %s1262
        // Predicated region
        $region49: #{transformer_block_forward.5} parent=39 // pred_check
          %p1264 = pneg %p172
        $region50: #{transformer_block_forward.5} parent=39 // pred_check_branch
          %1266 = sbr.rel (%p1264) target = $region52
        $region51: #{transformer_block_forward.5} parent=39 // pred_region
          %s1267 = smul.u32 16, %s24
          %s1268 = smul.u32 3, %s25
        $region52: #{transformer_block_forward.5} parent=39 // pred_fallthru
          _
      $region40: #{transformer_block_forward.5} parent=5 // pred_fallthru
        _
      %p1269 = scmp.le.s32.totalorder 2, %s15
      // Predicated region
      $region53: #{transformer_block_forward.5} parent=5 // pred_check
        %p1270 = pneg %p1269
      $region54: #{transformer_block_forward.5} parent=5 // pred_check_branch
        %1272 = sbr.rel (%p1270) target = $region56
      $region55: #{transformer_block_forward.5} parent=5 // pred_region
        %s1273 = ssub.s32 %s15, 2
        // Predicated region
        $region57: #{transformer_block_forward.5} parent=55 // pred_check
          %p1274 = pneg %p178
        $region58: #{transformer_block_forward.5} parent=55 // pred_check_branch
          %1276 = sbr.rel (%p1274) target = $region60
        $region59: #{transformer_block_forward.5} parent=55 // pred_region
          %s1277 = smul.u32 16, %s26
          %s1278 = smul.u32 3, %s27
          %p1279 = scmp.lt.s32.totalorder %s1277, 31
          %s1280 = scalar_select %p1279, %s1277, 31
          %p1281 = scmp.lt.s32.totalorder %s1278, 2
          %s1282 = scalar_select %p1281, %s1278, 2
          %s1283 = smul.addr %s1280, 3
          %s1284 = sadd.s32 %s1282, %s1283
          %s1285 = smul.addr %s1284, 4
          %s1286 = scalar_lea.vmem %s5, %s1285
        $region60: #{transformer_block_forward.5} parent=55 // pred_fallthru
          _
      $region56: #{transformer_block_forward.5} parent=5 // pred_fallthru
        _
    $region6: #{transformer_block_forward.5} parent=1 // loop_footer
      %s19 = sadd.s32 1, %s15
    $region7: #{transformer_block_forward.5} parent=1 // loop_footer_branch
      %14 = sbr.rel target = $region3
    $region8: #{transformer_block_forward.5} parent=1 // loop_exit
      _
    %1287 = vsyncpa [#allocation3], 1
    %s1288 = scalar_lea.sflag [#allocation3], 1
    %1289 = vsyncpa %s1288, 1
    %1290 = vsyncpa [#allocation5], 1

// kernel: transformer_block_forward.6
$region0: #{transformer_block_forward.6}
  #allocation0 [shape = 'u32[]', space=smem, size = 0x4, offset = 0x4, fixed_abs, tag = 'smem constant byte address 0x4 - core index']
  #allocation1 [shape = 'u32[144,128]{1,0:T(1,128)}', space=vmem, size = 0x12000, scoped, tag = 'internal scratch']
  #allocation2 [shape = 's32[1]{0}', space=sflag, size = 0x4, scoped, tag = 'scoped memory for transformer_block_forward.6']
  #allocation3 [shape = 'u8[512]{0}', space=smem, size = 0x200, scoped, tag = 'prefetched SMEM operand 0']
  %s0 = inlined_call_operand.vmem [shape: s32[2], index: 0, kind: input, shape index: {}]
  %s1 = inlined_call_operand.vmem [shape: bf16[2,128,384], index: 1, kind: input, shape index: {}, may-alias: {1,2,3}]
  %s2 = inlined_call_operand.vmem [shape: bf16[2,128,384], index: 2, kind: input, shape index: {}, may-alias: {1,2,3}]
  %s3 = inlined_call_operand.vmem [shape: bf16[2,128,384], index: 3, kind: input, shape index: {}, may-alias: {1,2,3}]
  %s4 = inlined_call_operand.vmem [shape: bf16[2,128,128], index: 4, kind: output, shape index: {}]
  %s5 = sld [smem:[#allocation0]]
  $region168: #{transformer_block_forward.6} parent=0
    _
  %s7 = ssub.s32 1, %s5
  %s8 = scalar_select 0, %s7, %s5
  %s9 = sshll.u32 %s0, 4
  %s10 = int_to_ptr.vmem [resolvable:$true] %s9
  %12 = dma.vmem_to_smem %s10, 16, [#allocation3], [#allocation2]
  %13 = dma.done [#allocation2], 16
  %14 = sfence
  $region1: #{transformer_block_forward.6} parent=0
    #allocation4 [shape = 'u8[65536]{0}', space=vmem, size = 0x10000, scoped, tag = 'input window, operand 1']
    #allocation5 [shape = 'u8[65536]{0}', space=vmem, size = 0x10000, scoped, tag = 'input window, operand 2']
    #allocation6 [shape = 'u8[65536]{0}', space=vmem, size = 0x10000, scoped, tag = 'input window, operand 3']
    loop: start=0, step=1, limit=4
    $region2: #{transformer_block_forward.6} parent=1 // loop_pre_header
      _
    $region3: #{transformer_block_forward.6} parent=1 // loop_header
      %s16 = sphi 0, %s20
      %p17 = scmp.ge.s32.totalorder %s16, 4
      %s23 = sphi 0, %s35
      %s24 = sphi 0, %s31
      %s25 = sphi 0, %s23
      %s26 = sphi 0, %s24
      %s27 = sphi 0, %s25
      %s28 = sphi 0, %s26
      %s40 = sphi 0, %s42
      %s43 = sphi 0, %s40
      %s44 = sphi 0, %s43
      %s60 = sphi 0, %s44
      %s66 = sphi 0, %s68
      %s69 = sphi 0, %s66
      %s70 = sphi 0, %s69
      %s86 = sphi 0, %s70
      %s92 = sphi 0, %s94
      %s95 = sphi 0, %s92
      %s96 = sphi 0, %s95
      %s112 = sphi 0, %s96
      %s120 = sphi 0, %s122
      %s123 = sphi 0, %s120
      %s124 = sphi 0, %s123
      %s140 = sphi 0, %s124
    $region4: #{transformer_block_forward.6} parent=1 // loop_header_branch
      %19 = sbr.rel (%p17) target = $region8
    $region5: #{transformer_block_forward.6} parent=1 // loop_body
      %s21 = ssub.s32 %s16, 1
      %s22 = ssub.s32 %s16, 2
      %s29 = sadd.s32 1, %s24
      %p30 = scmp.ge.s32.totalorder %s29, 1
      %s31 = scalar_select %p30, 0, %s29
      %s32 = sadd.s32 1, %s23
      %s33 = scalar_select %p30, %s32, %s23
      %p34 = scmp.ge.s32.totalorder %s33, 2
      %s35 = scalar_select %p34, 0, %s33
      %s36 = ssub.s32 %s23, %s35
      %s37 = ssub.s32 %s24, %s31
      %s38 = sor.u32 %s36, %s37
      %p39 = scmp.eq.s32.totalorder %s38, 0
      %s41 = sadd.s32 %s40, 1
      %s42 = scalar_select %p39, %s40, %s41
      %p45 = pneg %p39
      %p46 = scmp.eq.s32.totalorder %s16, 1
      %p47 = por %p45, %p46
      %p48 = scmp.ne.s32.totalorder %s40, %s43
      %p49 = scmp.eq.s32.totalorder %s16, 0
      %p50 = por %p48, %p49
      %p51 = scmp.ne.s32.totalorder %s40, %s43
      %p52 = scmp.eq.s32.totalorder %s21, 1
      %p53 = por %p51, %p52
      %p54 = scmp.ne.s32.totalorder %s43, %s44
      %p55 = scmp.eq.s32.totalorder %s21, 0
      %p56 = por %p54, %p55
      %p57 = scmp.ne.s32.totalorder %s43, %s44
      %p58 = scmp.eq.s32.totalorder %s22, 1
      %p59 = por %p57, %p58
      %p61 = scmp.ne.s32.totalorder %s44, %s60
      %p62 = scmp.eq.s32.totalorder %s22, 0
      %p63 = por %p61, %p62
      %s64 = ssub.s32 %s23, %s35
      %p65 = scmp.eq.s32.totalorder %s64, 0
      %s67 = sadd.s32 %s66, 1
      %s68 = scalar_select %p65, %s66, %s67
      %p71 = pneg %p65
      %p72 = scmp.eq.s32.totalorder %s16, 1
      %p73 = por %p71, %p72
      %p74 = scmp.ne.s32.totalorder %s66, %s69
      %p75 = scmp.eq.s32.totalorder %s16, 0
      %p76 = por %p74, %p75
      %p77 = scmp.ne.s32.totalorder %s66, %s69
      %p78 = scmp.eq.s32.totalorder %s21, 1
      %p79 = por %p77, %p78
      %p80 = scmp.ne.s32.totalorder %s69, %s70
      %p81 = scmp.eq.s32.totalorder %s21, 0
      %p82 = por %p80, %p81
      %p83 = scmp.ne.s32.totalorder %s69, %s70
      %p84 = scmp.eq.s32.totalorder %s22, 1
      %p85 = por %p83, %p84
      %p87 = scmp.ne.s32.totalorder %s70, %s86
      %p88 = scmp.eq.s32.totalorder %s22, 0
      %p89 = por %p87, %p88
      %s90 = ssub.s32 %s23, %s35
      %p91 = scmp.eq.s32.totalorder %s90, 0
      %s93 = sadd.s32 %s92, 1
      %s94 = scalar_select %p91, %s92, %s93
      %p97 = pneg %p91
      %p98 = scmp.eq.s32.totalorder %s16, 1
      %p99 = por %p97, %p98
      %p100 = scmp.ne.s32.totalorder %s92, %s95
      %p101 = scmp.eq.s32.totalorder %s16, 0
      %p102 = por %p100, %p101
      %p103 = scmp.ne.s32.totalorder %s92, %s95
      %p104 = scmp.eq.s32.totalorder %s21, 1
      %p105 = por %p103, %p104
      %p106 = scmp.ne.s32.totalorder %s95, %s96
      %p107 = scmp.eq.s32.totalorder %s21, 0
      %p108 = por %p106, %p107
      %p109 = scmp.ne.s32.totalorder %s95, %s96
      %p110 = scmp.eq.s32.totalorder %s22, 1
      %p111 = por %p109, %p110
      %p113 = scmp.ne.s32.totalorder %s96, %s112
      %p114 = scmp.eq.s32.totalorder %s22, 0
      %p115 = por %p113, %p114
      %s116 = ssub.s32 %s23, %s35
      %s117 = ssub.s32 %s24, %s31
      %s118 = sor.u32 %s116, %s117
      %p119 = scmp.eq.s32.totalorder %s118, 0
      %s121 = sadd.s32 %s120, 1
      %s122 = scalar_select %p119, %s120, %s121
      %p125 = pneg %p119
      %p126 = scmp.eq.s32.totalorder %s16, 1
      %p127 = por %p125, %p126
      %p128 = scmp.ne.s32.totalorder %s120, %s123
      %p129 = scmp.eq.s32.totalorder %s16, 0
      %p130 = por %p128, %p129
      %p131 = scmp.ne.s32.totalorder %s120, %s123
      %p132 = scmp.eq.s32.totalorder %s21, 1
      %p133 = por %p131, %p132
      %p134 = scmp.ne.s32.totalorder %s123, %s124
      %p135 = scmp.eq.s32.totalorder %s21, 0
      %p136 = por %p134, %p135
      %p137 = scmp.ne.s32.totalorder %s123, %s124
      %p138 = scmp.eq.s32.totalorder %s22, 1
      %p139 = por %p137, %p138
      %p141 = scmp.ne.s32.totalorder %s124, %s140
      %p142 = scmp.eq.s32.totalorder %s22, 0
      %p143 = por %p141, %p142
      %p144 = scmp.le.s32.totalorder 1, %s16
      %p145 = scmp.lt.s32.totalorder %s16, 3
      %p146 = pnand %p144, %p145
      %p147 = pneg %p146
      // Predicated region
      $region9: #{transformer_block_forward.6} parent=5 // pred_check
        _
      $region10: #{transformer_block_forward.6} parent=5 // pred_check_branch
        %149 = sbr.rel (%p146) target = $region12
      $region11: #{transformer_block_forward.6} parent=5 // pred_region
        %s150 = ssub.s32 %s16, 1
      $region12: #{transformer_block_forward.6} parent=5 // pred_fallthru
        _
      %p151 = scmp.lt.s32.totalorder %s16, 2
      // Predicated region
      $region13: #{transformer_block_forward.6} parent=5 // pred_check
        %p152 = pneg %p151
      $region14: #{transformer_block_forward.6} parent=5 // pred_check_branch
        %154 = sbr.rel (%p152) target = $region16
      $region15: #{transformer_block_forward.6} parent=5 // pred_region
        // Predicated region
        $region17: #{transformer_block_forward.6} parent=15 // pred_check
          %p155 = pneg %p50
        $region18: #{transformer_block_forward.6} parent=15 // pred_check_branch
          %157 = sbr.rel (%p155) target = $region20
        $region19: #{transformer_block_forward.6} parent=15 // pred_region
          %s158 = sand.u32 %s40, 1
          %s159 = sand.u32 %s40, 1
          %s160 = smul.addr %s159, 64
          %s161 = scalar_lea.vmem [#allocation4], %s160
          %s162 = smul.u32 16, %s24
          %s163 = smul.addr %s162, 3
          %s164 = smul.addr %s23, 48
          %s165 = sadd.s32 %s163, %s164
          %s166 = smul.addr %s165, 4
          %s167 = scalar_lea.vmem %s1, %s166
          // Predicated region
          $region21: #{transformer_block_forward.6} parent=19 // pred_check
            _
          $region22: #{transformer_block_forward.6} parent=19 // pred_check_branch
            %169 = sbr.rel (0) target = $region24
          $region23: #{transformer_block_forward.6} parent=19 // pred_region
            // Predicated region
            $region25: #{transformer_block_forward.6} parent=23 // pred_check
              _
            $region26: #{transformer_block_forward.6} parent=23 // pred_check_branch
              %171 = sbr.rel target = $region28
            $region27: #{transformer_block_forward.6} parent=23 // pred_region
              // Predicated region
              $region40: #{transformer_block_forward.6} parent=27 // pred_check
                _
              $region41: #{transformer_block_forward.6} parent=27 // pred_check_branch
                %216 = sbr.rel (0) target = $region43
              $region42: #{transformer_block_forward.6} parent=27 // pred_region
                loop: start=0, step=1, limit=1
                $region44: #{transformer_block_forward.6} parent=42 // loop_pre_header
                  _
                $region45: #{transformer_block_forward.6} parent=42 // loop_header
                  %s218 = sphi 0, %s222
                  %p219 = scmp.ge.s32.totalorder %s218, 1
                  %s223 = sphi %s167, %s167
                  %s224 = sphi %s161, %s161
                $region46: #{transformer_block_forward.6} parent=42 // loop_header_branch
                  %221 = sbr.rel (%p219) target = $region50
                $region47: #{transformer_block_forward.6} parent=42 // loop_body
                  _
                $region48: #{transformer_block_forward.6} parent=42 // loop_footer
                  %s222 = sadd.s32 1, %s218
                $region49: #{transformer_block_forward.6} parent=42 // loop_footer_branch
                  %217 = sbr.rel target = $region45
                $region50: #{transformer_block_forward.6} parent=42 // loop_exit
                  _
                loop: start=0, step=1, limit=1
                $region51: #{transformer_block_forward.6} parent=42 // loop_pre_header
                  _
                $region52: #{transformer_block_forward.6} parent=42 // loop_header
                  %s227 = sphi 0, %s231
                  %p228 = scmp.ge.s32.totalorder %s227, 1
                  %s232 = sphi %s167, %s167
                  %s233 = sphi %s161, %s161
                $region53: #{transformer_block_forward.6} parent=42 // loop_header_branch
                  %230 = sbr.rel (%p228) target = $region57
                $region54: #{transformer_block_forward.6} parent=42 // loop_body
                  %v234 = vld [vmem:[%s232] sm:$0xf]
                  %235 = vst [vmem:[%s233] sm:$0xf] %v234
                  %v236 = vld [vmem:[%s232 + $0xc] sm:$0xf]
                  %237 = vst [vmem:[%s233 + $0x4] sm:$0xf] %v236
                  %v238 = vld [vmem:[%s232 + $0x18] sm:$0xf]
                  %239 = vst [vmem:[%s233 + $0x8] sm:$0xf] %v238
                  %v240 = vld [vmem:[%s232 + $0x24] sm:$0xf]
                  %241 = vst [vmem:[%s233 + $0xc] sm:$0xf] %v240
                  %v242 = vld [vmem:[%s232 + $0x30] sm:$0xf]
                  %243 = vst [vmem:[%s233 + $0x10] sm:$0xf] %v242
                  %v244 = vld [vmem:[%s232 + $0x3c] sm:$0xf]
                  %245 = vst [vmem:[%s233 + $0x14] sm:$0xf] %v244
                  %v246 = vld [vmem:[%s232 + $0x48] sm:$0xf]
                  %247 = vst [vmem:[%s233 + $0x18] sm:$0xf] %v246
                  %v248 = vld [vmem:[%s232 + $0x54] sm:$0xf]
                  %249 = vst [vmem:[%s233 + $0x1c] sm:$0xf] %v248
                  %v250 = vld [vmem:[%s232 + $0x60] sm:$0xf]
                  %251 = vst [vmem:[%s233 + $0x20] sm:$0xf] %v250
                  %v252 = vld [vmem:[%s232 + $0x6c] sm:$0xf]
                  %253 = vst [vmem:[%s233 + $0x24] sm:$0xf] %v252
                  %v254 = vld [vmem:[%s232 + $0x78] sm:$0xf]
                  %255 = vst [vmem:[%s233 + $0x28] sm:$0xf] %v254
                  %v256 = vld [vmem:[%s232 + $0x84] sm:$0xf]
                  %257 = vst [vmem:[%s233 + $0x2c] sm:$0xf] %v256
                  %v258 = vld [vmem:[%s232 + $0x90] sm:$0xf]
                  %259 = vst [vmem:[%s233 + $0x30] sm:$0xf] %v258
                  %v260 = vld [vmem:[%s232 + $0x9c] sm:$0xf]
                  %261 = vst [vmem:[%s233 + $0x34] sm:$0xf] %v260
                  %v262 = vld [vmem:[%s232 + $0xa8] sm:$0xf]
                  %263 = vst [vmem:[%s233 + $0x38] sm:$0xf] %v262
                  %v264 = vld [vmem:[%s232 + $0xb4] sm:$0xf]
                  %265 = vst [vmem:[%s233 + $0x3c] sm:$0xf] %v264
                $region55: #{transformer_block_forward.6} parent=42 // loop_footer
                  %s231 = sadd.s32 1, %s227
                $region56: #{transformer_block_forward.6} parent=42 // loop_footer_branch
                  %226 = sbr.rel target = $region52
                $region57: #{transformer_block_forward.6} parent=42 // loop_exit
                  _
              $region43: #{transformer_block_forward.6} parent=27 // pred_fallthru
                _
            $region28: #{transformer_block_forward.6} parent=23 // pred_fallthru
              _
            // Predicated region
            $region29: #{transformer_block_forward.6} parent=23 // pred_check
              _
            $region30: #{transformer_block_forward.6} parent=23 // pred_check_branch
              %173 = sbr.rel (0) target = $region32
            $region31: #{transformer_block_forward.6} parent=23 // pred_region
              loop: start=0, step=1, limit=1
              $region33: #{transformer_block_forward.6} parent=31 // loop_pre_header
                _
              $region34: #{transformer_block_forward.6} parent=31 // loop_header
                %s176 = sphi 0, %s180
                %p177 = scmp.ge.s32.totalorder %s176, 1
                %s181 = sphi %s167, %s167
                %s182 = sphi %s161, %s161
              $region35: #{transformer_block_forward.6} parent=31 // loop_header_branch
                %179 = sbr.rel (%p177) target = $region39
              $region36: #{transformer_block_forward.6} parent=31 // loop_body
                %v183 = vld [vmem:[%s181] sm:$0xf]
                %184 = vst [vmem:[%s182] sm:$0xf] %v183
                %v185 = vld [vmem:[%s181 + $0xc] sm:$0xf]
                %186 = vst [vmem:[%s182 + $0x4] sm:$0xf] %v185
                %v187 = vld [vmem:[%s181 + $0x18] sm:$0xf]
                %188 = vst [vmem:[%s182 + $0x8] sm:$0xf] %v187
                %v189 = vld [vmem:[%s181 + $0x24] sm:$0xf]
                %190 = vst [vmem:[%s182 + $0xc] sm:$0xf] %v189
                %v191 = vld [vmem:[%s181 + $0x30] sm:$0xf]
                %192 = vst [vmem:[%s182 + $0x10] sm:$0xf] %v191
                %v193 = vld [vmem:[%s181 + $0x3c] sm:$0xf]
                %194 = vst [vmem:[%s182 + $0x14] sm:$0xf] %v193
                %v195 = vld [vmem:[%s181 + $0x48] sm:$0xf]
                %196 = vst [vmem:[%s182 + $0x18] sm:$0xf] %v195
                %v197 = vld [vmem:[%s181 + $0x54] sm:$0xf]
                %198 = vst [vmem:[%s182 + $0x1c] sm:$0xf] %v197
                %v199 = vld [vmem:[%s181 + $0x60] sm:$0xf]
                %200 = vst [vmem:[%s182 + $0x20] sm:$0xf] %v199
                %v201 = vld [vmem:[%s181 + $0x6c] sm:$0xf]
                %202 = vst [vmem:[%s182 + $0x24] sm:$0xf] %v201
                %v203 = vld [vmem:[%s181 + $0x78] sm:$0xf]
                %204 = vst [vmem:[%s182 + $0x28] sm:$0xf] %v203
                %v205 = vld [vmem:[%s181 + $0x84] sm:$0xf]
                %206 = vst [vmem:[%s182 + $0x2c] sm:$0xf] %v205
                %v207 = vld [vmem:[%s181 + $0x90] sm:$0xf]
                %208 = vst [vmem:[%s182 + $0x30] sm:$0xf] %v207
                %v209 = vld [vmem:[%s181 + $0x9c] sm:$0xf]
                %210 = vst [vmem:[%s182 + $0x34] sm:$0xf] %v209
                %v211 = vld [vmem:[%s181 + $0xa8] sm:$0xf]
                %212 = vst [vmem:[%s182 + $0x38] sm:$0xf] %v211
                %v213 = vld [vmem:[%s181 + $0xb4] sm:$0xf]
                %214 = vst [vmem:[%s182 + $0x3c] sm:$0xf] %v213
              $region37: #{transformer_block_forward.6} parent=31 // loop_footer
                %s180 = sadd.s32 1, %s176
              $region38: #{transformer_block_forward.6} parent=31 // loop_footer_branch
                %175 = sbr.rel target = $region34
              $region39: #{transformer_block_forward.6} parent=31 // loop_exit
                _
            $region32: #{transformer_block_forward.6} parent=23 // pred_fallthru
              _
          $region24: #{transformer_block_forward.6} parent=19 // pred_fallthru
            _
          %266 = vnop
        $region20: #{transformer_block_forward.6} parent=15 // pred_fallthru
          _
        // Predicated region
        $region58: #{transformer_block_forward.6} parent=15 // pred_check
          %p267 = pneg %p76
        $region59: #{transformer_block_forward.6} parent=15 // pred_check_branch
          %269 = sbr.rel (%p267) target = $region61
        $region60: #{transformer_block_forward.6} parent=15 // pred_region
          %s270 = sand.u32 %s66, 1
          %s271 = sand.u32 %s66, 1
          %s272 = smul.addr %s271, 64
          %s273 = scalar_lea.vmem [#allocation5], %s272
          %s274 = smul.addr %s23, 48
          %s275 = sadd.s32 1, %s274
          %s276 = smul.addr %s275, 4
          %s277 = scalar_lea.vmem %s2, %s276
          // Predicated region
          $region62: #{transformer_block_forward.6} parent=60 // pred_check
            _
          $region63: #{transformer_block_forward.6} parent=60 // pred_check_branch
            %279 = sbr.rel (0) target = $region65
          $region64: #{transformer_block_forward.6} parent=60 // pred_region
            // Predicated region
            $region66: #{transformer_block_forward.6} parent=64 // pred_check
              _
            $region67: #{transformer_block_forward.6} parent=64 // pred_check_branch
              %281 = sbr.rel target = $region69
            $region68: #{transformer_block_forward.6} parent=64 // pred_region
              // Predicated region
              $region81: #{transformer_block_forward.6} parent=68 // pred_check
                _
              $region82: #{transformer_block_forward.6} parent=68 // pred_check_branch
                %326 = sbr.rel (0) target = $region84
              $region83: #{transformer_block_forward.6} parent=68 // pred_region
                loop: start=0, step=1, limit=1
                $region85: #{transformer_block_forward.6} parent=83 // loop_pre_header
                  _
                $region86: #{transformer_block_forward.6} parent=83 // loop_header
                  %s328 = sphi 0, %s332
                  %p329 = scmp.ge.s32.totalorder %s328, 1
                  %s333 = sphi %s277, %s277
                  %s334 = sphi %s273, %s273
                $region87: #{transformer_block_forward.6} parent=83 // loop_header_branch
                  %331 = sbr.rel (%p329) target = $region91
                $region88: #{transformer_block_forward.6} parent=83 // loop_body
                  _
                $region89: #{transformer_block_forward.6} parent=83 // loop_footer
                  %s332 = sadd.s32 1, %s328
                $region90: #{transformer_block_forward.6} parent=83 // loop_footer_branch
                  %327 = sbr.rel target = $region86
                $region91: #{transformer_block_forward.6} parent=83 // loop_exit
                  _
                loop: start=0, step=1, limit=1
                $region92: #{transformer_block_forward.6} parent=83 // loop_pre_header
                  _
                $region93: #{transformer_block_forward.6} parent=83 // loop_header
                  %s337 = sphi 0, %s341
                  %p338 = scmp.ge.s32.totalorder %s337, 1
                  %s342 = sphi %s277, %s277
                  %s343 = sphi %s273, %s273
                $region94: #{transformer_block_forward.6} parent=83 // loop_header_branch
                  %340 = sbr.rel (%p338) target = $region98
                $region95: #{transformer_block_forward.6} parent=83 // loop_body
                  %v344 = vld [vmem:[%s342] sm:$0xf]
                  %345 = vst [vmem:[%s343] sm:$0xf] %v344
                  %v346 = vld [vmem:[%s342 + $0xc] sm:$0xf]
                  %347 = vst [vmem:[%s343 + $0x4] sm:$0xf] %v346
                  %v348 = vld [vmem:[%s342 + $0x18] sm:$0xf]
                  %349 = vst [vmem:[%s343 + $0x8] sm:$0xf] %v348
                  %v350 = vld [vmem:[%s342 + $0x24] sm:$0xf]
                  %351 = vst [vmem:[%s343 + $0xc] sm:$0xf] %v350
                  %v352 = vld [vmem:[%s342 + $0x30] sm:$0xf]
                  %353 = vst [vmem:[%s343 + $0x10] sm:$0xf] %v352
                  %v354 = vld [vmem:[%s342 + $0x3c] sm:$0xf]
                  %355 = vst [vmem:[%s343 + $0x14] sm:$0xf] %v354
                  %v356 = vld [vmem:[%s342 + $0x48] sm:$0xf]
                  %357 = vst [vmem:[%s343 + $0x18] sm:$0xf] %v356
                  %v358 = vld [vmem:[%s342 + $0x54] sm:$0xf]
                  %359 = vst [vmem:[%s343 + $0x1c] sm:$0xf] %v358
                  %v360 = vld [vmem:[%s342 + $0x60] sm:$0xf]
                  %361 = vst [vmem:[%s343 + $0x20] sm:$0xf] %v360
                  %v362 = vld [vmem:[%s342 + $0x6c] sm:$0xf]
                  %363 = vst [vmem:[%s343 + $0x24] sm:$0xf] %v362
                  %v364 = vld [vmem:[%s342 + $0x78] sm:$0xf]
                  %365 = vst [vmem:[%s343 + $0x28] sm:$0xf] %v364
                  %v366 = vld [vmem:[%s342 + $0x84] sm:$0xf]
                  %367 = vst [vmem:[%s343 + $0x2c] sm:$0xf] %v366
                  %v368 = vld [vmem:[%s342 + $0x90] sm:$0xf]
                  %369 = vst [vmem:[%s343 + $0x30] sm:$0xf] %v368
                  %v370 = vld [vmem:[%s342 + $0x9c] sm:$0xf]
                  %371 = vst [vmem:[%s343 + $0x34] sm:$0xf] %v370
                  %v372 = vld [vmem:[%s342 + $0xa8] sm:$0xf]
                  %373 = vst [vmem:[%s343 + $0x38] sm:$0xf] %v372
                  %v374 = vld [vmem:[%s342 + $0xb4] sm:$0xf]
                  %375 = vst [vmem:[%s343 + $0x3c] sm:$0xf] %v374
                $region96: #{transformer_block_forward.6} parent=83 // loop_footer
                  %s341 = sadd.s32 1, %s337
                $region97: #{transformer_block_forward.6} parent=83 // loop_footer_branch
                  %336 = sbr.rel target = $region93
                $region98: #{transformer_block_forward.6} parent=83 // loop_exit
                  _
              $region84: #{transformer_block_forward.6} parent=68 // pred_fallthru
                _
            $region69: #{transformer_block_forward.6} parent=64 // pred_fallthru
              _
            // Predicated region
            $region70: #{transformer_block_forward.6} parent=64 // pred_check
              _
            $region71: #{transformer_block_forward.6} parent=64 // pred_check_branch
              %283 = sbr.rel (0) target = $region73
            $region72: #{transformer_block_forward.6} parent=64 // pred_region
              loop: start=0, step=1, limit=1
              $region74: #{transformer_block_forward.6} parent=72 // loop_pre_header
                _
              $region75: #{transformer_block_forward.6} parent=72 // loop_header
                %s286 = sphi 0, %s290
                %p287 = scmp.ge.s32.totalorder %s286, 1
                %s291 = sphi %s277, %s277
                %s292 = sphi %s273, %s273
              $region76: #{transformer_block_forward.6} parent=72 // loop_header_branch
                %289 = sbr.rel (%p287) target = $region80
              $region77: #{transformer_block_forward.6} parent=72 // loop_body
                %v293 = vld [vmem:[%s291] sm:$0xf]
                %294 = vst [vmem:[%s292] sm:$0xf] %v293
                %v295 = vld [vmem:[%s291 + $0xc] sm:$0xf]
                %296 = vst [vmem:[%s292 + $0x4] sm:$0xf] %v295
                %v297 = vld [vmem:[%s291 + $0x18] sm:$0xf]
                %298 = vst [vmem:[%s292 + $0x8] sm:$0xf] %v297
                %v299 = vld [vmem:[%s291 + $0x24] sm:$0xf]
                %300 = vst [vmem:[%s292 + $0xc] sm:$0xf] %v299
                %v301 = vld [vmem:[%s291 + $0x30] sm:$0xf]
                %302 = vst [vmem:[%s292 + $0x10] sm:$0xf] %v301
                %v303 = vld [vmem:[%s291 + $0x3c] sm:$0xf]
                %304 = vst [vmem:[%s292 + $0x14] sm:$0xf] %v303
                %v305 = vld [vmem:[%s291 + $0x48] sm:$0xf]
                %306 = vst [vmem:[%s292 + $0x18] sm:$0xf] %v305
                %v307 = vld [vmem:[%s291 + $0x54] sm:$0xf]
                %308 = vst [vmem:[%s292 + $0x1c] sm:$0xf] %v307
                %v309 = vld [vmem:[%s291 + $0x60] sm:$0xf]
                %310 = vst [vmem:[%s292 + $0x20] sm:$0xf] %v309
                %v311 = vld [vmem:[%s291 + $0x6c] sm:$0xf]
                %312 = vst [vmem:[%s292 + $0x24] sm:$0xf] %v311
                %v313 = vld [vmem:[%s291 + $0x78] sm:$0xf]
                %314 = vst [vmem:[%s292 + $0x28] sm:$0xf] %v313
                %v315 = vld [vmem:[%s291 + $0x84] sm:$0xf]
                %316 = vst [vmem:[%s292 + $0x2c] sm:$0xf] %v315
                %v317 = vld [vmem:[%s291 + $0x90] sm:$0xf]
                %318 = vst [vmem:[%s292 + $0x30] sm:$0xf] %v317
                %v319 = vld [vmem:[%s291 + $0x9c] sm:$0xf]
                %320 = vst [vmem:[%s292 + $0x34] sm:$0xf] %v319
                %v321 = vld [vmem:[%s291 + $0xa8] sm:$0xf]
                %322 = vst [vmem:[%s292 + $0x38] sm:$0xf] %v321
                %v323 = vld [vmem:[%s291 + $0xb4] sm:$0xf]
                %324 = vst [vmem:[%s292 + $0x3c] sm:$0xf] %v323
              $region78: #{transformer_block_forward.6} parent=72 // loop_footer
                %s290 = sadd.s32 1, %s286
              $region79: #{transformer_block_forward.6} parent=72 // loop_footer_branch
                %285 = sbr.rel target = $region75
              $region80: #{transformer_block_forward.6} parent=72 // loop_exit
                _
            $region73: #{transformer_block_forward.6} parent=64 // pred_fallthru
              _
          $region65: #{transformer_block_forward.6} parent=60 // pred_fallthru
            _
          %376 = vnop
        $region61: #{transformer_block_forward.6} parent=15 // pred_fallthru
          _
        // Predicated region
        $region99: #{transformer_block_forward.6} parent=15 // pred_check
          %p377 = pneg %p102
        $region100: #{transformer_block_forward.6} parent=15 // pred_check_branch
          %379 = sbr.rel (%p377) target = $region102
        $region101: #{transformer_block_forward.6} parent=15 // pred_region
          %s380 = sand.u32 %s92, 1
          %s381 = sand.u32 %s92, 1
          %s382 = smul.addr %s381, 64
          %s383 = scalar_lea.vmem [#allocation6], %s382
          %s384 = smul.addr %s23, 48
          %s385 = sadd.s32 2, %s384
          %s386 = smul.addr %s385, 4
          %s387 = scalar_lea.vmem %s3, %s386
          // Predicated region
          $region103: #{transformer_block_forward.6} parent=101 // pred_check
            _
          $region104: #{transformer_block_forward.6} parent=101 // pred_check_branch
            %389 = sbr.rel (0) target = $region106
          $region105: #{transformer_block_forward.6} parent=101 // pred_region
            // Predicated region
            $region107: #{transformer_block_forward.6} parent=105 // pred_check
              _
            $region108: #{transformer_block_forward.6} parent=105 // pred_check_branch
              %391 = sbr.rel target = $region110
            $region109: #{transformer_block_forward.6} parent=105 // pred_region
              // Predicated region
              $region122: #{transformer_block_forward.6} parent=109 // pred_check
                _
              $region123: #{transformer_block_forward.6} parent=109 // pred_check_branch
                %436 = sbr.rel (0) target = $region125
              $region124: #{transformer_block_forward.6} parent=109 // pred_region
                loop: start=0, step=1, limit=1
                $region126: #{transformer_block_forward.6} parent=124 // loop_pre_header
                  _
                $region127: #{transformer_block_forward.6} parent=124 // loop_header
                  %s438 = sphi 0, %s442
                  %p439 = scmp.ge.s32.totalorder %s438, 1
                  %s443 = sphi %s387, %s387
                  %s444 = sphi %s383, %s383
                $region128: #{transformer_block_forward.6} parent=124 // loop_header_branch
                  %441 = sbr.rel (%p439) target = $region132
                $region129: #{transformer_block_forward.6} parent=124 // loop_body
                  _
                $region130: #{transformer_block_forward.6} parent=124 // loop_footer
                  %s442 = sadd.s32 1, %s438
                $region131: #{transformer_block_forward.6} parent=124 // loop_footer_branch
                  %437 = sbr.rel target = $region127
                $region132: #{transformer_block_forward.6} parent=124 // loop_exit
                  _
                loop: start=0, step=1, limit=1
                $region133: #{transformer_block_forward.6} parent=124 // loop_pre_header
                  _
                $region134: #{transformer_block_forward.6} parent=124 // loop_header
                  %s447 = sphi 0, %s451
                  %p448 = scmp.ge.s32.totalorder %s447, 1
                  %s452 = sphi %s387, %s387
                  %s453 = sphi %s383, %s383
                $region135: #{transformer_block_forward.6} parent=124 // loop_header_branch
                  %450 = sbr.rel (%p448) target = $region139
                $region136: #{transformer_block_forward.6} parent=124 // loop_body
                  %v454 = vld [vmem:[%s452] sm:$0xf]
                  %455 = vst [vmem:[%s453] sm:$0xf] %v454
                  %v456 = vld [vmem:[%s452 + $0xc] sm:$0xf]
                  %457 = vst [vmem:[%s453 + $0x4] sm:$0xf] %v456
                  %v458 = vld [vmem:[%s452 + $0x18] sm:$0xf]
                  %459 = vst [vmem:[%s453 + $0x8] sm:$0xf] %v458
                  %v460 = vld [vmem:[%s452 + $0x24] sm:$0xf]
                  %461 = vst [vmem:[%s453 + $0xc] sm:$0xf] %v460
                  %v462 = vld [vmem:[%s452 + $0x30] sm:$0xf]
                  %463 = vst [vmem:[%s453 + $0x10] sm:$0xf] %v462
                  %v464 = vld [vmem:[%s452 + $0x3c] sm:$0xf]
                  %465 = vst [vmem:[%s453 + $0x14] sm:$0xf] %v464
                  %v466 = vld [vmem:[%s452 + $0x48] sm:$0xf]
                  %467 = vst [vmem:[%s453 + $0x18] sm:$0xf] %v466
                  %v468 = vld [vmem:[%s452 + $0x54] sm:$0xf]
                  %469 = vst [vmem:[%s453 + $0x1c] sm:$0xf] %v468
                  %v470 = vld [vmem:[%s452 + $0x60] sm:$0xf]
                  %471 = vst [vmem:[%s453 + $0x20] sm:$0xf] %v470
                  %v472 = vld [vmem:[%s452 + $0x6c] sm:$0xf]
                  %473 = vst [vmem:[%s453 + $0x24] sm:$0xf] %v472
                  %v474 = vld [vmem:[%s452 + $0x78] sm:$0xf]
                  %475 = vst [vmem:[%s453 + $0x28] sm:$0xf] %v474
                  %v476 = vld [vmem:[%s452 + $0x84] sm:$0xf]
                  %477 = vst [vmem:[%s453 + $0x2c] sm:$0xf] %v476
                  %v478 = vld [vmem:[%s452 + $0x90] sm:$0xf]
                  %479 = vst [vmem:[%s453 + $0x30] sm:$0xf] %v478
                  %v480 = vld [vmem:[%s452 + $0x9c] sm:$0xf]
                  %481 = vst [vmem:[%s453 + $0x34] sm:$0xf] %v480
                  %v482 = vld [vmem:[%s452 + $0xa8] sm:$0xf]
                  %483 = vst [vmem:[%s453 + $0x38] sm:$0xf] %v482
                  %v484 = vld [vmem:[%s452 + $0xb4] sm:$0xf]
                  %485 = vst [vmem:[%s453 + $0x3c] sm:$0xf] %v484
                $region137: #{transformer_block_forward.6} parent=124 // loop_footer
                  %s451 = sadd.s32 1, %s447
                $region138: #{transformer_block_forward.6} parent=124 // loop_footer_branch
                  %446 = sbr.rel target = $region134
                $region139: #{transformer_block_forward.6} parent=124 // loop_exit
                  _
              $region125: #{transformer_block_forward.6} parent=109 // pred_fallthru
                _
            $region110: #{transformer_block_forward.6} parent=105 // pred_fallthru
              _
            // Predicated region
            $region111: #{transformer_block_forward.6} parent=105 // pred_check
              _
            $region112: #{transformer_block_forward.6} parent=105 // pred_check_branch
              %393 = sbr.rel (0) target = $region114
            $region113: #{transformer_block_forward.6} parent=105 // pred_region
              loop: start=0, step=1, limit=1
              $region115: #{transformer_block_forward.6} parent=113 // loop_pre_header
                _
              $region116: #{transformer_block_forward.6} parent=113 // loop_header
                %s396 = sphi 0, %s400
                %p397 = scmp.ge.s32.totalorder %s396, 1
                %s401 = sphi %s387, %s387
                %s402 = sphi %s383, %s383
              $region117: #{transformer_block_forward.6} parent=113 // loop_header_branch
                %399 = sbr.rel (%p397) target = $region121
              $region118: #{transformer_block_forward.6} parent=113 // loop_body
                %v403 = vld [vmem:[%s401] sm:$0xf]
                %404 = vst [vmem:[%s402] sm:$0xf] %v403
                %v405 = vld [vmem:[%s401 + $0xc] sm:$0xf]
                %406 = vst [vmem:[%s402 + $0x4] sm:$0xf] %v405
                %v407 = vld [vmem:[%s401 + $0x18] sm:$0xf]
                %408 = vst [vmem:[%s402 + $0x8] sm:$0xf] %v407
                %v409 = vld [vmem:[%s401 + $0x24] sm:$0xf]
                %410 = vst [vmem:[%s402 + $0xc] sm:$0xf] %v409
                %v411 = vld [vmem:[%s401 + $0x30] sm:$0xf]
                %412 = vst [vmem:[%s402 + $0x10] sm:$0xf] %v411
                %v413 = vld [vmem:[%s401 + $0x3c] sm:$0xf]
                %414 = vst [vmem:[%s402 + $0x14] sm:$0xf] %v413
                %v415 = vld [vmem:[%s401 + $0x48] sm:$0xf]
                %416 = vst [vmem:[%s402 + $0x18] sm:$0xf] %v415
                %v417 = vld [vmem:[%s401 + $0x54] sm:$0xf]
                %418 = vst [vmem:[%s402 + $0x1c] sm:$0xf] %v417
                %v419 = vld [vmem:[%s401 + $0x60] sm:$0xf]
                %420 = vst [vmem:[%s402 + $0x20] sm:$0xf] %v419
                %v421 = vld [vmem:[%s401 + $0x6c] sm:$0xf]
                %422 = vst [vmem:[%s402 + $0x24] sm:$0xf] %v421
                %v423 = vld [vmem:[%s401 + $0x78] sm:$0xf]
                %424 = vst [vmem:[%s402 + $0x28] sm:$0xf] %v423
                %v425 = vld [vmem:[%s401 + $0x84] sm:$0xf]
                %426 = vst [vmem:[%s402 + $0x2c] sm:$0xf] %v425
                %v427 = vld [vmem:[%s401 + $0x90] sm:$0xf]
                %428 = vst [vmem:[%s402 + $0x30] sm:$0xf] %v427
                %v429 = vld [vmem:[%s401 + $0x9c] sm:$0xf]
                %430 = vst [vmem:[%s402 + $0x34] sm:$0xf] %v429
                %v431 = vld [vmem:[%s401 + $0xa8] sm:$0xf]
                %432 = vst [vmem:[%s402 + $0x38] sm:$0xf] %v431
                %v433 = vld [vmem:[%s401 + $0xb4] sm:$0xf]
                %434 = vst [vmem:[%s402 + $0x3c] sm:$0xf] %v433
              $region119: #{transformer_block_forward.6} parent=113 // loop_footer
                %s400 = sadd.s32 1, %s396
              $region120: #{transformer_block_forward.6} parent=113 // loop_footer_branch
                %395 = sbr.rel target = $region116
              $region121: #{transformer_block_forward.6} parent=113 // loop_exit
                _
            $region114: #{transformer_block_forward.6} parent=105 // pred_fallthru
              _
          $region106: #{transformer_block_forward.6} parent=101 // pred_fallthru
            _
          %486 = vnop
        $region102: #{transformer_block_forward.6} parent=15 // pred_fallthru
          _
      $region16: #{transformer_block_forward.6} parent=5 // pred_fallthru
        _
      %p487 = scmp.le.s32.totalorder 1, %s16
      %p488 = scmp.lt.s32.totalorder %s16, 3
      %p489 = pnand %p487, %p488
      %p490 = pneg %p489
      // Predicated region
      $region140: #{transformer_block_forward.6} parent=5 // pred_check
        _
      $region141: #{transformer_block_forward.6} parent=5 // pred_check_branch
        %492 = sbr.rel (%p489) target = $region143
      $region142: #{transformer_block_forward.6} parent=5 // pred_region
        %s493 = ssub.s32 %s16, 1
        %s494 = sand.u32 %s43, 1
        %s495 = sand.u32 %s43, 1
        %s496 = smul.addr %s495, 64
        %s497 = scalar_lea.vmem [#allocation4], %s496
        // Predicated region
        $region144: #{transformer_block_forward.6} parent=142 // pred_check
          %p498 = pneg %p56
        $region145: #{transformer_block_forward.6} parent=142 // pred_check_branch
          %500 = sbr.rel (%p498) target = $region147
        $region146: #{transformer_block_forward.6} parent=142 // pred_region
          _
        $region147: #{transformer_block_forward.6} parent=142 // pred_fallthru
          _
        %s501 = sand.u32 %s69, 1
        %s502 = sand.u32 %s69, 1
        %s503 = smul.addr %s502, 64
        %s504 = scalar_lea.vmem [#allocation5], %s503
        // Predicated region
        $region148: #{transformer_block_forward.6} parent=142 // pred_check
          %p505 = pneg %p82
        $region149: #{transformer_block_forward.6} parent=142 // pred_check_branch
          %507 = sbr.rel (%p505) target = $region151
        $region150: #{transformer_block_forward.6} parent=142 // pred_region
          _
        $region151: #{transformer_block_forward.6} parent=142 // pred_fallthru
          _
        %s508 = sand.u32 %s95, 1
        %s509 = sand.u32 %s95, 1
        %s510 = smul.addr %s509, 64
        %s511 = scalar_lea.vmem [#allocation6], %s510
        // Predicated region
        $region152: #{transformer_block_forward.6} parent=142 // pred_check
          %p512 = pneg %p108
        $region153: #{transformer_block_forward.6} parent=142 // pred_check_branch
          %514 = sbr.rel (%p512) target = $region155
        $region154: #{transformer_block_forward.6} parent=142 // pred_region
          _
        $region155: #{transformer_block_forward.6} parent=142 // pred_fallthru
          _
        %s515 = sand.u32 %s43, 1
        %s516 = sand.u32 %s43, 1
        %s517 = smul.addr %s516, 64
        %s518 = scalar_lea.vmem [#allocation4], %s517
        %p519 = pneg %p56
        %p520 = pneg %p53
        %s521 = sand.u32 %s69, 1
        %s522 = sand.u32 %s69, 1
        %s523 = smul.addr %s522, 64
        %s524 = scalar_lea.vmem [#allocation5], %s523
        %p525 = pneg %p82
        %p526 = pneg %p79
        %s527 = sand.u32 %s95, 1
        %s528 = sand.u32 %s95, 1
        %s529 = smul.addr %s528, 64
        %s530 = scalar_lea.vmem [#allocation6], %s529
        %p531 = pneg %p108
        %p532 = pneg %p105
        %p533 = pneg %p136
        %p534 = pneg %p133
        %s535 = smul.u32 16, %s26
        %p536 = scmp.lt.s32.totalorder %s25, 1
        %s537 = scalar_select %p536, %s25, 1
        %p538 = scmp.lt.s32.totalorder %s535, 15
        %s539 = scalar_select %p538, %s535, 15
        %s540 = smul.addr %s537, 16
        %s541 = sadd.s32 %s539, %s540
        %s542 = smul.addr %s541, 4
        %s543 = scalar_lea.vmem %s4, %s542
        %s544 = smul.u32 16, %s26
        %s545 = smul.u32 16, %s26
        %p546 = scmp.lt.s32.totalorder %s25, 1
        %s547 = scalar_select %p546, %s25, 1
        %p548 = scmp.lt.s32.totalorder %s545, 15
        %s549 = scalar_select %p548, %s545, 15
        %s550 = smul.addr %s547, 16
        %s551 = sadd.s32 %s549, %s550
        %s552 = smul.addr %s551, 4
        %s553 = scalar_lea.vmem %s4, %s552
        %s554 = smul.u32 16, %s26
        %s556 = sld [smem:[#allocation3 + %s25]]
        %v557 = vld [vmem:[%s497] sm:$0xf]
        %v558 = vld [vmem:[%s497 + $0x4] sm:$0xf]
        %v559 = vld [vmem:[%s497 + $0x8] sm:$0xf]
        %v560 = vld [vmem:[%s497 + $0xc] sm:$0xf]
        %v561 = vld [vmem:[%s497 + $0x10] sm:$0xf]
        %v562 = vld [vmem:[%s497 + $0x14] sm:$0xf]
        %v563 = vld [vmem:[%s497 + $0x18] sm:$0xf]
        %v564 = vld [vmem:[%s497 + $0x1c] sm:$0xf]
        %v565 = vld [vmem:[%s497 + $0x20] sm:$0xf]
        %v566 = vld [vmem:[%s497 + $0x24] sm:$0xf]
        %v567 = vld [vmem:[%s497 + $0x28] sm:$0xf]
        %v568 = vld [vmem:[%s497 + $0x2c] sm:$0xf]
        %v569 = vld [vmem:[%s497 + $0x30] sm:$0xf]
        %v570 = vld [vmem:[%s497 + $0x34] sm:$0xf]
        %v571 = vld [vmem:[%s497 + $0x38] sm:$0xf]
        %v572 = vld [vmem:[%s497 + $0x3c] sm:$0xf]
        %v573 = vld [vmem:[%s504] sm:$0xf]
        %v574 = vld [vmem:[%s504 + $0x4] sm:$0xf]
        %v575 = vld [vmem:[%s504 + $0x8] sm:$0xf]
        %v576 = vld [vmem:[%s504 + $0xc] sm:$0xf]
        %v577 = vld [vmem:[%s504 + $0x10] sm:$0xf]
        %v578 = vld [vmem:[%s504 + $0x14] sm:$0xf]
        %v579 = vld [vmem:[%s504 + $0x18] sm:$0xf]
        %v580 = vld [vmem:[%s504 + $0x1c] sm:$0xf]
        %v581 = vld [vmem:[%s504 + $0x20] sm:$0xf]
        %v582 = vld [vmem:[%s504 + $0x24] sm:$0xf]
        %v583 = vld [vmem:[%s504 + $0x28] sm:$0xf]
        %v584 = vld [vmem:[%s504 + $0x2c] sm:$0xf]
        %v585 = vld [vmem:[%s504 + $0x30] sm:$0xf]
        %v586 = vld [vmem:[%s504 + $0x34] sm:$0xf]
        %v587 = vld [vmem:[%s504 + $0x38] sm:$0xf]
        %v588 = vld [vmem:[%s504 + $0x3c] sm:$0xf]
        %v589 = vld [vmem:[%s511] sm:$0xf]
        %v590 = vld [vmem:[%s511 + $0x4] sm:$0xf]
        %v591 = vld [vmem:[%s511 + $0x8] sm:$0xf]
        %v592 = vld [vmem:[%s511 + $0xc] sm:$0xf]
        %v593 = vld [vmem:[%s511 + $0x10] sm:$0xf]
        %v594 = vld [vmem:[%s511 + $0x14] sm:$0xf]
        %v595 = vld [vmem:[%s511 + $0x18] sm:$0xf]
        %v596 = vld [vmem:[%s511 + $0x1c] sm:$0xf]
        %v597 = vld [vmem:[%s511 + $0x20] sm:$0xf]
        %v598 = vld [vmem:[%s511 + $0x24] sm:$0xf]
        %v599 = vld [vmem:[%s511 + $0x28] sm:$0xf]
        %v600 = vld [vmem:[%s511 + $0x2c] sm:$0xf]
        %v601 = vld [vmem:[%s511 + $0x30] sm:$0xf]
        %v602 = vld [vmem:[%s511 + $0x34] sm:$0xf]
        %v603 = vld [vmem:[%s511 + $0x38] sm:$0xf]
        %v604 = vld [vmem:[%s511 + $0x3c] sm:$0xf]
        %v605 = vlaneseq
        %v606 = vand.u32 %v605, 127
        %v607 = vstv %s556
        %vm608 = vcmp.lt.s32.totalorder %v606, %v607
        %v625 = vunpack.c.l.b16 %v557
        %v626 = vunpack.c.l.b16 %v558
        %v627 = vunpack.c.l.b16 %v559
        %v628 = vunpack.c.l.b16 %v560
        %v629 = vunpack.c.l.b16 %v561
        %v630 = vunpack.c.l.b16 %v562
        %v631 = vunpack.c.l.b16 %v563
        %v632 = vunpack.c.l.b16 %v564
        %v633 = vunpack.c.l.b16 %v565
        %v634 = vunpack.c.l.b16 %v566
        %v635 = vunpack.c.l.b16 %v567
        %v636 = vunpack.c.l.b16 %v568
        %v637 = vunpack.c.l.b16 %v569
        %v638 = vunpack.c.l.b16 %v570
        %v639 = vunpack.c.l.b16 %v571
        %v640 = vunpack.c.l.b16 %v572
        %v641 = vpack.c.b16 %v626, %v625
        %v642 = vpack.c.b16 %v628, %v627
        %v643 = vpack.c.b16 %v630, %v629
        %v644 = vpack.c.b16 %v632, %v631
        %v645 = vpack.c.b16 %v634, %v633
        %v646 = vpack.c.b16 %v636, %v635
        %v647 = vpack.c.b16 %v638, %v637
        %v648 = vpack.c.b16 %v640, %v639
        %v665 = vunpack.c.l.b16 %v573
        %v666 = vunpack.c.l.b16 %v574
        %v667 = vunpack.c.l.b16 %v575
        %v668 = vunpack.c.l.b16 %v576
        %v669 = vunpack.c.l.b16 %v577
        %v670 = vunpack.c.l.b16 %v578
        %v671 = vunpack.c.l.b16 %v579
        %v672 = vunpack.c.l.b16 %v580
        %v673 = vunpack.c.l.b16 %v581
        %v674 = vunpack.c.l.b16 %v582
        %v675 = vunpack.c.l.b16 %v583
        %v676 = vunpack.c.l.b16 %v584
        %v677 = vunpack.c.l.b16 %v585
        %v678 = vunpack.c.l.b16 %v586
        %v679 = vunpack.c.l.b16 %v587
        %v680 = vunpack.c.l.b16 %v588
        %v681 = vpack.c.b16 %v666, %v665
        %v682 = vpack.c.b16 %v668, %v667
        %v683 = vpack.c.b16 %v670, %v669
        %v684 = vpack.c.b16 %v672, %v671
        %v685 = vpack.c.b16 %v674, %v673
        %v686 = vpack.c.b16 %v676, %v675
        %v687 = vpack.c.b16 %v678, %v677
        %v688 = vpack.c.b16 %v680, %v679
        %vm689 = vcmask 261120
        %v691 = vsel %vm689, %v641, 0
        %v694 = vsel %vm689, %v642, 0
        %v697 = vsel %vm689, %v643, 0
        %v700 = vsel %vm689, %v644, 0
        %v703 = vsel %vm689, %v645, 0
        %v706 = vsel %vm689, %v646, 0
        %v709 = vsel %vm689, %v647, 0
        %v712 = vsel %vm689, %v648, 0
        %v715 = vsel %vm689, %v681, 0
        %v718 = vsel %vm689, %v682, 0
        %v721 = vsel %vm689, %v683, 0
        %v724 = vsel %vm689, %v684, 0
        %v727 = vsel %vm689, %v685, 0
        %v730 = vsel %vm689, %v686, 0
        %v733 = vsel %vm689, %v687, 0
        %v736 = vsel %vm689, %v688, 0
        %738 = vmatprep.subr.bf16.mxu0 0
        %739 = vmatpush1.bf16.xpose.msra.mxu0 %v715
        %740 = vmatprep.subr.bf16.mxu0 0
        %741 = vmatpush1.bf16.xpose.msra.mxu0 %v718
        %742 = vmatprep.subr.bf16.mxu0 0
        %743 = vmatpush1.bf16.xpose.msra.mxu0 %v721
        %744 = vmatprep.subr.bf16.mxu0 0
        %745 = vmatpush1.bf16.xpose.msra.mxu0 %v724
        %746 = vmatprep.subr.bf16.mxu0 0
        %747 = vmatpush1.bf16.xpose.msra.mxu0 %v727
        %748 = vmatprep.subr.bf16.mxu0 0
        %749 = vmatpush1.bf16.xpose.msra.mxu0 %v730
        %750 = vmatprep.subr.bf16.mxu0 0
        %751 = vmatpush1.bf16.xpose.msra.mxu0 %v733
        %752 = vmatprep.subr.bf16.mxu0 0
        %753 = vmatpush1.bf16.xpose.msra.mxu0 %v736
        %754 = vmatprep.subr.bf16.mxu0 0
        %755 = vmatpush1.bf16.xpose.msra.mxu0 0
        %756 = vmatprep.subr.bf16.mxu0 0
        %757 = vmatpush1.bf16.xpose.msra.mxu0 0
        %758 = vmatprep.subr.bf16.mxu0 0
        %759 = vmatpush1.bf16.xpose.msra.mxu0 0
        %760 = vmatprep.subr.bf16.mxu0 0
        %761 = vmatpush1.bf16.xpose.msra.mxu0 0
        %762 = vmatprep.subr.bf16.mxu0 0
        %763 = vmatpush1.bf16.xpose.msra.mxu0 0
        %764 = vmatprep.subr.bf16.mxu0 0
        %765 = vmatpush1.bf16.xpose.msra.mxu0 0
        %766 = vmatprep.subr.bf16.mxu0 0
        %767 = vmatpush1.bf16.xpose.msra.mxu0 0
        %768 = vmatprep.subr.bf16.mxu0 0
        %769 = vmatpush1.bf16.xpose.msra.mxu0 0
        %770 = vmatprep.mubr.bf16.mxu0 0
        %771 = vmatmul.mubr.bf16.gmra.mrb[0].mxu0 %v691
        %v772 = vpop.f32.mrb[0].mxu0
        %v773 = vadd.f32 0.0, %v772
        %v774 = vpop.f32.mrb[0].mxu0
        %v775 = vpop.f32.mrb[0].mxu0
        %v776 = vadd.f32 0.0, %v775
        %v777 = vpop.f32.mrb[0].mxu0
        %778 = vmatprep.mubr.bf16.mxu0 0
        %779 = vmatmul.mubr.bf16.gmra.mrb[0].mxu0 %v694
        %v780 = vpop.f32.mrb[0].mxu0
        %v781 = vadd.f32 0.0, %v780
        %v782 = vpop.f32.mrb[0].mxu0
        %v783 = vpop.f32.mrb[0].mxu0
        %v784 = vadd.f32 0.0, %v783
        %v785 = vpop.f32.mrb[0].mxu0
        %786 = vmatprep.mubr.bf16.mxu0 0
        %787 = vmatmul.mubr.bf16.gmra.mrb[0].mxu0 %v697
        %v788 = vpop.f32.mrb[0].mxu0
        %v789 = vadd.f32 0.0, %v788
        %v790 = vpop.f32.mrb[0].mxu0
        %v791 = vpop.f32.mrb[0].mxu0
        %v792 = vadd.f32 0.0, %v791
        %v793 = vpop.f32.mrb[0].mxu0
        %794 = vmatprep.mubr.bf16.mxu0 0
        %795 = vmatmul.mubr.bf16.gmra.mrb[0].mxu0 %v700
        %v796 = vpop.f32.mrb[0].mxu0
        %v797 = vadd.f32 0.0, %v796
        %v798 = vpop.f32.mrb[0].mxu0
        %v799 = vpop.f32.mrb[0].mxu0
        %v800 = vadd.f32 0.0, %v799
        %v801 = vpop.f32.mrb[0].mxu0
        %802 = vmatprep.mubr.bf16.mxu0 0
        %803 = vmatmul.mubr.bf16.gmra.mrb[0].mxu0 %v703
        %v804 = vpop.f32.mrb[0].mxu0
        %v805 = vadd.f32 0.0, %v804
        %v806 = vpop.f32.mrb[0].mxu0
        %v807 = vpop.f32.mrb[0].mxu0
        %v808 = vadd.f32 0.0, %v807
        %v809 = vpop.f32.mrb[0].mxu0
        %810 = vmatprep.mubr.bf16.mxu0 0
        %811 = vmatmul.mubr.bf16.gmra.mrb[0].mxu0 %v706
        %v812 = vpop.f32.mrb[0].mxu0
        %v813 = vadd.f32 0.0, %v812
        %v814 = vpop.f32.mrb[0].mxu0
        %v815 = vpop.f32.mrb[0].mxu0
        %v816 = vadd.f32 0.0, %v815
        %v817 = vpop.f32.mrb[0].mxu0
        %818 = vmatprep.mubr.bf16.mxu0 0
        %819 = vmatmul.mubr.bf16.gmra.mrb[0].mxu0 %v709
        %v820 = vpop.f32.mrb[0].mxu0
        %v821 = vadd.f32 0.0, %v820
        %v822 = vpop.f32.mrb[0].mxu0
        %v823 = vpop.f32.mrb[0].mxu0
        %v824 = vadd.f32 0.0, %v823
        %v825 = vpop.f32.mrb[0].mxu0
        %826 = vmatprep.mubr.bf16.mxu0 0
        %827 = vmatmul.mubr.bf16.gmra.mrb[0].mxu0 %v712
        %v828 = vpop.f32.mrb[0].mxu0
        %v829 = vadd.f32 0.0, %v828
        %v830 = vpop.f32.mrb[0].mxu0
        %v831 = vpop.f32.mrb[0].mxu0
        %v832 = vadd.f32 0.0, %v831
        %v833 = vpop.f32.mrb[0].mxu0
        %834 = vdwg.mxu0
        %v835 = vmul.f32 %v773, 0.17677669
        %v836 = vmul.f32 %v776, 0.17677669
        %v837 = vmul.f32 %v781, 0.17677669
        %v838 = vmul.f32 %v784, 0.17677669
        %v839 = vmul.f32 %v789, 0.17677669
        %v840 = vmul.f32 %v792, 0.17677669
        %v841 = vmul.f32 %v797, 0.17677669
        %v842 = vmul.f32 %v800, 0.17677669
        %v843 = vmul.f32 %v805, 0.17677669
        %v844 = vmul.f32 %v808, 0.17677669
        %v845 = vmul.f32 %v813, 0.17677669
        %v846 = vmul.f32 %v816, 0.17677669
        %v847 = vmul.f32 %v821, 0.17677669
        %v848 = vmul.f32 %v824, 0.17677669
        %v849 = vmul.f32 %v829, 0.17677669
        %v850 = vmul.f32 %v832, 0.17677669
        %v851 = vsel %vm608, %v835, -1e+09
        %v852 = vsel %vm608, %v836, -1e+09
        %v853 = vsel %vm608, %v837, -1e+09
        %v854 = vsel %vm608, %v838, -1e+09
        %v855 = vsel %vm608, %v839, -1e+09
        %v856 = vsel %vm608, %v840, -1e+09
        %v857 = vsel %vm608, %v841, -1e+09
        %v858 = vsel %vm608, %v842, -1e+09
        %v859 = vsel %vm608, %v843, -1e+09
        %v860 = vsel %vm608, %v844, -1e+09
        %v861 = vsel %vm608, %v845, -1e+09
        %v862 = vsel %vm608, %v846, -1e+09
        %v863 = vsel %vm608, %v847, -1e+09
        %v864 = vsel %vm608, %v848, -1e+09
        %v865 = vsel %vm608, %v849, -1e+09
        %v866 = vsel %vm608, %v850, -1e+09
        %867 = vmax.xlane.f32.xlu0 %v851
        %v868 = vpop.xlane.xlu0 %867
        %869 = vmax.xlane.f32.xlu0 %v852
        %v870 = vpop.xlane.xlu0 %869
        %871 = vmax.xlane.f32.xlu0 %v853
        %v872 = vpop.xlane.xlu0 %871
        %873 = vmax.xlane.f32.xlu0 %v854
        %v874 = vpop.xlane.xlu0 %873
        %875 = vmax.xlane.f32.xlu0 %v855
        %v876 = vpop.xlane.xlu0 %875
        %877 = vmax.xlane.f32.xlu0 %v856
        %v878 = vpop.xlane.xlu0 %877
        %879 = vmax.xlane.f32.xlu0 %v857
        %v880 = vpop.xlane.xlu0 %879
        %881 = vmax.xlane.f32.xlu0 %v858
        %v882 = vpop.xlane.xlu0 %881
        %883 = vmax.xlane.f32.xlu0 %v859
        %v884 = vpop.xlane.xlu0 %883
        %885 = vmax.xlane.f32.xlu0 %v860
        %v886 = vpop.xlane.xlu0 %885
        %887 = vmax.xlane.f32.xlu0 %v861
        %v888 = vpop.xlane.xlu0 %887
        %889 = vmax.xlane.f32.xlu0 %v862
        %v890 = vpop.xlane.xlu0 %889
        %891 = vmax.xlane.f32.xlu0 %v863
        %v892 = vpop.xlane.xlu0 %891
        %893 = vmax.xlane.f32.xlu0 %v864
        %v894 = vpop.xlane.xlu0 %893
        %895 = vmax.xlane.f32.xlu0 %v865
        %v896 = vpop.xlane.xlu0 %895
        %897 = vmax.xlane.f32.xlu0 %v866
        %v898 = vpop.xlane.xlu0 %897
        %v899 = vsub.f32 %v851, %v868
        %v900 = vsub.f32 %v852, %v870
        %v901 = vsub.f32 %v853, %v872
        %v902 = vsub.f32 %v854, %v874
        %v903 = vsub.f32 %v855, %v876
        %v904 = vsub.f32 %v856, %v878
        %v905 = vsub.f32 %v857, %v880
        %v906 = vsub.f32 %v858, %v882
        %v907 = vsub.f32 %v859, %v884
        %v908 = vsub.f32 %v860, %v886
        %v909 = vsub.f32 %v861, %v888
        %v910 = vsub.f32 %v862, %v890
        %v911 = vsub.f32 %v863, %v892
        %v912 = vsub.f32 %v864, %v894
        %v913 = vsub.f32 %v865, %v896
        %v914 = vsub.f32 %v866, %v898
        %v915 = vmul.f32 %v899, 1.442695
        %v916 = vpow.pop %v915
        %v917 = vmul.f32 %v900, 1.442695
        %v918 = vpow.pop %v917
        %v919 = vmul.f32 %v901, 1.442695
        %v920 = vpow.pop %v919
        %v921 = vmul.f32 %v902, 1.442695
        %v922 = vpow.pop %v921
        %v923 = vmul.f32 %v903, 1.442695
        %v924 = vpow.pop %v923
        %v925 = vmul.f32 %v904, 1.442695
        %v926 = vpow.pop %v925
        %v927 = vmul.f32 %v905, 1.442695
        %v928 = vpow.pop %v927
        %v929 = vmul.f32 %v906, 1.442695
        %v930 = vpow.pop %v929
        %v931 = vmul.f32 %v907, 1.442695
        %v932 = vpow.pop %v931
        %v933 = vmul.f32 %v908, 1.442695
        %v934 = vpow.pop %v933
        %v935 = vmul.f32 %v909, 1.442695
        %v936 = vpow.pop %v935
        %v937 = vmul.f32 %v910, 1.442695
        %v938 = vpow.pop %v937
        %v939 = vmul.f32 %v911, 1.442695
        %v940 = vpow.pop %v939
        %v941 = vmul.f32 %v912, 1.442695
        %v942 = vpow.pop %v941
        %v943 = vmul.f32 %v913, 1.442695
        %v944 = vpow.pop %v943
        %v945 = vmul.f32 %v914, 1.442695
        %v946 = vpow.pop %v945
        %947 = vadd.xlane.f32.xlu0 %v916
        %v948 = vpop.xlane.xlu0 %947
        %949 = vadd.xlane.f32.xlu0 %v918
        %v950 = vpop.xlane.xlu0 %949
        %951 = vadd.xlane.f32.xlu0 %v920
        %v952 = vpop.xlane.xlu0 %951
        %953 = vadd.xlane.f32.xlu0 %v922
        %v954 = vpop.xlane.xlu0 %953
        %955 = vadd.xlane.f32.xlu0 %v924
        %v956 = vpop.xlane.xlu0 %955
        %957 = vadd.xlane.f32.xlu0 %v926
        %v958 = vpop.xlane.xlu0 %957
        %959 = vadd.xlane.f32.xlu0 %v928
        %v960 = vpop.xlane.xlu0 %959
        %961 = vadd.xlane.f32.xlu0 %v930
        %v962 = vpop.xlane.xlu0 %961
        %963 = vadd.xlane.f32.xlu0 %v932
        %v964 = vpop.xlane.xlu0 %963
        %965 = vadd.xlane.f32.xlu0 %v934
        %v966 = vpop.xlane.xlu0 %965
        %967 = vadd.xlane.f32.xlu0 %v936
        %v968 = vpop.xlane.xlu0 %967
        %969 = vadd.xlane.f32.xlu0 %v938
        %v970 = vpop.xlane.xlu0 %969
        %971 = vadd.xlane.f32.xlu0 %v940
        %v972 = vpop.xlane.xlu0 %971
        %973 = vadd.xlane.f32.xlu0 %v942
        %v974 = vpop.xlane.xlu0 %973
        %975 = vadd.xlane.f32.xlu0 %v944
        %v976 = vpop.xlane.xlu0 %975
        %977 = vadd.xlane.f32.xlu0 %v946
        %v978 = vpop.xlane.xlu0 %977
        %v979 = vrcp.pop %v948
        %v980 = vrcp.pop %v950
        %v981 = vrcp.pop %v952
        %v982 = vrcp.pop %v954
        %v983 = vrcp.pop %v956
        %v984 = vrcp.pop %v958
        %v985 = vrcp.pop %v960
        %v986 = vrcp.pop %v962
        %v987 = vrcp.pop %v964
        %v988 = vrcp.pop %v966
        %v989 = vrcp.pop %v968
        %v990 = vrcp.pop %v970
        %v991 = vrcp.pop %v972
        %v992 = vrcp.pop %v974
        %v993 = vrcp.pop %v976
        %v994 = vrcp.pop %v978
        %v995 = vmul.f32 %v916, %v979
        %v996 = vmul.f32 %v918, %v980
        %v997 = vmul.f32 %v920, %v981
        %v998 = vmul.f32 %v922, %v982
        %v999 = vmul.f32 %v924, %v983
        %v1000 = vmul.f32 %v926, %v984
        %v1001 = vmul.f32 %v928, %v985
        %v1002 = vmul.f32 %v930, %v986
        %v1003 = vmul.f32 %v932, %v987
        %v1004 = vmul.f32 %v934, %v988
        %v1005 = vmul.f32 %v936, %v989
        %v1006 = vmul.f32 %v938, %v990
        %v1007 = vmul.f32 %v940, %v991
        %v1008 = vmul.f32 %v942, %v992
        %v1009 = vmul.f32 %v944, %v993
        %v1010 = vmul.f32 %v946, %v994
        %v1011 = vpack.c.bf16 %v996, %v995
        %v1012 = vpack.c.bf16 %v998, %v997
        %v1013 = vpack.c.bf16 %v1000, %v999
        %v1014 = vpack.c.bf16 %v1002, %v1001
        %v1015 = vpack.c.bf16 %v1004, %v1003
        %v1016 = vpack.c.bf16 %v1006, %v1005
        %v1017 = vpack.c.bf16 %v1008, %v1007
        %v1018 = vpack.c.bf16 %v1010, %v1009
        %v1035 = vunpack.c.l.b16 %v589
        %v1036 = vunpack.c.l.b16 %v590
        %v1037 = vunpack.c.l.b16 %v591
        %v1038 = vunpack.c.l.b16 %v592
        %v1039 = vunpack.c.l.b16 %v593
        %v1040 = vunpack.c.l.b16 %v594
        %v1041 = vunpack.c.l.b16 %v595
        %v1042 = vunpack.c.l.b16 %v596
        %v1043 = vunpack.c.l.b16 %v597
        %v1044 = vunpack.c.l.b16 %v598
        %v1045 = vunpack.c.l.b16 %v599
        %v1046 = vunpack.c.l.b16 %v600
        %v1047 = vunpack.c.l.b16 %v601
        %v1048 = vunpack.c.l.b16 %v602
        %v1049 = vunpack.c.l.b16 %v603
        %v1050 = vunpack.c.l.b16 %v604
        %v1051 = vpack.c.b16 %v1036, %v1035
        %v1052 = vpack.c.b16 %v1038, %v1037
        %v1053 = vpack.c.b16 %v1040, %v1039
        %v1054 = vpack.c.b16 %v1042, %v1041
        %v1055 = vpack.c.b16 %v1044, %v1043
        %v1056 = vpack.c.b16 %v1046, %v1045
        %v1057 = vpack.c.b16 %v1048, %v1047
        %v1058 = vpack.c.b16 %v1050, %v1049
        %1067 = vmatprep.subr.bf16.mxu0 0
        %1068 = vmatpush1.bf16.msra.mxu0 %v1051
        %1069 = vmatprep.subr.bf16.mxu0 0
        %1070 = vmatpush1.bf16.msra.mxu0 %v1052
        %1071 = vmatprep.subr.bf16.mxu0 0
        %1072 = vmatpush1.bf16.msra.mxu0 %v1053
        %1073 = vmatprep.subr.bf16.mxu0 0
        %1074 = vmatpush1.bf16.msra.mxu0 %v1054
        %1075 = vmatprep.subr.bf16.mxu0 0
        %1076 = vmatpush1.bf16.msra.mxu0 %v1055
        %1077 = vmatprep.subr.bf16.mxu0 0
        %1078 = vmatpush1.bf16.msra.mxu0 %v1056
        %1079 = vmatprep.subr.bf16.mxu0 0
        %1080 = vmatpush1.bf16.msra.mxu0 %v1057
        %1081 = vmatprep.subr.bf16.mxu0 0
        %1082 = vmatpush1.bf16.msra.mxu0 %v1058
        %1083 = vmatprep.subr.bf16.mxu0 0
        %1084 = vmatpush1.bf16.msra.mxu0 0
        %1085 = vmatprep.subr.bf16.mxu0 0
        %1086 = vmatpush1.bf16.msra.mxu0 0
        %1087 = vmatprep.subr.bf16.mxu0 0
        %1088 = vmatpush1.bf16.msra.mxu0 0
        %1089 = vmatprep.subr.bf16.mxu0 0
        %1090 = vmatpush1.bf16.msra.mxu0 0
        %1091 = vmatprep.subr.bf16.mxu0 0
        %1092 = vmatpush1.bf16.msra.mxu0 0
        %1093 = vmatprep.subr.bf16.mxu0 0
        %1094 = vmatpush1.bf16.msra.mxu0 0
        %1095 = vmatprep.subr.bf16.mxu0 0
        %1096 = vmatpush1.bf16.msra.mxu0 0
        %1097 = vmatprep.subr.bf16.mxu0 0
        %1098 = vmatpush1.bf16.msra.mxu0 0
        %1099 = vmatprep.mubr.bf16.mxu0 0
        %1100 = vmatmul.mubr.bf16.gmra.mrb[0].mxu0 %v1011
        %v1101 = vpop.f32.mrb[0].mxu0
        %v1102 = vadd.f32 0.0, %v1101
        %v1103 = vpop.f32.mrb[0].mxu0
        %v1104 = vpop.f32.mrb[0].mxu0
        %v1105 = vadd.f32 0.0, %v1104
        %v1106 = vpop.f32.mrb[0].mxu0
        %1107 = vmatprep.mubr.bf16.mxu0 0
        %1108 = vmatmul.mubr.bf16.gmra.mrb[0].mxu0 %v1012
        %v1109 = vpop.f32.mrb[0].mxu0
        %v1110 = vadd.f32 0.0, %v1109
        %v1111 = vpop.f32.mrb[0].mxu0
        %v1112 = vpop.f32.mrb[0].mxu0
        %v1113 = vadd.f32 0.0, %v1112
        %v1114 = vpop.f32.mrb[0].mxu0
        %1115 = vmatprep.mubr.bf16.mxu0 0
        %1116 = vmatmul.mubr.bf16.gmra.mrb[0].mxu0 %v1013
        %v1117 = vpop.f32.mrb[0].mxu0
        %v1118 = vadd.f32 0.0, %v1117
        %v1119 = vpop.f32.mrb[0].mxu0
        %v1120 = vpop.f32.mrb[0].mxu0
        %v1121 = vadd.f32 0.0, %v1120
        %v1122 = vpop.f32.mrb[0].mxu0
        %1123 = vmatprep.mubr.bf16.mxu0 0
        %1124 = vmatmul.mubr.bf16.gmra.mrb[0].mxu0 %v1014
        %v1125 = vpop.f32.mrb[0].mxu0
        %v1126 = vadd.f32 0.0, %v1125
        %v1127 = vpop.f32.mrb[0].mxu0
        %v1128 = vpop.f32.mrb[0].mxu0
        %v1129 = vadd.f32 0.0, %v1128
        %v1130 = vpop.f32.mrb[0].mxu0
        %1131 = vmatprep.mubr.bf16.mxu0 0
        %1132 = vmatmul.mubr.bf16.gmra.mrb[0].mxu0 %v1015
        %v1133 = vpop.f32.mrb[0].mxu0
        %v1134 = vadd.f32 0.0, %v1133
        %v1135 = vpop.f32.mrb[0].mxu0
        %v1136 = vpop.f32.mrb[0].mxu0
        %v1137 = vadd.f32 0.0, %v1136
        %v1138 = vpop.f32.mrb[0].mxu0
        %1139 = vmatprep.mubr.bf16.mxu0 0
        %1140 = vmatmul.mubr.bf16.gmra.mrb[0].mxu0 %v1016
        %v1141 = vpop.f32.mrb[0].mxu0
        %v1142 = vadd.f32 0.0, %v1141
        %v1143 = vpop.f32.mrb[0].mxu0
        %v1144 = vpop.f32.mrb[0].mxu0
        %v1145 = vadd.f32 0.0, %v1144
        %v1146 = vpop.f32.mrb[0].mxu0
        %1147 = vmatprep.mubr.bf16.mxu0 0
        %1148 = vmatmul.mubr.bf16.gmra.mrb[0].mxu0 %v1017
        %v1149 = vpop.f32.mrb[0].mxu0
        %v1150 = vadd.f32 0.0, %v1149
        %v1151 = vpop.f32.mrb[0].mxu0
        %v1152 = vpop.f32.mrb[0].mxu0
        %v1153 = vadd.f32 0.0, %v1152
        %v1154 = vpop.f32.mrb[0].mxu0
        %1155 = vmatprep.mubr.bf16.mxu0 0
        %1156 = vmatmul.mubr.bf16.gmra.mrb[0].mxu0 %v1018
        %v1157 = vpop.f32.mrb[0].mxu0
        %v1158 = vadd.f32 0.0, %v1157
        %v1159 = vpop.f32.mrb[0].mxu0
        %v1160 = vpop.f32.mrb[0].mxu0
        %v1161 = vadd.f32 0.0, %v1160
        %v1162 = vpop.f32.mrb[0].mxu0
        %1163 = vdwg.mxu0
        %1164 = vrot.lane.b32.xlu0 %v641, 96
        %v1165 = vpop.permute.xlu0 %1164
        %1166 = vrot.lane.b32.xlu0 %v642, 96
        %v1167 = vpop.permute.xlu0 %1166
        %1168 = vrot.lane.b32.xlu0 %v643, 96
        %v1169 = vpop.permute.xlu0 %1168
        %1170 = vrot.lane.b32.xlu0 %v644, 96
        %v1171 = vpop.permute.xlu0 %1170
        %1172 = vrot.lane.b32.xlu0 %v645, 96
        %v1173 = vpop.permute.xlu0 %1172
        %1174 = vrot.lane.b32.xlu0 %v646, 96
        %v1175 = vpop.permute.xlu0 %1174
        %1176 = vrot.lane.b32.xlu0 %v647, 96
        %v1177 = vpop.permute.xlu0 %1176
        %1178 = vrot.lane.b32.xlu0 %v648, 96
        %v1179 = vpop.permute.xlu0 %1178
        %1180 = vrot.lane.b32.xlu0 %v681, 96
        %v1181 = vpop.permute.xlu0 %1180
        %1182 = vrot.lane.b32.xlu0 %v682, 96
        %v1183 = vpop.permute.xlu0 %1182
        %1184 = vrot.lane.b32.xlu0 %v683, 96
        %v1185 = vpop.permute.xlu0 %1184
        %1186 = vrot.lane.b32.xlu0 %v684, 96
        %v1187 = vpop.permute.xlu0 %1186
        %1188 = vrot.lane.b32.xlu0 %v685, 96
        %v1189 = vpop.permute.xlu0 %1188
        %1190 = vrot.lane.b32.xlu0 %v686, 96
        %v1191 = vpop.permute.xlu0 %1190
        %1192 = vrot.lane.b32.xlu0 %v687, 96
        %v1193 = vpop.permute.xlu0 %1192
        %1194 = vrot.lane.b32.xlu0 %v688, 96
        %v1195 = vpop.permute.xlu0 %1194
        %v1197 = vsel %vm689, %v1165, 0
        %v1200 = vsel %vm689, %v1167, 0
        %v1203 = vsel %vm689, %v1169, 0
        %v1206 = vsel %vm689, %v1171, 0
        %v1209 = vsel %vm689, %v1173, 0
        %v1212 = vsel %vm689, %v1175, 0
        %v1215 = vsel %vm689, %v1177, 0
        %v1218 = vsel %vm689, %v1179, 0
        %v1221 = vsel %vm689, %v1181, 0
        %v1224 = vsel %vm689, %v1183, 0
        %v1227 = vsel %vm689, %v1185, 0
        %v1230 = vsel %vm689, %v1187, 0
        %v1233 = vsel %vm689, %v1189, 0
        %v1236 = vsel %vm689, %v1191, 0
        %v1239 = vsel %vm689, %v1193, 0
        %v1242 = vsel %vm689, %v1195, 0
        %1244 = vmatprep.subr.bf16.mxu0 0
        %1245 = vmatpush1.bf16.xpose.msra.mxu0 %v1221
        %1246 = vmatprep.subr.bf16.mxu0 0
        %1247 = vmatpush1.bf16.xpose.msra.mxu0 %v1224
        %1248 = vmatprep.subr.bf16.mxu0 0
        %1249 = vmatpush1.bf16.xpose.msra.mxu0 %v1227
        %1250 = vmatprep.subr.bf16.mxu0 0
        %1251 = vmatpush1.bf16.xpose.msra.mxu0 %v1230
        %1252 = vmatprep.subr.bf16.mxu0 0
        %1253 = vmatpush1.bf16.xpose.msra.mxu0 %v1233
        %1254 = vmatprep.subr.bf16.mxu0 0
        %1255 = vmatpush1.bf16.xpose.msra.mxu0 %v1236
        %1256 = vmatprep.subr.bf16.mxu0 0
        %1257 = vmatpush1.bf16.xpose.msra.mxu0 %v1239
        %1258 = vmatprep.subr.bf16.mxu0 0
        %1259 = vmatpush1.bf16.xpose.msra.mxu0 %v1242
        %1260 = vmatprep.subr.bf16.mxu0 0
        %1261 = vmatpush1.bf16.xpose.msra.mxu0 0
        %1262 = vmatprep.subr.bf16.mxu0 0
        %1263 = vmatpush1.bf16.xpose.msra.mxu0 0
        %1264 = vmatprep.subr.bf16.mxu0 0
        %1265 = vmatpush1.bf16.xpose.msra.mxu0 0
        %1266 = vmatprep.subr.bf16.mxu0 0
        %1267 = vmatpush1.bf16.xpose.msra.mxu0 0
        %1268 = vmatprep.subr.bf16.mxu0 0
        %1269 = vmatpush1.bf16.xpose.msra.mxu0 0
        %1270 = vmatprep.subr.bf16.mxu0 0
        %1271 = vmatpush1.bf16.xpose.msra.mxu0 0
        %1272 = vmatprep.subr.bf16.mxu0 0
        %1273 = vmatpush1.bf16.xpose.msra.mxu0 0
        %1274 = vmatprep.subr.bf16.mxu0 0
        %1275 = vmatpush1.bf16.xpose.msra.mxu0 0
        %1276 = vmatprep.mubr.bf16.mxu0 0
        %1277 = vmatmul.mubr.bf16.gmra.mrb[0].mxu0 %v1197
        %v1278 = vpop.f32.mrb[0].mxu0
        %v1279 = vadd.f32 0.0, %v1278
        %v1280 = vpop.f32.mrb[0].mxu0
        %v1281 = vpop.f32.mrb[0].mxu0
        %v1282 = vadd.f32 0.0, %v1281
        %v1283 = vpop.f32.mrb[0].mxu0
        %1284 = vmatprep.mubr.bf16.mxu0 0
        %1285 = vmatmul.mubr.bf16.gmra.mrb[0].mxu0 %v1200
        %v1286 = vpop.f32.mrb[0].mxu0
        %v1287 = vadd.f32 0.0, %v1286
        %v1288 = vpop.f32.mrb[0].mxu0
        %v1289 = vpop.f32.mrb[0].mxu0
        %v1290 = vadd.f32 0.0, %v1289
        %v1291 = vpop.f32.mrb[0].mxu0
        %1292 = vmatprep.mubr.bf16.mxu0 0
        %1293 = vmatmul.mubr.bf16.gmra.mrb[0].mxu0 %v1203
        %v1294 = vpop.f32.mrb[0].mxu0
        %v1295 = vadd.f32 0.0, %v1294
        %v1296 = vpop.f32.mrb[0].mxu0
        %v1297 = vpop.f32.mrb[0].mxu0
        %v1298 = vadd.f32 0.0, %v1297
        %v1299 = vpop.f32.mrb[0].mxu0
        %1300 = vmatprep.mubr.bf16.mxu0 0
        %1301 = vmatmul.mubr.bf16.gmra.mrb[0].mxu0 %v1206
        %v1302 = vpop.f32.mrb[0].mxu0
        %v1303 = vadd.f32 0.0, %v1302
        %v1304 = vpop.f32.mrb[0].mxu0
        %v1305 = vpop.f32.mrb[0].mxu0
        %v1306 = vadd.f32 0.0, %v1305
        %v1307 = vpop.f32.mrb[0].mxu0
        %1308 = vmatprep.mubr.bf16.mxu0 0
        %1309 = vmatmul.mubr.bf16.gmra.mrb[0].mxu0 %v1209
        %v1310 = vpop.f32.mrb[0].mxu0
        %v1311 = vadd.f32 0.0, %v1310
        %v1312 = vpop.f32.mrb[0].mxu0
        %v1313 = vpop.f32.mrb[0].mxu0
        %v1314 = vadd.f32 0.0, %v1313
        %v1315 = vpop.f32.mrb[0].mxu0
        %1316 = vmatprep.mubr.bf16.mxu0 0
        %1317 = vmatmul.mubr.bf16.gmra.mrb[0].mxu0 %v1212
        %v1318 = vpop.f32.mrb[0].mxu0
        %v1319 = vadd.f32 0.0, %v1318
        %v1320 = vpop.f32.mrb[0].mxu0
        %v1321 = vpop.f32.mrb[0].mxu0
        %v1322 = vadd.f32 0.0, %v1321
        %v1323 = vpop.f32.mrb[0].mxu0
        %1324 = vmatprep.mubr.bf16.mxu0 0
        %1325 = vmatmul.mubr.bf16.gmra.mrb[0].mxu0 %v1215
        %v1326 = vpop.f32.mrb[0].mxu0
        %v1327 = vadd.f32 0.0, %v1326
        %v1328 = vpop.f32.mrb[0].mxu0
        %v1329 = vpop.f32.mrb[0].mxu0
        %v1330 = vadd.f32 0.0, %v1329
        %v1331 = vpop.f32.mrb[0].mxu0
        %1332 = vmatprep.mubr.bf16.mxu0 0
        %1333 = vmatmul.mubr.bf16.gmra.mrb[0].mxu0 %v1218
        %v1334 = vpop.f32.mrb[0].mxu0
        %v1335 = vadd.f32 0.0, %v1334
        %v1336 = vpop.f32.mrb[0].mxu0
        %v1337 = vpop.f32.mrb[0].mxu0
        %v1338 = vadd.f32 0.0, %v1337
        %v1339 = vpop.f32.mrb[0].mxu0
        %1340 = vdwg.mxu0
        %v1341 = vmul.f32 %v1279, 0.17677669
        %v1342 = vmul.f32 %v1282, 0.17677669
        %v1343 = vmul.f32 %v1287, 0.17677669
        %v1344 = vmul.f32 %v1290, 0.17677669
        %v1345 = vmul.f32 %v1295, 0.17677669
        %v1346 = vmul.f32 %v1298, 0.17677669
        %v1347 = vmul.f32 %v1303, 0.17677669
        %v1348 = vmul.f32 %v1306, 0.17677669
        %v1349 = vmul.f32 %v1311, 0.17677669
        %v1350 = vmul.f32 %v1314, 0.17677669
        %v1351 = vmul.f32 %v1319, 0.17677669
        %v1352 = vmul.f32 %v1322, 0.17677669
        %v1353 = vmul.f32 %v1327, 0.17677669
        %v1354 = vmul.f32 %v1330, 0.17677669
        %v1355 = vmul.f32 %v1335, 0.17677669
        %v1356 = vmul.f32 %v1338, 0.17677669
        %v1357 = vsel %vm608, %v1341, -1e+09
        %v1358 = vsel %vm608, %v1342, -1e+09
        %v1359 = vsel %vm608, %v1343, -1e+09
        %v1360 = vsel %vm608, %v1344, -1e+09
        %v1361 = vsel %vm608, %v1345, -1e+09
        %v1362 = vsel %vm608, %v1346, -1e+09
        %v1363 = vsel %vm608, %v1347, -1e+09
        %v1364 = vsel %vm608, %v1348, -1e+09
        %v1365 = vsel %vm608, %v1349, -1e+09
        %v1366 = vsel %vm608, %v1350, -1e+09
        %v1367 = vsel %vm608, %v1351, -1e+09
        %v1368 = vsel %vm608, %v1352, -1e+09
        %v1369 = vsel %vm608, %v1353, -1e+09
        %v1370 = vsel %vm608, %v1354, -1e+09
        %v1371 = vsel %vm608, %v1355, -1e+09
        %v1372 = vsel %vm608, %v1356, -1e+09
        %1373 = vmax.xlane.f32.xlu0 %v1357
        %v1374 = vpop.xlane.xlu0 %1373
        %1375 = vmax.xlane.f32.xlu0 %v1358
        %v1376 = vpop.xlane.xlu0 %1375
        %1377 = vmax.xlane.f32.xlu0 %v1359
        %v1378 = vpop.xlane.xlu0 %1377
        %1379 = vmax.xlane.f32.xlu0 %v1360
        %v1380 = vpop.xlane.xlu0 %1379
        %1381 = vmax.xlane.f32.xlu0 %v1361
        %v1382 = vpop.xlane.xlu0 %1381
        %1383 = vmax.xlane.f32.xlu0 %v1362
        %v1384 = vpop.xlane.xlu0 %1383
        %1385 = vmax.xlane.f32.xlu0 %v1363
        %v1386 = vpop.xlane.xlu0 %1385
        %1387 = vmax.xlane.f32.xlu0 %v1364
        %v1388 = vpop.xlane.xlu0 %1387
        %1389 = vmax.xlane.f32.xlu0 %v1365
        %v1390 = vpop.xlane.xlu0 %1389
        %1391 = vmax.xlane.f32.xlu0 %v1366
        %v1392 = vpop.xlane.xlu0 %1391
        %1393 = vmax.xlane.f32.xlu0 %v1367
        %v1394 = vpop.xlane.xlu0 %1393
        %1395 = vmax.xlane.f32.xlu0 %v1368
        %v1396 = vpop.xlane.xlu0 %1395
        %1397 = vmax.xlane.f32.xlu0 %v1369
        %v1398 = vpop.xlane.xlu0 %1397
        %1399 = vmax.xlane.f32.xlu0 %v1370
        %v1400 = vpop.xlane.xlu0 %1399
        %1401 = vmax.xlane.f32.xlu0 %v1371
        %v1402 = vpop.xlane.xlu0 %1401
        %1403 = vmax.xlane.f32.xlu0 %v1372
        %v1404 = vpop.xlane.xlu0 %1403
        %v1405 = vsub.f32 %v1357, %v1374
        %v1406 = vsub.f32 %v1358, %v1376
        %v1407 = vsub.f32 %v1359, %v1378
        %v1408 = vsub.f32 %v1360, %v1380
        %v1409 = vsub.f32 %v1361, %v1382
        %v1410 = vsub.f32 %v1362, %v1384
        %v1411 = vsub.f32 %v1363, %v1386
        %v1412 = vsub.f32 %v1364, %v1388
        %v1413 = vsub.f32 %v1365, %v1390
        %v1414 = vsub.f32 %v1366, %v1392
        %v1415 = vsub.f32 %v1367, %v1394
        %v1416 = vsub.f32 %v1368, %v1396
        %v1417 = vsub.f32 %v1369, %v1398
        %v1418 = vsub.f32 %v1370, %v1400
        %v1419 = vsub.f32 %v1371, %v1402
        %v1420 = vsub.f32 %v1372, %v1404
        %v1421 = vmul.f32 %v1405, 1.442695
        %v1422 = vpow.pop %v1421
        %v1423 = vmul.f32 %v1406, 1.442695
        %v1424 = vpow.pop %v1423
        %v1425 = vmul.f32 %v1407, 1.442695
        %v1426 = vpow.pop %v1425
        %v1427 = vmul.f32 %v1408, 1.442695
        %v1428 = vpow.pop %v1427
        %v1429 = vmul.f32 %v1409, 1.442695
        %v1430 = vpow.pop %v1429
        %v1431 = vmul.f32 %v1410, 1.442695
        %v1432 = vpow.pop %v1431
        %v1433 = vmul.f32 %v1411, 1.442695
        %v1434 = vpow.pop %v1433
        %v1435 = vmul.f32 %v1412, 1.442695
        %v1436 = vpow.pop %v1435
        %v1437 = vmul.f32 %v1413, 1.442695
        %v1438 = vpow.pop %v1437
        %v1439 = vmul.f32 %v1414, 1.442695
        %v1440 = vpow.pop %v1439
        %v1441 = vmul.f32 %v1415, 1.442695
        %v1442 = vpow.pop %v1441
        %v1443 = vmul.f32 %v1416, 1.442695
        %v1444 = vpow.pop %v1443
        %v1445 = vmul.f32 %v1417, 1.442695
        %v1446 = vpow.pop %v1445
        %v1447 = vmul.f32 %v1418, 1.442695
        %v1448 = vpow.pop %v1447
        %v1449 = vmul.f32 %v1419, 1.442695
        %v1450 = vpow.pop %v1449
        %v1451 = vmul.f32 %v1420, 1.442695
        %v1452 = vpow.pop %v1451
        %1453 = vadd.xlane.f32.xlu0 %v1422
        %v1454 = vpop.xlane.xlu0 %1453
        %1455 = vadd.xlane.f32.xlu0 %v1424
        %v1456 = vpop.xlane.xlu0 %1455
        %1457 = vadd.xlane.f32.xlu0 %v1426
        %v1458 = vpop.xlane.xlu0 %1457
        %1459 = vadd.xlane.f32.xlu0 %v1428
        %v1460 = vpop.xlane.xlu0 %1459
        %1461 = vadd.xlane.f32.xlu0 %v1430
        %v1462 = vpop.xlane.xlu0 %1461
        %1463 = vadd.xlane.f32.xlu0 %v1432
        %v1464 = vpop.xlane.xlu0 %1463
        %1465 = vadd.xlane.f32.xlu0 %v1434
        %v1466 = vpop.xlane.xlu0 %1465
        %1467 = vadd.xlane.f32.xlu0 %v1436
        %v1468 = vpop.xlane.xlu0 %1467
        %1469 = vadd.xlane.f32.xlu0 %v1438
        %v1470 = vpop.xlane.xlu0 %1469
        %1471 = vadd.xlane.f32.xlu0 %v1440
        %v1472 = vpop.xlane.xlu0 %1471
        %1473 = vadd.xlane.f32.xlu0 %v1442
        %v1474 = vpop.xlane.xlu0 %1473
        %1475 = vadd.xlane.f32.xlu0 %v1444
        %v1476 = vpop.xlane.xlu0 %1475
        %1477 = vadd.xlane.f32.xlu0 %v1446
        %v1478 = vpop.xlane.xlu0 %1477
        %1479 = vadd.xlane.f32.xlu0 %v1448
        %v1480 = vpop.xlane.xlu0 %1479
        %1481 = vadd.xlane.f32.xlu0 %v1450
        %v1482 = vpop.xlane.xlu0 %1481
        %1483 = vadd.xlane.f32.xlu0 %v1452
        %v1484 = vpop.xlane.xlu0 %1483
        %v1485 = vrcp.pop %v1454
        %v1486 = vrcp.pop %v1456
        %v1487 = vrcp.pop %v1458
        %v1488 = vrcp.pop %v1460
        %v1489 = vrcp.pop %v1462
        %v1490 = vrcp.pop %v1464
        %v1491 = vrcp.pop %v1466
        %v1492 = vrcp.pop %v1468
        %v1493 = vrcp.pop %v1470
        %v1494 = vrcp.pop %v1472
        %v1495 = vrcp.pop %v1474
        %v1496 = vrcp.pop %v1476
        %v1497 = vrcp.pop %v1478
        %v1498 = vrcp.pop %v1480
        %v1499 = vrcp.pop %v1482
        %v1500 = vrcp.pop %v1484
        %v1501 = vmul.f32 %v1422, %v1485
        %v1502 = vmul.f32 %v1424, %v1486
        %v1503 = vmul.f32 %v1426, %v1487
        %v1504 = vmul.f32 %v1428, %v1488
        %v1505 = vmul.f32 %v1430, %v1489
        %v1506 = vmul.f32 %v1432, %v1490
        %v1507 = vmul.f32 %v1434, %v1491
        %v1508 = vmul.f32 %v1436, %v1492
        %v1509 = vmul.f32 %v1438, %v1493
        %v1510 = vmul.f32 %v1440, %v1494
        %v1511 = vmul.f32 %v1442, %v1495
        %v1512 = vmul.f32 %v1444, %v1496
        %v1513 = vmul.f32 %v1446, %v1497
        %v1514 = vmul.f32 %v1448, %v1498
        %v1515 = vmul.f32 %v1450, %v1499
        %v1516 = vmul.f32 %v1452, %v1500
        %v1517 = vpack.c.bf16 %v1502, %v1501
        %v1518 = vpack.c.bf16 %v1504, %v1503
        %v1519 = vpack.c.bf16 %v1506, %v1505
        %v1520 = vpack.c.bf16 %v1508, %v1507
        %v1521 = vpack.c.bf16 %v1510, %v1509
        %v1522 = vpack.c.bf16 %v1512, %v1511
        %v1523 = vpack.c.bf16 %v1514, %v1513
        %v1524 = vpack.c.bf16 %v1516, %v1515
        %1525 = vrot.lane.b32.xlu0 %v1051, 96
        %v1526 = vpop.permute.xlu0 %1525
        %1527 = vrot.lane.b32.xlu0 %v1052, 96
        %v1528 = vpop.permute.xlu0 %1527
        %1529 = vrot.lane.b32.xlu0 %v1053, 96
        %v1530 = vpop.permute.xlu0 %1529
        %1531 = vrot.lane.b32.xlu0 %v1054, 96
        %v1532 = vpop.permute.xlu0 %1531
        %1533 = vrot.lane.b32.xlu0 %v1055, 96
        %v1534 = vpop.permute.xlu0 %1533
        %1535 = vrot.lane.b32.xlu0 %v1056, 96
        %v1536 = vpop.permute.xlu0 %1535
        %1537 = vrot.lane.b32.xlu0 %v1057, 96
        %v1538 = vpop.permute.xlu0 %1537
        %1539 = vrot.lane.b32.xlu0 %v1058, 96
        %v1540 = vpop.permute.xlu0 %1539
        %1549 = vmatprep.subr.bf16.mxu0 0
        %1550 = vmatpush1.bf16.msra.mxu0 %v1526
        %1551 = vmatprep.subr.bf16.mxu0 0
        %1552 = vmatpush1.bf16.msra.mxu0 %v1528
        %1553 = vmatprep.subr.bf16.mxu0 0
        %1554 = vmatpush1.bf16.msra.mxu0 %v1530
        %1555 = vmatprep.subr.bf16.mxu0 0
        %1556 = vmatpush1.bf16.msra.mxu0 %v1532
        %1557 = vmatprep.subr.bf16.mxu0 0
        %1558 = vmatpush1.bf16.msra.mxu0 %v1534
        %1559 = vmatprep.subr.bf16.mxu0 0
        %1560 = vmatpush1.bf16.msra.mxu0 %v1536
        %1561 = vmatprep.subr.bf16.mxu0 0
        %1562 = vmatpush1.bf16.msra.mxu0 %v1538
        %1563 = vmatprep.subr.bf16.mxu0 0
        %1564 = vmatpush1.bf16.msra.mxu0 %v1540
        %1565 = vmatprep.subr.bf16.mxu0 0
        %1566 = vmatpush1.bf16.msra.mxu0 0
        %1567 = vmatprep.subr.bf16.mxu0 0
        %1568 = vmatpush1.bf16.msra.mxu0 0
        %1569 = vmatprep.subr.bf16.mxu0 0
        %1570 = vmatpush1.bf16.msra.mxu0 0
        %1571 = vmatprep.subr.bf16.mxu0 0
        %1572 = vmatpush1.bf16.msra.mxu0 0
        %1573 = vmatprep.subr.bf16.mxu0 0
        %1574 = vmatpush1.bf16.msra.mxu0 0
        %1575 = vmatprep.subr.bf16.mxu0 0
        %1576 = vmatpush1.bf16.msra.mxu0 0
        %1577 = vmatprep.subr.bf16.mxu0 0
        %1578 = vmatpush1.bf16.msra.mxu0 0
        %1579 = vmatprep.subr.bf16.mxu0 0
        %1580 = vmatpush1.bf16.msra.mxu0 0
        %1581 = vmatprep.mubr.bf16.mxu0 0
        %1582 = vmatmul.mubr.bf16.gmra.mrb[0].mxu0 %v1517
        %v1583 = vpop.f32.mrb[0].mxu0
        %v1584 = vadd.f32 0.0, %v1583
        %v1585 = vpop.f32.mrb[0].mxu0
        %v1586 = vpop.f32.mrb[0].mxu0
        %v1587 = vadd.f32 0.0, %v1586
        %v1588 = vpop.f32.mrb[0].mxu0
        %1589 = vmatprep.mubr.bf16.mxu0 0
        %1590 = vmatmul.mubr.bf16.gmra.mrb[0].mxu0 %v1518
        %v1591 = vpop.f32.mrb[0].mxu0
        %v1592 = vadd.f32 0.0, %v1591
        %v1593 = vpop.f32.mrb[0].mxu0
        %v1594 = vpop.f32.mrb[0].mxu0
        %v1595 = vadd.f32 0.0, %v1594
        %v1596 = vpop.f32.mrb[0].mxu0
        %1597 = vmatprep.mubr.bf16.mxu0 0
        %1598 = vmatmul.mubr.bf16.gmra.mrb[0].mxu0 %v1519
        %v1599 = vpop.f32.mrb[0].mxu0
        %v1600 = vadd.f32 0.0, %v1599
        %v1601 = vpop.f32.mrb[0].mxu0
        %v1602 = vpop.f32.mrb[0].mxu0
        %v1603 = vadd.f32 0.0, %v1602
        %v1604 = vpop.f32.mrb[0].mxu0
        %1605 = vmatprep.mubr.bf16.mxu0 0
        %1606 = vmatmul.mubr.bf16.gmra.mrb[0].mxu0 %v1520
        %v1607 = vpop.f32.mrb[0].mxu0
        %v1608 = vadd.f32 0.0, %v1607
        %v1609 = vpop.f32.mrb[0].mxu0
        %v1610 = vpop.f32.mrb[0].mxu0
        %v1611 = vadd.f32 0.0, %v1610
        %v1612 = vpop.f32.mrb[0].mxu0
        %1613 = vmatprep.mubr.bf16.mxu0 0
        %1614 = vmatmul.mubr.bf16.gmra.mrb[0].mxu0 %v1521
        %v1615 = vpop.f32.mrb[0].mxu0
        %v1616 = vadd.f32 0.0, %v1615
        %v1617 = vpop.f32.mrb[0].mxu0
        %v1618 = vpop.f32.mrb[0].mxu0
        %v1619 = vadd.f32 0.0, %v1618
        %v1620 = vpop.f32.mrb[0].mxu0
        %1621 = vmatprep.mubr.bf16.mxu0 0
        %1622 = vmatmul.mubr.bf16.gmra.mrb[0].mxu0 %v1522
        %v1623 = vpop.f32.mrb[0].mxu0
        %v1624 = vadd.f32 0.0, %v1623
        %v1625 = vpop.f32.mrb[0].mxu0
        %v1626 = vpop.f32.mrb[0].mxu0
        %v1627 = vadd.f32 0.0, %v1626
        %v1628 = vpop.f32.mrb[0].mxu0
        %1629 = vmatprep.mubr.bf16.mxu0 0
        %1630 = vmatmul.mubr.bf16.gmra.mrb[0].mxu0 %v1523
        %v1631 = vpop.f32.mrb[0].mxu0
        %v1632 = vadd.f32 0.0, %v1631
        %v1633 = vpop.f32.mrb[0].mxu0
        %v1634 = vpop.f32.mrb[0].mxu0
        %v1635 = vadd.f32 0.0, %v1634
        %v1636 = vpop.f32.mrb[0].mxu0
        %1637 = vmatprep.mubr.bf16.mxu0 0
        %1638 = vmatmul.mubr.bf16.gmra.mrb[0].mxu0 %v1524
        %v1639 = vpop.f32.mrb[0].mxu0
        %v1640 = vadd.f32 0.0, %v1639
        %v1641 = vpop.f32.mrb[0].mxu0
        %v1642 = vpop.f32.mrb[0].mxu0
        %v1643 = vadd.f32 0.0, %v1642
        %v1644 = vpop.f32.mrb[0].mxu0
        %1645 = vdwg.mxu0
        %1646 = vrot.lane.b32.xlu0 %v641, 64
        %v1647 = vpop.permute.xlu0 %1646
        %1648 = vrot.lane.b32.xlu0 %v642, 64
        %v1649 = vpop.permute.xlu0 %1648
        %1650 = vrot.lane.b32.xlu0 %v643, 64
        %v1651 = vpop.permute.xlu0 %1650
        %1652 = vrot.lane.b32.xlu0 %v644, 64
        %v1653 = vpop.permute.xlu0 %1652
        %1654 = vrot.lane.b32.xlu0 %v645, 64
        %v1655 = vpop.permute.xlu0 %1654
        %1656 = vrot.lane.b32.xlu0 %v646, 64
        %v1657 = vpop.permute.xlu0 %1656
        %1658 = vrot.lane.b32.xlu0 %v647, 64
        %v1659 = vpop.permute.xlu0 %1658
        %1660 = vrot.lane.b32.xlu0 %v648, 64
        %v1661 = vpop.permute.xlu0 %1660
        %1662 = vrot.lane.b32.xlu0 %v681, 64
        %v1663 = vpop.permute.xlu0 %1662
        %1664 = vrot.lane.b32.xlu0 %v682, 64
        %v1665 = vpop.permute.xlu0 %1664
        %1666 = vrot.lane.b32.xlu0 %v683, 64
        %v1667 = vpop.permute.xlu0 %1666
        %1668 = vrot.lane.b32.xlu0 %v684, 64
        %v1669 = vpop.permute.xlu0 %1668
        %1670 = vrot.lane.b32.xlu0 %v685, 64
        %v1671 = vpop.permute.xlu0 %1670
        %1672 = vrot.lane.b32.xlu0 %v686, 64
        %v1673 = vpop.permute.xlu0 %1672
        %1674 = vrot.lane.b32.xlu0 %v687, 64
        %v1675 = vpop.permute.xlu0 %1674
        %1676 = vrot.lane.b32.xlu0 %v688, 64
        %v1677 = vpop.permute.xlu0 %1676
        %v1679 = vsel %vm689, %v1647, 0
        %v1682 = vsel %vm689, %v1649, 0
        %v1685 = vsel %vm689, %v1651, 0
        %v1688 = vsel %vm689, %v1653, 0
        %v1691 = vsel %vm689, %v1655, 0
        %v1694 = vsel %vm689, %v1657, 0
        %v1697 = vsel %vm689, %v1659, 0
        %v1700 = vsel %vm689, %v1661, 0
        %v1703 = vsel %vm689, %v1663, 0
        %v1706 = vsel %vm689, %v1665, 0
        %v1709 = vsel %vm689, %v1667, 0
        %v1712 = vsel %vm689, %v1669, 0
        %v1715 = vsel %vm689, %v1671, 0
        %v1718 = vsel %vm689, %v1673, 0
        %v1721 = vsel %vm689, %v1675, 0
        %v1724 = vsel %vm689, %v1677, 0
        %1726 = vmatprep.subr.bf16.mxu0 0
        %1727 = vmatpush1.bf16.xpose.msra.mxu0 %v1703
        %1728 = vmatprep.subr.bf16.mxu0 0
        %1729 = vmatpush1.bf16.xpose.msra.mxu0 %v1706
        %1730 = vmatprep.subr.bf16.mxu0 0
        %1731 = vmatpush1.bf16.xpose.msra.mxu0 %v1709
        %1732 = vmatprep.subr.bf16.mxu0 0
        %1733 = vmatpush1.bf16.xpose.msra.mxu0 %v1712
        %1734 = vmatprep.subr.bf16.mxu0 0
        %1735 = vmatpush1.bf16.xpose.msra.mxu0 %v1715
        %1736 = vmatprep.subr.bf16.mxu0 0
        %1737 = vmatpush1.bf16.xpose.msra.mxu0 %v1718
        %1738 = vmatprep.subr.bf16.mxu0 0
        %1739 = vmatpush1.bf16.xpose.msra.mxu0 %v1721
        %1740 = vmatprep.subr.bf16.mxu0 0
        %1741 = vmatpush1.bf16.xpose.msra.mxu0 %v1724
        %1742 = vmatprep.subr.bf16.mxu0 0
        %1743 = vmatpush1.bf16.xpose.msra.mxu0 0
        %1744 = vmatprep.subr.bf16.mxu0 0
        %1745 = vmatpush1.bf16.xpose.msra.mxu0 0
        %1746 = vmatprep.subr.bf16.mxu0 0
        %1747 = vmatpush1.bf16.xpose.msra.mxu0 0
        %1748 = vmatprep.subr.bf16.mxu0 0
        %1749 = vmatpush1.bf16.xpose.msra.mxu0 0
        %1750 = vmatprep.subr.bf16.mxu0 0
        %1751 = vmatpush1.bf16.xpose.msra.mxu0 0
        %1752 = vmatprep.subr.bf16.mxu0 0
        %1753 = vmatpush1.bf16.xpose.msra.mxu0 0
        %1754 = vmatprep.subr.bf16.mxu0 0
        %1755 = vmatpush1.bf16.xpose.msra.mxu0 0
        %1756 = vmatprep.subr.bf16.mxu0 0
        %1757 = vmatpush1.bf16.xpose.msra.mxu0 0
        %1758 = vmatprep.mubr.bf16.mxu0 0
        %1759 = vmatmul.mubr.bf16.gmra.mrb[0].mxu0 %v1679
        %v1760 = vpop.f32.mrb[0].mxu0
        %v1761 = vadd.f32 0.0, %v1760
        %v1762 = vpop.f32.mrb[0].mxu0
        %v1763 = vpop.f32.mrb[0].mxu0
        %v1764 = vadd.f32 0.0, %v1763
        %v1765 = vpop.f32.mrb[0].mxu0
        %1766 = vmatprep.mubr.bf16.mxu0 0
        %1767 = vmatmul.mubr.bf16.gmra.mrb[0].mxu0 %v1682
        %v1768 = vpop.f32.mrb[0].mxu0
        %v1769 = vadd.f32 0.0, %v1768
        %v1770 = vpop.f32.mrb[0].mxu0
        %v1771 = vpop.f32.mrb[0].mxu0
        %v1772 = vadd.f32 0.0, %v1771
        %v1773 = vpop.f32.mrb[0].mxu0
        %1774 = vmatprep.mubr.bf16.mxu0 0
        %1775 = vmatmul.mubr.bf16.gmra.mrb[0].mxu0 %v1685
        %v1776 = vpop.f32.mrb[0].mxu0
        %v1777 = vadd.f32 0.0, %v1776
        %v1778 = vpop.f32.mrb[0].mxu0
        %v1779 = vpop.f32.mrb[0].mxu0
        %v1780 = vadd.f32 0.0, %v1779
        %v1781 = vpop.f32.mrb[0].mxu0
        %1782 = vmatprep.mubr.bf16.mxu0 0
        %1783 = vmatmul.mubr.bf16.gmra.mrb[0].mxu0 %v1688
        %v1784 = vpop.f32.mrb[0].mxu0
        %v1785 = vadd.f32 0.0, %v1784
        %v1786 = vpop.f32.mrb[0].mxu0
        %v1787 = vpop.f32.mrb[0].mxu0
        %v1788 = vadd.f32 0.0, %v1787
        %v1789 = vpop.f32.mrb[0].mxu0
        %1790 = vmatprep.mubr.bf16.mxu0 0
        %1791 = vmatmul.mubr.bf16.gmra.mrb[0].mxu0 %v1691
        %v1792 = vpop.f32.mrb[0].mxu0
        %v1793 = vadd.f32 0.0, %v1792
        %v1794 = vpop.f32.mrb[0].mxu0
        %v1795 = vpop.f32.mrb[0].mxu0
        %v1796 = vadd.f32 0.0, %v1795
        %v1797 = vpop.f32.mrb[0].mxu0
        %1798 = vmatprep.mubr.bf16.mxu0 0
        %1799 = vmatmul.mubr.bf16.gmra.mrb[0].mxu0 %v1694
        %v1800 = vpop.f32.mrb[0].mxu0
        %v1801 = vadd.f32 0.0, %v1800
        %v1802 = vpop.f32.mrb[0].mxu0
        %v1803 = vpop.f32.mrb[0].mxu0
        %v1804 = vadd.f32 0.0, %v1803
        %v1805 = vpop.f32.mrb[0].mxu0
        %1806 = vmatprep.mubr.bf16.mxu0 0
        %1807 = vmatmul.mubr.bf16.gmra.mrb[0].mxu0 %v1697
        %v1808 = vpop.f32.mrb[0].mxu0
        %v1809 = vadd.f32 0.0, %v1808
        %v1810 = vpop.f32.mrb[0].mxu0
        %v1811 = vpop.f32.mrb[0].mxu0
        %v1812 = vadd.f32 0.0, %v1811
        %v1813 = vpop.f32.mrb[0].mxu0
        %1814 = vmatprep.mubr.bf16.mxu0 0
        %1815 = vmatmul.mubr.bf16.gmra.mrb[0].mxu0 %v1700
        %v1816 = vpop.f32.mrb[0].mxu0
        %v1817 = vadd.f32 0.0, %v1816
        %v1818 = vpop.f32.mrb[0].mxu0
        %v1819 = vpop.f32.mrb[0].mxu0
        %v1820 = vadd.f32 0.0, %v1819
        %v1821 = vpop.f32.mrb[0].mxu0
        %1822 = vdwg.mxu0
        %v1823 = vmul.f32 %v1761, 0.17677669
        %v1824 = vmul.f32 %v1764, 0.17677669
        %v1825 = vmul.f32 %v1769, 0.17677669
        %v1826 = vmul.f32 %v1772, 0.17677669
        %v1827 = vmul.f32 %v1777, 0.17677669
        %v1828 = vmul.f32 %v1780, 0.17677669
        %v1829 = vmul.f32 %v1785, 0.17677669
        %v1830 = vmul.f32 %v1788, 0.17677669
        %v1831 = vmul.f32 %v1793, 0.17677669
        %v1832 = vmul.f32 %v1796, 0.17677669
        %v1833 = vmul.f32 %v1801, 0.17677669
        %v1834 = vmul.f32 %v1804, 0.17677669
        %v1835 = vmul.f32 %v1809, 0.17677669
        %v1836 = vmul.f32 %v1812, 0.17677669
        %v1837 = vmul.f32 %v1817, 0.17677669
        %v1838 = vmul.f32 %v1820, 0.17677669
        %v1839 = vsel %vm608, %v1823, -1e+09
        %v1840 = vsel %vm608, %v1824, -1e+09
        %v1841 = vsel %vm608, %v1825, -1e+09
        %v1842 = vsel %vm608, %v1826, -1e+09
        %v1843 = vsel %vm608, %v1827, -1e+09
        %v1844 = vsel %vm608, %v1828, -1e+09
        %v1845 = vsel %vm608, %v1829, -1e+09
        %v1846 = vsel %vm608, %v1830, -1e+09
        %v1847 = vsel %vm608, %v1831, -1e+09
        %v1848 = vsel %vm608, %v1832, -1e+09
        %v1849 = vsel %vm608, %v1833, -1e+09
        %v1850 = vsel %vm608, %v1834, -1e+09
        %v1851 = vsel %vm608, %v1835, -1e+09
        %v1852 = vsel %vm608, %v1836, -1e+09
        %v1853 = vsel %vm608, %v1837, -1e+09
        %v1854 = vsel %vm608, %v1838, -1e+09
        %1855 = vmax.xlane.f32.xlu0 %v1839
        %v1856 = vpop.xlane.xlu0 %1855
        %1857 = vmax.xlane.f32.xlu0 %v1840
        %v1858 = vpop.xlane.xlu0 %1857
        %1859 = vmax.xlane.f32.xlu0 %v1841
        %v1860 = vpop.xlane.xlu0 %1859
        %1861 = vmax.xlane.f32.xlu0 %v1842
        %v1862 = vpop.xlane.xlu0 %1861
        %1863 = vmax.xlane.f32.xlu0 %v1843
        %v1864 = vpop.xlane.xlu0 %1863
        %1865 = vmax.xlane.f32.xlu0 %v1844
        %v1866 = vpop.xlane.xlu0 %1865
        %1867 = vmax.xlane.f32.xlu0 %v1845
        %v1868 = vpop.xlane.xlu0 %1867
        %1869 = vmax.xlane.f32.xlu0 %v1846
        %v1870 = vpop.xlane.xlu0 %1869
        %1871 = vmax.xlane.f32.xlu0 %v1847
        %v1872 = vpop.xlane.xlu0 %1871
        %1873 = vmax.xlane.f32.xlu0 %v1848
        %v1874 = vpop.xlane.xlu0 %1873
        %1875 = vmax.xlane.f32.xlu0 %v1849
        %v1876 = vpop.xlane.xlu0 %1875
        %1877 = vmax.xlane.f32.xlu0 %v1850
        %v1878 = vpop.xlane.xlu0 %1877
        %1879 = vmax.xlane.f32.xlu0 %v1851
        %v1880 = vpop.xlane.xlu0 %1879
        %1881 = vmax.xlane.f32.xlu0 %v1852
        %v1882 = vpop.xlane.xlu0 %1881
        %1883 = vmax.xlane.f32.xlu0 %v1853
        %v1884 = vpop.xlane.xlu0 %1883
        %1885 = vmax.xlane.f32.xlu0 %v1854
        %v1886 = vpop.xlane.xlu0 %1885
        %v1887 = vsub.f32 %v1839, %v1856
        %v1888 = vsub.f32 %v1840, %v1858
        %v1889 = vsub.f32 %v1841, %v1860
        %v1890 = vsub.f32 %v1842, %v1862
        %v1891 = vsub.f32 %v1843, %v1864
        %v1892 = vsub.f32 %v1844, %v1866
        %v1893 = vsub.f32 %v1845, %v1868
        %v1894 = vsub.f32 %v1846, %v1870
        %v1895 = vsub.f32 %v1847, %v1872
        %v1896 = vsub.f32 %v1848, %v1874
        %v1897 = vsub.f32 %v1849, %v1876
        %v1898 = vsub.f32 %v1850, %v1878
        %v1899 = vsub.f32 %v1851, %v1880
        %v1900 = vsub.f32 %v1852, %v1882
        %v1901 = vsub.f32 %v1853, %v1884
        %v1902 = vsub.f32 %v1854, %v1886
        %v1903 = vmul.f32 %v1887, 1.442695
        %v1904 = vpow.pop %v1903
        %v1905 = vmul.f32 %v1888, 1.442695
        %v1906 = vpow.pop %v1905
        %v1907 = vmul.f32 %v1889, 1.442695
        %v1908 = vpow.pop %v1907
        %v1909 = vmul.f32 %v1890, 1.442695
        %v1910 = vpow.pop %v1909
        %v1911 = vmul.f32 %v1891, 1.442695
        %v1912 = vpow.pop %v1911
        %v1913 = vmul.f32 %v1892, 1.442695
        %v1914 = vpow.pop %v1913
        %v1915 = vmul.f32 %v1893, 1.442695
        %v1916 = vpow.pop %v1915
        %v1917 = vmul.f32 %v1894, 1.442695
        %v1918 = vpow.pop %v1917
        %v1919 = vmul.f32 %v1895, 1.442695
        %v1920 = vpow.pop %v1919
        %v1921 = vmul.f32 %v1896, 1.442695
        %v1922 = vpow.pop %v1921
        %v1923 = vmul.f32 %v1897, 1.442695
        %v1924 = vpow.pop %v1923
        %v1925 = vmul.f32 %v1898, 1.442695
        %v1926 = vpow.pop %v1925
        %v1927 = vmul.f32 %v1899, 1.442695
        %v1928 = vpow.pop %v1927
        %v1929 = vmul.f32 %v1900, 1.442695
        %v1930 = vpow.pop %v1929
        %v1931 = vmul.f32 %v1901, 1.442695
        %v1932 = vpow.pop %v1931
        %v1933 = vmul.f32 %v1902, 1.442695
        %v1934 = vpow.pop %v1933
        %1935 = vadd.xlane.f32.xlu0 %v1904
        %v1936 = vpop.xlane.xlu0 %1935
        %1937 = vadd.xlane.f32.xlu0 %v1906
        %v1938 = vpop.xlane.xlu0 %1937
        %1939 = vadd.xlane.f32.xlu0 %v1908
        %v1940 = vpop.xlane.xlu0 %1939
        %1941 = vadd.xlane.f32.xlu0 %v1910
        %v1942 = vpop.xlane.xlu0 %1941
        %1943 = vadd.xlane.f32.xlu0 %v1912
        %v1944 = vpop.xlane.xlu0 %1943
        %1945 = vadd.xlane.f32.xlu0 %v1914
        %v1946 = vpop.xlane.xlu0 %1945
        %1947 = vadd.xlane.f32.xlu0 %v1916
        %v1948 = vpop.xlane.xlu0 %1947
        %1949 = vadd.xlane.f32.xlu0 %v1918
        %v1950 = vpop.xlane.xlu0 %1949
        %1951 = vadd.xlane.f32.xlu0 %v1920
        %v1952 = vpop.xlane.xlu0 %1951
        %1953 = vadd.xlane.f32.xlu0 %v1922
        %v1954 = vpop.xlane.xlu0 %1953
        %1955 = vadd.xlane.f32.xlu0 %v1924
        %v1956 = vpop.xlane.xlu0 %1955
        %1957 = vadd.xlane.f32.xlu0 %v1926
        %v1958 = vpop.xlane.xlu0 %1957
        %1959 = vadd.xlane.f32.xlu0 %v1928
        %v1960 = vpop.xlane.xlu0 %1959
        %1961 = vadd.xlane.f32.xlu0 %v1930
        %v1962 = vpop.xlane.xlu0 %1961
        %1963 = vadd.xlane.f32.xlu0 %v1932
        %v1964 = vpop.xlane.xlu0 %1963
        %1965 = vadd.xlane.f32.xlu0 %v1934
        %v1966 = vpop.xlane.xlu0 %1965
        %v1967 = vrcp.pop %v1936
        %v1968 = vrcp.pop %v1938
        %v1969 = vrcp.pop %v1940
        %v1970 = vrcp.pop %v1942
        %v1971 = vrcp.pop %v1944
        %v1972 = vrcp.pop %v1946
        %v1973 = vrcp.pop %v1948
        %v1974 = vrcp.pop %v1950
        %v1975 = vrcp.pop %v1952
        %v1976 = vrcp.pop %v1954
        %v1977 = vrcp.pop %v1956
        %v1978 = vrcp.pop %v1958
        %v1979 = vrcp.pop %v1960
        %v1980 = vrcp.pop %v1962
        %v1981 = vrcp.pop %v1964
        %v1982 = vrcp.pop %v1966
        %v1983 = vmul.f32 %v1904, %v1967
        %v1984 = vmul.f32 %v1906, %v1968
        %v1985 = vmul.f32 %v1908, %v1969
        %v1986 = vmul.f32 %v1910, %v1970
        %v1987 = vmul.f32 %v1912, %v1971
        %v1988 = vmul.f32 %v1914, %v1972
        %v1989 = vmul.f32 %v1916, %v1973
        %v1990 = vmul.f32 %v1918, %v1974
        %v1991 = vmul.f32 %v1920, %v1975
        %v1992 = vmul.f32 %v1922, %v1976
        %v1993 = vmul.f32 %v1924, %v1977
        %v1994 = vmul.f32 %v1926, %v1978
        %v1995 = vmul.f32 %v1928, %v1979
        %v1996 = vmul.f32 %v1930, %v1980
        %v1997 = vmul.f32 %v1932, %v1981
        %v1998 = vmul.f32 %v1934, %v1982
        %v1999 = vpack.c.bf16 %v1984, %v1983
        %v2000 = vpack.c.bf16 %v1986, %v1985
        %v2001 = vpack.c.bf16 %v1988, %v1987
        %v2002 = vpack.c.bf16 %v1990, %v1989
        %v2003 = vpack.c.bf16 %v1992, %v1991
        %v2004 = vpack.c.bf16 %v1994, %v1993
        %v2005 = vpack.c.bf16 %v1996, %v1995
        %v2006 = vpack.c.bf16 %v1998, %v1997
        %2007 = vrot.lane.b32.xlu0 %v1051, 64
        %v2008 = vpop.permute.xlu0 %2007
        %2009 = vrot.lane.b32.xlu0 %v1052, 64
        %v2010 = vpop.permute.xlu0 %2009
        %2011 = vrot.lane.b32.xlu0 %v1053, 64
        %v2012 = vpop.permute.xlu0 %2011
        %2013 = vrot.lane.b32.xlu0 %v1054, 64
        %v2014 = vpop.permute.xlu0 %2013
        %2015 = vrot.lane.b32.xlu0 %v1055, 64
        %v2016 = vpop.permute.xlu0 %2015
        %2017 = vrot.lane.b32.xlu0 %v1056, 64
        %v2018 = vpop.permute.xlu0 %2017
        %2019 = vrot.lane.b32.xlu0 %v1057, 64
        %v2020 = vpop.permute.xlu0 %2019
        %2021 = vrot.lane.b32.xlu0 %v1058, 64
        %v2022 = vpop.permute.xlu0 %2021
        %2031 = vmatprep.subr.bf16.mxu0 0
        %2032 = vmatpush1.bf16.msra.mxu0 %v2008
        %2033 = vmatprep.subr.bf16.mxu0 0
        %2034 = vmatpush1.bf16.msra.mxu0 %v2010
        %2035 = vmatprep.subr.bf16.mxu0 0
        %2036 = vmatpush1.bf16.msra.mxu0 %v2012
        %2037 = vmatprep.subr.bf16.mxu0 0
        %2038 = vmatpush1.bf16.msra.mxu0 %v2014
        %2039 = vmatprep.subr.bf16.mxu0 0
        %2040 = vmatpush1.bf16.msra.mxu0 %v2016
        %2041 = vmatprep.subr.bf16.mxu0 0
        %2042 = vmatpush1.bf16.msra.mxu0 %v2018
        %2043 = vmatprep.subr.bf16.mxu0 0
        %2044 = vmatpush1.bf16.msra.mxu0 %v2020
        %2045 = vmatprep.subr.bf16.mxu0 0
        %2046 = vmatpush1.bf16.msra.mxu0 %v2022
        %2047 = vmatprep.subr.bf16.mxu0 0
        %2048 = vmatpush1.bf16.msra.mxu0 0
        %2049 = vmatprep.subr.bf16.mxu0 0
        %2050 = vmatpush1.bf16.msra.mxu0 0
        %2051 = vmatprep.subr.bf16.mxu0 0
        %2052 = vmatpush1.bf16.msra.mxu0 0
        %2053 = vmatprep.subr.bf16.mxu0 0
        %2054 = vmatpush1.bf16.msra.mxu0 0
        %2055 = vmatprep.subr.bf16.mxu0 0
        %2056 = vmatpush1.bf16.msra.mxu0 0
        %2057 = vmatprep.subr.bf16.mxu0 0
        %2058 = vmatpush1.bf16.msra.mxu0 0
        %2059 = vmatprep.subr.bf16.mxu0 0
        %2060 = vmatpush1.bf16.msra.mxu0 0
        %2061 = vmatprep.subr.bf16.mxu0 0
        %2062 = vmatpush1.bf16.msra.mxu0 0
        %2063 = vmatprep.mubr.bf16.mxu0 0
        %2064 = vmatmul.mubr.bf16.gmra.mrb[0].mxu0 %v1999
        %v2065 = vpop.f32.mrb[0].mxu0
        %v2066 = vadd.f32 0.0, %v2065
        %v2067 = vpop.f32.mrb[0].mxu0
        %v2068 = vpop.f32.mrb[0].mxu0
        %v2069 = vadd.f32 0.0, %v2068
        %v2070 = vpop.f32.mrb[0].mxu0
        %2071 = vmatprep.mubr.bf16.mxu0 0
        %2072 = vmatmul.mubr.bf16.gmra.mrb[0].mxu0 %v2000
        %v2073 = vpop.f32.mrb[0].mxu0
        %v2074 = vadd.f32 0.0, %v2073
        %v2075 = vpop.f32.mrb[0].mxu0
        %v2076 = vpop.f32.mrb[0].mxu0
        %v2077 = vadd.f32 0.0, %v2076
        %v2078 = vpop.f32.mrb[0].mxu0
        %2079 = vmatprep.mubr.bf16.mxu0 0
        %2080 = vmatmul.mubr.bf16.gmra.mrb[0].mxu0 %v2001
        %v2081 = vpop.f32.mrb[0].mxu0
        %v2082 = vadd.f32 0.0, %v2081
        %v2083 = vpop.f32.mrb[0].mxu0
        %v2084 = vpop.f32.mrb[0].mxu0
        %v2085 = vadd.f32 0.0, %v2084
        %v2086 = vpop.f32.mrb[0].mxu0
        %2087 = vmatprep.mubr.bf16.mxu0 0
        %2088 = vmatmul.mubr.bf16.gmra.mrb[0].mxu0 %v2002
        %v2089 = vpop.f32.mrb[0].mxu0
        %v2090 = vadd.f32 0.0, %v2089
        %v2091 = vpop.f32.mrb[0].mxu0
        %v2092 = vpop.f32.mrb[0].mxu0
        %v2093 = vadd.f32 0.0, %v2092
        %v2094 = vpop.f32.mrb[0].mxu0
        %2095 = vmatprep.mubr.bf16.mxu0 0
        %2096 = vmatmul.mubr.bf16.gmra.mrb[0].mxu0 %v2003
        %v2097 = vpop.f32.mrb[0].mxu0
        %v2098 = vadd.f32 0.0, %v2097
        %v2099 = vpop.f32.mrb[0].mxu0
        %v2100 = vpop.f32.mrb[0].mxu0
        %v2101 = vadd.f32 0.0, %v2100
        %v2102 = vpop.f32.mrb[0].mxu0
        %2103 = vmatprep.mubr.bf16.mxu0 0
        %2104 = vmatmul.mubr.bf16.gmra.mrb[0].mxu0 %v2004
        %v2105 = vpop.f32.mrb[0].mxu0
        %v2106 = vadd.f32 0.0, %v2105
        %v2107 = vpop.f32.mrb[0].mxu0
        %v2108 = vpop.f32.mrb[0].mxu0
        %v2109 = vadd.f32 0.0, %v2108
        %v2110 = vpop.f32.mrb[0].mxu0
        %2111 = vmatprep.mubr.bf16.mxu0 0
        %2112 = vmatmul.mubr.bf16.gmra.mrb[0].mxu0 %v2005
        %v2113 = vpop.f32.mrb[0].mxu0
        %v2114 = vadd.f32 0.0, %v2113
        %v2115 = vpop.f32.mrb[0].mxu0
        %v2116 = vpop.f32.mrb[0].mxu0
        %v2117 = vadd.f32 0.0, %v2116
        %v2118 = vpop.f32.mrb[0].mxu0
        %2119 = vmatprep.mubr.bf16.mxu0 0
        %2120 = vmatmul.mubr.bf16.gmra.mrb[0].mxu0 %v2006
        %v2121 = vpop.f32.mrb[0].mxu0
        %v2122 = vadd.f32 0.0, %v2121
        %v2123 = vpop.f32.mrb[0].mxu0
        %v2124 = vpop.f32.mrb[0].mxu0
        %v2125 = vadd.f32 0.0, %v2124
        %v2126 = vpop.f32.mrb[0].mxu0
        %2127 = vdwg.mxu0
        %2128 = vrot.lane.b32.xlu0 %v641, 32
        %v2129 = vpop.permute.xlu0 %2128
        %2130 = vrot.lane.b32.xlu0 %v642, 32
        %v2131 = vpop.permute.xlu0 %2130
        %2132 = vrot.lane.b32.xlu0 %v643, 32
        %v2133 = vpop.permute.xlu0 %2132
        %2134 = vrot.lane.b32.xlu0 %v644, 32
        %v2135 = vpop.permute.xlu0 %2134
        %2136 = vrot.lane.b32.xlu0 %v645, 32
        %v2137 = vpop.permute.xlu0 %2136
        %2138 = vrot.lane.b32.xlu0 %v646, 32
        %v2139 = vpop.permute.xlu0 %2138
        %2140 = vrot.lane.b32.xlu0 %v647, 32
        %v2141 = vpop.permute.xlu0 %2140
        %2142 = vrot.lane.b32.xlu0 %v648, 32
        %v2143 = vpop.permute.xlu0 %2142
        %2144 = vrot.lane.b32.xlu0 %v681, 32
        %v2145 = vpop.permute.xlu0 %2144
        %2146 = vrot.lane.b32.xlu0 %v682, 32
        %v2147 = vpop.permute.xlu0 %2146
        %2148 = vrot.lane.b32.xlu0 %v683, 32
        %v2149 = vpop.permute.xlu0 %2148
        %2150 = vrot.lane.b32.xlu0 %v684, 32
        %v2151 = vpop.permute.xlu0 %2150
        %2152 = vrot.lane.b32.xlu0 %v685, 32
        %v2153 = vpop.permute.xlu0 %2152
        %2154 = vrot.lane.b32.xlu0 %v686, 32
        %v2155 = vpop.permute.xlu0 %2154
        %2156 = vrot.lane.b32.xlu0 %v687, 32
        %v2157 = vpop.permute.xlu0 %2156
        %2158 = vrot.lane.b32.xlu0 %v688, 32
        %v2159 = vpop.permute.xlu0 %2158
        %v2161 = vsel %vm689, %v2129, 0
        %v2164 = vsel %vm689, %v2131, 0
        %v2167 = vsel %vm689, %v2133, 0
        %v2170 = vsel %vm689, %v2135, 0
        %v2173 = vsel %vm689, %v2137, 0
        %v2176 = vsel %vm689, %v2139, 0
        %v2179 = vsel %vm689, %v2141, 0
        %v2182 = vsel %vm689, %v2143, 0
        %v2185 = vsel %vm689, %v2145, 0
        %v2188 = vsel %vm689, %v2147, 0
        %v2191 = vsel %vm689, %v2149, 0
        %v2194 = vsel %vm689, %v2151, 0
        %v2197 = vsel %vm689, %v2153, 0
        %v2200 = vsel %vm689, %v2155, 0
        %v2203 = vsel %vm689, %v2157, 0
        %v2206 = vsel %vm689, %v2159, 0
        %2208 = vmatprep.subr.bf16.mxu0 0
        %2209 = vmatpush1.bf16.xpose.msra.mxu0 %v2185
        %2210 = vmatprep.subr.bf16.mxu0 0
        %2211 = vmatpush1.bf16.xpose.msra.mxu0 %v2188
        %2212 = vmatprep.subr.bf16.mxu0 0
        %2213 = vmatpush1.bf16.xpose.msra.mxu0 %v2191
        %2214 = vmatprep.subr.bf16.mxu0 0
        %2215 = vmatpush1.bf16.xpose.msra.mxu0 %v2194
        %2216 = vmatprep.subr.bf16.mxu0 0
        %2217 = vmatpush1.bf16.xpose.msra.mxu0 %v2197
        %2218 = vmatprep.subr.bf16.mxu0 0
        %2219 = vmatpush1.bf16.xpose.msra.mxu0 %v2200
        %2220 = vmatprep.subr.bf16.mxu0 0
        %2221 = vmatpush1.bf16.xpose.msra.mxu0 %v2203
        %2222 = vmatprep.subr.bf16.mxu0 0
        %2223 = vmatpush1.bf16.xpose.msra.mxu0 %v2206
        %2224 = vmatprep.subr.bf16.mxu0 0
        %2225 = vmatpush1.bf16.xpose.msra.mxu0 0
        %2226 = vmatprep.subr.bf16.mxu0 0
        %2227 = vmatpush1.bf16.xpose.msra.mxu0 0
        %2228 = vmatprep.subr.bf16.mxu0 0
        %2229 = vmatpush1.bf16.xpose.msra.mxu0 0
        %2230 = vmatprep.subr.bf16.mxu0 0
        %2231 = vmatpush1.bf16.xpose.msra.mxu0 0
        %2232 = vmatprep.subr.bf16.mxu0 0
        %2233 = vmatpush1.bf16.xpose.msra.mxu0 0
        %2234 = vmatprep.subr.bf16.mxu0 0
        %2235 = vmatpush1.bf16.xpose.msra.mxu0 0
        %2236 = vmatprep.subr.bf16.mxu0 0
        %2237 = vmatpush1.bf16.xpose.msra.mxu0 0
        %2238 = vmatprep.subr.bf16.mxu0 0
        %2239 = vmatpush1.bf16.xpose.msra.mxu0 0
        %2240 = vmatprep.mubr.bf16.mxu0 0
        %2241 = vmatmul.mubr.bf16.gmra.mrb[0].mxu0 %v2161
        %v2242 = vpop.f32.mrb[0].mxu0
        %v2243 = vadd.f32 0.0, %v2242
        %v2244 = vpop.f32.mrb[0].mxu0
        %v2245 = vpop.f32.mrb[0].mxu0
        %v2246 = vadd.f32 0.0, %v2245
        %v2247 = vpop.f32.mrb[0].mxu0
        %2248 = vmatprep.mubr.bf16.mxu0 0
        %2249 = vmatmul.mubr.bf16.gmra.mrb[0].mxu0 %v2164
        %v2250 = vpop.f32.mrb[0].mxu0
        %v2251 = vadd.f32 0.0, %v2250
        %v2252 = vpop.f32.mrb[0].mxu0
        %v2253 = vpop.f32.mrb[0].mxu0
        %v2254 = vadd.f32 0.0, %v2253
        %v2255 = vpop.f32.mrb[0].mxu0
        %2256 = vmatprep.mubr.bf16.mxu0 0
        %2257 = vmatmul.mubr.bf16.gmra.mrb[0].mxu0 %v2167
        %v2258 = vpop.f32.mrb[0].mxu0
        %v2259 = vadd.f32 0.0, %v2258
        %v2260 = vpop.f32.mrb[0].mxu0
        %v2261 = vpop.f32.mrb[0].mxu0
        %v2262 = vadd.f32 0.0, %v2261
        %v2263 = vpop.f32.mrb[0].mxu0
        %2264 = vmatprep.mubr.bf16.mxu0 0
        %2265 = vmatmul.mubr.bf16.gmra.mrb[0].mxu0 %v2170
        %v2266 = vpop.f32.mrb[0].mxu0
        %v2267 = vadd.f32 0.0, %v2266
        %v2268 = vpop.f32.mrb[0].mxu0
        %v2269 = vpop.f32.mrb[0].mxu0
        %v2270 = vadd.f32 0.0, %v2269
        %v2271 = vpop.f32.mrb[0].mxu0
        %2272 = vmatprep.mubr.bf16.mxu0 0
        %2273 = vmatmul.mubr.bf16.gmra.mrb[0].mxu0 %v2173
        %v2274 = vpop.f32.mrb[0].mxu0
        %v2275 = vadd.f32 0.0, %v2274
        %v2276 = vpop.f32.mrb[0].mxu0
        %v2277 = vpop.f32.mrb[0].mxu0
        %v2278 = vadd.f32 0.0, %v2277
        %v2279 = vpop.f32.mrb[0].mxu0
        %2280 = vmatprep.mubr.bf16.mxu0 0
        %2281 = vmatmul.mubr.bf16.gmra.mrb[0].mxu0 %v2176
        %v2282 = vpop.f32.mrb[0].mxu0
        %v2283 = vadd.f32 0.0, %v2282
        %v2284 = vpop.f32.mrb[0].mxu0
        %v2285 = vpop.f32.mrb[0].mxu0
        %v2286 = vadd.f32 0.0, %v2285
        %v2287 = vpop.f32.mrb[0].mxu0
        %2288 = vmatprep.mubr.bf16.mxu0 0
        %2289 = vmatmul.mubr.bf16.gmra.mrb[0].mxu0 %v2179
        %v2290 = vpop.f32.mrb[0].mxu0
        %v2291 = vadd.f32 0.0, %v2290
        %v2292 = vpop.f32.mrb[0].mxu0
        %v2293 = vpop.f32.mrb[0].mxu0
        %v2294 = vadd.f32 0.0, %v2293
        %v2295 = vpop.f32.mrb[0].mxu0
        %2296 = vmatprep.mubr.bf16.mxu0 0
        %2297 = vmatmul.mubr.bf16.gmra.mrb[0].mxu0 %v2182
        %v2298 = vpop.f32.mrb[0].mxu0
        %v2299 = vadd.f32 0.0, %v2298
        %v2300 = vpop.f32.mrb[0].mxu0
        %v2301 = vpop.f32.mrb[0].mxu0
        %v2302 = vadd.f32 0.0, %v2301
        %v2303 = vpop.f32.mrb[0].mxu0
        %2304 = vdwg.mxu0
        %v2305 = vmul.f32 %v2243, 0.17677669
        %v2306 = vmul.f32 %v2246, 0.17677669
        %v2307 = vmul.f32 %v2251, 0.17677669
        %v2308 = vmul.f32 %v2254, 0.17677669
        %v2309 = vmul.f32 %v2259, 0.17677669
        %v2310 = vmul.f32 %v2262, 0.17677669
        %v2311 = vmul.f32 %v2267, 0.17677669
        %v2312 = vmul.f32 %v2270, 0.17677669
        %v2313 = vmul.f32 %v2275, 0.17677669
        %v2314 = vmul.f32 %v2278, 0.17677669
        %v2315 = vmul.f32 %v2283, 0.17677669
        %v2316 = vmul.f32 %v2286, 0.17677669
        %v2317 = vmul.f32 %v2291, 0.17677669
        %v2318 = vmul.f32 %v2294, 0.17677669
        %v2319 = vmul.f32 %v2299, 0.17677669
        %v2320 = vmul.f32 %v2302, 0.17677669
        %v2321 = vsel %vm608, %v2305, -1e+09
        %v2322 = vsel %vm608, %v2306, -1e+09
        %v2323 = vsel %vm608, %v2307, -1e+09
        %v2324 = vsel %vm608, %v2308, -1e+09
        %v2325 = vsel %vm608, %v2309, -1e+09
        %v2326 = vsel %vm608, %v2310, -1e+09
        %v2327 = vsel %vm608, %v2311, -1e+09
        %v2328 = vsel %vm608, %v2312, -1e+09
        %v2329 = vsel %vm608, %v2313, -1e+09
        %v2330 = vsel %vm608, %v2314, -1e+09
        %v2331 = vsel %vm608, %v2315, -1e+09
        %v2332 = vsel %vm608, %v2316, -1e+09
        %v2333 = vsel %vm608, %v2317, -1e+09
        %v2334 = vsel %vm608, %v2318, -1e+09
        %v2335 = vsel %vm608, %v2319, -1e+09
        %v2336 = vsel %vm608, %v2320, -1e+09
        %2337 = vmax.xlane.f32.xlu0 %v2321
        %v2338 = vpop.xlane.xlu0 %2337
        %2339 = vmax.xlane.f32.xlu0 %v2322
        %v2340 = vpop.xlane.xlu0 %2339
        %2341 = vmax.xlane.f32.xlu0 %v2323
        %v2342 = vpop.xlane.xlu0 %2341
        %2343 = vmax.xlane.f32.xlu0 %v2324
        %v2344 = vpop.xlane.xlu0 %2343
        %2345 = vmax.xlane.f32.xlu0 %v2325
        %v2346 = vpop.xlane.xlu0 %2345
        %2347 = vmax.xlane.f32.xlu0 %v2326
        %v2348 = vpop.xlane.xlu0 %2347
        %2349 = vmax.xlane.f32.xlu0 %v2327
        %v2350 = vpop.xlane.xlu0 %2349
        %2351 = vmax.xlane.f32.xlu0 %v2328
        %v2352 = vpop.xlane.xlu0 %2351
        %2353 = vmax.xlane.f32.xlu0 %v2329
        %v2354 = vpop.xlane.xlu0 %2353
        %2355 = vmax.xlane.f32.xlu0 %v2330
        %v2356 = vpop.xlane.xlu0 %2355
        %2357 = vmax.xlane.f32.xlu0 %v2331
        %v2358 = vpop.xlane.xlu0 %2357
        %2359 = vmax.xlane.f32.xlu0 %v2332
        %v2360 = vpop.xlane.xlu0 %2359
        %2361 = vmax.xlane.f32.xlu0 %v2333
        %v2362 = vpop.xlane.xlu0 %2361
        %2363 = vmax.xlane.f32.xlu0 %v2334
        %v2364 = vpop.xlane.xlu0 %2363
        %2365 = vmax.xlane.f32.xlu0 %v2335
        %v2366 = vpop.xlane.xlu0 %2365
        %2367 = vmax.xlane.f32.xlu0 %v2336
        %v2368 = vpop.xlane.xlu0 %2367
        %v2369 = vsub.f32 %v2321, %v2338
        %v2370 = vsub.f32 %v2322, %v2340
        %v2371 = vsub.f32 %v2323, %v2342
        %v2372 = vsub.f32 %v2324, %v2344
        %v2373 = vsub.f32 %v2325, %v2346
        %v2374 = vsub.f32 %v2326, %v2348
        %v2375 = vsub.f32 %v2327, %v2350
        %v2376 = vsub.f32 %v2328, %v2352
        %v2377 = vsub.f32 %v2329, %v2354
        %v2378 = vsub.f32 %v2330, %v2356
        %v2379 = vsub.f32 %v2331, %v2358
        %v2380 = vsub.f32 %v2332, %v2360
        %v2381 = vsub.f32 %v2333, %v2362
        %v2382 = vsub.f32 %v2334, %v2364
        %v2383 = vsub.f32 %v2335, %v2366
        %v2384 = vsub.f32 %v2336, %v2368
        %v2385 = vmul.f32 %v2369, 1.442695
        %v2386 = vpow.pop %v2385
        %v2387 = vmul.f32 %v2370, 1.442695
        %v2388 = vpow.pop %v2387
        %v2389 = vmul.f32 %v2371, 1.442695
        %v2390 = vpow.pop %v2389
        %v2391 = vmul.f32 %v2372, 1.442695
        %v2392 = vpow.pop %v2391
        %v2393 = vmul.f32 %v2373, 1.442695
        %v2394 = vpow.pop %v2393
        %v2395 = vmul.f32 %v2374, 1.442695
        %v2396 = vpow.pop %v2395
        %v2397 = vmul.f32 %v2375, 1.442695
        %v2398 = vpow.pop %v2397
        %v2399 = vmul.f32 %v2376, 1.442695
        %v2400 = vpow.pop %v2399
        %v2401 = vmul.f32 %v2377, 1.442695
        %v2402 = vpow.pop %v2401
        %v2403 = vmul.f32 %v2378, 1.442695
        %v2404 = vpow.pop %v2403
        %v2405 = vmul.f32 %v2379, 1.442695
        %v2406 = vpow.pop %v2405
        %v2407 = vmul.f32 %v2380, 1.442695
        %v2408 = vpow.pop %v2407
        %v2409 = vmul.f32 %v2381, 1.442695
        %v2410 = vpow.pop %v2409
        %v2411 = vmul.f32 %v2382, 1.442695
        %v2412 = vpow.pop %v2411
        %v2413 = vmul.f32 %v2383, 1.442695
        %v2414 = vpow.pop %v2413
        %v2415 = vmul.f32 %v2384, 1.442695
        %v2416 = vpow.pop %v2415
        %2417 = vadd.xlane.f32.xlu0 %v2386
        %v2418 = vpop.xlane.xlu0 %2417
        %2419 = vadd.xlane.f32.xlu0 %v2388
        %v2420 = vpop.xlane.xlu0 %2419
        %2421 = vadd.xlane.f32.xlu0 %v2390
        %v2422 = vpop.xlane.xlu0 %2421
        %2423 = vadd.xlane.f32.xlu0 %v2392
        %v2424 = vpop.xlane.xlu0 %2423
        %2425 = vadd.xlane.f32.xlu0 %v2394
        %v2426 = vpop.xlane.xlu0 %2425
        %2427 = vadd.xlane.f32.xlu0 %v2396
        %v2428 = vpop.xlane.xlu0 %2427
        %2429 = vadd.xlane.f32.xlu0 %v2398
        %v2430 = vpop.xlane.xlu0 %2429
        %2431 = vadd.xlane.f32.xlu0 %v2400
        %v2432 = vpop.xlane.xlu0 %2431
        %2433 = vadd.xlane.f32.xlu0 %v2402
        %v2434 = vpop.xlane.xlu0 %2433
        %2435 = vadd.xlane.f32.xlu0 %v2404
        %v2436 = vpop.xlane.xlu0 %2435
        %2437 = vadd.xlane.f32.xlu0 %v2406
        %v2438 = vpop.xlane.xlu0 %2437
        %2439 = vadd.xlane.f32.xlu0 %v2408
        %v2440 = vpop.xlane.xlu0 %2439
        %2441 = vadd.xlane.f32.xlu0 %v2410
        %v2442 = vpop.xlane.xlu0 %2441
        %2443 = vadd.xlane.f32.xlu0 %v2412
        %v2444 = vpop.xlane.xlu0 %2443
        %2445 = vadd.xlane.f32.xlu0 %v2414
        %v2446 = vpop.xlane.xlu0 %2445
        %2447 = vadd.xlane.f32.xlu0 %v2416
        %v2448 = vpop.xlane.xlu0 %2447
        %v2449 = vrcp.pop %v2418
        %v2450 = vrcp.pop %v2420
        %v2451 = vrcp.pop %v2422
        %v2452 = vrcp.pop %v2424
        %v2453 = vrcp.pop %v2426
        %v2454 = vrcp.pop %v2428
        %v2455 = vrcp.pop %v2430
        %v2456 = vrcp.pop %v2432
        %v2457 = vrcp.pop %v2434
        %v2458 = vrcp.pop %v2436
        %v2459 = vrcp.pop %v2438
        %v2460 = vrcp.pop %v2440
        %v2461 = vrcp.pop %v2442
        %v2462 = vrcp.pop %v2444
        %v2463 = vrcp.pop %v2446
        %v2464 = vrcp.pop %v2448
        %v2465 = vmul.f32 %v2386, %v2449
        %v2466 = vmul.f32 %v2388, %v2450
        %v2467 = vmul.f32 %v2390, %v2451
        %v2468 = vmul.f32 %v2392, %v2452
        %v2469 = vmul.f32 %v2394, %v2453
        %v2470 = vmul.f32 %v2396, %v2454
        %v2471 = vmul.f32 %v2398, %v2455
        %v2472 = vmul.f32 %v2400, %v2456
        %v2473 = vmul.f32 %v2402, %v2457
        %v2474 = vmul.f32 %v2404, %v2458
        %v2475 = vmul.f32 %v2406, %v2459
        %v2476 = vmul.f32 %v2408, %v2460
        %v2477 = vmul.f32 %v2410, %v2461
        %v2478 = vmul.f32 %v2412, %v2462
        %v2479 = vmul.f32 %v2414, %v2463
        %v2480 = vmul.f32 %v2416, %v2464
        %v2481 = vpack.c.bf16 %v2466, %v2465
        %v2482 = vpack.c.bf16 %v2468, %v2467
        %v2483 = vpack.c.bf16 %v2470, %v2469
        %v2484 = vpack.c.bf16 %v2472, %v2471
        %v2485 = vpack.c.bf16 %v2474, %v2473
        %v2486 = vpack.c.bf16 %v2476, %v2475
        %v2487 = vpack.c.bf16 %v2478, %v2477
        %v2488 = vpack.c.bf16 %v2480, %v2479
        %2489 = vrot.lane.b32.xlu0 %v1051, 32
        %v2490 = vpop.permute.xlu0 %2489
        %2491 = vrot.lane.b32.xlu0 %v1052, 32
        %v2492 = vpop.permute.xlu0 %2491
        %2493 = vrot.lane.b32.xlu0 %v1053, 32
        %v2494 = vpop.permute.xlu0 %2493
        %2495 = vrot.lane.b32.xlu0 %v1054, 32
        %v2496 = vpop.permute.xlu0 %2495
        %2497 = vrot.lane.b32.xlu0 %v1055, 32
        %v2498 = vpop.permute.xlu0 %2497
        %2499 = vrot.lane.b32.xlu0 %v1056, 32
        %v2500 = vpop.permute.xlu0 %2499
        %2501 = vrot.lane.b32.xlu0 %v1057, 32
        %v2502 = vpop.permute.xlu0 %2501
        %2503 = vrot.lane.b32.xlu0 %v1058, 32
        %v2504 = vpop.permute.xlu0 %2503
        %2513 = vmatprep.subr.bf16.mxu0 0
        %2514 = vmatpush1.bf16.msra.mxu0 %v2490
        %2515 = vmatprep.subr.bf16.mxu0 0
        %2516 = vmatpush1.bf16.msra.mxu0 %v2492
        %2517 = vmatprep.subr.bf16.mxu0 0
        %2518 = vmatpush1.bf16.msra.mxu0 %v2494
        %2519 = vmatprep.subr.bf16.mxu0 0
        %2520 = vmatpush1.bf16.msra.mxu0 %v2496
        %2521 = vmatprep.subr.bf16.mxu0 0
        %2522 = vmatpush1.bf16.msra.mxu0 %v2498
        %2523 = vmatprep.subr.bf16.mxu0 0
        %2524 = vmatpush1.bf16.msra.mxu0 %v2500
        %2525 = vmatprep.subr.bf16.mxu0 0
        %2526 = vmatpush1.bf16.msra.mxu0 %v2502
        %2527 = vmatprep.subr.bf16.mxu0 0
        %2528 = vmatpush1.bf16.msra.mxu0 %v2504
        %2529 = vmatprep.subr.bf16.mxu0 0
        %2530 = vmatpush1.bf16.msra.mxu0 0
        %2531 = vmatprep.subr.bf16.mxu0 0
        %2532 = vmatpush1.bf16.msra.mxu0 0
        %2533 = vmatprep.subr.bf16.mxu0 0
        %2534 = vmatpush1.bf16.msra.mxu0 0
        %2535 = vmatprep.subr.bf16.mxu0 0
        %2536 = vmatpush1.bf16.msra.mxu0 0
        %2537 = vmatprep.subr.bf16.mxu0 0
        %2538 = vmatpush1.bf16.msra.mxu0 0
        %2539 = vmatprep.subr.bf16.mxu0 0
        %2540 = vmatpush1.bf16.msra.mxu0 0
        %2541 = vmatprep.subr.bf16.mxu0 0
        %2542 = vmatpush1.bf16.msra.mxu0 0
        %2543 = vmatprep.subr.bf16.mxu0 0
        %2544 = vmatpush1.bf16.msra.mxu0 0
        %2545 = vmatprep.mubr.bf16.mxu0 0
        %2546 = vmatmul.mubr.bf16.gmra.mrb[0].mxu0 %v2481
        %v2547 = vpop.f32.mrb[0].mxu0
        %v2548 = vadd.f32 0.0, %v2547
        %v2549 = vpop.f32.mrb[0].mxu0
        %v2550 = vpop.f32.mrb[0].mxu0
        %v2551 = vadd.f32 0.0, %v2550
        %v2552 = vpop.f32.mrb[0].mxu0
        %2553 = vmatprep.mubr.bf16.mxu0 0
        %2554 = vmatmul.mubr.bf16.gmra.mrb[0].mxu0 %v2482
        %v2555 = vpop.f32.mrb[0].mxu0
        %v2556 = vadd.f32 0.0, %v2555
        %v2557 = vpop.f32.mrb[0].mxu0
        %v2558 = vpop.f32.mrb[0].mxu0
        %v2559 = vadd.f32 0.0, %v2558
        %v2560 = vpop.f32.mrb[0].mxu0
        %2561 = vmatprep.mubr.bf16.mxu0 0
        %2562 = vmatmul.mubr.bf16.gmra.mrb[0].mxu0 %v2483
        %v2563 = vpop.f32.mrb[0].mxu0
        %v2564 = vadd.f32 0.0, %v2563
        %v2565 = vpop.f32.mrb[0].mxu0
        %v2566 = vpop.f32.mrb[0].mxu0
        %v2567 = vadd.f32 0.0, %v2566
        %v2568 = vpop.f32.mrb[0].mxu0
        %2569 = vmatprep.mubr.bf16.mxu0 0
        %2570 = vmatmul.mubr.bf16.gmra.mrb[0].mxu0 %v2484
        %v2571 = vpop.f32.mrb[0].mxu0
        %v2572 = vadd.f32 0.0, %v2571
        %v2573 = vpop.f32.mrb[0].mxu0
        %v2574 = vpop.f32.mrb[0].mxu0
        %v2575 = vadd.f32 0.0, %v2574
        %v2576 = vpop.f32.mrb[0].mxu0
        %2577 = vmatprep.mubr.bf16.mxu0 0
        %2578 = vmatmul.mubr.bf16.gmra.mrb[0].mxu0 %v2485
        %v2579 = vpop.f32.mrb[0].mxu0
        %v2580 = vadd.f32 0.0, %v2579
        %v2581 = vpop.f32.mrb[0].mxu0
        %v2582 = vpop.f32.mrb[0].mxu0
        %v2583 = vadd.f32 0.0, %v2582
        %v2584 = vpop.f32.mrb[0].mxu0
        %2585 = vmatprep.mubr.bf16.mxu0 0
        %2586 = vmatmul.mubr.bf16.gmra.mrb[0].mxu0 %v2486
        %v2587 = vpop.f32.mrb[0].mxu0
        %v2588 = vadd.f32 0.0, %v2587
        %v2589 = vpop.f32.mrb[0].mxu0
        %v2590 = vpop.f32.mrb[0].mxu0
        %v2591 = vadd.f32 0.0, %v2590
        %v2592 = vpop.f32.mrb[0].mxu0
        %2593 = vmatprep.mubr.bf16.mxu0 0
        %2594 = vmatmul.mubr.bf16.gmra.mrb[0].mxu0 %v2487
        %v2595 = vpop.f32.mrb[0].mxu0
        %v2596 = vadd.f32 0.0, %v2595
        %v2597 = vpop.f32.mrb[0].mxu0
        %v2598 = vpop.f32.mrb[0].mxu0
        %v2599 = vadd.f32 0.0, %v2598
        %v2600 = vpop.f32.mrb[0].mxu0
        %2601 = vmatprep.mubr.bf16.mxu0 0
        %2602 = vmatmul.mubr.bf16.gmra.mrb[0].mxu0 %v2488
        %v2603 = vpop.f32.mrb[0].mxu0
        %v2604 = vadd.f32 0.0, %v2603
        %v2605 = vpop.f32.mrb[0].mxu0
        %v2606 = vpop.f32.mrb[0].mxu0
        %v2607 = vadd.f32 0.0, %v2606
        %v2608 = vpop.f32.mrb[0].mxu0
        %2609 = vdwg.mxu0
        %2626 = vrot.lane.b32.xlu0 %v1584, 32
        %v2627 = vpop.permute.xlu0 %2626
        %2628 = vrot.lane.b32.xlu0 %v1587, 32
        %v2629 = vpop.permute.xlu0 %2628
        %2630 = vrot.lane.b32.xlu0 %v1592, 32
        %v2631 = vpop.permute.xlu0 %2630
        %2632 = vrot.lane.b32.xlu0 %v1595, 32
        %v2633 = vpop.permute.xlu0 %2632
        %2634 = vrot.lane.b32.xlu0 %v1600, 32
        %v2635 = vpop.permute.xlu0 %2634
        %2636 = vrot.lane.b32.xlu0 %v1603, 32
        %v2637 = vpop.permute.xlu0 %2636
        %2638 = vrot.lane.b32.xlu0 %v1608, 32
        %v2639 = vpop.permute.xlu0 %2638
        %2640 = vrot.lane.b32.xlu0 %v1611, 32
        %v2641 = vpop.permute.xlu0 %2640
        %2642 = vrot.lane.b32.xlu0 %v1616, 32
        %v2643 = vpop.permute.xlu0 %2642
        %2644 = vrot.lane.b32.xlu0 %v1619, 32
        %v2645 = vpop.permute.xlu0 %2644
        %2646 = vrot.lane.b32.xlu0 %v1624, 32
        %v2647 = vpop.permute.xlu0 %2646
        %2648 = vrot.lane.b32.xlu0 %v1627, 32
        %v2649 = vpop.permute.xlu0 %2648
        %2650 = vrot.lane.b32.xlu0 %v1632, 32
        %v2651 = vpop.permute.xlu0 %2650
        %2652 = vrot.lane.b32.xlu0 %v1635, 32
        %v2653 = vpop.permute.xlu0 %2652
        %2654 = vrot.lane.b32.xlu0 %v1640, 32
        %v2655 = vpop.permute.xlu0 %2654
        %2656 = vrot.lane.b32.xlu0 %v1643, 32
        %v2657 = vpop.permute.xlu0 %2656
        %2690 = vrot.lane.b32.xlu0 %v2066, 64
        %v2691 = vpop.permute.xlu0 %2690
        %2692 = vrot.lane.b32.xlu0 %v2069, 64
        %v2693 = vpop.permute.xlu0 %2692
        %2694 = vrot.lane.b32.xlu0 %v2074, 64
        %v2695 = vpop.permute.xlu0 %2694
        %2696 = vrot.lane.b32.xlu0 %v2077, 64
        %v2697 = vpop.permute.xlu0 %2696
        %2698 = vrot.lane.b32.xlu0 %v2082, 64
        %v2699 = vpop.permute.xlu0 %2698
        %2700 = vrot.lane.b32.xlu0 %v2085, 64
        %v2701 = vpop.permute.xlu0 %2700
        %2702 = vrot.lane.b32.xlu0 %v2090, 64
        %v2703 = vpop.permute.xlu0 %2702
        %2704 = vrot.lane.b32.xlu0 %v2093, 64
        %v2705 = vpop.permute.xlu0 %2704
        %2706 = vrot.lane.b32.xlu0 %v2098, 64
        %v2707 = vpop.permute.xlu0 %2706
        %2708 = vrot.lane.b32.xlu0 %v2101, 64
        %v2709 = vpop.permute.xlu0 %2708
        %2710 = vrot.lane.b32.xlu0 %v2106, 64
        %v2711 = vpop.permute.xlu0 %2710
        %2712 = vrot.lane.b32.xlu0 %v2109, 64
        %v2713 = vpop.permute.xlu0 %2712
        %2714 = vrot.lane.b32.xlu0 %v2114, 64
        %v2715 = vpop.permute.xlu0 %2714
        %2716 = vrot.lane.b32.xlu0 %v2117, 64
        %v2717 = vpop.permute.xlu0 %2716
        %2718 = vrot.lane.b32.xlu0 %v2122, 64
        %v2719 = vpop.permute.xlu0 %2718
        %2720 = vrot.lane.b32.xlu0 %v2125, 64
        %v2721 = vpop.permute.xlu0 %2720
        %2754 = vrot.lane.b32.xlu0 %v2548, 96
        %v2755 = vpop.permute.xlu0 %2754
        %2756 = vrot.lane.b32.xlu0 %v2551, 96
        %v2757 = vpop.permute.xlu0 %2756
        %2758 = vrot.lane.b32.xlu0 %v2556, 96
        %v2759 = vpop.permute.xlu0 %2758
        %2760 = vrot.lane.b32.xlu0 %v2559, 96
        %v2761 = vpop.permute.xlu0 %2760
        %2762 = vrot.lane.b32.xlu0 %v2564, 96
        %v2763 = vpop.permute.xlu0 %2762
        %2764 = vrot.lane.b32.xlu0 %v2567, 96
        %v2765 = vpop.permute.xlu0 %2764
        %2766 = vrot.lane.b32.xlu0 %v2572, 96
        %v2767 = vpop.permute.xlu0 %2766
        %2768 = vrot.lane.b32.xlu0 %v2575, 96
        %v2769 = vpop.permute.xlu0 %2768
        %2770 = vrot.lane.b32.xlu0 %v2580, 96
        %v2771 = vpop.permute.xlu0 %2770
        %2772 = vrot.lane.b32.xlu0 %v2583, 96
        %v2773 = vpop.permute.xlu0 %2772
        %2774 = vrot.lane.b32.xlu0 %v2588, 96
        %v2775 = vpop.permute.xlu0 %2774
        %2776 = vrot.lane.b32.xlu0 %v2591, 96
        %v2777 = vpop.permute.xlu0 %2776
        %2778 = vrot.lane.b32.xlu0 %v2596, 96
        %v2779 = vpop.permute.xlu0 %2778
        %2780 = vrot.lane.b32.xlu0 %v2599, 96
        %v2781 = vpop.permute.xlu0 %2780
        %2782 = vrot.lane.b32.xlu0 %v2604, 96
        %v2783 = vpop.permute.xlu0 %2782
        %2784 = vrot.lane.b32.xlu0 %v2607, 96
        %v2785 = vpop.permute.xlu0 %2784
        %v2802 = vsel %vm689, %v1102, %v2627
        %v2803 = vsel %vm689, %v1105, %v2629
        %v2804 = vsel %vm689, %v1110, %v2631
        %v2805 = vsel %vm689, %v1113, %v2633
        %v2806 = vsel %vm689, %v1118, %v2635
        %v2807 = vsel %vm689, %v1121, %v2637
        %v2808 = vsel %vm689, %v1126, %v2639
        %v2809 = vsel %vm689, %v1129, %v2641
        %v2810 = vsel %vm689, %v1134, %v2643
        %v2811 = vsel %vm689, %v1137, %v2645
        %v2812 = vsel %vm689, %v1142, %v2647
        %v2813 = vsel %vm689, %v1145, %v2649
        %v2814 = vsel %vm689, %v1150, %v2651
        %v2815 = vsel %vm689, %v1153, %v2653
        %v2816 = vsel %vm689, %v1158, %v2655
        %v2817 = vsel %vm689, %v1161, %v2657
        %vm2818 = vcmask 523264
        %v2819 = vsel %vm2818, %v2802, %v2691
        %v2820 = vsel %vm2818, %v2803, %v2693
        %v2821 = vsel %vm2818, %v2804, %v2695
        %v2822 = vsel %vm2818, %v2805, %v2697
        %v2823 = vsel %vm2818, %v2806, %v2699
        %v2824 = vsel %vm2818, %v2807, %v2701
        %v2825 = vsel %vm2818, %v2808, %v2703
        %v2826 = vsel %vm2818, %v2809, %v2705
        %v2827 = vsel %vm2818, %v2810, %v2707
        %v2828 = vsel %vm2818, %v2811, %v2709
        %v2829 = vsel %vm2818, %v2812, %v2711
        %v2830 = vsel %vm2818, %v2813, %v2713
        %v2831 = vsel %vm2818, %v2814, %v2715
        %v2832 = vsel %vm2818, %v2815, %v2717
        %v2833 = vsel %vm2818, %v2816, %v2719
        %v2834 = vsel %vm2818, %v2817, %v2721
        %vm2835 = vcmask 785408
        %v2836 = vsel %vm2835, %v2819, %v2755
        %v2837 = vsel %vm2835, %v2820, %v2757
        %v2838 = vsel %vm2835, %v2821, %v2759
        %v2839 = vsel %vm2835, %v2822, %v2761
        %v2840 = vsel %vm2835, %v2823, %v2763
        %v2841 = vsel %vm2835, %v2824, %v2765
        %v2842 = vsel %vm2835, %v2825, %v2767
        %v2843 = vsel %vm2835, %v2826, %v2769
        %v2844 = vsel %vm2835, %v2827, %v2771
        %v2845 = vsel %vm2835, %v2828, %v2773
        %v2846 = vsel %vm2835, %v2829, %v2775
        %v2847 = vsel %vm2835, %v2830, %v2777
        %v2848 = vsel %vm2835, %v2831, %v2779
        %v2849 = vsel %vm2835, %v2832, %v2781
        %v2850 = vsel %vm2835, %v2833, %v2783
        %v2851 = vsel %vm2835, %v2834, %v2785
        %v2852 = vpack.c.bf16 %v2837, %v2836
        %v2853 = vpack.c.bf16 %v2839, %v2838
        %v2854 = vpack.c.bf16 %v2841, %v2840
        %v2855 = vpack.c.bf16 %v2843, %v2842
        %v2856 = vpack.c.bf16 %v2845, %v2844
        %v2857 = vpack.c.bf16 %v2847, %v2846
        %v2858 = vpack.c.bf16 %v2849, %v2848
        %v2859 = vpack.c.bf16 %v2851, %v2850
        %v2868 = vunpack.c.l.b16 %v2852
        %v2869 = vunpack.c.h.b16 %v2852
        %v2870 = vunpack.c.l.b16 %v2853
        %v2871 = vunpack.c.h.b16 %v2853
        %v2872 = vunpack.c.l.b16 %v2854
        %v2873 = vunpack.c.h.b16 %v2854
        %v2874 = vunpack.c.l.b16 %v2855
        %v2875 = vunpack.c.h.b16 %v2855
        %v2876 = vunpack.c.l.b16 %v2856
        %v2877 = vunpack.c.h.b16 %v2856
        %v2878 = vunpack.c.l.b16 %v2857
        %v2879 = vunpack.c.h.b16 %v2857
        %v2880 = vunpack.c.l.b16 %v2858
        %v2881 = vunpack.c.h.b16 %v2858
        %v2882 = vunpack.c.l.b16 %v2859
        %v2883 = vunpack.c.h.b16 %v2859
        %v2884 = vpack.c.b16 %v2868, %v2868
        %v2885 = vpack.c.b16 %v2869, %v2869
        %v2886 = vpack.c.b16 %v2870, %v2870
        %v2887 = vpack.c.b16 %v2871, %v2871
        %v2888 = vpack.c.b16 %v2872, %v2872
        %v2889 = vpack.c.b16 %v2873, %v2873
        %v2890 = vpack.c.b16 %v2874, %v2874
        %v2891 = vpack.c.b16 %v2875, %v2875
        %v2892 = vpack.c.b16 %v2876, %v2876
        %v2893 = vpack.c.b16 %v2877, %v2877
        %v2894 = vpack.c.b16 %v2878, %v2878
        %v2895 = vpack.c.b16 %v2879, %v2879
        %v2896 = vpack.c.b16 %v2880, %v2880
        %v2897 = vpack.c.b16 %v2881, %v2881
        %v2898 = vpack.c.b16 %v2882, %v2882
        %v2899 = vpack.c.b16 %v2883, %v2883
        %2916 = vst [vmem:[%s553] sm:$0xf] %v2884
        %2917 = vst [vmem:[%s553 + $0x4] sm:$0xf] %v2885
        %2918 = vst [vmem:[%s553 + $0x8] sm:$0xf] %v2886
        %2919 = vst [vmem:[%s553 + $0xc] sm:$0xf] %v2887
        %2920 = vst [vmem:[%s553 + $0x10] sm:$0xf] %v2888
        %2921 = vst [vmem:[%s553 + $0x14] sm:$0xf] %v2889
        %2922 = vst [vmem:[%s553 + $0x18] sm:$0xf] %v2890
        %2923 = vst [vmem:[%s553 + $0x1c] sm:$0xf] %v2891
        %2924 = vst [vmem:[%s553 + $0x20] sm:$0xf] %v2892
        %2925 = vst [vmem:[%s553 + $0x24] sm:$0xf] %v2893
        %2926 = vst [vmem:[%s553 + $0x28] sm:$0xf] %v2894
        %2927 = vst [vmem:[%s553 + $0x2c] sm:$0xf] %v2895
        %2928 = vst [vmem:[%s553 + $0x30] sm:$0xf] %v2896
        %2929 = vst [vmem:[%s553 + $0x34] sm:$0xf] %v2897
        %2930 = vst [vmem:[%s553 + $0x38] sm:$0xf] %v2898
        %2931 = vst [vmem:[%s553 + $0x3c] sm:$0xf] %v2899
        %s2932 = smul.u32 16, %s26
        %p2933 = scmp.lt.s32.totalorder %s25, 1
        %s2934 = scalar_select %p2933, %s25, 1
        %p2935 = scmp.lt.s32.totalorder %s2932, 15
        %s2936 = scalar_select %p2935, %s2932, 15
        %s2937 = smul.addr %s2934, 16
        %s2938 = sadd.s32 %s2936, %s2937
        %s2939 = smul.addr %s2938, 4
        %s2940 = scalar_lea.vmem %s4, %s2939
        // Predicated region
        $region156: #{transformer_block_forward.6} parent=142 // pred_check
          %p2941 = pneg %p133
        $region157: #{transformer_block_forward.6} parent=142 // pred_check_branch
          %2943 = sbr.rel (%p2941) target = $region159
        $region158: #{transformer_block_forward.6} parent=142 // pred_region
          %s2944 = smul.u32 16, %s26
        $region159: #{transformer_block_forward.6} parent=142 // pred_fallthru
          _
      $region143: #{transformer_block_forward.6} parent=5 // pred_fallthru
        _
      %p2945 = scmp.le.s32.totalorder 2, %s16
      // Predicated region
      $region160: #{transformer_block_forward.6} parent=5 // pred_check
        %p2946 = pneg %p2945
      $region161: #{transformer_block_forward.6} parent=5 // pred_check_branch
        %2948 = sbr.rel (%p2946) target = $region163
      $region162: #{transformer_block_forward.6} parent=5 // pred_region
        %s2949 = ssub.s32 %s16, 2
        // Predicated region
        $region164: #{transformer_block_forward.6} parent=162 // pred_check
          %p2950 = pneg %p139
        $region165: #{transformer_block_forward.6} parent=162 // pred_check_branch
          %2952 = sbr.rel (%p2950) target = $region167
        $region166: #{transformer_block_forward.6} parent=162 // pred_region
          %s2953 = smul.u32 16, %s28
          %p2954 = scmp.lt.s32.totalorder %s27, 1
          %s2955 = scalar_select %p2954, %s27, 1
          %p2956 = scmp.lt.s32.totalorder %s2953, 15
          %s2957 = scalar_select %p2956, %s2953, 15
          %s2958 = smul.addr %s2955, 16
          %s2959 = sadd.s32 %s2957, %s2958
          %s2960 = smul.addr %s2959, 4
          %s2961 = scalar_lea.vmem %s4, %s2960
        $region167: #{transformer_block_forward.6} parent=162 // pred_fallthru
          _
      $region163: #{transformer_block_forward.6} parent=5 // pred_fallthru
        _
    $region6: #{transformer_block_forward.6} parent=1 // loop_footer
      %s20 = sadd.s32 1, %s16
    $region7: #{transformer_block_forward.6} parent=1 // loop_footer_branch
      %15 = sbr.rel target = $region3
    $region8: #{transformer_block_forward.6} parent=1 // loop_exit
      _

// kernel: transformer_block_forward.8
$region0: #{transformer_block_forward.8}
  #allocation0 [shape = 'u32[]', space=smem, size = 0x4, offset = 0x4, fixed_abs, tag = 'smem constant byte address 0x4 - core index']
  #allocation1 [shape = 'u32[144,128]{1,0:T(1,128)}', space=vmem, size = 0x12000, scoped, tag = 'internal scratch']
  %s0 = inlined_call_operand.vmem [shape: f32[256,128], index: 0, kind: input, shape index: {}]
  %s1 = inlined_call_operand.vmem [shape: f32[1,128], index: 1, kind: input, shape index: {}]
  %s2 = inlined_call_operand.vmem [shape: f32[1,128], index: 2, kind: input, shape index: {}]
  %s3 = inlined_call_operand.vmem [shape: bf16[128,512], index: 3, kind: input, shape index: {}]
  %s4 = inlined_call_operand.vmem [shape: f32[1,512], index: 4, kind: input, shape index: {}]
  %s5 = inlined_call_operand.vmem [shape: bf16[256,512], index: 5, kind: output, shape index: {}]
  %s6 = sld [smem:[#allocation0]]
  $region53: #{transformer_block_forward.8} parent=0
    _
  %s8 = ssub.s32 1, %s6
  %s9 = scalar_select 0, %s8, %s6
  loop: start=0, step=1, limit=4
  $region2: #{transformer_block_forward.8} parent=0 // loop_pre_header
    _
  $region3: #{transformer_block_forward.8} parent=0 // loop_header
    %s11 = sphi 0, %s15
    %p12 = scmp.ge.s32.totalorder %s11, 4
    %s18 = sphi 0, %s30
    %s19 = sphi 0, %s26
    %s20 = sphi 0, %s18
    %s21 = sphi 0, %s19
    %s22 = sphi 0, %s20
    %s23 = sphi 0, %s21
    %s33 = sphi 0, %s35
    %s36 = sphi 0, %s33
    %s37 = sphi 0, %s36
    %s53 = sphi 0, %s37
    %s57 = sphi 0, %s57
    %s59 = sphi 0, %s57
    %s60 = sphi 0, %s59
    %s74 = sphi 0, %s60
    %s78 = sphi 0, %s78
    %s80 = sphi 0, %s78
    %s81 = sphi 0, %s80
    %s95 = sphi 0, %s81
    %s101 = sphi 0, %s103
    %s104 = sphi 0, %s101
    %s105 = sphi 0, %s104
    %s121 = sphi 0, %s105
    %s127 = sphi 0, %s129
    %s130 = sphi 0, %s127
    %s131 = sphi 0, %s130
    %s147 = sphi 0, %s131
    %s155 = sphi 0, %s157
    %s158 = sphi 0, %s155
    %s159 = sphi 0, %s158
    %s175 = sphi 0, %s159
  $region4: #{transformer_block_forward.8} parent=0 // loop_header_branch
    %14 = sbr.rel (%p12) target = $region8
  $region5: #{transformer_block_forward.8} parent=0 // loop_body
    %s16 = ssub.s32 %s11, 1
    %s17 = ssub.s32 %s11, 2
    %s24 = sadd.s32 1, %s19
    %p25 = scmp.ge.s32.totalorder %s24, 1
    %s26 = scalar_select %p25, 0, %s24
    %s27 = sadd.s32 1, %s18
    %s28 = scalar_select %p25, %s27, %s18
    %p29 = scmp.ge.s32.totalorder %s28, 2
    %s30 = scalar_select %p29, 0, %s28
    %s31 = ssub.s32 %s18, %s30
    %p32 = scmp.eq.s32.totalorder %s31, 0
    %s34 = sadd.s32 %s33, 1
    %s35 = scalar_select %p32, %s33, %s34
    %p38 = pneg %p32
    %p39 = scmp.eq.s32.totalorder %s11, 1
    %p40 = por %p38, %p39
    %p41 = scmp.ne.s32.totalorder %s33, %s36
    %p42 = scmp.eq.s32.totalorder %s11, 0
    %p43 = por %p41, %p42
    %p44 = scmp.ne.s32.totalorder %s33, %s36
    %p45 = scmp.eq.s32.totalorder %s16, 1
    %p46 = por %p44, %p45
    %p47 = scmp.ne.s32.totalorder %s36, %s37
    %p48 = scmp.eq.s32.totalorder %s16, 0
    %p49 = por %p47, %p48
    %p50 = scmp.ne.s32.totalorder %s36, %s37
    %p51 = scmp.eq.s32.totalorder %s17, 1
    %p52 = por %p50, %p51
    %p54 = scmp.ne.s32.totalorder %s37, %s53
    %p55 = scmp.eq.s32.totalorder %s17, 0
    %p56 = por %p54, %p55
    %s58 = sadd.s32 %s57, 1
    %p61 = scmp.eq.s32.totalorder %s11, 1
    %p62 = scmp.ne.s32.totalorder %s57, %s59
    %p63 = scmp.eq.s32.totalorder %s11, 0
    %p64 = por %p62, %p63
    %p65 = scmp.ne.s32.totalorder %s57, %s59
    %p66 = scmp.eq.s32.totalorder %s16, 1
    %p67 = por %p65, %p66
    %p68 = scmp.ne.s32.totalorder %s59, %s60
    %p69 = scmp.eq.s32.totalorder %s16, 0
    %p70 = por %p68, %p69
    %p71 = scmp.ne.s32.totalorder %s59, %s60
    %p72 = scmp.eq.s32.totalorder %s17, 1
    %p73 = por %p71, %p72
    %p75 = scmp.ne.s32.totalorder %s60, %s74
    %p76 = scmp.eq.s32.totalorder %s17, 0
    %p77 = por %p75, %p76
    %s79 = sadd.s32 %s78, 1
    %p82 = scmp.eq.s32.totalorder %s11, 1
    %p83 = scmp.ne.s32.totalorder %s78, %s80
    %p84 = scmp.eq.s32.totalorder %s11, 0
    %p85 = por %p83, %p84
    %p86 = scmp.ne.s32.totalorder %s78, %s80
    %p87 = scmp.eq.s32.totalorder %s16, 1
    %p88 = por %p86, %p87
    %p89 = scmp.ne.s32.totalorder %s80, %s81
    %p90 = scmp.eq.s32.totalorder %s16, 0
    %p91 = por %p89, %p90
    %p92 = scmp.ne.s32.totalorder %s80, %s81
    %p93 = scmp.eq.s32.totalorder %s17, 1
    %p94 = por %p92, %p93
    %p96 = scmp.ne.s32.totalorder %s81, %s95
    %p97 = scmp.eq.s32.totalorder %s17, 0
    %p98 = por %p96, %p97
    %s99 = ssub.s32 %s19, %s26
    %p100 = scmp.eq.s32.totalorder %s99, 0
    %s102 = sadd.s32 %s101, 1
    %s103 = scalar_select %p100, %s101, %s102
    %p106 = pneg %p100
    %p107 = scmp.eq.s32.totalorder %s11, 1
    %p108 = por %p106, %p107
    %p109 = scmp.ne.s32.totalorder %s101, %s104
    %p110 = scmp.eq.s32.totalorder %s11, 0
    %p111 = por %p109, %p110
    %p112 = scmp.ne.s32.totalorder %s101, %s104
    %p113 = scmp.eq.s32.totalorder %s16, 1
    %p114 = por %p112, %p113
    %p115 = scmp.ne.s32.totalorder %s104, %s105
    %p116 = scmp.eq.s32.totalorder %s16, 0
    %p117 = por %p115, %p116
    %p118 = scmp.ne.s32.totalorder %s104, %s105
    %p119 = scmp.eq.s32.totalorder %s17, 1
    %p120 = por %p118, %p119
    %p122 = scmp.ne.s32.totalorder %s105, %s121
    %p123 = scmp.eq.s32.totalorder %s17, 0
    %p124 = por %p122, %p123
    %s125 = ssub.s32 %s19, %s26
    %p126 = scmp.eq.s32.totalorder %s125, 0
    %s128 = sadd.s32 %s127, 1
    %s129 = scalar_select %p126, %s127, %s128
    %p132 = pneg %p126
    %p133 = scmp.eq.s32.totalorder %s11, 1
    %p134 = por %p132, %p133
    %p135 = scmp.ne.s32.totalorder %s127, %s130
    %p136 = scmp.eq.s32.totalorder %s11, 0
    %p137 = por %p135, %p136
    %p138 = scmp.ne.s32.totalorder %s127, %s130
    %p139 = scmp.eq.s32.totalorder %s16, 1
    %p140 = por %p138, %p139
    %p141 = scmp.ne.s32.totalorder %s130, %s131
    %p142 = scmp.eq.s32.totalorder %s16, 0
    %p143 = por %p141, %p142
    %p144 = scmp.ne.s32.totalorder %s130, %s131
    %p145 = scmp.eq.s32.totalorder %s17, 1
    %p146 = por %p144, %p145
    %p148 = scmp.ne.s32.totalorder %s131, %s147
    %p149 = scmp.eq.s32.totalorder %s17, 0
    %p150 = por %p148, %p149
    %s151 = ssub.s32 %s18, %s30
    %s152 = ssub.s32 %s19, %s26
    %s153 = sor.u32 %s151, %s152
    %p154 = scmp.eq.s32.totalorder %s153, 0
    %s156 = sadd.s32 %s155, 1
    %s157 = scalar_select %p154, %s155, %s156
    %p160 = pneg %p154
    %p161 = scmp.eq.s32.totalorder %s11, 1
    %p162 = por %p160, %p161
    %p163 = scmp.ne.s32.totalorder %s155, %s158
    %p164 = scmp.eq.s32.totalorder %s11, 0
    %p165 = por %p163, %p164
    %p166 = scmp.ne.s32.totalorder %s155, %s158
    %p167 = scmp.eq.s32.totalorder %s16, 1
    %p168 = por %p166, %p167
    %p169 = scmp.ne.s32.totalorder %s158, %s159
    %p170 = scmp.eq.s32.totalorder %s16, 0
    %p171 = por %p169, %p170
    %p172 = scmp.ne.s32.totalorder %s158, %s159
    %p173 = scmp.eq.s32.totalorder %s17, 1
    %p174 = por %p172, %p173
    %p176 = scmp.ne.s32.totalorder %s159, %s175
    %p177 = scmp.eq.s32.totalorder %s17, 0
    %p178 = por %p176, %p177
    %p179 = scmp.le.s32.totalorder 1, %s11
    %p180 = scmp.lt.s32.totalorder %s11, 3
    %p181 = pnand %p179, %p180
    %p182 = pneg %p181
    // Predicated region
    $region9: #{transformer_block_forward.8} parent=5 // pred_check
      _
    $region10: #{transformer_block_forward.8} parent=5 // pred_check_branch
      %184 = sbr.rel (%p181) target = $region12
    $region11: #{transformer_block_forward.8} parent=5 // pred_region
      %s185 = ssub.s32 %s11, 1
      // Predicated region
      $region13: #{transformer_block_forward.8} parent=11 // pred_check
        %p186 = pneg %p70
      $region14: #{transformer_block_forward.8} parent=11 // pred_check_branch
        %188 = sbr.rel (%p186) target = $region16
      $region15: #{transformer_block_forward.8} parent=11 // pred_region
        _
      $region16: #{transformer_block_forward.8} parent=11 // pred_fallthru
        _
      // Predicated region
      $region17: #{transformer_block_forward.8} parent=11 // pred_check
        %p189 = pneg %p91
      $region18: #{transformer_block_forward.8} parent=11 // pred_check_branch
        %191 = sbr.rel (%p189) target = $region20
      $region19: #{transformer_block_forward.8} parent=11 // pred_region
        _
      $region20: #{transformer_block_forward.8} parent=11 // pred_fallthru
        _
      // Predicated region
      $region21: #{transformer_block_forward.8} parent=11 // pred_check
        %p192 = pneg %p117
      $region22: #{transformer_block_forward.8} parent=11 // pred_check_branch
        %194 = sbr.rel (%p192) target = $region24
      $region23: #{transformer_block_forward.8} parent=11 // pred_region
        %s195 = smul.u32 4, %s21
        %p196 = scmp.lt.s32.totalorder %s195, 3
        %s197 = scalar_select %p196, %s195, 3
        %s198 = smul.addr %s197, 4
        %s199 = scalar_lea.vmem %s3, %s198
        %s200 = smul.u32 4, %s21
      $region24: #{transformer_block_forward.8} parent=11 // pred_fallthru
        _
      // Predicated region
      $region25: #{transformer_block_forward.8} parent=11 // pred_check
        %p201 = pneg %p143
      $region26: #{transformer_block_forward.8} parent=11 // pred_check_branch
        %203 = sbr.rel (%p201) target = $region28
      $region27: #{transformer_block_forward.8} parent=11 // pred_region
        %s204 = smul.u32 4, %s21
        %p205 = scmp.lt.s32.totalorder %s204, 3
        %s206 = scalar_select %p205, %s204, 3
        %s207 = scalar_lea.vmem %s4, %s206
        %s208 = smul.u32 4, %s21
      $region28: #{transformer_block_forward.8} parent=11 // pred_fallthru
        _
    $region12: #{transformer_block_forward.8} parent=5 // pred_fallthru
      _
    %p209 = scmp.lt.s32.totalorder %s11, 2
    // Predicated region
    $region29: #{transformer_block_forward.8} parent=5 // pred_check
      %p210 = pneg %p209
    $region30: #{transformer_block_forward.8} parent=5 // pred_check_branch
      %212 = sbr.rel (%p210) target = $region32
    $region31: #{transformer_block_forward.8} parent=5 // pred_region
      // Predicated region
      $region33: #{transformer_block_forward.8} parent=31 // pred_check
        %p213 = pneg %p43
      $region34: #{transformer_block_forward.8} parent=31 // pred_check_branch
        %215 = sbr.rel (%p213) target = $region36
      $region35: #{transformer_block_forward.8} parent=31 // pred_region
        %s216 = smul.u32 16, %s18
        %p217 = scmp.lt.s32.totalorder %s216, 31
        %s218 = scalar_select %p217, %s216, 31
        %s219 = smul.addr %s218, 8
        %s220 = scalar_lea.vmem %s0, %s219
        %s221 = smul.u32 16, %s18
      $region36: #{transformer_block_forward.8} parent=31 // pred_fallthru
        _
    $region32: #{transformer_block_forward.8} parent=5 // pred_fallthru
      _
    %p222 = scmp.le.s32.totalorder 1, %s11
    %p223 = scmp.lt.s32.totalorder %s11, 3
    %p224 = pnand %p222, %p223
    %p225 = pneg %p224
    // Predicated region
    $region37: #{transformer_block_forward.8} parent=5 // pred_check
      _
    $region38: #{transformer_block_forward.8} parent=5 // pred_check_branch
      %227 = sbr.rel (%p224) target = $region40
    $region39: #{transformer_block_forward.8} parent=5 // pred_region
      %s228 = ssub.s32 %s11, 1
      %s229 = smul.u32 16, %s20
      %p230 = scmp.lt.s32.totalorder %s229, 31
      %s231 = scalar_select %p230, %s229, 31
      %s232 = smul.addr %s231, 8
      %s233 = scalar_lea.vmem %s0, %s232
      %p234 = pneg %p49
      %p235 = pneg %p46
      %p236 = pneg %p70
      %p237 = pneg %p67
      %p238 = pneg %p91
      %p239 = pneg %p88
      %s240 = smul.u32 4, %s21
      %p241 = scmp.lt.s32.totalorder %s240, 3
      %s242 = scalar_select %p241, %s240, 3
      %s243 = smul.addr %s242, 4
      %s244 = scalar_lea.vmem %s3, %s243
      %p245 = pneg %p117
      %p246 = pneg %p114
      %s247 = smul.u32 4, %s21
      %p248 = scmp.lt.s32.totalorder %s247, 3
      %s249 = scalar_select %p248, %s247, 3
      %s250 = scalar_lea.vmem %s4, %s249
      %p251 = pneg %p143
      %p252 = pneg %p140
      %p253 = pneg %p171
      %p254 = pneg %p168
      %s255 = smul.u32 16, %s20
      %s256 = smul.u32 4, %s21
      %p257 = scmp.lt.s32.totalorder %s255, 31
      %s258 = scalar_select %p257, %s255, 31
      %p259 = scmp.lt.s32.totalorder %s256, 3
      %s260 = scalar_select %p259, %s256, 3
      %s261 = smul.addr %s258, 4
      %s262 = sadd.s32 %s260, %s261
      %s263 = smul.addr %s262, 4
      %s264 = scalar_lea.vmem %s5, %s263
      %s265 = smul.u32 16, %s20
      %p266 = scmp.lt.s32.totalorder %s265, 31
      %s267 = scalar_select %p266, %s265, 31
      %s268 = smul.addr %s267, 8
      %s269 = scalar_lea.vmem %s0, %s268
      %s270 = smul.u32 16, %s20
      %s271 = smul.u32 4, %s21
      %p272 = scmp.lt.s32.totalorder %s271, 3
      %s273 = scalar_select %p272, %s271, 3
      %s274 = smul.addr %s273, 4
      %s275 = scalar_lea.vmem %s3, %s274
      %s276 = smul.u32 4, %s21
      %s277 = smul.u32 4, %s21
      %p278 = scmp.lt.s32.totalorder %s277, 3
      %s279 = scalar_select %p278, %s277, 3
      %s280 = scalar_lea.vmem %s4, %s279
      %s281 = smul.u32 4, %s21
      %s282 = smul.u32 16, %s20
      %s283 = smul.u32 4, %s21
      %p284 = scmp.lt.s32.totalorder %s282, 31
      %s285 = scalar_select %p284, %s282, 31
      %p286 = scmp.lt.s32.totalorder %s283, 3
      %s287 = scalar_select %p286, %s283, 3
      %s288 = smul.addr %s285, 4
      %s289 = sadd.s32 %s287, %s288
      %s290 = smul.addr %s289, 4
      %s291 = scalar_lea.vmem %s5, %s290
      %s292 = smul.u32 16, %s20
      %s293 = smul.u32 4, %s21
      %v295 = vld [vmem:[%s269] sm:$0xff]
      %v296 = vld [vmem:[%s269 + $0x8] sm:$0xff]
      %v297 = vld [vmem:[%s269 + $0x10] sm:$0xff]
      %v298 = vld [vmem:[%s269 + $0x18] sm:$0xff]
      %v299 = vld [vmem:[%s269 + $0x20] sm:$0xff]
      %v300 = vld [vmem:[%s269 + $0x28] sm:$0xff]
      %v301 = vld [vmem:[%s269 + $0x30] sm:$0xff]
      %v302 = vld [vmem:[%s269 + $0x38] sm:$0xff]
      %v303 = vld [vmem:[%s269 + $0x40] sm:$0xff]
      %v304 = vld [vmem:[%s269 + $0x48] sm:$0xff]
      %v305 = vld [vmem:[%s269 + $0x50] sm:$0xff]
      %v306 = vld [vmem:[%s269 + $0x58] sm:$0xff]
      %v307 = vld [vmem:[%s269 + $0x60] sm:$0xff]
      %v308 = vld [vmem:[%s269 + $0x68] sm:$0xff]
      %v309 = vld [vmem:[%s269 + $0x70] sm:$0xff]
      %v310 = vld [vmem:[%s269 + $0x78] sm:$0xff]
      %311 = vadd.xlane.f32.xlu0 %v295
      %v312 = vpop.xlane.xlu0 %311
      %313 = vadd.xlane.f32.xlu0 %v296
      %v314 = vpop.xlane.xlu0 %313
      %315 = vadd.xlane.f32.xlu0 %v297
      %v316 = vpop.xlane.xlu0 %315
      %317 = vadd.xlane.f32.xlu0 %v298
      %v318 = vpop.xlane.xlu0 %317
      %319 = vadd.xlane.f32.xlu0 %v299
      %v320 = vpop.xlane.xlu0 %319
      %321 = vadd.xlane.f32.xlu0 %v300
      %v322 = vpop.xlane.xlu0 %321
      %323 = vadd.xlane.f32.xlu0 %v301
      %v324 = vpop.xlane.xlu0 %323
      %325 = vadd.xlane.f32.xlu0 %v302
      %v326 = vpop.xlane.xlu0 %325
      %327 = vadd.xlane.f32.xlu0 %v303
      %v328 = vpop.xlane.xlu0 %327
      %329 = vadd.xlane.f32.xlu0 %v304
      %v330 = vpop.xlane.xlu0 %329
      %331 = vadd.xlane.f32.xlu0 %v305
      %v332 = vpop.xlane.xlu0 %331
      %333 = vadd.xlane.f32.xlu0 %v306
      %v334 = vpop.xlane.xlu0 %333
      %335 = vadd.xlane.f32.xlu0 %v307
      %v336 = vpop.xlane.xlu0 %335
      %337 = vadd.xlane.f32.xlu0 %v308
      %v338 = vpop.xlane.xlu0 %337
      %339 = vadd.xlane.f32.xlu0 %v309
      %v340 = vpop.xlane.xlu0 %339
      %341 = vadd.xlane.f32.xlu0 %v310
      %v342 = vpop.xlane.xlu0 %341
      %v343 = vrcp.pop 128.0
      %v344 = vmul.f32 %v312, %v343
      %v345 = vmul.f32 %v314, %v343
      %v346 = vmul.f32 %v316, %v343
      %v347 = vmul.f32 %v318, %v343
      %v348 = vmul.f32 %v320, %v343
      %v349 = vmul.f32 %v322, %v343
      %v350 = vmul.f32 %v324, %v343
      %v351 = vmul.f32 %v326, %v343
      %v352 = vmul.f32 %v328, %v343
      %v353 = vmul.f32 %v330, %v343
      %v354 = vmul.f32 %v332, %v343
      %v355 = vmul.f32 %v334, %v343
      %v356 = vmul.f32 %v336, %v343
      %v357 = vmul.f32 %v338, %v343
      %v358 = vmul.f32 %v340, %v343
      %v359 = vmul.f32 %v342, %v343
      %v360 = vsub.f32 %v295, %v344
      %v361 = vsub.f32 %v296, %v345
      %v362 = vsub.f32 %v297, %v346
      %v363 = vsub.f32 %v298, %v347
      %v364 = vsub.f32 %v299, %v348
      %v365 = vsub.f32 %v300, %v349
      %v366 = vsub.f32 %v301, %v350
      %v367 = vsub.f32 %v302, %v351
      %v368 = vsub.f32 %v303, %v352
      %v369 = vsub.f32 %v304, %v353
      %v370 = vsub.f32 %v305, %v354
      %v371 = vsub.f32 %v306, %v355
      %v372 = vsub.f32 %v307, %v356
      %v373 = vsub.f32 %v308, %v357
      %v374 = vsub.f32 %v309, %v358
      %v375 = vsub.f32 %v310, %v359
      %v376 = vmul.f32 %v360, %v360
      %v377 = vmul.f32 %v361, %v361
      %v378 = vmul.f32 %v362, %v362
      %v379 = vmul.f32 %v363, %v363
      %v380 = vmul.f32 %v364, %v364
      %v381 = vmul.f32 %v365, %v365
      %v382 = vmul.f32 %v366, %v366
      %v383 = vmul.f32 %v367, %v367
      %v384 = vmul.f32 %v368, %v368
      %v385 = vmul.f32 %v369, %v369
      %v386 = vmul.f32 %v370, %v370
      %v387 = vmul.f32 %v371, %v371
      %v388 = vmul.f32 %v372, %v372
      %v389 = vmul.f32 %v373, %v373
      %v390 = vmul.f32 %v374, %v374
      %v391 = vmul.f32 %v375, %v375
      %392 = vadd.xlane.f32.xlu0 %v376
      %v393 = vpop.xlane.xlu0 %392
      %394 = vadd.xlane.f32.xlu0 %v377
      %v395 = vpop.xlane.xlu0 %394
      %396 = vadd.xlane.f32.xlu0 %v378
      %v397 = vpop.xlane.xlu0 %396
      %398 = vadd.xlane.f32.xlu0 %v379
      %v399 = vpop.xlane.xlu0 %398
      %400 = vadd.xlane.f32.xlu0 %v380
      %v401 = vpop.xlane.xlu0 %400
      %402 = vadd.xlane.f32.xlu0 %v381
      %v403 = vpop.xlane.xlu0 %402
      %404 = vadd.xlane.f32.xlu0 %v382
      %v405 = vpop.xlane.xlu0 %404
      %406 = vadd.xlane.f32.xlu0 %v383
      %v407 = vpop.xlane.xlu0 %406
      %408 = vadd.xlane.f32.xlu0 %v384
      %v409 = vpop.xlane.xlu0 %408
      %410 = vadd.xlane.f32.xlu0 %v385
      %v411 = vpop.xlane.xlu0 %410
      %412 = vadd.xlane.f32.xlu0 %v386
      %v413 = vpop.xlane.xlu0 %412
      %414 = vadd.xlane.f32.xlu0 %v387
      %v415 = vpop.xlane.xlu0 %414
      %416 = vadd.xlane.f32.xlu0 %v388
      %v417 = vpop.xlane.xlu0 %416
      %418 = vadd.xlane.f32.xlu0 %v389
      %v419 = vpop.xlane.xlu0 %418
      %420 = vadd.xlane.f32.xlu0 %v390
      %v421 = vpop.xlane.xlu0 %420
      %422 = vadd.xlane.f32.xlu0 %v391
      %v423 = vpop.xlane.xlu0 %422
      %v424 = vmul.f32 %v393, 0.007874016
      %v425 = vmul.f32 %v395, 0.007874016
      %v426 = vmul.f32 %v397, 0.007874016
      %v427 = vmul.f32 %v399, 0.007874016
      %v428 = vmul.f32 %v401, 0.007874016
      %v429 = vmul.f32 %v403, 0.007874016
      %v430 = vmul.f32 %v405, 0.007874016
      %v431 = vmul.f32 %v407, 0.007874016
      %v432 = vmul.f32 %v409, 0.007874016
      %v433 = vmul.f32 %v411, 0.007874016
      %v434 = vmul.f32 %v413, 0.007874016
      %v435 = vmul.f32 %v415, 0.007874016
      %v436 = vmul.f32 %v417, 0.007874016
      %v437 = vmul.f32 %v419, 0.007874016
      %v438 = vmul.f32 %v421, 0.007874016
      %v439 = vmul.f32 %v423, 0.007874016
      %v440 = vrsqrt.pop %v424
      %v441 = vmul.f32 %v424, %v440
      %vm442 = vcmp.eq.f32.partialorder %v424, inf
      %v443 = vsel %vm442, %v424, %v441
      %vm444 = vcmp.eq.f32.partialorder %v424, 0.0
      %v445 = vand.u32 %v424, 2147483648
      %v446 = vsel %vm444, %v445, %v443
      %v447 = vrsqrt.pop %v425
      %v448 = vmul.f32 %v425, %v447
      %vm449 = vcmp.eq.f32.partialorder %v425, inf
      %v450 = vsel %vm449, %v425, %v448
      %vm451 = vcmp.eq.f32.partialorder %v425, 0.0
      %v452 = vand.u32 %v425, 2147483648
      %v453 = vsel %vm451, %v452, %v450
      %v454 = vrsqrt.pop %v426
      %v455 = vmul.f32 %v426, %v454
      %vm456 = vcmp.eq.f32.partialorder %v426, inf
      %v457 = vsel %vm456, %v426, %v455
      %vm458 = vcmp.eq.f32.partialorder %v426, 0.0
      %v459 = vand.u32 %v426, 2147483648
      %v460 = vsel %vm458, %v459, %v457
      %v461 = vrsqrt.pop %v427
      %v462 = vmul.f32 %v427, %v461
      %vm463 = vcmp.eq.f32.partialorder %v427, inf
      %v464 = vsel %vm463, %v427, %v462
      %vm465 = vcmp.eq.f32.partialorder %v427, 0.0
      %v466 = vand.u32 %v427, 2147483648
      %v467 = vsel %vm465, %v466, %v464
      %v468 = vrsqrt.pop %v428
      %v469 = vmul.f32 %v428, %v468
      %vm470 = vcmp.eq.f32.partialorder %v428, inf
      %v471 = vsel %vm470, %v428, %v469
      %vm472 = vcmp.eq.f32.partialorder %v428, 0.0
      %v473 = vand.u32 %v428, 2147483648
      %v474 = vsel %vm472, %v473, %v471
      %v475 = vrsqrt.pop %v429
      %v476 = vmul.f32 %v429, %v475
      %vm477 = vcmp.eq.f32.partialorder %v429, inf
      %v478 = vsel %vm477, %v429, %v476
      %vm479 = vcmp.eq.f32.partialorder %v429, 0.0
      %v480 = vand.u32 %v429, 2147483648
      %v481 = vsel %vm479, %v480, %v478
      %v482 = vrsqrt.pop %v430
      %v483 = vmul.f32 %v430, %v482
      %vm484 = vcmp.eq.f32.partialorder %v430, inf
      %v485 = vsel %vm484, %v430, %v483
      %vm486 = vcmp.eq.f32.partialorder %v430, 0.0
      %v487 = vand.u32 %v430, 2147483648
      %v488 = vsel %vm486, %v487, %v485
      %v489 = vrsqrt.pop %v431
      %v490 = vmul.f32 %v431, %v489
      %vm491 = vcmp.eq.f32.partialorder %v431, inf
      %v492 = vsel %vm491, %v431, %v490
      %vm493 = vcmp.eq.f32.partialorder %v431, 0.0
      %v494 = vand.u32 %v431, 2147483648
      %v495 = vsel %vm493, %v494, %v492
      %v496 = vrsqrt.pop %v432
      %v497 = vmul.f32 %v432, %v496
      %vm498 = vcmp.eq.f32.partialorder %v432, inf
      %v499 = vsel %vm498, %v432, %v497
      %vm500 = vcmp.eq.f32.partialorder %v432, 0.0
      %v501 = vand.u32 %v432, 2147483648
      %v502 = vsel %vm500, %v501, %v499
      %v503 = vrsqrt.pop %v433
      %v504 = vmul.f32 %v433, %v503
      %vm505 = vcmp.eq.f32.partialorder %v433, inf
      %v506 = vsel %vm505, %v433, %v504
      %vm507 = vcmp.eq.f32.partialorder %v433, 0.0
      %v508 = vand.u32 %v433, 2147483648
      %v509 = vsel %vm507, %v508, %v506
      %v510 = vrsqrt.pop %v434
      %v511 = vmul.f32 %v434, %v510
      %vm512 = vcmp.eq.f32.partialorder %v434, inf
      %v513 = vsel %vm512, %v434, %v511
      %vm514 = vcmp.eq.f32.partialorder %v434, 0.0
      %v515 = vand.u32 %v434, 2147483648
      %v516 = vsel %vm514, %v515, %v513
      %v517 = vrsqrt.pop %v435
      %v518 = vmul.f32 %v435, %v517
      %vm519 = vcmp.eq.f32.partialorder %v435, inf
      %v520 = vsel %vm519, %v435, %v518
      %vm521 = vcmp.eq.f32.partialorder %v435, 0.0
      %v522 = vand.u32 %v435, 2147483648
      %v523 = vsel %vm521, %v522, %v520
      %v524 = vrsqrt.pop %v436
      %v525 = vmul.f32 %v436, %v524
      %vm526 = vcmp.eq.f32.partialorder %v436, inf
      %v527 = vsel %vm526, %v436, %v525
      %vm528 = vcmp.eq.f32.partialorder %v436, 0.0
      %v529 = vand.u32 %v436, 2147483648
      %v530 = vsel %vm528, %v529, %v527
      %v531 = vrsqrt.pop %v437
      %v532 = vmul.f32 %v437, %v531
      %vm533 = vcmp.eq.f32.partialorder %v437, inf
      %v534 = vsel %vm533, %v437, %v532
      %vm535 = vcmp.eq.f32.partialorder %v437, 0.0
      %v536 = vand.u32 %v437, 2147483648
      %v537 = vsel %vm535, %v536, %v534
      %v538 = vrsqrt.pop %v438
      %v539 = vmul.f32 %v438, %v538
      %vm540 = vcmp.eq.f32.partialorder %v438, inf
      %v541 = vsel %vm540, %v438, %v539
      %vm542 = vcmp.eq.f32.partialorder %v438, 0.0
      %v543 = vand.u32 %v438, 2147483648
      %v544 = vsel %vm542, %v543, %v541
      %v545 = vrsqrt.pop %v439
      %v546 = vmul.f32 %v439, %v545
      %vm547 = vcmp.eq.f32.partialorder %v439, inf
      %v548 = vsel %vm547, %v439, %v546
      %vm549 = vcmp.eq.f32.partialorder %v439, 0.0
      %v550 = vand.u32 %v439, 2147483648
      %v551 = vsel %vm549, %v550, %v548
      %v552 = vadd.f32 %v446, 1e-06
      %v553 = vadd.f32 %v453, 1e-06
      %v554 = vadd.f32 %v460, 1e-06
      %v555 = vadd.f32 %v467, 1e-06
      %v556 = vadd.f32 %v474, 1e-06
      %v557 = vadd.f32 %v481, 1e-06
      %v558 = vadd.f32 %v488, 1e-06
      %v559 = vadd.f32 %v495, 1e-06
      %v560 = vadd.f32 %v502, 1e-06
      %v561 = vadd.f32 %v509, 1e-06
      %v562 = vadd.f32 %v516, 1e-06
      %v563 = vadd.f32 %v523, 1e-06
      %v564 = vadd.f32 %v530, 1e-06
      %v565 = vadd.f32 %v537, 1e-06
      %v566 = vadd.f32 %v544, 1e-06
      %v567 = vadd.f32 %v551, 1e-06
      %v568 = vrcp.pop %v552
      %v569 = vrcp.pop %v553
      %v570 = vrcp.pop %v554
      %v571 = vrcp.pop %v555
      %v572 = vrcp.pop %v556
      %v573 = vrcp.pop %v557
      %v574 = vrcp.pop %v558
      %v575 = vrcp.pop %v559
      %v576 = vrcp.pop %v560
      %v577 = vrcp.pop %v561
      %v578 = vrcp.pop %v562
      %v579 = vrcp.pop %v563
      %v580 = vrcp.pop %v564
      %v581 = vrcp.pop %v565
      %v582 = vrcp.pop %v566
      %v583 = vrcp.pop %v567
      %v584 = vld [vmem:[%s1] sm:$0x1]
      %v585 = vmul.f32 %v360, %v568
      %v586 = vmul.f32 %v361, %v569
      %v587 = vmul.f32 %v362, %v570
      %v588 = vmul.f32 %v363, %v571
      %v589 = vmul.f32 %v364, %v572
      %v590 = vmul.f32 %v365, %v573
      %v591 = vmul.f32 %v366, %v574
      %v592 = vmul.f32 %v367, %v575
      %v593 = vmul.f32 %v368, %v576
      %v594 = vmul.f32 %v369, %v577
      %v595 = vmul.f32 %v370, %v578
      %v596 = vmul.f32 %v371, %v579
      %v597 = vmul.f32 %v372, %v580
      %v598 = vmul.f32 %v373, %v581
      %v599 = vmul.f32 %v374, %v582
      %v600 = vmul.f32 %v375, %v583
      %v602 = vlaneseq
      %v603 = vshrl.u32 %v602, 7
      %v604 = vsub.s32 0, %v603
      %v605 = vrot.slane %v584, %v604
      %v607 = vmul.f32 %v605, %v585
      %v608 = vmul.f32 %v605, %v586
      %v609 = vmul.f32 %v605, %v587
      %v610 = vmul.f32 %v605, %v588
      %v611 = vmul.f32 %v605, %v589
      %v612 = vmul.f32 %v605, %v590
      %v613 = vmul.f32 %v605, %v591
      %v614 = vmul.f32 %v605, %v592
      %v615 = vmul.f32 %v605, %v593
      %v616 = vmul.f32 %v605, %v594
      %v617 = vmul.f32 %v605, %v595
      %v618 = vmul.f32 %v605, %v596
      %v619 = vmul.f32 %v605, %v597
      %v620 = vmul.f32 %v605, %v598
      %v621 = vmul.f32 %v605, %v599
      %v622 = vmul.f32 %v605, %v600
      %v623 = vld [vmem:[%s2] sm:$0x1]
      %v625 = vlaneseq
      %v626 = vshrl.u32 %v625, 7
      %v627 = vsub.s32 0, %v626
      %v628 = vrot.slane %v623, %v627
      %v630 = vadd.f32 %v607, %v628
      %v631 = vadd.f32 %v608, %v628
      %v632 = vadd.f32 %v609, %v628
      %v633 = vadd.f32 %v610, %v628
      %v634 = vadd.f32 %v611, %v628
      %v635 = vadd.f32 %v612, %v628
      %v636 = vadd.f32 %v613, %v628
      %v637 = vadd.f32 %v614, %v628
      %v638 = vadd.f32 %v615, %v628
      %v639 = vadd.f32 %v616, %v628
      %v640 = vadd.f32 %v617, %v628
      %v641 = vadd.f32 %v618, %v628
      %v642 = vadd.f32 %v619, %v628
      %v643 = vadd.f32 %v620, %v628
      %v644 = vadd.f32 %v621, %v628
      %v645 = vadd.f32 %v622, %v628
      %v646 = vpack.c.bf16 %v631, %v630
      %v647 = vpack.c.bf16 %v633, %v632
      %v648 = vpack.c.bf16 %v635, %v634
      %v649 = vpack.c.bf16 %v637, %v636
      %v650 = vpack.c.bf16 %v639, %v638
      %v651 = vpack.c.bf16 %v641, %v640
      %v652 = vpack.c.bf16 %v643, %v642
      %v653 = vpack.c.bf16 %v645, %v644
      %v654 = vld [vmem:[%s275] sm:$0xff]
      %v655 = vld [vmem:[%s275 + $0x8] sm:$0xff]
      %v656 = vld [vmem:[%s275 + $0x10] sm:$0xff]
      %v657 = vld [vmem:[%s275 + $0x18] sm:$0xff]
      %v658 = vld [vmem:[%s275 + $0x20] sm:$0xff]
      %v659 = vld [vmem:[%s275 + $0x28] sm:$0xff]
      %v660 = vld [vmem:[%s275 + $0x30] sm:$0xff]
      %v661 = vld [vmem:[%s275 + $0x38] sm:$0xff]
      %v662 = vld [vmem:[%s275 + $0x40] sm:$0xff]
      %v663 = vld [vmem:[%s275 + $0x48] sm:$0xff]
      %v664 = vld [vmem:[%s275 + $0x50] sm:$0xff]
      %v665 = vld [vmem:[%s275 + $0x58] sm:$0xff]
      %v666 = vld [vmem:[%s275 + $0x60] sm:$0xff]
      %v667 = vld [vmem:[%s275 + $0x68] sm:$0xff]
      %v668 = vld [vmem:[%s275 + $0x70] sm:$0xff]
      %v669 = vld [vmem:[%s275 + $0x78] sm:$0xff]
      %v670 = vld [vmem:[%s275 + $0x80] sm:$0xff]
      %v671 = vld [vmem:[%s275 + $0x88] sm:$0xff]
      %v672 = vld [vmem:[%s275 + $0x90] sm:$0xff]
      %v673 = vld [vmem:[%s275 + $0x98] sm:$0xff]
      %v674 = vld [vmem:[%s275 + $0xa0] sm:$0xff]
      %v675 = vld [vmem:[%s275 + $0xa8] sm:$0xff]
      %v676 = vld [vmem:[%s275 + $0xb0] sm:$0xff]
      %v677 = vld [vmem:[%s275 + $0xb8] sm:$0xff]
      %v678 = vld [vmem:[%s275 + $0xc0] sm:$0xff]
      %v679 = vld [vmem:[%s275 + $0xc8] sm:$0xff]
      %v680 = vld [vmem:[%s275 + $0xd0] sm:$0xff]
      %v681 = vld [vmem:[%s275 + $0xd8] sm:$0xff]
      %v682 = vld [vmem:[%s275 + $0xe0] sm:$0xff]
      %v683 = vld [vmem:[%s275 + $0xe8] sm:$0xff]
      %v684 = vld [vmem:[%s275 + $0xf0] sm:$0xff]
      %v685 = vld [vmem:[%s275 + $0xf8] sm:$0xff]
      %v686 = vld [vmem:[%s280] sm:$0xf]
      %v688 = vlaneseq
      %v689 = vshrl.u32 %v688, 7
      %v690 = vsub.s32 0, %v689
      %v691 = vrot.slane %v686, %v690
      %v692 = vlaneseq
      %v693 = vshrl.u32 %v692, 7
      %v694 = vsub.s32 1, %v693
      %v695 = vrot.slane %v686, %v694
      %v696 = vlaneseq
      %v697 = vshrl.u32 %v696, 7
      %v698 = vsub.s32 2, %v697
      %v699 = vrot.slane %v686, %v698
      %v700 = vlaneseq
      %v701 = vshrl.u32 %v700, 7
      %v702 = vsub.s32 3, %v701
      %v703 = vrot.slane %v686, %v702
      %v740 = vunpack.c.l.b16 %v654
      %v741 = vunpack.c.h.b16 %v654
      %v742 = vunpack.c.l.b16 %v655
      %v743 = vunpack.c.h.b16 %v655
      %v744 = vunpack.c.l.b16 %v656
      %v745 = vunpack.c.h.b16 %v656
      %v746 = vunpack.c.l.b16 %v657
      %v747 = vunpack.c.h.b16 %v657
      %v748 = vunpack.c.l.b16 %v658
      %v749 = vunpack.c.h.b16 %v658
      %v750 = vunpack.c.l.b16 %v659
      %v751 = vunpack.c.h.b16 %v659
      %v752 = vunpack.c.l.b16 %v660
      %v753 = vunpack.c.h.b16 %v660
      %v754 = vunpack.c.l.b16 %v661
      %v755 = vunpack.c.h.b16 %v661
      %v756 = vunpack.c.l.b16 %v662
      %v757 = vunpack.c.h.b16 %v662
      %v758 = vunpack.c.l.b16 %v663
      %v759 = vunpack.c.h.b16 %v663
      %v760 = vunpack.c.l.b16 %v664
      %v761 = vunpack.c.h.b16 %v664
      %v762 = vunpack.c.l.b16 %v665
      %v763 = vunpack.c.h.b16 %v665
      %v764 = vunpack.c.l.b16 %v666
      %v765 = vunpack.c.h.b16 %v666
      %v766 = vunpack.c.l.b16 %v667
      %v767 = vunpack.c.h.b16 %v667
      %v768 = vunpack.c.l.b16 %v668
      %v769 = vunpack.c.h.b16 %v668
      %v770 = vunpack.c.l.b16 %v669
      %v771 = vunpack.c.h.b16 %v669
      %v772 = vunpack.c.l.b16 %v670
      %v773 = vunpack.c.h.b16 %v670
      %v774 = vunpack.c.l.b16 %v671
      %v775 = vunpack.c.h.b16 %v671
      %v776 = vunpack.c.l.b16 %v672
      %v777 = vunpack.c.h.b16 %v672
      %v778 = vunpack.c.l.b16 %v673
      %v779 = vunpack.c.h.b16 %v673
      %v780 = vunpack.c.l.b16 %v674
      %v781 = vunpack.c.h.b16 %v674
      %v782 = vunpack.c.l.b16 %v675
      %v783 = vunpack.c.h.b16 %v675
      %v784 = vunpack.c.l.b16 %v676
      %v785 = vunpack.c.h.b16 %v676
      %v786 = vunpack.c.l.b16 %v677
      %v787 = vunpack.c.h.b16 %v677
      %v788 = vunpack.c.l.b16 %v678
      %v789 = vunpack.c.h.b16 %v678
      %v790 = vunpack.c.l.b16 %v679
      %v791 = vunpack.c.h.b16 %v679
      %v792 = vunpack.c.l.b16 %v680
      %v793 = vunpack.c.h.b16 %v680
      %v794 = vunpack.c.l.b16 %v681
      %v795 = vunpack.c.h.b16 %v681
      %v796 = vunpack.c.l.b16 %v682
      %v797 = vunpack.c.h.b16 %v682
      %v798 = vunpack.c.l.b16 %v683
      %v799 = vunpack.c.h.b16 %v683
      %v800 = vunpack.c.l.b16 %v684
      %v801 = vunpack.c.h.b16 %v684
      %v802 = vunpack.c.l.b16 %v685
      %v803 = vunpack.c.h.b16 %v685
      %v804 = vpack.c.b16 %v744, %v740
      %v805 = vpack.c.b16 %v745, %v741
      %v806 = vpack.c.b16 %v746, %v742
      %v807 = vpack.c.b16 %v747, %v743
      %v808 = vpack.c.b16 %v752, %v748
      %v809 = vpack.c.b16 %v753, %v749
      %v810 = vpack.c.b16 %v754, %v750
      %v811 = vpack.c.b16 %v755, %v751
      %v812 = vpack.c.b16 %v760, %v756
      %v813 = vpack.c.b16 %v761, %v757
      %v814 = vpack.c.b16 %v762, %v758
      %v815 = vpack.c.b16 %v763, %v759
      %v816 = vpack.c.b16 %v768, %v764
      %v817 = vpack.c.b16 %v769, %v765
      %v818 = vpack.c.b16 %v770, %v766
      %v819 = vpack.c.b16 %v771, %v767
      %v820 = vpack.c.b16 %v776, %v772
      %v821 = vpack.c.b16 %v777, %v773
      %v822 = vpack.c.b16 %v778, %v774
      %v823 = vpack.c.b16 %v779, %v775
      %v824 = vpack.c.b16 %v784, %v780
      %v825 = vpack.c.b16 %v785, %v781
      %v826 = vpack.c.b16 %v786, %v782
      %v827 = vpack.c.b16 %v787, %v783
      %v828 = vpack.c.b16 %v792, %v788
      %v829 = vpack.c.b16 %v793, %v789
      %v830 = vpack.c.b16 %v794, %v790
      %v831 = vpack.c.b16 %v795, %v791
      %v832 = vpack.c.b16 %v800, %v796
      %v833 = vpack.c.b16 %v801, %v797
      %v834 = vpack.c.b16 %v802, %v798
      %v835 = vpack.c.b16 %v803, %v799
      %868 = vmatprep.subr.bf16.mxu0 %v805
      %869 = vmatpush1.bf16.msra.mxu0 %v804
      %870 = vmatprep.subr.bf16.mxu0 %v809
      %871 = vmatpush1.bf16.msra.mxu0 %v808
      %872 = vmatprep.subr.bf16.mxu0 %v813
      %873 = vmatpush1.bf16.msra.mxu0 %v812
      %874 = vmatprep.subr.bf16.mxu0 %v817
      %875 = vmatpush1.bf16.msra.mxu0 %v816
      %876 = vmatprep.subr.bf16.mxu0 %v821
      %877 = vmatpush1.bf16.msra.mxu0 %v820
      %878 = vmatprep.subr.bf16.mxu0 %v825
      %879 = vmatpush1.bf16.msra.mxu0 %v824
      %880 = vmatprep.subr.bf16.mxu0 %v829
      %881 = vmatpush1.bf16.msra.mxu0 %v828
      %882 = vmatprep.subr.bf16.mxu0 %v833
      %883 = vmatpush1.bf16.msra.mxu0 %v832
      %884 = vmatprep.subr.bf16.mxu0 0
      %885 = vmatpush1.bf16.msra.mxu0 0
      %886 = vmatprep.subr.bf16.mxu0 0
      %887 = vmatpush1.bf16.msra.mxu0 0
      %888 = vmatprep.subr.bf16.mxu0 0
      %889 = vmatpush1.bf16.msra.mxu0 0
      %890 = vmatprep.subr.bf16.mxu0 0
      %891 = vmatpush1.bf16.msra.mxu0 0
      %892 = vmatprep.subr.bf16.mxu0 0
      %893 = vmatpush1.bf16.msra.mxu0 0
      %894 = vmatprep.subr.bf16.mxu0 0
      %895 = vmatpush1.bf16.msra.mxu0 0
      %896 = vmatprep.subr.bf16.mxu0 0
      %897 = vmatpush1.bf16.msra.mxu0 0
      %898 = vmatprep.subr.bf16.mxu0 0
      %899 = vmatpush1.bf16.msra.mxu0 0
      %900 = vmatprep.mubr.bf16.mxu0 0
      %901 = vmatmul.mubr.bf16.gmra.mrb[0].mxu0 %v646
      %v902 = vpop.f32.mrb[0].mxu0
      %v903 = vadd.f32 %v691, %v902
      %v904 = vpop.f32.mrb[0].mxu0
      %v905 = vadd.f32 %v695, %v904
      %v906 = vpop.f32.mrb[0].mxu0
      %v907 = vadd.f32 %v691, %v906
      %v908 = vpop.f32.mrb[0].mxu0
      %v909 = vadd.f32 %v695, %v908
      %910 = vmatprep.mubr.bf16.mxu0 0
      %911 = vmatmul.mubr.bf16.gmra.mrb[0].mxu0 %v647
      %v912 = vpop.f32.mrb[0].mxu0
      %v913 = vadd.f32 %v691, %v912
      %v914 = vpop.f32.mrb[0].mxu0
      %v915 = vadd.f32 %v695, %v914
      %v916 = vpop.f32.mrb[0].mxu0
      %v917 = vadd.f32 %v691, %v916
      %v918 = vpop.f32.mrb[0].mxu0
      %v919 = vadd.f32 %v695, %v918
      %920 = vmatprep.mubr.bf16.mxu0 0
      %921 = vmatmul.mubr.bf16.gmra.mrb[0].mxu0 %v648
      %v922 = vpop.f32.mrb[0].mxu0
      %v923 = vadd.f32 %v691, %v922
      %v924 = vpop.f32.mrb[0].mxu0
      %v925 = vadd.f32 %v695, %v924
      %v926 = vpop.f32.mrb[0].mxu0
      %v927 = vadd.f32 %v691, %v926
      %v928 = vpop.f32.mrb[0].mxu0
      %v929 = vadd.f32 %v695, %v928
      %930 = vmatprep.mubr.bf16.mxu0 0
      %931 = vmatmul.mubr.bf16.gmra.mrb[0].mxu0 %v649
      %v932 = vpop.f32.mrb[0].mxu0
      %v933 = vadd.f32 %v691, %v932
      %v934 = vpop.f32.mrb[0].mxu0
      %v935 = vadd.f32 %v695, %v934
      %v936 = vpop.f32.mrb[0].mxu0
      %v937 = vadd.f32 %v691, %v936
      %v938 = vpop.f32.mrb[0].mxu0
      %v939 = vadd.f32 %v695, %v938
      %940 = vmatprep.mubr.bf16.mxu0 0
      %941 = vmatmul.mubr.bf16.gmra.mrb[0].mxu0 %v650
      %v942 = vpop.f32.mrb[0].mxu0
      %v943 = vadd.f32 %v691, %v942
      %v944 = vpop.f32.mrb[0].mxu0
      %v945 = vadd.f32 %v695, %v944
      %v946 = vpop.f32.mrb[0].mxu0
      %v947 = vadd.f32 %v691, %v946
      %v948 = vpop.f32.mrb[0].mxu0
      %v949 = vadd.f32 %v695, %v948
      %950 = vmatprep.mubr.bf16.mxu0 0
      %951 = vmatmul.mubr.bf16.gmra.mrb[0].mxu0 %v651
      %v952 = vpop.f32.mrb[0].mxu0
      %v953 = vadd.f32 %v691, %v952
      %v954 = vpop.f32.mrb[0].mxu0
      %v955 = vadd.f32 %v695, %v954
      %v956 = vpop.f32.mrb[0].mxu0
      %v957 = vadd.f32 %v691, %v956
      %v958 = vpop.f32.mrb[0].mxu0
      %v959 = vadd.f32 %v695, %v958
      %960 = vmatprep.mubr.bf16.mxu0 0
      %961 = vmatmul.mubr.bf16.gmra.mrb[0].mxu0 %v652
      %v962 = vpop.f32.mrb[0].mxu0
      %v963 = vadd.f32 %v691, %v962
      %v964 = vpop.f32.mrb[0].mxu0
      %v965 = vadd.f32 %v695, %v964
      %v966 = vpop.f32.mrb[0].mxu0
      %v967 = vadd.f32 %v691, %v966
      %v968 = vpop.f32.mrb[0].mxu0
      %v969 = vadd.f32 %v695, %v968
      %970 = vmatprep.mubr.bf16.mxu0 0
      %971 = vmatmul.mubr.bf16.gmra.mrb[0].mxu0 %v653
      %v972 = vpop.f32.mrb[0].mxu0
      %v973 = vadd.f32 %v691, %v972
      %v974 = vpop.f32.mrb[0].mxu0
      %v975 = vadd.f32 %v695, %v974
      %v976 = vpop.f32.mrb[0].mxu0
      %v977 = vadd.f32 %v691, %v976
      %v978 = vpop.f32.mrb[0].mxu0
      %v979 = vadd.f32 %v695, %v978
      %980 = vdwg.mxu0
      %981 = vmatprep.subr.bf16.mxu0 %v807
      %982 = vmatpush1.bf16.msra.mxu0 %v806
      %983 = vmatprep.subr.bf16.mxu0 %v811
      %984 = vmatpush1.bf16.msra.mxu0 %v810
      %985 = vmatprep.subr.bf16.mxu0 %v815
      %986 = vmatpush1.bf16.msra.mxu0 %v814
      %987 = vmatprep.subr.bf16.mxu0 %v819
      %988 = vmatpush1.bf16.msra.mxu0 %v818
      %989 = vmatprep.subr.bf16.mxu0 %v823
      %990 = vmatpush1.bf16.msra.mxu0 %v822
      %991 = vmatprep.subr.bf16.mxu0 %v827
      %992 = vmatpush1.bf16.msra.mxu0 %v826
      %993 = vmatprep.subr.bf16.mxu0 %v831
      %994 = vmatpush1.bf16.msra.mxu0 %v830
      %995 = vmatprep.subr.bf16.mxu0 %v835
      %996 = vmatpush1.bf16.msra.mxu0 %v834
      %997 = vmatprep.subr.bf16.mxu0 0
      %998 = vmatpush1.bf16.msra.mxu0 0
      %999 = vmatprep.subr.bf16.mxu0 0
      %1000 = vmatpush1.bf16.msra.mxu0 0
      %1001 = vmatprep.subr.bf16.mxu0 0
      %1002 = vmatpush1.bf16.msra.mxu0 0
      %1003 = vmatprep.subr.bf16.mxu0 0
      %1004 = vmatpush1.bf16.msra.mxu0 0
      %1005 = vmatprep.subr.bf16.mxu0 0
      %1006 = vmatpush1.bf16.msra.mxu0 0
      %1007 = vmatprep.subr.bf16.mxu0 0
      %1008 = vmatpush1.bf16.msra.mxu0 0
      %1009 = vmatprep.subr.bf16.mxu0 0
      %1010 = vmatpush1.bf16.msra.mxu0 0
      %1011 = vmatprep.subr.bf16.mxu0 0
      %1012 = vmatpush1.bf16.msra.mxu0 0
      %1013 = vmatprep.mubr.bf16.mxu0 0
      %1014 = vmatmul.mubr.bf16.gmra.mrb[0].mxu0 %v646
      %v1015 = vpop.f32.mrb[0].mxu0
      %v1016 = vadd.f32 %v699, %v1015
      %v1017 = vpop.f32.mrb[0].mxu0
      %v1018 = vadd.f32 %v703, %v1017
      %v1019 = vpop.f32.mrb[0].mxu0
      %v1020 = vadd.f32 %v699, %v1019
      %v1021 = vpop.f32.mrb[0].mxu0
      %v1022 = vadd.f32 %v703, %v1021
      %1023 = vmatprep.mubr.bf16.mxu0 0
      %1024 = vmatmul.mubr.bf16.gmra.mrb[0].mxu0 %v647
      %v1025 = vpop.f32.mrb[0].mxu0
      %v1026 = vadd.f32 %v699, %v1025
      %v1027 = vpop.f32.mrb[0].mxu0
      %v1028 = vadd.f32 %v703, %v1027
      %v1029 = vpop.f32.mrb[0].mxu0
      %v1030 = vadd.f32 %v699, %v1029
      %v1031 = vpop.f32.mrb[0].mxu0
      %v1032 = vadd.f32 %v703, %v1031
      %1033 = vmatprep.mubr.bf16.mxu0 0
      %1034 = vmatmul.mubr.bf16.gmra.mrb[0].mxu0 %v648
      %v1035 = vpop.f32.mrb[0].mxu0
      %v1036 = vadd.f32 %v699, %v1035
      %v1037 = vpop.f32.mrb[0].mxu0
      %v1038 = vadd.f32 %v703, %v1037
      %v1039 = vpop.f32.mrb[0].mxu0
      %v1040 = vadd.f32 %v699, %v1039
      %v1041 = vpop.f32.mrb[0].mxu0
      %v1042 = vadd.f32 %v703, %v1041
      %1043 = vmatprep.mubr.bf16.mxu0 0
      %1044 = vmatmul.mubr.bf16.gmra.mrb[0].mxu0 %v649
      %v1045 = vpop.f32.mrb[0].mxu0
      %v1046 = vadd.f32 %v699, %v1045
      %v1047 = vpop.f32.mrb[0].mxu0
      %v1048 = vadd.f32 %v703, %v1047
      %v1049 = vpop.f32.mrb[0].mxu0
      %v1050 = vadd.f32 %v699, %v1049
      %v1051 = vpop.f32.mrb[0].mxu0
      %v1052 = vadd.f32 %v703, %v1051
      %1053 = vmatprep.mubr.bf16.mxu0 0
      %1054 = vmatmul.mubr.bf16.gmra.mrb[0].mxu0 %v650
      %v1055 = vpop.f32.mrb[0].mxu0
      %v1056 = vadd.f32 %v699, %v1055
      %v1057 = vpop.f32.mrb[0].mxu0
      %v1058 = vadd.f32 %v703, %v1057
      %v1059 = vpop.f32.mrb[0].mxu0
      %v1060 = vadd.f32 %v699, %v1059
      %v1061 = vpop.f32.mrb[0].mxu0
      %v1062 = vadd.f32 %v703, %v1061
      %1063 = vmatprep.mubr.bf16.mxu0 0
      %1064 = vmatmul.mubr.bf16.gmra.mrb[0].mxu0 %v651
      %v1065 = vpop.f32.mrb[0].mxu0
      %v1066 = vadd.f32 %v699, %v1065
      %v1067 = vpop.f32.mrb[0].mxu0
      %v1068 = vadd.f32 %v703, %v1067
      %v1069 = vpop.f32.mrb[0].mxu0
      %v1070 = vadd.f32 %v699, %v1069
      %v1071 = vpop.f32.mrb[0].mxu0
      %v1072 = vadd.f32 %v703, %v1071
      %1073 = vmatprep.mubr.bf16.mxu0 0
      %1074 = vmatmul.mubr.bf16.gmra.mrb[0].mxu0 %v652
      %v1075 = vpop.f32.mrb[0].mxu0
      %v1076 = vadd.f32 %v699, %v1075
      %v1077 = vpop.f32.mrb[0].mxu0
      %v1078 = vadd.f32 %v703, %v1077
      %v1079 = vpop.f32.mrb[0].mxu0
      %v1080 = vadd.f32 %v699, %v1079
      %v1081 = vpop.f32.mrb[0].mxu0
      %v1082 = vadd.f32 %v703, %v1081
      %1083 = vmatprep.mubr.bf16.mxu0 0
      %1084 = vmatmul.mubr.bf16.gmra.mrb[0].mxu0 %v653
      %v1085 = vpop.f32.mrb[0].mxu0
      %v1086 = vadd.f32 %v699, %v1085
      %v1087 = vpop.f32.mrb[0].mxu0
      %v1088 = vadd.f32 %v703, %v1087
      %v1089 = vpop.f32.mrb[0].mxu0
      %v1090 = vadd.f32 %v699, %v1089
      %v1091 = vpop.f32.mrb[0].mxu0
      %v1092 = vadd.f32 %v703, %v1091
      %1093 = vdwg.mxu0
      %v1094 = vmul.f32 %v903, 0.5
      %v1095 = vmul.f32 %v905, 0.5
      %v1096 = vmul.f32 %v1016, 0.5
      %v1097 = vmul.f32 %v1018, 0.5
      %v1098 = vmul.f32 %v907, 0.5
      %v1099 = vmul.f32 %v909, 0.5
      %v1100 = vmul.f32 %v1020, 0.5
      %v1101 = vmul.f32 %v1022, 0.5
      %v1102 = vmul.f32 %v913, 0.5
      %v1103 = vmul.f32 %v915, 0.5
      %v1104 = vmul.f32 %v1026, 0.5
      %v1105 = vmul.f32 %v1028, 0.5
      %v1106 = vmul.f32 %v917, 0.5
      %v1107 = vmul.f32 %v919, 0.5
      %v1108 = vmul.f32 %v1030, 0.5
      %v1109 = vmul.f32 %v1032, 0.5
      %v1110 = vmul.f32 %v923, 0.5
      %v1111 = vmul.f32 %v925, 0.5
      %v1112 = vmul.f32 %v1036, 0.5
      %v1113 = vmul.f32 %v1038, 0.5
      %v1114 = vmul.f32 %v927, 0.5
      %v1115 = vmul.f32 %v929, 0.5
      %v1116 = vmul.f32 %v1040, 0.5
      %v1117 = vmul.f32 %v1042, 0.5
      %v1118 = vmul.f32 %v933, 0.5
      %v1119 = vmul.f32 %v935, 0.5
      %v1120 = vmul.f32 %v1046, 0.5
      %v1121 = vmul.f32 %v1048, 0.5
      %v1122 = vmul.f32 %v937, 0.5
      %v1123 = vmul.f32 %v939, 0.5
      %v1124 = vmul.f32 %v1050, 0.5
      %v1125 = vmul.f32 %v1052, 0.5
      %v1126 = vmul.f32 %v943, 0.5
      %v1127 = vmul.f32 %v945, 0.5
      %v1128 = vmul.f32 %v1056, 0.5
      %v1129 = vmul.f32 %v1058, 0.5
      %v1130 = vmul.f32 %v947, 0.5
      %v1131 = vmul.f32 %v949, 0.5
      %v1132 = vmul.f32 %v1060, 0.5
      %v1133 = vmul.f32 %v1062, 0.5
      %v1134 = vmul.f32 %v953, 0.5
      %v1135 = vmul.f32 %v955, 0.5
      %v1136 = vmul.f32 %v1066, 0.5
      %v1137 = vmul.f32 %v1068, 0.5
      %v1138 = vmul.f32 %v957, 0.5
      %v1139 = vmul.f32 %v959, 0.5
      %v1140 = vmul.f32 %v1070, 0.5
      %v1141 = vmul.f32 %v1072, 0.5
      %v1142 = vmul.f32 %v963, 0.5
      %v1143 = vmul.f32 %v965, 0.5
      %v1144 = vmul.f32 %v1076, 0.5
      %v1145 = vmul.f32 %v1078, 0.5
      %v1146 = vmul.f32 %v967, 0.5
      %v1147 = vmul.f32 %v969, 0.5
      %v1148 = vmul.f32 %v1080, 0.5
      %v1149 = vmul.f32 %v1082, 0.5
      %v1150 = vmul.f32 %v973, 0.5
      %v1151 = vmul.f32 %v975, 0.5
      %v1152 = vmul.f32 %v1086, 0.5
      %v1153 = vmul.f32 %v1088, 0.5
      %v1154 = vmul.f32 %v977, 0.5
      %v1155 = vmul.f32 %v979, 0.5
      %v1156 = vmul.f32 %v1090, 0.5
      %v1157 = vmul.f32 %v1092, 0.5
      %v1158 = vmul.f32 %v903, 0.044715
      %v1159 = vmul.f32 %v905, 0.044715
      %v1160 = vmul.f32 %v1016, 0.044715
      %v1161 = vmul.f32 %v1018, 0.044715
      %v1162 = vmul.f32 %v907, 0.044715
      %v1163 = vmul.f32 %v909, 0.044715
      %v1164 = vmul.f32 %v1020, 0.044715
      %v1165 = vmul.f32 %v1022, 0.044715
      %v1166 = vmul.f32 %v913, 0.044715
      %v1167 = vmul.f32 %v915, 0.044715
      %v1168 = vmul.f32 %v1026, 0.044715
      %v1169 = vmul.f32 %v1028, 0.044715
      %v1170 = vmul.f32 %v917, 0.044715
      %v1171 = vmul.f32 %v919, 0.044715
      %v1172 = vmul.f32 %v1030, 0.044715
      %v1173 = vmul.f32 %v1032, 0.044715
      %v1174 = vmul.f32 %v923, 0.044715
      %v1175 = vmul.f32 %v925, 0.044715
      %v1176 = vmul.f32 %v1036, 0.044715
      %v1177 = vmul.f32 %v1038, 0.044715
      %v1178 = vmul.f32 %v927, 0.044715
      %v1179 = vmul.f32 %v929, 0.044715
      %v1180 = vmul.f32 %v1040, 0.044715
      %v1181 = vmul.f32 %v1042, 0.044715
      %v1182 = vmul.f32 %v933, 0.044715
      %v1183 = vmul.f32 %v935, 0.044715
      %v1184 = vmul.f32 %v1046, 0.044715
      %v1185 = vmul.f32 %v1048, 0.044715
      %v1186 = vmul.f32 %v937, 0.044715
      %v1187 = vmul.f32 %v939, 0.044715
      %v1188 = vmul.f32 %v1050, 0.044715
      %v1189 = vmul.f32 %v1052, 0.044715
      %v1190 = vmul.f32 %v943, 0.044715
      %v1191 = vmul.f32 %v945, 0.044715
      %v1192 = vmul.f32 %v1056, 0.044715
      %v1193 = vmul.f32 %v1058, 0.044715
      %v1194 = vmul.f32 %v947, 0.044715
      %v1195 = vmul.f32 %v949, 0.044715
      %v1196 = vmul.f32 %v1060, 0.044715
      %v1197 = vmul.f32 %v1062, 0.044715
      %v1198 = vmul.f32 %v953, 0.044715
      %v1199 = vmul.f32 %v955, 0.044715
      %v1200 = vmul.f32 %v1066, 0.044715
      %v1201 = vmul.f32 %v1068, 0.044715
      %v1202 = vmul.f32 %v957, 0.044715
      %v1203 = vmul.f32 %v959, 0.044715
      %v1204 = vmul.f32 %v1070, 0.044715
      %v1205 = vmul.f32 %v1072, 0.044715
      %v1206 = vmul.f32 %v963, 0.044715
      %v1207 = vmul.f32 %v965, 0.044715
      %v1208 = vmul.f32 %v1076, 0.044715
      %v1209 = vmul.f32 %v1078, 0.044715
      %v1210 = vmul.f32 %v967, 0.044715
      %v1211 = vmul.f32 %v969, 0.044715
      %v1212 = vmul.f32 %v1080, 0.044715
      %v1213 = vmul.f32 %v1082, 0.044715
      %v1214 = vmul.f32 %v973, 0.044715
      %v1215 = vmul.f32 %v975, 0.044715
      %v1216 = vmul.f32 %v1086, 0.044715
      %v1217 = vmul.f32 %v1088, 0.044715
      %v1218 = vmul.f32 %v977, 0.044715
      %v1219 = vmul.f32 %v979, 0.044715
      %v1220 = vmul.f32 %v1090, 0.044715
      %v1221 = vmul.f32 %v1092, 0.044715
      %v1222 = vmul.f32 %v1158, %v903
      %v1223 = vmul.f32 %v1159, %v905
      %v1224 = vmul.f32 %v1160, %v1016
      %v1225 = vmul.f32 %v1161, %v1018
      %v1226 = vmul.f32 %v1162, %v907
      %v1227 = vmul.f32 %v1163, %v909
      %v1228 = vmul.f32 %v1164, %v1020
      %v1229 = vmul.f32 %v1165, %v1022
      %v1230 = vmul.f32 %v1166, %v913
      %v1231 = vmul.f32 %v1167, %v915
      %v1232 = vmul.f32 %v1168, %v1026
      %v1233 = vmul.f32 %v1169, %v1028
      %v1234 = vmul.f32 %v1170, %v917
      %v1235 = vmul.f32 %v1171, %v919
      %v1236 = vmul.f32 %v1172, %v1030
      %v1237 = vmul.f32 %v1173, %v1032
      %v1238 = vmul.f32 %v1174, %v923
      %v1239 = vmul.f32 %v1175, %v925
      %v1240 = vmul.f32 %v1176, %v1036
      %v1241 = vmul.f32 %v1177, %v1038
      %v1242 = vmul.f32 %v1178, %v927
      %v1243 = vmul.f32 %v1179, %v929
      %v1244 = vmul.f32 %v1180, %v1040
      %v1245 = vmul.f32 %v1181, %v1042
      %v1246 = vmul.f32 %v1182, %v933
      %v1247 = vmul.f32 %v1183, %v935
      %v1248 = vmul.f32 %v1184, %v1046
      %v1249 = vmul.f32 %v1185, %v1048
      %v1250 = vmul.f32 %v1186, %v937
      %v1251 = vmul.f32 %v1187, %v939
      %v1252 = vmul.f32 %v1188, %v1050
      %v1253 = vmul.f32 %v1189, %v1052
      %v1254 = vmul.f32 %v1190, %v943
      %v1255 = vmul.f32 %v1191, %v945
      %v1256 = vmul.f32 %v1192, %v1056
      %v1257 = vmul.f32 %v1193, %v1058
      %v1258 = vmul.f32 %v1194, %v947
      %v1259 = vmul.f32 %v1195, %v949
      %v1260 = vmul.f32 %v1196, %v1060
      %v1261 = vmul.f32 %v1197, %v1062
      %v1262 = vmul.f32 %v1198, %v953
      %v1263 = vmul.f32 %v1199, %v955
      %v1264 = vmul.f32 %v1200, %v1066
      %v1265 = vmul.f32 %v1201, %v1068
      %v1266 = vmul.f32 %v1202, %v957
      %v1267 = vmul.f32 %v1203, %v959
      %v1268 = vmul.f32 %v1204, %v1070
      %v1269 = vmul.f32 %v1205, %v1072
      %v1270 = vmul.f32 %v1206, %v963
      %v1271 = vmul.f32 %v1207, %v965
      %v1272 = vmul.f32 %v1208, %v1076
      %v1273 = vmul.f32 %v1209, %v1078
      %v1274 = vmul.f32 %v1210, %v967
      %v1275 = vmul.f32 %v1211, %v969
      %v1276 = vmul.f32 %v1212, %v1080
      %v1277 = vmul.f32 %v1213, %v1082
      %v1278 = vmul.f32 %v1214, %v973
      %v1279 = vmul.f32 %v1215, %v975
      %v1280 = vmul.f32 %v1216, %v1086
      %v1281 = vmul.f32 %v1217, %v1088
      %v1282 = vmul.f32 %v1218, %v977
      %v1283 = vmul.f32 %v1219, %v979
      %v1284 = vmul.f32 %v1220, %v1090
      %v1285 = vmul.f32 %v1221, %v1092
      %v1286 = vmul.f32 %v1222, %v903
      %v1287 = vmul.f32 %v1223, %v905
      %v1288 = vmul.f32 %v1224, %v1016
      %v1289 = vmul.f32 %v1225, %v1018
      %v1290 = vmul.f32 %v1226, %v907
      %v1291 = vmul.f32 %v1227, %v909
      %v1292 = vmul.f32 %v1228, %v1020
      %v1293 = vmul.f32 %v1229, %v1022
      %v1294 = vmul.f32 %v1230, %v913
      %v1295 = vmul.f32 %v1231, %v915
      %v1296 = vmul.f32 %v1232, %v1026
      %v1297 = vmul.f32 %v1233, %v1028
      %v1298 = vmul.f32 %v1234, %v917
      %v1299 = vmul.f32 %v1235, %v919
      %v1300 = vmul.f32 %v1236, %v1030
      %v1301 = vmul.f32 %v1237, %v1032
      %v1302 = vmul.f32 %v1238, %v923
      %v1303 = vmul.f32 %v1239, %v925
      %v1304 = vmul.f32 %v1240, %v1036
      %v1305 = vmul.f32 %v1241, %v1038
      %v1306 = vmul.f32 %v1242, %v927
      %v1307 = vmul.f32 %v1243, %v929
      %v1308 = vmul.f32 %v1244, %v1040
      %v1309 = vmul.f32 %v1245, %v1042
      %v1310 = vmul.f32 %v1246, %v933
      %v1311 = vmul.f32 %v1247, %v935
      %v1312 = vmul.f32 %v1248, %v1046
      %v1313 = vmul.f32 %v1249, %v1048
      %v1314 = vmul.f32 %v1250, %v937
      %v1315 = vmul.f32 %v1251, %v939
      %v1316 = vmul.f32 %v1252, %v1050
      %v1317 = vmul.f32 %v1253, %v1052
      %v1318 = vmul.f32 %v1254, %v943
      %v1319 = vmul.f32 %v1255, %v945
      %v1320 = vmul.f32 %v1256, %v1056
      %v1321 = vmul.f32 %v1257, %v1058
      %v1322 = vmul.f32 %v1258, %v947
      %v1323 = vmul.f32 %v1259, %v949
      %v1324 = vmul.f32 %v1260, %v1060
      %v1325 = vmul.f32 %v1261, %v1062
      %v1326 = vmul.f32 %v1262, %v953
      %v1327 = vmul.f32 %v1263, %v955
      %v1328 = vmul.f32 %v1264, %v1066
      %v1329 = vmul.f32 %v1265, %v1068
      %v1330 = vmul.f32 %v1266, %v957
      %v1331 = vmul.f32 %v1267, %v959
      %v1332 = vmul.f32 %v1268, %v1070
      %v1333 = vmul.f32 %v1269, %v1072
      %v1334 = vmul.f32 %v1270, %v963
      %v1335 = vmul.f32 %v1271, %v965
      %v1336 = vmul.f32 %v1272, %v1076
      %v1337 = vmul.f32 %v1273, %v1078
      %v1338 = vmul.f32 %v1274, %v967
      %v1339 = vmul.f32 %v1275, %v969
      %v1340 = vmul.f32 %v1276, %v1080
      %v1341 = vmul.f32 %v1277, %v1082
      %v1342 = vmul.f32 %v1278, %v973
      %v1343 = vmul.f32 %v1279, %v975
      %v1344 = vmul.f32 %v1280, %v1086
      %v1345 = vmul.f32 %v1281, %v1088
      %v1346 = vmul.f32 %v1282, %v977
      %v1347 = vmul.f32 %v1283, %v979
      %v1348 = vmul.f32 %v1284, %v1090
      %v1349 = vmul.f32 %v1285, %v1092
      %v1350 = vadd.f32 %v903, %v1286
      %v1351 = vadd.f32 %v905, %v1287
      %v1352 = vadd.f32 %v1016, %v1288
      %v1353 = vadd.f32 %v1018, %v1289
      %v1354 = vadd.f32 %v907, %v1290
      %v1355 = vadd.f32 %v909, %v1291
      %v1356 = vadd.f32 %v1020, %v1292
      %v1357 = vadd.f32 %v1022, %v1293
      %v1358 = vadd.f32 %v913, %v1294
      %v1359 = vadd.f32 %v915, %v1295
      %v1360 = vadd.f32 %v1026, %v1296
      %v1361 = vadd.f32 %v1028, %v1297
      %v1362 = vadd.f32 %v917, %v1298
      %v1363 = vadd.f32 %v919, %v1299
      %v1364 = vadd.f32 %v1030, %v1300
      %v1365 = vadd.f32 %v1032, %v1301
      %v1366 = vadd.f32 %v923, %v1302
      %v1367 = vadd.f32 %v925, %v1303
      %v1368 = vadd.f32 %v1036, %v1304
      %v1369 = vadd.f32 %v1038, %v1305
      %v1370 = vadd.f32 %v927, %v1306
      %v1371 = vadd.f32 %v929, %v1307
      %v1372 = vadd.f32 %v1040, %v1308
      %v1373 = vadd.f32 %v1042, %v1309
      %v1374 = vadd.f32 %v933, %v1310
      %v1375 = vadd.f32 %v935, %v1311
      %v1376 = vadd.f32 %v1046, %v1312
      %v1377 = vadd.f32 %v1048, %v1313
      %v1378 = vadd.f32 %v937, %v1314
      %v1379 = vadd.f32 %v939, %v1315
      %v1380 = vadd.f32 %v1050, %v1316
      %v1381 = vadd.f32 %v1052, %v1317
      %v1382 = vadd.f32 %v943, %v1318
      %v1383 = vadd.f32 %v945, %v1319
      %v1384 = vadd.f32 %v1056, %v1320
      %v1385 = vadd.f32 %v1058, %v1321
      %v1386 = vadd.f32 %v947, %v1322
      %v1387 = vadd.f32 %v949, %v1323
      %v1388 = vadd.f32 %v1060, %v1324
      %v1389 = vadd.f32 %v1062, %v1325
      %v1390 = vadd.f32 %v953, %v1326
      %v1391 = vadd.f32 %v955, %v1327
      %v1392 = vadd.f32 %v1066, %v1328
      %v1393 = vadd.f32 %v1068, %v1329
      %v1394 = vadd.f32 %v957, %v1330
      %v1395 = vadd.f32 %v959, %v1331
      %v1396 = vadd.f32 %v1070, %v1332
      %v1397 = vadd.f32 %v1072, %v1333
      %v1398 = vadd.f32 %v963, %v1334
      %v1399 = vadd.f32 %v965, %v1335
      %v1400 = vadd.f32 %v1076, %v1336
      %v1401 = vadd.f32 %v1078, %v1337
      %v1402 = vadd.f32 %v967, %v1338
      %v1403 = vadd.f32 %v969, %v1339
      %v1404 = vadd.f32 %v1080, %v1340
      %v1405 = vadd.f32 %v1082, %v1341
      %v1406 = vadd.f32 %v973, %v1342
      %v1407 = vadd.f32 %v975, %v1343
      %v1408 = vadd.f32 %v1086, %v1344
      %v1409 = vadd.f32 %v1088, %v1345
      %v1410 = vadd.f32 %v977, %v1346
      %v1411 = vadd.f32 %v979, %v1347
      %v1412 = vadd.f32 %v1090, %v1348
      %v1413 = vadd.f32 %v1092, %v1349
      %v1414 = vmul.f32 %v1350, 0.7978846
      %v1415 = vmul.f32 %v1351, 0.7978846
      %v1416 = vmul.f32 %v1352, 0.7978846
      %v1417 = vmul.f32 %v1353, 0.7978846
      %v1418 = vmul.f32 %v1354, 0.7978846
      %v1419 = vmul.f32 %v1355, 0.7978846
      %v1420 = vmul.f32 %v1356, 0.7978846
      %v1421 = vmul.f32 %v1357, 0.7978846
      %v1422 = vmul.f32 %v1358, 0.7978846
      %v1423 = vmul.f32 %v1359, 0.7978846
      %v1424 = vmul.f32 %v1360, 0.7978846
      %v1425 = vmul.f32 %v1361, 0.7978846
      %v1426 = vmul.f32 %v1362, 0.7978846
      %v1427 = vmul.f32 %v1363, 0.7978846
      %v1428 = vmul.f32 %v1364, 0.7978846
      %v1429 = vmul.f32 %v1365, 0.7978846
      %v1430 = vmul.f32 %v1366, 0.7978846
      %v1431 = vmul.f32 %v1367, 0.7978846
      %v1432 = vmul.f32 %v1368, 0.7978846
      %v1433 = vmul.f32 %v1369, 0.7978846
      %v1434 = vmul.f32 %v1370, 0.7978846
      %v1435 = vmul.f32 %v1371, 0.7978846
      %v1436 = vmul.f32 %v1372, 0.7978846
      %v1437 = vmul.f32 %v1373, 0.7978846
      %v1438 = vmul.f32 %v1374, 0.7978846
      %v1439 = vmul.f32 %v1375, 0.7978846
      %v1440 = vmul.f32 %v1376, 0.7978846
      %v1441 = vmul.f32 %v1377, 0.7978846
      %v1442 = vmul.f32 %v1378, 0.7978846
      %v1443 = vmul.f32 %v1379, 0.7978846
      %v1444 = vmul.f32 %v1380, 0.7978846
      %v1445 = vmul.f32 %v1381, 0.7978846
      %v1446 = vmul.f32 %v1382, 0.7978846
      %v1447 = vmul.f32 %v1383, 0.7978846
      %v1448 = vmul.f32 %v1384, 0.7978846
      %v1449 = vmul.f32 %v1385, 0.7978846
      %v1450 = vmul.f32 %v1386, 0.7978846
      %v1451 = vmul.f32 %v1387, 0.7978846
      %v1452 = vmul.f32 %v1388, 0.7978846
      %v1453 = vmul.f32 %v1389, 0.7978846
      %v1454 = vmul.f32 %v1390, 0.7978846
      %v1455 = vmul.f32 %v1391, 0.7978846
      %v1456 = vmul.f32 %v1392, 0.7978846
      %v1457 = vmul.f32 %v1393, 0.7978846
      %v1458 = vmul.f32 %v1394, 0.7978846
      %v1459 = vmul.f32 %v1395, 0.7978846
      %v1460 = vmul.f32 %v1396, 0.7978846
      %v1461 = vmul.f32 %v1397, 0.7978846
      %v1462 = vmul.f32 %v1398, 0.7978846
      %v1463 = vmul.f32 %v1399, 0.7978846
      %v1464 = vmul.f32 %v1400, 0.7978846
      %v1465 = vmul.f32 %v1401, 0.7978846
      %v1466 = vmul.f32 %v1402, 0.7978846
      %v1467 = vmul.f32 %v1403, 0.7978846
      %v1468 = vmul.f32 %v1404, 0.7978846
      %v1469 = vmul.f32 %v1405, 0.7978846
      %v1470 = vmul.f32 %v1406, 0.7978846
      %v1471 = vmul.f32 %v1407, 0.7978846
      %v1472 = vmul.f32 %v1408, 0.7978846
      %v1473 = vmul.f32 %v1409, 0.7978846
      %v1474 = vmul.f32 %v1410, 0.7978846
      %v1475 = vmul.f32 %v1411, 0.7978846
      %v1476 = vmul.f32 %v1412, 0.7978846
      %v1477 = vmul.f32 %v1413, 0.7978846
      %v1478 = vtanh.pop %v1414
      %v1479 = vtanh.pop %v1415
      %v1480 = vtanh.pop %v1416
      %v1481 = vtanh.pop %v1417
      %v1482 = vtanh.pop %v1418
      %v1483 = vtanh.pop %v1419
      %v1484 = vtanh.pop %v1420
      %v1485 = vtanh.pop %v1421
      %v1486 = vtanh.pop %v1422
      %v1487 = vtanh.pop %v1423
      %v1488 = vtanh.pop %v1424
      %v1489 = vtanh.pop %v1425
      %v1490 = vtanh.pop %v1426
      %v1491 = vtanh.pop %v1427
      %v1492 = vtanh.pop %v1428
      %v1493 = vtanh.pop %v1429
      %v1494 = vtanh.pop %v1430
      %v1495 = vtanh.pop %v1431
      %v1496 = vtanh.pop %v1432
      %v1497 = vtanh.pop %v1433
      %v1498 = vtanh.pop %v1434
      %v1499 = vtanh.pop %v1435
      %v1500 = vtanh.pop %v1436
      %v1501 = vtanh.pop %v1437
      %v1502 = vtanh.pop %v1438
      %v1503 = vtanh.pop %v1439
      %v1504 = vtanh.pop %v1440
      %v1505 = vtanh.pop %v1441
      %v1506 = vtanh.pop %v1442
      %v1507 = vtanh.pop %v1443
      %v1508 = vtanh.pop %v1444
      %v1509 = vtanh.pop %v1445
      %v1510 = vtanh.pop %v1446
      %v1511 = vtanh.pop %v1447
      %v1512 = vtanh.pop %v1448
      %v1513 = vtanh.pop %v1449
      %v1514 = vtanh.pop %v1450
      %v1515 = vtanh.pop %v1451
      %v1516 = vtanh.pop %v1452
      %v1517 = vtanh.pop %v1453
      %v1518 = vtanh.pop %v1454
      %v1519 = vtanh.pop %v1455
      %v1520 = vtanh.pop %v1456
      %v1521 = vtanh.pop %v1457
      %v1522 = vtanh.pop %v1458
      %v1523 = vtanh.pop %v1459
      %v1524 = vtanh.pop %v1460
      %v1525 = vtanh.pop %v1461
      %v1526 = vtanh.pop %v1462
      %v1527 = vtanh.pop %v1463
      %v1528 = vtanh.pop %v1464
      %v1529 = vtanh.pop %v1465
      %v1530 = vtanh.pop %v1466
      %v1531 = vtanh.pop %v1467
      %v1532 = vtanh.pop %v1468
      %v1533 = vtanh.pop %v1469
      %v1534 = vtanh.pop %v1470
      %v1535 = vtanh.pop %v1471
      %v1536 = vtanh.pop %v1472
      %v1537 = vtanh.pop %v1473
      %v1538 = vtanh.pop %v1474
      %v1539 = vtanh.pop %v1475
      %v1540 = vtanh.pop %v1476
      %v1541 = vtanh.pop %v1477
      %v1542 = vadd.f32 %v1478, 1.0
      %v1543 = vadd.f32 %v1479, 1.0
      %v1544 = vadd.f32 %v1480, 1.0
      %v1545 = vadd.f32 %v1481, 1.0
      %v1546 = vadd.f32 %v1482, 1.0
      %v1547 = vadd.f32 %v1483, 1.0
      %v1548 = vadd.f32 %v1484, 1.0
      %v1549 = vadd.f32 %v1485, 1.0
      %v1550 = vadd.f32 %v1486, 1.0
      %v1551 = vadd.f32 %v1487, 1.0
      %v1552 = vadd.f32 %v1488, 1.0
      %v1553 = vadd.f32 %v1489, 1.0
      %v1554 = vadd.f32 %v1490, 1.0
      %v1555 = vadd.f32 %v1491, 1.0
      %v1556 = vadd.f32 %v1492, 1.0
      %v1557 = vadd.f32 %v1493, 1.0
      %v1558 = vadd.f32 %v1494, 1.0
      %v1559 = vadd.f32 %v1495, 1.0
      %v1560 = vadd.f32 %v1496, 1.0
      %v1561 = vadd.f32 %v1497, 1.0
      %v1562 = vadd.f32 %v1498, 1.0
      %v1563 = vadd.f32 %v1499, 1.0
      %v1564 = vadd.f32 %v1500, 1.0
      %v1565 = vadd.f32 %v1501, 1.0
      %v1566 = vadd.f32 %v1502, 1.0
      %v1567 = vadd.f32 %v1503, 1.0
      %v1568 = vadd.f32 %v1504, 1.0
      %v1569 = vadd.f32 %v1505, 1.0
      %v1570 = vadd.f32 %v1506, 1.0
      %v1571 = vadd.f32 %v1507, 1.0
      %v1572 = vadd.f32 %v1508, 1.0
      %v1573 = vadd.f32 %v1509, 1.0
      %v1574 = vadd.f32 %v1510, 1.0
      %v1575 = vadd.f32 %v1511, 1.0
      %v1576 = vadd.f32 %v1512, 1.0
      %v1577 = vadd.f32 %v1513, 1.0
      %v1578 = vadd.f32 %v1514, 1.0
      %v1579 = vadd.f32 %v1515, 1.0
      %v1580 = vadd.f32 %v1516, 1.0
      %v1581 = vadd.f32 %v1517, 1.0
      %v1582 = vadd.f32 %v1518, 1.0
      %v1583 = vadd.f32 %v1519, 1.0
      %v1584 = vadd.f32 %v1520, 1.0
      %v1585 = vadd.f32 %v1521, 1.0
      %v1586 = vadd.f32 %v1522, 1.0
      %v1587 = vadd.f32 %v1523, 1.0
      %v1588 = vadd.f32 %v1524, 1.0
      %v1589 = vadd.f32 %v1525, 1.0
      %v1590 = vadd.f32 %v1526, 1.0
      %v1591 = vadd.f32 %v1527, 1.0
      %v1592 = vadd.f32 %v1528, 1.0
      %v1593 = vadd.f32 %v1529, 1.0
      %v1594 = vadd.f32 %v1530, 1.0
      %v1595 = vadd.f32 %v1531, 1.0
      %v1596 = vadd.f32 %v1532, 1.0
      %v1597 = vadd.f32 %v1533, 1.0
      %v1598 = vadd.f32 %v1534, 1.0
      %v1599 = vadd.f32 %v1535, 1.0
      %v1600 = vadd.f32 %v1536, 1.0
      %v1601 = vadd.f32 %v1537, 1.0
      %v1602 = vadd.f32 %v1538, 1.0
      %v1603 = vadd.f32 %v1539, 1.0
      %v1604 = vadd.f32 %v1540, 1.0
      %v1605 = vadd.f32 %v1541, 1.0
      %v1606 = vmul.f32 %v1094, %v1542
      %v1607 = vmul.f32 %v1095, %v1543
      %v1608 = vmul.f32 %v1096, %v1544
      %v1609 = vmul.f32 %v1097, %v1545
      %v1610 = vmul.f32 %v1098, %v1546
      %v1611 = vmul.f32 %v1099, %v1547
      %v1612 = vmul.f32 %v1100, %v1548
      %v1613 = vmul.f32 %v1101, %v1549
      %v1614 = vmul.f32 %v1102, %v1550
      %v1615 = vmul.f32 %v1103, %v1551
      %v1616 = vmul.f32 %v1104, %v1552
      %v1617 = vmul.f32 %v1105, %v1553
      %v1618 = vmul.f32 %v1106, %v1554
      %v1619 = vmul.f32 %v1107, %v1555
      %v1620 = vmul.f32 %v1108, %v1556
      %v1621 = vmul.f32 %v1109, %v1557
      %v1622 = vmul.f32 %v1110, %v1558
      %v1623 = vmul.f32 %v1111, %v1559
      %v1624 = vmul.f32 %v1112, %v1560
      %v1625 = vmul.f32 %v1113, %v1561
      %v1626 = vmul.f32 %v1114, %v1562
      %v1627 = vmul.f32 %v1115, %v1563
      %v1628 = vmul.f32 %v1116, %v1564
      %v1629 = vmul.f32 %v1117, %v1565
      %v1630 = vmul.f32 %v1118, %v1566
      %v1631 = vmul.f32 %v1119, %v1567
      %v1632 = vmul.f32 %v1120, %v1568
      %v1633 = vmul.f32 %v1121, %v1569
      %v1634 = vmul.f32 %v1122, %v1570
      %v1635 = vmul.f32 %v1123, %v1571
      %v1636 = vmul.f32 %v1124, %v1572
      %v1637 = vmul.f32 %v1125, %v1573
      %v1638 = vmul.f32 %v1126, %v1574
      %v1639 = vmul.f32 %v1127, %v1575
      %v1640 = vmul.f32 %v1128, %v1576
      %v1641 = vmul.f32 %v1129, %v1577
      %v1642 = vmul.f32 %v1130, %v1578
      %v1643 = vmul.f32 %v1131, %v1579
      %v1644 = vmul.f32 %v1132, %v1580
      %v1645 = vmul.f32 %v1133, %v1581
      %v1646 = vmul.f32 %v1134, %v1582
      %v1647 = vmul.f32 %v1135, %v1583
      %v1648 = vmul.f32 %v1136, %v1584
      %v1649 = vmul.f32 %v1137, %v1585
      %v1650 = vmul.f32 %v1138, %v1586
      %v1651 = vmul.f32 %v1139, %v1587
      %v1652 = vmul.f32 %v1140, %v1588
      %v1653 = vmul.f32 %v1141, %v1589
      %v1654 = vmul.f32 %v1142, %v1590
      %v1655 = vmul.f32 %v1143, %v1591
      %v1656 = vmul.f32 %v1144, %v1592
      %v1657 = vmul.f32 %v1145, %v1593
      %v1658 = vmul.f32 %v1146, %v1594
      %v1659 = vmul.f32 %v1147, %v1595
      %v1660 = vmul.f32 %v1148, %v1596
      %v1661 = vmul.f32 %v1149, %v1597
      %v1662 = vmul.f32 %v1150, %v1598
      %v1663 = vmul.f32 %v1151, %v1599
      %v1664 = vmul.f32 %v1152, %v1600
      %v1665 = vmul.f32 %v1153, %v1601
      %v1666 = vmul.f32 %v1154, %v1602
      %v1667 = vmul.f32 %v1155, %v1603
      %v1668 = vmul.f32 %v1156, %v1604
      %v1669 = vmul.f32 %v1157, %v1605
      %v1670 = vpack.c.bf16 %v1610, %v1606
      %v1671 = vpack.c.bf16 %v1611, %v1607
      %v1672 = vpack.c.bf16 %v1612, %v1608
      %v1673 = vpack.c.bf16 %v1613, %v1609
      %v1674 = vpack.c.bf16 %v1618, %v1614
      %v1675 = vpack.c.bf16 %v1619, %v1615
      %v1676 = vpack.c.bf16 %v1620, %v1616
      %v1677 = vpack.c.bf16 %v1621, %v1617
      %v1678 = vpack.c.bf16 %v1626, %v1622
      %v1679 = vpack.c.bf16 %v1627, %v1623
      %v1680 = vpack.c.bf16 %v1628, %v1624
      %v1681 = vpack.c.bf16 %v1629, %v1625
      %v1682 = vpack.c.bf16 %v1634, %v1630
      %v1683 = vpack.c.bf16 %v1635, %v1631
      %v1684 = vpack.c.bf16 %v1636, %v1632
      %v1685 = vpack.c.bf16 %v1637, %v1633
      %v1686 = vpack.c.bf16 %v1642, %v1638
      %v1687 = vpack.c.bf16 %v1643, %v1639
      %v1688 = vpack.c.bf16 %v1644, %v1640
      %v1689 = vpack.c.bf16 %v1645, %v1641
      %v1690 = vpack.c.bf16 %v1650, %v1646
      %v1691 = vpack.c.bf16 %v1651, %v1647
      %v1692 = vpack.c.bf16 %v1652, %v1648
      %v1693 = vpack.c.bf16 %v1653, %v1649
      %v1694 = vpack.c.bf16 %v1658, %v1654
      %v1695 = vpack.c.bf16 %v1659, %v1655
      %v1696 = vpack.c.bf16 %v1660, %v1656
      %v1697 = vpack.c.bf16 %v1661, %v1657
      %v1698 = vpack.c.bf16 %v1666, %v1662
      %v1699 = vpack.c.bf16 %v1667, %v1663
      %v1700 = vpack.c.bf16 %v1668, %v1664
      %v1701 = vpack.c.bf16 %v1669, %v1665
      %v1734 = vunpack.c.l.b16 %v1670
      %v1735 = vunpack.c.l.b16 %v1671
      %v1736 = vunpack.c.l.b16 %v1672
      %v1737 = vunpack.c.l.b16 %v1673
      %v1738 = vunpack.c.h.b16 %v1670
      %v1739 = vunpack.c.h.b16 %v1671
      %v1740 = vunpack.c.h.b16 %v1672
      %v1741 = vunpack.c.h.b16 %v1673
      %v1742 = vunpack.c.l.b16 %v1674
      %v1743 = vunpack.c.l.b16 %v1675
      %v1744 = vunpack.c.l.b16 %v1676
      %v1745 = vunpack.c.l.b16 %v1677
      %v1746 = vunpack.c.h.b16 %v1674
      %v1747 = vunpack.c.h.b16 %v1675
      %v1748 = vunpack.c.h.b16 %v1676
      %v1749 = vunpack.c.h.b16 %v1677
      %v1750 = vunpack.c.l.b16 %v1678
      %v1751 = vunpack.c.l.b16 %v1679
      %v1752 = vunpack.c.l.b16 %v1680
      %v1753 = vunpack.c.l.b16 %v1681
      %v1754 = vunpack.c.h.b16 %v1678
      %v1755 = vunpack.c.h.b16 %v1679
      %v1756 = vunpack.c.h.b16 %v1680
      %v1757 = vunpack.c.h.b16 %v1681
      %v1758 = vunpack.c.l.b16 %v1682
      %v1759 = vunpack.c.l.b16 %v1683
      %v1760 = vunpack.c.l.b16 %v1684
      %v1761 = vunpack.c.l.b16 %v1685
      %v1762 = vunpack.c.h.b16 %v1682
      %v1763 = vunpack.c.h.b16 %v1683
      %v1764 = vunpack.c.h.b16 %v1684
      %v1765 = vunpack.c.h.b16 %v1685
      %v1766 = vunpack.c.l.b16 %v1686
      %v1767 = vunpack.c.l.b16 %v1687
      %v1768 = vunpack.c.l.b16 %v1688
      %v1769 = vunpack.c.l.b16 %v1689
      %v1770 = vunpack.c.h.b16 %v1686
      %v1771 = vunpack.c.h.b16 %v1687
      %v1772 = vunpack.c.h.b16 %v1688
      %v1773 = vunpack.c.h.b16 %v1689
      %v1774 = vunpack.c.l.b16 %v1690
      %v1775 = vunpack.c.l.b16 %v1691
      %v1776 = vunpack.c.l.b16 %v1692
      %v1777 = vunpack.c.l.b16 %v1693
      %v1778 = vunpack.c.h.b16 %v1690
      %v1779 = vunpack.c.h.b16 %v1691
      %v1780 = vunpack.c.h.b16 %v1692
      %v1781 = vunpack.c.h.b16 %v1693
      %v1782 = vunpack.c.l.b16 %v1694
      %v1783 = vunpack.c.l.b16 %v1695
      %v1784 = vunpack.c.l.b16 %v1696
      %v1785 = vunpack.c.l.b16 %v1697
      %v1786 = vunpack.c.h.b16 %v1694
      %v1787 = vunpack.c.h.b16 %v1695
      %v1788 = vunpack.c.h.b16 %v1696
      %v1789 = vunpack.c.h.b16 %v1697
      %v1790 = vunpack.c.l.b16 %v1698
      %v1791 = vunpack.c.l.b16 %v1699
      %v1792 = vunpack.c.l.b16 %v1700
      %v1793 = vunpack.c.l.b16 %v1701
      %v1794 = vunpack.c.h.b16 %v1698
      %v1795 = vunpack.c.h.b16 %v1699
      %v1796 = vunpack.c.h.b16 %v1700
      %v1797 = vunpack.c.h.b16 %v1701
      %v1798 = vpack.c.b16 %v1735, %v1734
      %v1799 = vpack.c.b16 %v1737, %v1736
      %v1800 = vpack.c.b16 %v1739, %v1738
      %v1801 = vpack.c.b16 %v1741, %v1740
      %v1802 = vpack.c.b16 %v1743, %v1742
      %v1803 = vpack.c.b16 %v1745, %v1744
      %v1804 = vpack.c.b16 %v1747, %v1746
      %v1805 = vpack.c.b16 %v1749, %v1748
      %v1806 = vpack.c.b16 %v1751, %v1750
      %v1807 = vpack.c.b16 %v1753, %v1752
      %v1808 = vpack.c.b16 %v1755, %v1754
      %v1809 = vpack.c.b16 %v1757, %v1756
      %v1810 = vpack.c.b16 %v1759, %v1758
      %v1811 = vpack.c.b16 %v1761, %v1760
      %v1812 = vpack.c.b16 %v1763, %v1762
      %v1813 = vpack.c.b16 %v1765, %v1764
      %v1814 = vpack.c.b16 %v1767, %v1766
      %v1815 = vpack.c.b16 %v1769, %v1768
      %v1816 = vpack.c.b16 %v1771, %v1770
      %v1817 = vpack.c.b16 %v1773, %v1772
      %v1818 = vpack.c.b16 %v1775, %v1774
      %v1819 = vpack.c.b16 %v1777, %v1776
      %v1820 = vpack.c.b16 %v1779, %v1778
      %v1821 = vpack.c.b16 %v1781, %v1780
      %v1822 = vpack.c.b16 %v1783, %v1782
      %v1823 = vpack.c.b16 %v1785, %v1784
      %v1824 = vpack.c.b16 %v1787, %v1786
      %v1825 = vpack.c.b16 %v1789, %v1788
      %v1826 = vpack.c.b16 %v1791, %v1790
      %v1827 = vpack.c.b16 %v1793, %v1792
      %v1828 = vpack.c.b16 %v1795, %v1794
      %v1829 = vpack.c.b16 %v1797, %v1796
      %1862 = vst [vmem:[%s291] sm:$0xff] %v1798
      %1863 = vst [vmem:[%s291 + $0x8] sm:$0xff] %v1799
      %1864 = vst [vmem:[%s291 + $0x10] sm:$0xff] %v1800
      %1865 = vst [vmem:[%s291 + $0x18] sm:$0xff] %v1801
      %1866 = vst [vmem:[%s291 + $0x20] sm:$0xff] %v1802
      %1867 = vst [vmem:[%s291 + $0x28] sm:$0xff] %v1803
      %1868 = vst [vmem:[%s291 + $0x30] sm:$0xff] %v1804
      %1869 = vst [vmem:[%s291 + $0x38] sm:$0xff] %v1805
      %1870 = vst [vmem:[%s291 + $0x40] sm:$0xff] %v1806
      %1871 = vst [vmem:[%s291 + $0x48] sm:$0xff] %v1807
      %1872 = vst [vmem:[%s291 + $0x50] sm:$0xff] %v1808
      %1873 = vst [vmem:[%s291 + $0x58] sm:$0xff] %v1809
      %1874 = vst [vmem:[%s291 + $0x60] sm:$0xff] %v1810
      %1875 = vst [vmem:[%s291 + $0x68] sm:$0xff] %v1811
      %1876 = vst [vmem:[%s291 + $0x70] sm:$0xff] %v1812
      %1877 = vst [vmem:[%s291 + $0x78] sm:$0xff] %v1813
      %1878 = vst [vmem:[%s291 + $0x80] sm:$0xff] %v1814
      %1879 = vst [vmem:[%s291 + $0x88] sm:$0xff] %v1815
      %1880 = vst [vmem:[%s291 + $0x90] sm:$0xff] %v1816
      %1881 = vst [vmem:[%s291 + $0x98] sm:$0xff] %v1817
      %1882 = vst [vmem:[%s291 + $0xa0] sm:$0xff] %v1818
      %1883 = vst [vmem:[%s291 + $0xa8] sm:$0xff] %v1819
      %1884 = vst [vmem:[%s291 + $0xb0] sm:$0xff] %v1820
      %1885 = vst [vmem:[%s291 + $0xb8] sm:$0xff] %v1821
      %1886 = vst [vmem:[%s291 + $0xc0] sm:$0xff] %v1822
      %1887 = vst [vmem:[%s291 + $0xc8] sm:$0xff] %v1823
      %1888 = vst [vmem:[%s291 + $0xd0] sm:$0xff] %v1824
      %1889 = vst [vmem:[%s291 + $0xd8] sm:$0xff] %v1825
      %1890 = vst [vmem:[%s291 + $0xe0] sm:$0xff] %v1826
      %1891 = vst [vmem:[%s291 + $0xe8] sm:$0xff] %v1827
      %1892 = vst [vmem:[%s291 + $0xf0] sm:$0xff] %v1828
      %1893 = vst [vmem:[%s291 + $0xf8] sm:$0xff] %v1829
      %s1894 = smul.u32 16, %s20
      %s1895 = smul.u32 4, %s21
      %p1896 = scmp.lt.s32.totalorder %s1894, 31
      %s1897 = scalar_select %p1896, %s1894, 31
      %p1898 = scmp.lt.s32.totalorder %s1895, 3
      %s1899 = scalar_select %p1898, %s1895, 3
      %s1900 = smul.addr %s1897, 4
      %s1901 = sadd.s32 %s1899, %s1900
      %s1902 = smul.addr %s1901, 4
      %s1903 = scalar_lea.vmem %s5, %s1902
      // Predicated region
      $region41: #{transformer_block_forward.8} parent=39 // pred_check
        %p1904 = pneg %p168
      $region42: #{transformer_block_forward.8} parent=39 // pred_check_branch
        %1906 = sbr.rel (%p1904) target = $region44
      $region43: #{transformer_block_forward.8} parent=39 // pred_region
        %s1907 = smul.u32 16, %s20
        %s1908 = smul.u32 4, %s21
      $region44: #{transformer_block_forward.8} parent=39 // pred_fallthru
        _
    $region40: #{transformer_block_forward.8} parent=5 // pred_fallthru
      _
    %p1909 = scmp.le.s32.totalorder 2, %s11
    // Predicated region
    $region45: #{transformer_block_forward.8} parent=5 // pred_check
      %p1910 = pneg %p1909
    $region46: #{transformer_block_forward.8} parent=5 // pred_check_branch
      %1912 = sbr.rel (%p1910) target = $region48
    $region47: #{transformer_block_forward.8} parent=5 // pred_region
      %s1913 = ssub.s32 %s11, 2
      // Predicated region
      $region49: #{transformer_block_forward.8} parent=47 // pred_check
        %p1914 = pneg %p174
      $region50: #{transformer_block_forward.8} parent=47 // pred_check_branch
        %1916 = sbr.rel (%p1914) target = $region52
      $region51: #{transformer_block_forward.8} parent=47 // pred_region
        %s1917 = smul.u32 16, %s22
        %s1918 = smul.u32 4, %s23
        %p1919 = scmp.lt.s32.totalorder %s1917, 31
        %s1920 = scalar_select %p1919, %s1917, 31
        %p1921 = scmp.lt.s32.totalorder %s1918, 3
        %s1922 = scalar_select %p1921, %s1918, 3
        %s1923 = smul.addr %s1920, 4
        %s1924 = sadd.s32 %s1922, %s1923
        %s1925 = smul.addr %s1924, 4
        %s1926 = scalar_lea.vmem %s5, %s1925
      $region52: #{transformer_block_forward.8} parent=47 // pred_fallthru
        _
    $region48: #{transformer_block_forward.8} parent=5 // pred_fallthru
      _
  $region6: #{transformer_block_forward.8} parent=0 // loop_footer
    %s15 = sadd.s32 1, %s11
  $region7: #{transformer_block_forward.8} parent=0 // loop_footer_branch
    %10 = sbr.rel target = $region3
  $region8: #{transformer_block_forward.8} parent=0 // loop_exit
    _

// kernel: transformer_block_forward.9
$region0: #{transformer_block_forward.9}
  #allocation0 [shape = 'u32[]', space=smem, size = 0x4, offset = 0x4, fixed_abs, tag = 'smem constant byte address 0x4 - core index']
  #allocation1 [shape = 'u32[144,128]{1,0:T(1,128)}', space=vmem, size = 0x12000, scoped, tag = 'internal scratch']
  #allocation2 [shape = 'f32[128,128]{1,0:T(8,128)}', space=vmem, size = 0x10000, scoped, tag = 'scratch operand']
  %s0 = inlined_call_operand.vmem [shape: bf16[256,512], index: 0, kind: input, shape index: {}]
  %s1 = inlined_call_operand.vmem [shape: bf16[512,128], index: 1, kind: input, shape index: {}]
  %s2 = inlined_call_operand.vmem [shape: f32[1,128], index: 2, kind: input, shape index: {}]
  %s3 = inlined_call_operand.vmem [shape: f32[256,128], index: 3, kind: input, shape index: {}]
  %s4 = inlined_call_operand.hbm [shape: f32[256,128], index: 4, kind: output, shape index: {}]
  %s5 = sld [smem:[#allocation0]]
  $region57: #{transformer_block_forward.9} parent=0
    _
  %s7 = ssub.s32 1, %s5
  %s8 = scalar_select 0, %s7, %s5
  $region1: #{transformer_block_forward.9} parent=0
    #allocation3 [shape = 'u8[131072]{0}', space=vmem, size = 0x20000, scoped, tag = 'output window, operand 0']
    #allocation4 [shape = 's32[2]{0}', space=sflag, size = 0x8, scoped, tag = 'scoped memory for transformer_block_forward.9']
    %9 = vsyncpa [#allocation4], 0
    %s10 = scalar_lea.sflag [#allocation4], 1
    %11 = vsyncpa %s10, 0
    loop: start=0, step=1, limit=4
    $region2: #{transformer_block_forward.9} parent=1 // loop_pre_header
      _
    $region3: #{transformer_block_forward.9} parent=1 // loop_header
      %s13 = sphi 0, %s17
      %p14 = scmp.ge.s32.totalorder %s13, 4
      %s20 = sphi 0, %s39
      %s21 = sphi 0, %s35
      %s22 = sphi 0, %s31
      %s23 = sphi 0, %s20
      %s24 = sphi 0, %s21
      %s25 = sphi 0, %s22
      %s26 = sphi 0, %s23
      %s27 = sphi 0, %s24
      %s28 = sphi 0, %s25
      %s44 = sphi 0, %s46
      %s47 = sphi 0, %s44
      %s48 = sphi 0, %s47
      %s64 = sphi 0, %s48
      %s72 = sphi 0, %s74
      %s75 = sphi 0, %s72
      %s76 = sphi 0, %s75
      %s92 = sphi 0, %s76
      %s98 = sphi 0, %s100
      %s101 = sphi 0, %s98
      %s102 = sphi 0, %s101
      %s118 = sphi 0, %s102
      %s126 = sphi 0, %s128
      %s129 = sphi 0, %s126
      %s130 = sphi 0, %s129
      %s146 = sphi 0, %s130
      %s154 = sphi 0, %s156
      %s157 = sphi 0, %s154
      %s158 = sphi 0, %s157
      %s174 = sphi 0, %s158
    $region4: #{transformer_block_forward.9} parent=1 // loop_header_branch
      %16 = sbr.rel (%p14) target = $region8
    $region5: #{transformer_block_forward.9} parent=1 // loop_body
      %s18 = ssub.s32 %s13, 1
      %s19 = ssub.s32 %s13, 2
      %s29 = sadd.s32 1, %s22
      %p30 = scmp.ge.s32.totalorder %s29, 1
      %s31 = scalar_select %p30, 0, %s29
      %s32 = sadd.s32 1, %s21
      %s33 = scalar_select %p30, %s32, %s21
      %p34 = scmp.ge.s32.totalorder %s33, 1
      %s35 = scalar_select %p34, 0, %s33
      %s36 = sadd.s32 1, %s20
      %s37 = scalar_select %p34, %s36, %s20
      %p38 = scmp.ge.s32.totalorder %s37, 2
      %s39 = scalar_select %p38, 0, %s37
      %s40 = ssub.s32 %s20, %s39
      %s41 = ssub.s32 %s22, %s31
      %s42 = sor.u32 %s40, %s41
      %p43 = scmp.eq.s32.totalorder %s42, 0
      %s45 = sadd.s32 %s44, 1
      %s46 = scalar_select %p43, %s44, %s45
      %p49 = pneg %p43
      %p50 = scmp.eq.s32.totalorder %s13, 1
      %p51 = por %p49, %p50
      %p52 = scmp.ne.s32.totalorder %s44, %s47
      %p53 = scmp.eq.s32.totalorder %s13, 0
      %p54 = por %p52, %p53
      %p55 = scmp.ne.s32.totalorder %s44, %s47
      %p56 = scmp.eq.s32.totalorder %s18, 1
      %p57 = por %p55, %p56
      %p58 = scmp.ne.s32.totalorder %s47, %s48
      %p59 = scmp.eq.s32.totalorder %s18, 0
      %p60 = por %p58, %p59
      %p61 = scmp.ne.s32.totalorder %s47, %s48
      %p62 = scmp.eq.s32.totalorder %s19, 1
      %p63 = por %p61, %p62
      %p65 = scmp.ne.s32.totalorder %s48, %s64
      %p66 = scmp.eq.s32.totalorder %s19, 0
      %p67 = por %p65, %p66
      %s68 = ssub.s32 %s22, %s31
      %s69 = ssub.s32 %s21, %s35
      %s70 = sor.u32 %s68, %s69
      %p71 = scmp.eq.s32.totalorder %s70, 0
      %s73 = sadd.s32 %s72, 1
      %s74 = scalar_select %p71, %s72, %s73
      %p77 = pneg %p71
      %p78 = scmp.eq.s32.totalorder %s13, 1
      %p79 = por %p77, %p78
      %p80 = scmp.ne.s32.totalorder %s72, %s75
      %p81 = scmp.eq.s32.totalorder %s13, 0
      %p82 = por %p80, %p81
      %p83 = scmp.ne.s32.totalorder %s72, %s75
      %p84 = scmp.eq.s32.totalorder %s18, 1
      %p85 = por %p83, %p84
      %p86 = scmp.ne.s32.totalorder %s75, %s76
      %p87 = scmp.eq.s32.totalorder %s18, 0
      %p88 = por %p86, %p87
      %p89 = scmp.ne.s32.totalorder %s75, %s76
      %p90 = scmp.eq.s32.totalorder %s19, 1
      %p91 = por %p89, %p90
      %p93 = scmp.ne.s32.totalorder %s76, %s92
      %p94 = scmp.eq.s32.totalorder %s19, 0
      %p95 = por %p93, %p94
      %s96 = ssub.s32 %s21, %s35
      %p97 = scmp.eq.s32.totalorder %s96, 0
      %s99 = sadd.s32 %s98, 1
      %s100 = scalar_select %p97, %s98, %s99
      %p103 = pneg %p97
      %p104 = scmp.eq.s32.totalorder %s13, 1
      %p105 = por %p103, %p104
      %p106 = scmp.ne.s32.totalorder %s98, %s101
      %p107 = scmp.eq.s32.totalorder %s13, 0
      %p108 = por %p106, %p107
      %p109 = scmp.ne.s32.totalorder %s98, %s101
      %p110 = scmp.eq.s32.totalorder %s18, 1
      %p111 = por %p109, %p110
      %p112 = scmp.ne.s32.totalorder %s101, %s102
      %p113 = scmp.eq.s32.totalorder %s18, 0
      %p114 = por %p112, %p113
      %p115 = scmp.ne.s32.totalorder %s101, %s102
      %p116 = scmp.eq.s32.totalorder %s19, 1
      %p117 = por %p115, %p116
      %p119 = scmp.ne.s32.totalorder %s102, %s118
      %p120 = scmp.eq.s32.totalorder %s19, 0
      %p121 = por %p119, %p120
      %s122 = ssub.s32 %s20, %s39
      %s123 = ssub.s32 %s21, %s35
      %s124 = sor.u32 %s122, %s123
      %p125 = scmp.eq.s32.totalorder %s124, 0
      %s127 = sadd.s32 %s126, 1
      %s128 = scalar_select %p125, %s126, %s127
      %p131 = pneg %p125
      %p132 = scmp.eq.s32.totalorder %s13, 1
      %p133 = por %p131, %p132
      %p134 = scmp.ne.s32.totalorder %s126, %s129
      %p135 = scmp.eq.s32.totalorder %s13, 0
      %p136 = por %p134, %p135
      %p137 = scmp.ne.s32.totalorder %s126, %s129
      %p138 = scmp.eq.s32.totalorder %s18, 1
      %p139 = por %p137, %p138
      %p140 = scmp.ne.s32.totalorder %s129, %s130
      %p141 = scmp.eq.s32.totalorder %s18, 0
      %p142 = por %p140, %p141
      %p143 = scmp.ne.s32.totalorder %s129, %s130
      %p144 = scmp.eq.s32.totalorder %s19, 1
      %p145 = por %p143, %p144
      %p147 = scmp.ne.s32.totalorder %s130, %s146
      %p148 = scmp.eq.s32.totalorder %s19, 0
      %p149 = por %p147, %p148
      %s150 = ssub.s32 %s20, %s39
      %s151 = ssub.s32 %s21, %s35
      %s152 = sor.u32 %s150, %s151
      %p153 = scmp.eq.s32.totalorder %s152, 0
      %s155 = sadd.s32 %s154, 1
      %s156 = scalar_select %p153, %s154, %s155
      %p159 = pneg %p153
      %p160 = scmp.eq.s32.totalorder %s13, 1
      %p161 = por %p159, %p160
      %p162 = scmp.ne.s32.totalorder %s154, %s157
      %p163 = scmp.eq.s32.totalorder %s13, 0
      %p164 = por %p162, %p163
      %p165 = scmp.ne.s32.totalorder %s154, %s157
      %p166 = scmp.eq.s32.totalorder %s18, 1
      %p167 = por %p165, %p166
      %p168 = scmp.ne.s32.totalorder %s157, %s158
      %p169 = scmp.eq.s32.totalorder %s18, 0
      %p170 = por %p168, %p169
      %p171 = scmp.ne.s32.totalorder %s157, %s158
      %p172 = scmp.eq.s32.totalorder %s19, 1
      %p173 = por %p171, %p172
      %p175 = scmp.ne.s32.totalorder %s158, %s174
      %p176 = scmp.eq.s32.totalorder %s19, 0
      %p177 = por %p175, %p176
      %p178 = scmp.le.s32.totalorder 1, %s13
      %p179 = scmp.lt.s32.totalorder %s13, 3
      %p180 = pnand %p178, %p179
      %p181 = pneg %p180
      // Predicated region
      $region9: #{transformer_block_forward.9} parent=5 // pred_check
        _
      $region10: #{transformer_block_forward.9} parent=5 // pred_check_branch
        %183 = sbr.rel (%p180) target = $region12
      $region11: #{transformer_block_forward.9} parent=5 // pred_region
        %s184 = ssub.s32 %s13, 1
        // Predicated region
        $region13: #{transformer_block_forward.9} parent=11 // pred_check
          %p185 = pneg %p88
        $region14: #{transformer_block_forward.9} parent=11 // pred_check_branch
          %187 = sbr.rel (%p185) target = $region16
        $region15: #{transformer_block_forward.9} parent=11 // pred_region
          %s188 = smul.u32 64, %s25
          %p189 = scmp.lt.s32.totalorder %s188, 63
          %s190 = scalar_select %p189, %s188, 63
          %p191 = scmp.lt.s32.totalorder %s24, 0
          %s192 = scalar_select %p191, %s24, 0
          %s193 = sadd.s32 %s192, %s190
          %s194 = smul.addr %s193, 4
          %s195 = scalar_lea.vmem %s1, %s194
          %s196 = smul.u32 64, %s25
        $region16: #{transformer_block_forward.9} parent=11 // pred_fallthru
          _
        // Predicated region
        $region17: #{transformer_block_forward.9} parent=11 // pred_check
          %p197 = pneg %p114
        $region18: #{transformer_block_forward.9} parent=11 // pred_check_branch
          %199 = sbr.rel (%p197) target = $region20
        $region19: #{transformer_block_forward.9} parent=11 // pred_region
          %p200 = scmp.lt.s32.totalorder %s24, 0
          %s201 = scalar_select %p200, %s24, 0
          %s202 = scalar_lea.vmem %s2, %s201
        $region20: #{transformer_block_forward.9} parent=11 // pred_fallthru
          _
      $region12: #{transformer_block_forward.9} parent=5 // pred_fallthru
        _
      %p203 = scmp.lt.s32.totalorder %s13, 2
      // Predicated region
      $region21: #{transformer_block_forward.9} parent=5 // pred_check
        %p204 = pneg %p203
      $region22: #{transformer_block_forward.9} parent=5 // pred_check_branch
        %206 = sbr.rel (%p204) target = $region24
      $region23: #{transformer_block_forward.9} parent=5 // pred_region
        // Predicated region
        $region25: #{transformer_block_forward.9} parent=23 // pred_check
          %p207 = pneg %p54
        $region26: #{transformer_block_forward.9} parent=23 // pred_check_branch
          %209 = sbr.rel (%p207) target = $region28
        $region27: #{transformer_block_forward.9} parent=23 // pred_region
          %s210 = smul.u32 16, %s20
          %s211 = smul.u32 4, %s22
          %p212 = scmp.lt.s32.totalorder %s210, 31
          %s213 = scalar_select %p212, %s210, 31
          %p214 = scmp.lt.s32.totalorder %s211, 3
          %s215 = scalar_select %p214, %s211, 3
          %s216 = smul.addr %s213, 4
          %s217 = sadd.s32 %s215, %s216
          %s218 = smul.addr %s217, 4
          %s219 = scalar_lea.vmem %s0, %s218
          %s220 = smul.u32 16, %s20
          %s221 = smul.u32 4, %s22
        $region28: #{transformer_block_forward.9} parent=23 // pred_fallthru
          _
        // Predicated region
        $region29: #{transformer_block_forward.9} parent=23 // pred_check
          %p222 = pneg %p136
        $region30: #{transformer_block_forward.9} parent=23 // pred_check_branch
          %224 = sbr.rel (%p222) target = $region32
        $region31: #{transformer_block_forward.9} parent=23 // pred_region
          %s225 = smul.u32 16, %s20
          %p226 = scmp.lt.s32.totalorder %s225, 31
          %s227 = scalar_select %p226, %s225, 31
          %p228 = scmp.lt.s32.totalorder %s21, 0
          %s229 = scalar_select %p228, %s21, 0
          %s230 = sadd.s32 %s229, %s227
          %s231 = smul.addr %s230, 8
          %s232 = scalar_lea.vmem %s3, %s231
          %s233 = smul.u32 16, %s20
        $region32: #{transformer_block_forward.9} parent=23 // pred_fallthru
          _
      $region24: #{transformer_block_forward.9} parent=5 // pred_fallthru
        _
      %p234 = scmp.le.s32.totalorder 1, %s13
      %p235 = scmp.lt.s32.totalorder %s13, 3
      %p236 = pnand %p234, %p235
      %p237 = pneg %p236
      // Predicated region
      $region33: #{transformer_block_forward.9} parent=5 // pred_check
        _
      $region34: #{transformer_block_forward.9} parent=5 // pred_check_branch
        %239 = sbr.rel (%p236) target = $region36
      $region35: #{transformer_block_forward.9} parent=5 // pred_region
        %s240 = ssub.s32 %s13, 1
        %s241 = smul.u32 16, %s23
        %s242 = smul.u32 4, %s25
        %p243 = scmp.lt.s32.totalorder %s241, 31
        %s244 = scalar_select %p243, %s241, 31
        %p245 = scmp.lt.s32.totalorder %s242, 3
        %s246 = scalar_select %p245, %s242, 3
        %s247 = smul.addr %s244, 4
        %s248 = sadd.s32 %s246, %s247
        %s249 = smul.addr %s248, 4
        %s250 = scalar_lea.vmem %s0, %s249
        %p251 = pneg %p60
        %p252 = pneg %p57
        %s253 = smul.u32 64, %s25
        %p254 = scmp.lt.s32.totalorder %s253, 63
        %s255 = scalar_select %p254, %s253, 63
        %p256 = scmp.lt.s32.totalorder %s24, 0
        %s257 = scalar_select %p256, %s24, 0
        %s258 = sadd.s32 %s257, %s255
        %s259 = smul.addr %s258, 4
        %s260 = scalar_lea.vmem %s1, %s259
        %p261 = pneg %p88
        %p262 = pneg %p85
        %p263 = scmp.lt.s32.totalorder %s24, 0
        %s264 = scalar_select %p263, %s24, 0
        %s265 = scalar_lea.vmem %s2, %s264
        %p266 = pneg %p114
        %p267 = pneg %p111
        %s268 = smul.u32 16, %s23
        %p269 = scmp.lt.s32.totalorder %s268, 31
        %s270 = scalar_select %p269, %s268, 31
        %p271 = scmp.lt.s32.totalorder %s24, 0
        %s272 = scalar_select %p271, %s24, 0
        %s273 = sadd.s32 %s272, %s270
        %s274 = smul.addr %s273, 8
        %s275 = scalar_lea.vmem %s3, %s274
        %p276 = pneg %p142
        %p277 = pneg %p139
        %p278 = pneg %p170
        %p279 = pneg %p167
        %s280 = sand.u32 %s157, 1
        %s281 = scalar_lea.sflag [#allocation4], %s280
        %s282 = sand.u32 %s157, 1
        %s283 = smul.addr %s282, 128
        %s284 = scalar_lea.vmem [#allocation3], %s283
        %s285 = smul.u32 16, %s23
        %s286 = smul.u32 4, %s25
        %p287 = scmp.lt.s32.totalorder %s285, 31
        %s288 = scalar_select %p287, %s285, 31
        %p289 = scmp.lt.s32.totalorder %s286, 3
        %s290 = scalar_select %p289, %s286, 3
        %s291 = smul.addr %s288, 4
        %s292 = sadd.s32 %s290, %s291
        %s293 = smul.addr %s292, 4
        %s294 = scalar_lea.vmem %s0, %s293
        %s295 = smul.u32 16, %s23
        %s296 = smul.u32 4, %s25
        %s297 = smul.u32 64, %s25
        %p298 = scmp.lt.s32.totalorder %s297, 63
        %s299 = scalar_select %p298, %s297, 63
        %p300 = scmp.lt.s32.totalorder %s24, 0
        %s301 = scalar_select %p300, %s24, 0
        %s302 = sadd.s32 %s301, %s299
        %s303 = smul.addr %s302, 4
        %s304 = scalar_lea.vmem %s1, %s303
        %s305 = smul.u32 64, %s25
        %p306 = scmp.lt.s32.totalorder %s24, 0
        %s307 = scalar_select %p306, %s24, 0
        %s308 = scalar_lea.vmem %s2, %s307
        %s309 = smul.u32 16, %s23
        %p310 = scmp.lt.s32.totalorder %s309, 31
        %s311 = scalar_select %p310, %s309, 31
        %p312 = scmp.lt.s32.totalorder %s24, 0
        %s313 = scalar_select %p312, %s24, 0
        %s314 = sadd.s32 %s313, %s311
        %s315 = smul.addr %s314, 8
        %s316 = scalar_lea.vmem %s3, %s315
        %s317 = smul.u32 16, %s23
        %s318 = smul.u32 16, %s23
        %p320 = scmp.eq.s32.totalorder %s25, 0
        // Predicated region
        $region37: #{transformer_block_forward.9} parent=35 // pred_check
          %p321 = pneg %p320
        $region38: #{transformer_block_forward.9} parent=35 // pred_check_branch
          %323 = sbr.rel (%p321) target = $region40
        $region39: #{transformer_block_forward.9} parent=35 // pred_region
          %324 = vst [vmem:[#allocation2] sm:$0xff] 0.0
          %325 = vst [vmem:[#allocation2 + $0x8] sm:$0xff] 0.0
          %326 = vst [vmem:[#allocation2 + $0x10] sm:$0xff] 0.0
          %327 = vst [vmem:[#allocation2 + $0x18] sm:$0xff] 0.0
          %328 = vst [vmem:[#allocation2 + $0x20] sm:$0xff] 0.0
          %329 = vst [vmem:[#allocation2 + $0x28] sm:$0xff] 0.0
          %330 = vst [vmem:[#allocation2 + $0x30] sm:$0xff] 0.0
          %331 = vst [vmem:[#allocation2 + $0x38] sm:$0xff] 0.0
          %332 = vst [vmem:[#allocation2 + $0x40] sm:$0xff] 0.0
          %333 = vst [vmem:[#allocation2 + $0x48] sm:$0xff] 0.0
          %334 = vst [vmem:[#allocation2 + $0x50] sm:$0xff] 0.0
          %335 = vst [vmem:[#allocation2 + $0x58] sm:$0xff] 0.0
          %336 = vst [vmem:[#allocation2 + $0x60] sm:$0xff] 0.0
          %337 = vst [vmem:[#allocation2 + $0x68] sm:$0xff] 0.0
          %338 = vst [vmem:[#allocation2 + $0x70] sm:$0xff] 0.0
          %339 = vst [vmem:[#allocation2 + $0x78] sm:$0xff] 0.0
        $region40: #{transformer_block_forward.9} parent=35 // pred_fallthru
          _
        %v340 = vld [vmem:[#allocation2] sm:$0xff]
        %v341 = vld [vmem:[#allocation2 + $0x8] sm:$0xff]
        %v342 = vld [vmem:[#allocation2 + $0x10] sm:$0xff]
        %v343 = vld [vmem:[#allocation2 + $0x18] sm:$0xff]
        %v344 = vld [vmem:[#allocation2 + $0x20] sm:$0xff]
        %v345 = vld [vmem:[#allocation2 + $0x28] sm:$0xff]
        %v346 = vld [vmem:[#allocation2 + $0x30] sm:$0xff]
        %v347 = vld [vmem:[#allocation2 + $0x38] sm:$0xff]
        %v348 = vld [vmem:[#allocation2 + $0x40] sm:$0xff]
        %v349 = vld [vmem:[#allocation2 + $0x48] sm:$0xff]
        %v350 = vld [vmem:[#allocation2 + $0x50] sm:$0xff]
        %v351 = vld [vmem:[#allocation2 + $0x58] sm:$0xff]
        %v352 = vld [vmem:[#allocation2 + $0x60] sm:$0xff]
        %v353 = vld [vmem:[#allocation2 + $0x68] sm:$0xff]
        %v354 = vld [vmem:[#allocation2 + $0x70] sm:$0xff]
        %v355 = vld [vmem:[#allocation2 + $0x78] sm:$0xff]
        %v356 = vld [vmem:[%s294] sm:$0xff]
        %v357 = vld [vmem:[%s294 + $0x8] sm:$0xff]
        %v358 = vld [vmem:[%s294 + $0x10] sm:$0xff]
        %v359 = vld [vmem:[%s294 + $0x18] sm:$0xff]
        %v360 = vld [vmem:[%s294 + $0x20] sm:$0xff]
        %v361 = vld [vmem:[%s294 + $0x28] sm:$0xff]
        %v362 = vld [vmem:[%s294 + $0x30] sm:$0xff]
        %v363 = vld [vmem:[%s294 + $0x38] sm:$0xff]
        %v364 = vld [vmem:[%s294 + $0x40] sm:$0xff]
        %v365 = vld [vmem:[%s294 + $0x48] sm:$0xff]
        %v366 = vld [vmem:[%s294 + $0x50] sm:$0xff]
        %v367 = vld [vmem:[%s294 + $0x58] sm:$0xff]
        %v368 = vld [vmem:[%s294 + $0x60] sm:$0xff]
        %v369 = vld [vmem:[%s294 + $0x68] sm:$0xff]
        %v370 = vld [vmem:[%s294 + $0x70] sm:$0xff]
        %v371 = vld [vmem:[%s294 + $0x78] sm:$0xff]
        %v372 = vld [vmem:[%s294 + $0x80] sm:$0xff]
        %v373 = vld [vmem:[%s294 + $0x88] sm:$0xff]
        %v374 = vld [vmem:[%s294 + $0x90] sm:$0xff]
        %v375 = vld [vmem:[%s294 + $0x98] sm:$0xff]
        %v376 = vld [vmem:[%s294 + $0xa0] sm:$0xff]
        %v377 = vld [vmem:[%s294 + $0xa8] sm:$0xff]
        %v378 = vld [vmem:[%s294 + $0xb0] sm:$0xff]
        %v379 = vld [vmem:[%s294 + $0xb8] sm:$0xff]
        %v380 = vld [vmem:[%s294 + $0xc0] sm:$0xff]
        %v381 = vld [vmem:[%s294 + $0xc8] sm:$0xff]
        %v382 = vld [vmem:[%s294 + $0xd0] sm:$0xff]
        %v383 = vld [vmem:[%s294 + $0xd8] sm:$0xff]
        %v384 = vld [vmem:[%s294 + $0xe0] sm:$0xff]
        %v385 = vld [vmem:[%s294 + $0xe8] sm:$0xff]
        %v386 = vld [vmem:[%s294 + $0xf0] sm:$0xff]
        %v387 = vld [vmem:[%s294 + $0xf8] sm:$0xff]
        %v388 = vld [vmem:[%s304] sm:$0xf]
        %v389 = vld [vmem:[%s304 + $0x4] sm:$0xf]
        %v390 = vld [vmem:[%s304 + $0x8] sm:$0xf]
        %v391 = vld [vmem:[%s304 + $0xc] sm:$0xf]
        %v392 = vld [vmem:[%s304 + $0x10] sm:$0xf]
        %v393 = vld [vmem:[%s304 + $0x14] sm:$0xf]
        %v394 = vld [vmem:[%s304 + $0x18] sm:$0xf]
        %v395 = vld [vmem:[%s304 + $0x1c] sm:$0xf]
        %v396 = vld [vmem:[%s304 + $0x20] sm:$0xf]
        %v397 = vld [vmem:[%s304 + $0x24] sm:$0xf]
        %v398 = vld [vmem:[%s304 + $0x28] sm:$0xf]
        %v399 = vld [vmem:[%s304 + $0x2c] sm:$0xf]
        %v400 = vld [vmem:[%s304 + $0x30] sm:$0xf]
        %v401 = vld [vmem:[%s304 + $0x34] sm:$0xf]
        %v402 = vld [vmem:[%s304 + $0x38] sm:$0xf]
        %v403 = vld [vmem:[%s304 + $0x3c] sm:$0xf]
        %v404 = vld [vmem:[%s304 + $0x40] sm:$0xf]
        %v405 = vld [vmem:[%s304 + $0x44] sm:$0xf]
        %v406 = vld [vmem:[%s304 + $0x48] sm:$0xf]
        %v407 = vld [vmem:[%s304 + $0x4c] sm:$0xf]
        %v408 = vld [vmem:[%s304 + $0x50] sm:$0xf]
        %v409 = vld [vmem:[%s304 + $0x54] sm:$0xf]
        %v410 = vld [vmem:[%s304 + $0x58] sm:$0xf]
        %v411 = vld [vmem:[%s304 + $0x5c] sm:$0xf]
        %v412 = vld [vmem:[%s304 + $0x60] sm:$0xf]
        %v413 = vld [vmem:[%s304 + $0x64] sm:$0xf]
        %v414 = vld [vmem:[%s304 + $0x68] sm:$0xf]
        %v415 = vld [vmem:[%s304 + $0x6c] sm:$0xf]
        %v416 = vld [vmem:[%s304 + $0x70] sm:$0xf]
        %v417 = vld [vmem:[%s304 + $0x74] sm:$0xf]
        %v418 = vld [vmem:[%s304 + $0x78] sm:$0xf]
        %v419 = vld [vmem:[%s304 + $0x7c] sm:$0xf]
        %v420 = vld [vmem:[%s304 + $0x80] sm:$0xf]
        %v421 = vld [vmem:[%s304 + $0x84] sm:$0xf]
        %v422 = vld [vmem:[%s304 + $0x88] sm:$0xf]
        %v423 = vld [vmem:[%s304 + $0x8c] sm:$0xf]
        %v424 = vld [vmem:[%s304 + $0x90] sm:$0xf]
        %v425 = vld [vmem:[%s304 + $0x94] sm:$0xf]
        %v426 = vld [vmem:[%s304 + $0x98] sm:$0xf]
        %v427 = vld [vmem:[%s304 + $0x9c] sm:$0xf]
        %v428 = vld [vmem:[%s304 + $0xa0] sm:$0xf]
        %v429 = vld [vmem:[%s304 + $0xa4] sm:$0xf]
        %v430 = vld [vmem:[%s304 + $0xa8] sm:$0xf]
        %v431 = vld [vmem:[%s304 + $0xac] sm:$0xf]
        %v432 = vld [vmem:[%s304 + $0xb0] sm:$0xf]
        %v433 = vld [vmem:[%s304 + $0xb4] sm:$0xf]
        %v434 = vld [vmem:[%s304 + $0xb8] sm:$0xf]
        %v435 = vld [vmem:[%s304 + $0xbc] sm:$0xf]
        %v436 = vld [vmem:[%s304 + $0xc0] sm:$0xf]
        %v437 = vld [vmem:[%s304 + $0xc4] sm:$0xf]
        %v438 = vld [vmem:[%s304 + $0xc8] sm:$0xf]
        %v439 = vld [vmem:[%s304 + $0xcc] sm:$0xf]
        %v440 = vld [vmem:[%s304 + $0xd0] sm:$0xf]
        %v441 = vld [vmem:[%s304 + $0xd4] sm:$0xf]
        %v442 = vld [vmem:[%s304 + $0xd8] sm:$0xf]
        %v443 = vld [vmem:[%s304 + $0xdc] sm:$0xf]
        %v444 = vld [vmem:[%s304 + $0xe0] sm:$0xf]
        %v445 = vld [vmem:[%s304 + $0xe4] sm:$0xf]
        %v446 = vld [vmem:[%s304 + $0xe8] sm:$0xf]
        %v447 = vld [vmem:[%s304 + $0xec] sm:$0xf]
        %v448 = vld [vmem:[%s304 + $0xf0] sm:$0xf]
        %v449 = vld [vmem:[%s304 + $0xf4] sm:$0xf]
        %v450 = vld [vmem:[%s304 + $0xf8] sm:$0xf]
        %v451 = vld [vmem:[%s304 + $0xfc] sm:$0xf]
        %v484 = vunpack.c.l.b16 %v356
        %v485 = vunpack.c.h.b16 %v356
        %v486 = vunpack.c.l.b16 %v357
        %v487 = vunpack.c.h.b16 %v357
        %v488 = vunpack.c.l.b16 %v358
        %v489 = vunpack.c.h.b16 %v358
        %v490 = vunpack.c.l.b16 %v359
        %v491 = vunpack.c.h.b16 %v359
        %v492 = vunpack.c.l.b16 %v360
        %v493 = vunpack.c.h.b16 %v360
        %v494 = vunpack.c.l.b16 %v361
        %v495 = vunpack.c.h.b16 %v361
        %v496 = vunpack.c.l.b16 %v362
        %v497 = vunpack.c.h.b16 %v362
        %v498 = vunpack.c.l.b16 %v363
        %v499 = vunpack.c.h.b16 %v363
        %v500 = vunpack.c.l.b16 %v364
        %v501 = vunpack.c.h.b16 %v364
        %v502 = vunpack.c.l.b16 %v365
        %v503 = vunpack.c.h.b16 %v365
        %v504 = vunpack.c.l.b16 %v366
        %v505 = vunpack.c.h.b16 %v366
        %v506 = vunpack.c.l.b16 %v367
        %v507 = vunpack.c.h.b16 %v367
        %v508 = vunpack.c.l.b16 %v368
        %v509 = vunpack.c.h.b16 %v368
        %v510 = vunpack.c.l.b16 %v369
        %v511 = vunpack.c.h.b16 %v369
        %v512 = vunpack.c.l.b16 %v370
        %v513 = vunpack.c.h.b16 %v370
        %v514 = vunpack.c.l.b16 %v371
        %v515 = vunpack.c.h.b16 %v371
        %v516 = vunpack.c.l.b16 %v372
        %v517 = vunpack.c.h.b16 %v372
        %v518 = vunpack.c.l.b16 %v373
        %v519 = vunpack.c.h.b16 %v373
        %v520 = vunpack.c.l.b16 %v374
        %v521 = vunpack.c.h.b16 %v374
        %v522 = vunpack.c.l.b16 %v375
        %v523 = vunpack.c.h.b16 %v375
        %v524 = vunpack.c.l.b16 %v376
        %v525 = vunpack.c.h.b16 %v376
        %v526 = vunpack.c.l.b16 %v377
        %v527 = vunpack.c.h.b16 %v377
        %v528 = vunpack.c.l.b16 %v378
        %v529 = vunpack.c.h.b16 %v378
        %v530 = vunpack.c.l.b16 %v379
        %v531 = vunpack.c.h.b16 %v379
        %v532 = vunpack.c.l.b16 %v380
        %v533 = vunpack.c.h.b16 %v380
        %v534 = vunpack.c.l.b16 %v381
        %v535 = vunpack.c.h.b16 %v381
        %v536 = vunpack.c.l.b16 %v382
        %v537 = vunpack.c.h.b16 %v382
        %v538 = vunpack.c.l.b16 %v383
        %v539 = vunpack.c.h.b16 %v383
        %v540 = vunpack.c.l.b16 %v384
        %v541 = vunpack.c.h.b16 %v384
        %v542 = vunpack.c.l.b16 %v385
        %v543 = vunpack.c.h.b16 %v385
        %v544 = vunpack.c.l.b16 %v386
        %v545 = vunpack.c.h.b16 %v386
        %v546 = vunpack.c.l.b16 %v387
        %v547 = vunpack.c.h.b16 %v387
        %v548 = vpack.c.b16 %v488, %v484
        %v549 = vpack.c.b16 %v489, %v485
        %v550 = vpack.c.b16 %v490, %v486
        %v551 = vpack.c.b16 %v491, %v487
        %v552 = vpack.c.b16 %v496, %v492
        %v553 = vpack.c.b16 %v497, %v493
        %v554 = vpack.c.b16 %v498, %v494
        %v555 = vpack.c.b16 %v499, %v495
        %v556 = vpack.c.b16 %v504, %v500
        %v557 = vpack.c.b16 %v505, %v501
        %v558 = vpack.c.b16 %v506, %v502
        %v559 = vpack.c.b16 %v507, %v503
        %v560 = vpack.c.b16 %v512, %v508
        %v561 = vpack.c.b16 %v513, %v509
        %v562 = vpack.c.b16 %v514, %v510
        %v563 = vpack.c.b16 %v515, %v511
        %v564 = vpack.c.b16 %v520, %v516
        %v565 = vpack.c.b16 %v521, %v517
        %v566 = vpack.c.b16 %v522, %v518
        %v567 = vpack.c.b16 %v523, %v519
        %v568 = vpack.c.b16 %v528, %v524
        %v569 = vpack.c.b16 %v529, %v525
        %v570 = vpack.c.b16 %v530, %v526
        %v571 = vpack.c.b16 %v531, %v527
        %v572 = vpack.c.b16 %v536, %v532
        %v573 = vpack.c.b16 %v537, %v533
        %v574 = vpack.c.b16 %v538, %v534
        %v575 = vpack.c.b16 %v539, %v535
        %v576 = vpack.c.b16 %v544, %v540
        %v577 = vpack.c.b16 %v545, %v541
        %v578 = vpack.c.b16 %v546, %v542
        %v579 = vpack.c.b16 %v547, %v543
        %v676 = vunpack.c.l.b16 %v388
        %v677 = vunpack.c.l.b16 %v389
        %v678 = vunpack.c.l.b16 %v390
        %v679 = vunpack.c.l.b16 %v391
        %v680 = vunpack.c.l.b16 %v392
        %v681 = vunpack.c.l.b16 %v393
        %v682 = vunpack.c.l.b16 %v394
        %v683 = vunpack.c.l.b16 %v395
        %v684 = vunpack.c.l.b16 %v396
        %v685 = vunpack.c.l.b16 %v397
        %v686 = vunpack.c.l.b16 %v398
        %v687 = vunpack.c.l.b16 %v399
        %v688 = vunpack.c.l.b16 %v400
        %v689 = vunpack.c.l.b16 %v401
        %v690 = vunpack.c.l.b16 %v402
        %v691 = vunpack.c.l.b16 %v403
        %v692 = vunpack.c.l.b16 %v404
        %v693 = vunpack.c.l.b16 %v405
        %v694 = vunpack.c.l.b16 %v406
        %v695 = vunpack.c.l.b16 %v407
        %v696 = vunpack.c.l.b16 %v408
        %v697 = vunpack.c.l.b16 %v409
        %v698 = vunpack.c.l.b16 %v410
        %v699 = vunpack.c.l.b16 %v411
        %v700 = vunpack.c.l.b16 %v412
        %v701 = vunpack.c.l.b16 %v413
        %v702 = vunpack.c.l.b16 %v414
        %v703 = vunpack.c.l.b16 %v415
        %v704 = vunpack.c.l.b16 %v416
        %v705 = vunpack.c.l.b16 %v417
        %v706 = vunpack.c.l.b16 %v418
        %v707 = vunpack.c.l.b16 %v419
        %v708 = vunpack.c.l.b16 %v420
        %v709 = vunpack.c.l.b16 %v421
        %v710 = vunpack.c.l.b16 %v422
        %v711 = vunpack.c.l.b16 %v423
        %v712 = vunpack.c.l.b16 %v424
        %v713 = vunpack.c.l.b16 %v425
        %v714 = vunpack.c.l.b16 %v426
        %v715 = vunpack.c.l.b16 %v427
        %v716 = vunpack.c.l.b16 %v428
        %v717 = vunpack.c.l.b16 %v429
        %v718 = vunpack.c.l.b16 %v430
        %v719 = vunpack.c.l.b16 %v431
        %v720 = vunpack.c.l.b16 %v432
        %v721 = vunpack.c.l.b16 %v433
        %v722 = vunpack.c.l.b16 %v434
        %v723 = vunpack.c.l.b16 %v435
        %v724 = vunpack.c.l.b16 %v436
        %v725 = vunpack.c.l.b16 %v437
        %v726 = vunpack.c.l.b16 %v438
        %v727 = vunpack.c.l.b16 %v439
        %v728 = vunpack.c.l.b16 %v440
        %v729 = vunpack.c.l.b16 %v441
        %v730 = vunpack.c.l.b16 %v442
        %v731 = vunpack.c.l.b16 %v443
        %v732 = vunpack.c.l.b16 %v444
        %v733 = vunpack.c.l.b16 %v445
        %v734 = vunpack.c.l.b16 %v446
        %v735 = vunpack.c.l.b16 %v447
        %v736 = vunpack.c.l.b16 %v448
        %v737 = vunpack.c.l.b16 %v449
        %v738 = vunpack.c.l.b16 %v450
        %v739 = vunpack.c.l.b16 %v451
        %v740 = vpack.c.b16 %v677, %v676
        %v741 = vpack.c.b16 %v679, %v678
        %v742 = vpack.c.b16 %v681, %v680
        %v743 = vpack.c.b16 %v683, %v682
        %v744 = vpack.c.b16 %v685, %v684
        %v745 = vpack.c.b16 %v687, %v686
        %v746 = vpack.c.b16 %v689, %v688
        %v747 = vpack.c.b16 %v691, %v690
        %v748 = vpack.c.b16 %v693, %v692
        %v749 = vpack.c.b16 %v695, %v694
        %v750 = vpack.c.b16 %v697, %v696
        %v751 = vpack.c.b16 %v699, %v698
        %v752 = vpack.c.b16 %v701, %v700
        %v753 = vpack.c.b16 %v703, %v702
        %v754 = vpack.c.b16 %v705, %v704
        %v755 = vpack.c.b16 %v707, %v706
        %v756 = vpack.c.b16 %v709, %v708
        %v757 = vpack.c.b16 %v711, %v710
        %v758 = vpack.c.b16 %v713, %v712
        %v759 = vpack.c.b16 %v715, %v714
        %v760 = vpack.c.b16 %v717, %v716
        %v761 = vpack.c.b16 %v719, %v718
        %v762 = vpack.c.b16 %v721, %v720
        %v763 = vpack.c.b16 %v723, %v722
        %v764 = vpack.c.b16 %v725, %v724
        %v765 = vpack.c.b16 %v727, %v726
        %v766 = vpack.c.b16 %v729, %v728
        %v767 = vpack.c.b16 %v731, %v730
        %v768 = vpack.c.b16 %v733, %v732
        %v769 = vpack.c.b16 %v735, %v734
        %v770 = vpack.c.b16 %v737, %v736
        %v771 = vpack.c.b16 %v739, %v738
        %804 = vmatprep.subr.bf16.mxu0 0
        %805 = vmatpush1.bf16.msra.mxu0 %v740
        %806 = vmatprep.subr.bf16.mxu0 0
        %807 = vmatpush1.bf16.msra.mxu0 %v741
        %808 = vmatprep.subr.bf16.mxu0 0
        %809 = vmatpush1.bf16.msra.mxu0 %v742
        %810 = vmatprep.subr.bf16.mxu0 0
        %811 = vmatpush1.bf16.msra.mxu0 %v743
        %812 = vmatprep.subr.bf16.mxu0 0
        %813 = vmatpush1.bf16.msra.mxu0 %v744
        %814 = vmatprep.subr.bf16.mxu0 0
        %815 = vmatpush1.bf16.msra.mxu0 %v745
        %816 = vmatprep.subr.bf16.mxu0 0
        %817 = vmatpush1.bf16.msra.mxu0 %v746
        %818 = vmatprep.subr.bf16.mxu0 0
        %819 = vmatpush1.bf16.msra.mxu0 %v747
        %820 = vmatprep.subr.bf16.mxu0 0
        %821 = vmatpush1.bf16.msra.mxu0 %v748
        %822 = vmatprep.subr.bf16.mxu0 0
        %823 = vmatpush1.bf16.msra.mxu0 %v749
        %824 = vmatprep.subr.bf16.mxu0 0
        %825 = vmatpush1.bf16.msra.mxu0 %v750
        %826 = vmatprep.subr.bf16.mxu0 0
        %827 = vmatpush1.bf16.msra.mxu0 %v751
        %828 = vmatprep.subr.bf16.mxu0 0
        %829 = vmatpush1.bf16.msra.mxu0 %v752
        %830 = vmatprep.subr.bf16.mxu0 0
        %831 = vmatpush1.bf16.msra.mxu0 %v753
        %832 = vmatprep.subr.bf16.mxu0 0
        %833 = vmatpush1.bf16.msra.mxu0 %v754
        %834 = vmatprep.subr.bf16.mxu0 0
        %835 = vmatpush1.bf16.msra.mxu0 %v755
        %836 = vmatprep.mubr.bf16.mxu0 %v549
        %837 = vmatmul.mubr.bf16.gmra.mrb[0].mxu0 %v548
        %v838 = vpop.f32.mrb[0].mxu0
        %v839 = vadd.f32 0.0, %v838
        %v840 = vpop.f32.mrb[0].mxu0
        %v841 = vpop.f32.mrb[0].mxu0
        %v842 = vadd.f32 0.0, %v841
        %v843 = vpop.f32.mrb[0].mxu0
        %844 = vmatprep.mubr.bf16.mxu0 %v553
        %845 = vmatmul.mubr.bf16.gmra.mrb[0].mxu0 %v552
        %v846 = vpop.f32.mrb[0].mxu0
        %v847 = vadd.f32 0.0, %v846
        %v848 = vpop.f32.mrb[0].mxu0
        %v849 = vpop.f32.mrb[0].mxu0
        %v850 = vadd.f32 0.0, %v849
        %v851 = vpop.f32.mrb[0].mxu0
        %852 = vmatprep.mubr.bf16.mxu0 %v557
        %853 = vmatmul.mubr.bf16.gmra.mrb[0].mxu0 %v556
        %v854 = vpop.f32.mrb[0].mxu0
        %v855 = vadd.f32 0.0, %v854
        %v856 = vpop.f32.mrb[0].mxu0
        %v857 = vpop.f32.mrb[0].mxu0
        %v858 = vadd.f32 0.0, %v857
        %v859 = vpop.f32.mrb[0].mxu0
        %860 = vmatprep.mubr.bf16.mxu0 %v561
        %861 = vmatmul.mubr.bf16.gmra.mrb[0].mxu0 %v560
        %v862 = vpop.f32.mrb[0].mxu0
        %v863 = vadd.f32 0.0, %v862
        %v864 = vpop.f32.mrb[0].mxu0
        %v865 = vpop.f32.mrb[0].mxu0
        %v866 = vadd.f32 0.0, %v865
        %v867 = vpop.f32.mrb[0].mxu0
        %868 = vmatprep.mubr.bf16.mxu0 %v565
        %869 = vmatmul.mubr.bf16.gmra.mrb[0].mxu0 %v564
        %v870 = vpop.f32.mrb[0].mxu0
        %v871 = vadd.f32 0.0, %v870
        %v872 = vpop.f32.mrb[0].mxu0
        %v873 = vpop.f32.mrb[0].mxu0
        %v874 = vadd.f32 0.0, %v873
        %v875 = vpop.f32.mrb[0].mxu0
        %876 = vmatprep.mubr.bf16.mxu0 %v569
        %877 = vmatmul.mubr.bf16.gmra.mrb[0].mxu0 %v568
        %v878 = vpop.f32.mrb[0].mxu0
        %v879 = vadd.f32 0.0, %v878
        %v880 = vpop.f32.mrb[0].mxu0
        %v881 = vpop.f32.mrb[0].mxu0
        %v882 = vadd.f32 0.0, %v881
        %v883 = vpop.f32.mrb[0].mxu0
        %884 = vmatprep.mubr.bf16.mxu0 %v573
        %885 = vmatmul.mubr.bf16.gmra.mrb[0].mxu0 %v572
        %v886 = vpop.f32.mrb[0].mxu0
        %v887 = vadd.f32 0.0, %v886
        %v888 = vpop.f32.mrb[0].mxu0
        %v889 = vpop.f32.mrb[0].mxu0
        %v890 = vadd.f32 0.0, %v889
        %v891 = vpop.f32.mrb[0].mxu0
        %892 = vmatprep.mubr.bf16.mxu0 %v577
        %893 = vmatmul.mubr.bf16.gmra.mrb[0].mxu0 %v576
        %v894 = vpop.f32.mrb[0].mxu0
        %v895 = vadd.f32 0.0, %v894
        %v896 = vpop.f32.mrb[0].mxu0
        %v897 = vpop.f32.mrb[0].mxu0
        %v898 = vadd.f32 0.0, %v897
        %v899 = vpop.f32.mrb[0].mxu0
        %900 = vdwg.mxu0
        %901 = vmatprep.subr.bf16.mxu0 0
        %902 = vmatpush1.bf16.msra.mxu0 %v756
        %903 = vmatprep.subr.bf16.mxu0 0
        %904 = vmatpush1.bf16.msra.mxu0 %v757
        %905 = vmatprep.subr.bf16.mxu0 0
        %906 = vmatpush1.bf16.msra.mxu0 %v758
        %907 = vmatprep.subr.bf16.mxu0 0
        %908 = vmatpush1.bf16.msra.mxu0 %v759
        %909 = vmatprep.subr.bf16.mxu0 0
        %910 = vmatpush1.bf16.msra.mxu0 %v760
        %911 = vmatprep.subr.bf16.mxu0 0
        %912 = vmatpush1.bf16.msra.mxu0 %v761
        %913 = vmatprep.subr.bf16.mxu0 0
        %914 = vmatpush1.bf16.msra.mxu0 %v762
        %915 = vmatprep.subr.bf16.mxu0 0
        %916 = vmatpush1.bf16.msra.mxu0 %v763
        %917 = vmatprep.subr.bf16.mxu0 0
        %918 = vmatpush1.bf16.msra.mxu0 %v764
        %919 = vmatprep.subr.bf16.mxu0 0
        %920 = vmatpush1.bf16.msra.mxu0 %v765
        %921 = vmatprep.subr.bf16.mxu0 0
        %922 = vmatpush1.bf16.msra.mxu0 %v766
        %923 = vmatprep.subr.bf16.mxu0 0
        %924 = vmatpush1.bf16.msra.mxu0 %v767
        %925 = vmatprep.subr.bf16.mxu0 0
        %926 = vmatpush1.bf16.msra.mxu0 %v768
        %927 = vmatprep.subr.bf16.mxu0 0
        %928 = vmatpush1.bf16.msra.mxu0 %v769
        %929 = vmatprep.subr.bf16.mxu0 0
        %930 = vmatpush1.bf16.msra.mxu0 %v770
        %931 = vmatprep.subr.bf16.mxu0 0
        %932 = vmatpush1.bf16.msra.mxu0 %v771
        %933 = vmatprep.mubr.bf16.mxu0 %v551
        %934 = vmatmul.mubr.bf16.gmra.mrb[0].mxu0 %v550
        %v935 = vpop.f32.mrb[0].mxu0
        %v936 = vadd.f32 %v839, %v935
        %v937 = vpop.f32.mrb[0].mxu0
        %v938 = vpop.f32.mrb[0].mxu0
        %v939 = vadd.f32 %v842, %v938
        %v940 = vpop.f32.mrb[0].mxu0
        %941 = vmatprep.mubr.bf16.mxu0 %v555
        %942 = vmatmul.mubr.bf16.gmra.mrb[0].mxu0 %v554
        %v943 = vpop.f32.mrb[0].mxu0
        %v944 = vadd.f32 %v847, %v943
        %v945 = vpop.f32.mrb[0].mxu0
        %v946 = vpop.f32.mrb[0].mxu0
        %v947 = vadd.f32 %v850, %v946
        %v948 = vpop.f32.mrb[0].mxu0
        %949 = vmatprep.mubr.bf16.mxu0 %v559
        %950 = vmatmul.mubr.bf16.gmra.mrb[0].mxu0 %v558
        %v951 = vpop.f32.mrb[0].mxu0
        %v952 = vadd.f32 %v855, %v951
        %v953 = vpop.f32.mrb[0].mxu0
        %v954 = vpop.f32.mrb[0].mxu0
        %v955 = vadd.f32 %v858, %v954
        %v956 = vpop.f32.mrb[0].mxu0
        %957 = vmatprep.mubr.bf16.mxu0 %v563
        %958 = vmatmul.mubr.bf16.gmra.mrb[0].mxu0 %v562
        %v959 = vpop.f32.mrb[0].mxu0
        %v960 = vadd.f32 %v863, %v959
        %v961 = vpop.f32.mrb[0].mxu0
        %v962 = vpop.f32.mrb[0].mxu0
        %v963 = vadd.f32 %v866, %v962
        %v964 = vpop.f32.mrb[0].mxu0
        %965 = vmatprep.mubr.bf16.mxu0 %v567
        %966 = vmatmul.mubr.bf16.gmra.mrb[0].mxu0 %v566
        %v967 = vpop.f32.mrb[0].mxu0
        %v968 = vadd.f32 %v871, %v967
        %v969 = vpop.f32.mrb[0].mxu0
        %v970 = vpop.f32.mrb[0].mxu0
        %v971 = vadd.f32 %v874, %v970
        %v972 = vpop.f32.mrb[0].mxu0
        %973 = vmatprep.mubr.bf16.mxu0 %v571
        %974 = vmatmul.mubr.bf16.gmra.mrb[0].mxu0 %v570
        %v975 = vpop.f32.mrb[0].mxu0
        %v976 = vadd.f32 %v879, %v975
        %v977 = vpop.f32.mrb[0].mxu0
        %v978 = vpop.f32.mrb[0].mxu0
        %v979 = vadd.f32 %v882, %v978
        %v980 = vpop.f32.mrb[0].mxu0
        %981 = vmatprep.mubr.bf16.mxu0 %v575
        %982 = vmatmul.mubr.bf16.gmra.mrb[0].mxu0 %v574
        %v983 = vpop.f32.mrb[0].mxu0
        %v984 = vadd.f32 %v887, %v983
        %v985 = vpop.f32.mrb[0].mxu0
        %v986 = vpop.f32.mrb[0].mxu0
        %v987 = vadd.f32 %v890, %v986
        %v988 = vpop.f32.mrb[0].mxu0
        %989 = vmatprep.mubr.bf16.mxu0 %v579
        %990 = vmatmul.mubr.bf16.gmra.mrb[0].mxu0 %v578
        %v991 = vpop.f32.mrb[0].mxu0
        %v992 = vadd.f32 %v895, %v991
        %v993 = vpop.f32.mrb[0].mxu0
        %v994 = vpop.f32.mrb[0].mxu0
        %v995 = vadd.f32 %v898, %v994
        %v996 = vpop.f32.mrb[0].mxu0
        %997 = vdwg.mxu0
        %v998 = vadd.f32 %v340, %v936
        %v999 = vadd.f32 %v341, %v939
        %v1000 = vadd.f32 %v342, %v944
        %v1001 = vadd.f32 %v343, %v947
        %v1002 = vadd.f32 %v344, %v952
        %v1003 = vadd.f32 %v345, %v955
        %v1004 = vadd.f32 %v346, %v960
        %v1005 = vadd.f32 %v347, %v963
        %v1006 = vadd.f32 %v348, %v968
        %v1007 = vadd.f32 %v349, %v971
        %v1008 = vadd.f32 %v350, %v976
        %v1009 = vadd.f32 %v351, %v979
        %v1010 = vadd.f32 %v352, %v984
        %v1011 = vadd.f32 %v353, %v987
        %v1012 = vadd.f32 %v354, %v992
        %v1013 = vadd.f32 %v355, %v995
        %1014 = vst [vmem:[#allocation2] sm:$0xff] %v998
        %1015 = vst [vmem:[#allocation2 + $0x8] sm:$0xff] %v999
        %1016 = vst [vmem:[#allocation2 + $0x10] sm:$0xff] %v1000
        %1017 = vst [vmem:[#allocation2 + $0x18] sm:$0xff] %v1001
        %1018 = vst [vmem:[#allocation2 + $0x20] sm:$0xff] %v1002
        %1019 = vst [vmem:[#allocation2 + $0x28] sm:$0xff] %v1003
        %1020 = vst [vmem:[#allocation2 + $0x30] sm:$0xff] %v1004
        %1021 = vst [vmem:[#allocation2 + $0x38] sm:$0xff] %v1005
        %1022 = vst [vmem:[#allocation2 + $0x40] sm:$0xff] %v1006
        %1023 = vst [vmem:[#allocation2 + $0x48] sm:$0xff] %v1007
        %1024 = vst [vmem:[#allocation2 + $0x50] sm:$0xff] %v1008
        %1025 = vst [vmem:[#allocation2 + $0x58] sm:$0xff] %v1009
        %1026 = vst [vmem:[#allocation2 + $0x60] sm:$0xff] %v1010
        %1027 = vst [vmem:[#allocation2 + $0x68] sm:$0xff] %v1011
        %1028 = vst [vmem:[#allocation2 + $0x70] sm:$0xff] %v1012
        %1029 = vst [vmem:[#allocation2 + $0x78] sm:$0xff] %v1013
        // Predicated region
        $region41: #{transformer_block_forward.9} parent=35 // pred_check
          %p1030 = pneg %p320
        $region42: #{transformer_block_forward.9} parent=35 // pred_check_branch
          %1032 = sbr.rel (%p1030) target = $region44
        $region43: #{transformer_block_forward.9} parent=35 // pred_region
          %v1033 = vld [vmem:[#allocation2] sm:$0xff]
          %v1034 = vld [vmem:[#allocation2 + $0x8] sm:$0xff]
          %v1035 = vld [vmem:[#allocation2 + $0x10] sm:$0xff]
          %v1036 = vld [vmem:[#allocation2 + $0x18] sm:$0xff]
          %v1037 = vld [vmem:[#allocation2 + $0x20] sm:$0xff]
          %v1038 = vld [vmem:[#allocation2 + $0x28] sm:$0xff]
          %v1039 = vld [vmem:[#allocation2 + $0x30] sm:$0xff]
          %v1040 = vld [vmem:[#allocation2 + $0x38] sm:$0xff]
          %v1041 = vld [vmem:[#allocation2 + $0x40] sm:$0xff]
          %v1042 = vld [vmem:[#allocation2 + $0x48] sm:$0xff]
          %v1043 = vld [vmem:[#allocation2 + $0x50] sm:$0xff]
          %v1044 = vld [vmem:[#allocation2 + $0x58] sm:$0xff]
          %v1045 = vld [vmem:[#allocation2 + $0x60] sm:$0xff]
          %v1046 = vld [vmem:[#allocation2 + $0x68] sm:$0xff]
          %v1047 = vld [vmem:[#allocation2 + $0x70] sm:$0xff]
          %v1048 = vld [vmem:[#allocation2 + $0x78] sm:$0xff]
          %v1049 = vld [vmem:[%s308] sm:$0x1]
          %v1051 = vlaneseq
          %v1052 = vshrl.u32 %v1051, 7
          %v1053 = vsub.s32 0, %v1052
          %v1054 = vrot.slane %v1049, %v1053
          %v1056 = vadd.f32 %v1033, %v1054
          %v1057 = vadd.f32 %v1034, %v1054
          %v1058 = vadd.f32 %v1035, %v1054
          %v1059 = vadd.f32 %v1036, %v1054
          %v1060 = vadd.f32 %v1037, %v1054
          %v1061 = vadd.f32 %v1038, %v1054
          %v1062 = vadd.f32 %v1039, %v1054
          %v1063 = vadd.f32 %v1040, %v1054
          %v1064 = vadd.f32 %v1041, %v1054
          %v1065 = vadd.f32 %v1042, %v1054
          %v1066 = vadd.f32 %v1043, %v1054
          %v1067 = vadd.f32 %v1044, %v1054
          %v1068 = vadd.f32 %v1045, %v1054
          %v1069 = vadd.f32 %v1046, %v1054
          %v1070 = vadd.f32 %v1047, %v1054
          %v1071 = vadd.f32 %v1048, %v1054
          %v1072 = vld [vmem:[%s316] sm:$0xff]
          %v1073 = vld [vmem:[%s316 + $0x8] sm:$0xff]
          %v1074 = vld [vmem:[%s316 + $0x10] sm:$0xff]
          %v1075 = vld [vmem:[%s316 + $0x18] sm:$0xff]
          %v1076 = vld [vmem:[%s316 + $0x20] sm:$0xff]
          %v1077 = vld [vmem:[%s316 + $0x28] sm:$0xff]
          %v1078 = vld [vmem:[%s316 + $0x30] sm:$0xff]
          %v1079 = vld [vmem:[%s316 + $0x38] sm:$0xff]
          %v1080 = vld [vmem:[%s316 + $0x40] sm:$0xff]
          %v1081 = vld [vmem:[%s316 + $0x48] sm:$0xff]
          %v1082 = vld [vmem:[%s316 + $0x50] sm:$0xff]
          %v1083 = vld [vmem:[%s316 + $0x58] sm:$0xff]
          %v1084 = vld [vmem:[%s316 + $0x60] sm:$0xff]
          %v1085 = vld [vmem:[%s316 + $0x68] sm:$0xff]
          %v1086 = vld [vmem:[%s316 + $0x70] sm:$0xff]
          %v1087 = vld [vmem:[%s316 + $0x78] sm:$0xff]
          %v1088 = vadd.f32 %v1056, %v1072
          %v1089 = vadd.f32 %v1057, %v1073
          %v1090 = vadd.f32 %v1058, %v1074
          %v1091 = vadd.f32 %v1059, %v1075
          %v1092 = vadd.f32 %v1060, %v1076
          %v1093 = vadd.f32 %v1061, %v1077
          %v1094 = vadd.f32 %v1062, %v1078
          %v1095 = vadd.f32 %v1063, %v1079
          %v1096 = vadd.f32 %v1064, %v1080
          %v1097 = vadd.f32 %v1065, %v1081
          %v1098 = vadd.f32 %v1066, %v1082
          %v1099 = vadd.f32 %v1067, %v1083
          %v1100 = vadd.f32 %v1068, %v1084
          %v1101 = vadd.f32 %v1069, %v1085
          %v1102 = vadd.f32 %v1070, %v1086
          %v1103 = vadd.f32 %v1071, %v1087
          %1104 = vst [vmem:[%s284] sm:$0xff] %v1088
          %1105 = vst [vmem:[%s284 + $0x8] sm:$0xff] %v1089
          %1106 = vst [vmem:[%s284 + $0x10] sm:$0xff] %v1090
          %1107 = vst [vmem:[%s284 + $0x18] sm:$0xff] %v1091
          %1108 = vst [vmem:[%s284 + $0x20] sm:$0xff] %v1092
          %1109 = vst [vmem:[%s284 + $0x28] sm:$0xff] %v1093
          %1110 = vst [vmem:[%s284 + $0x30] sm:$0xff] %v1094
          %1111 = vst [vmem:[%s284 + $0x38] sm:$0xff] %v1095
          %1112 = vst [vmem:[%s284 + $0x40] sm:$0xff] %v1096
          %1113 = vst [vmem:[%s284 + $0x48] sm:$0xff] %v1097
          %1114 = vst [vmem:[%s284 + $0x50] sm:$0xff] %v1098
          %1115 = vst [vmem:[%s284 + $0x58] sm:$0xff] %v1099
          %1116 = vst [vmem:[%s284 + $0x60] sm:$0xff] %v1100
          %1117 = vst [vmem:[%s284 + $0x68] sm:$0xff] %v1101
          %1118 = vst [vmem:[%s284 + $0x70] sm:$0xff] %v1102
          %1119 = vst [vmem:[%s284 + $0x78] sm:$0xff] %v1103
        $region44: #{transformer_block_forward.9} parent=35 // pred_fallthru
          _
        %s1120 = sand.u32 %s157, 1
        %s1121 = scalar_lea.sflag [#allocation4], %s1120
        %s1122 = sand.u32 %s157, 1
        %s1123 = smul.addr %s1122, 128
        %s1124 = scalar_lea.vmem [#allocation3], %s1123
        // Predicated region
        $region45: #{transformer_block_forward.9} parent=35 // pred_check
          %p1125 = pneg %p167
        $region46: #{transformer_block_forward.9} parent=35 // pred_check_branch
          %1127 = sbr.rel (%p1125) target = $region48
        $region47: #{transformer_block_forward.9} parent=35 // pred_region
          %s1128 = smul.u32 16, %s23
          %s1130 = ssub.s32 2048, 2048
          %1131 = vsyncadd %s1121, %s1130
          %s1132 = sadd.s32 %s24, %s1128
          %s1133 = smul.addr %s1132, 128
          %s1134 = scalar_lea.hbm %s4, %s1133
          %s1135 = sshll.u32 %s1124, 4
          %s1136 = int_to_ptr.vmem [resolvable:$true] %s1135
          %1141 = dma.vmem_to_hbm [thread:$0]  %s1136, 2048, %s1134, %s1121, 128, 128, 8
        $region48: #{transformer_block_forward.9} parent=35 // pred_fallthru
          _
      $region36: #{transformer_block_forward.9} parent=5 // pred_fallthru
        _
      %p1142 = scmp.le.s32.totalorder 2, %s13
      // Predicated region
      $region49: #{transformer_block_forward.9} parent=5 // pred_check
        %p1143 = pneg %p1142
      $region50: #{transformer_block_forward.9} parent=5 // pred_check_branch
        %1145 = sbr.rel (%p1143) target = $region52
      $region51: #{transformer_block_forward.9} parent=5 // pred_region
        %s1146 = ssub.s32 %s13, 2
        // Predicated region
        $region53: #{transformer_block_forward.9} parent=51 // pred_check
          %p1147 = pneg %p173
        $region54: #{transformer_block_forward.9} parent=51 // pred_check_branch
          %1149 = sbr.rel (%p1147) target = $region56
        $region55: #{transformer_block_forward.9} parent=51 // pred_region
          %s1150 = sand.u32 %s158, 1
          %s1151 = scalar_lea.sflag [#allocation4], %s1150
          %s1152 = sand.u32 %s158, 1
          %s1153 = smul.addr %s1152, 128
          %s1154 = scalar_lea.vmem [#allocation3], %s1153
          %1155 = dma.done %s1151, 2048
        $region56: #{transformer_block_forward.9} parent=51 // pred_fallthru
          _
      $region52: #{transformer_block_forward.9} parent=5 // pred_fallthru
        _
    $region6: #{transformer_block_forward.9} parent=1 // loop_footer
      %s17 = sadd.s32 1, %s13
    $region7: #{transformer_block_forward.9} parent=1 // loop_footer_branch
      %12 = sbr.rel target = $region3
    $region8: #{transformer_block_forward.9} parent=1 // loop_exit
      _
    %1156 = vsyncpa [#allocation4], 1
    %s1157 = scalar_lea.sflag [#allocation4], 1
    %1158 = vsyncpa %s1157, 1

</llo_original>
